<compile_context>
chip_gen: v5e
topology: v5e:2x2
jax: 0.10.0
libtpu: 0.0.40
codegen_flags: <defaults>
</compile_context>

<pallas_src>
import math

import jax
import jax.numpy as jnp
from jax.experimental import pallas as pl
from jax.experimental.pallas import tpu as pltpu  # noqa: F401  (kept for completeness)

# ---- hyperparameters consistent with TransformerModel.__init__ ----
NUM_TOKENS = 50
DIM_MODEL  = 32
NUM_HEADS  = 4
NUM_LAYERS = 2
DIM_FFN    = 64
HEAD_DIM   = DIM_MODEL // NUM_HEADS
LN_EPS     = 1e-5
ATTN_SCALE = 1.0 / math.sqrt(HEAD_DIM)

BATCH = 2
SEQ   = 8
ROWS  = BATCH * SEQ          # 16 activation rows, kept in vregs for the whole kernel

VOCAB_PAD  = 64              # embedding rows padded 50 -> 64 for the one-hot gather matmul
FC_PAD     = 128             # fc_out lanes padded 50 -> 128 (lane-dense final store)
SLAB_LANES = 128             # the packed weight slab is (rows, 128)
NEG_BIG    = -1e9            # additive mask value for cross-batch attention entries

_ATTN_PREFIXES = tuple(
    [f"enc{l}_sa_" for l in range(NUM_LAYERS)]
    + [x for l in range(NUM_LAYERS) for x in (f"dec{l}_sa_", f"dec{l}_ca_")]
)
_FFN_PREFIXES = tuple([f"enc{l}_" for l in range(NUM_LAYERS)]
                      + [f"dec{l}_" for l in range(NUM_LAYERS)])
_LN_NAMES = tuple(
    [x for l in range(NUM_LAYERS) for x in (f"enc{l}_ln1", f"enc{l}_ln2")]
    + [x for l in range(NUM_LAYERS) for x in (f"dec{l}_ln1", f"dec{l}_ln2", f"dec{l}_ln3")]
    + ["enc_norm", "dec_norm"]
)


# --------------------------- packed-slab layout (static) ---------------------------

def _build_layout():
    layout = {}
    off = 0

    def _align8(v):
        return (v + 7) & ~7

    def add(name, rows, cols):
        nonlocal off
        if rows >= 8:                    # keep big weight loads (8,128)-tile aligned
            off = _align8(off)
        layout[name] = (off, rows, cols)
        off += rows

    add("emb", VOCAB_PAD, DIM_MODEL)     # zero-padded embedding rows (one-hot gather target)
    add("pos", ROWS, DIM_MODEL)          # positional encoding pre-tiled over both batch rows
    add("attn_bias", ROWS, ROWS)         # block-diagonal additive mask (0 / -1e9)
    for p in _ATTN_PREFIXES:
        add(p + "wq", DIM_MODEL, DIM_MODEL)   # (out, in), rows grouped by head
        add(p + "wk", DIM_MODEL, DIM_MODEL)
        add(p + "wv", DIM_MODEL, DIM_MODEL)
        add(p + "bq", NUM_HEADS, HEAD_DIM)    # one row per head
        add(p + "bk", NUM_HEADS, HEAD_DIM)
        add(p + "bv", NUM_HEADS, HEAD_DIM)
        add(p + "wo", DIM_MODEL, DIM_MODEL)   # W_o^T: (in, out), rows grouped by head
        add(p + "bo", 1, DIM_MODEL)
    for p in _FFN_PREFIXES:
        add(p + "w1", DIM_MODEL, DIM_FFN)     # (in, out)
        add(p + "b1", 1, DIM_FFN)
        add(p + "w2", DIM_FFN, DIM_MODEL)
        add(p + "b2", 1, DIM_MODEL)
    for n in _LN_NAMES:
        add(n + "_g", 1, DIM_MODEL)
        add(n + "_b", 1, DIM_MODEL)
    add("fc_w", DIM_MODEL, FC_PAD)            # (in, out), lanes zero-padded 50 -> 128
    add("fc_b", 1, FC_PAD)
    return layout, _align8(off)


_LAYOUT, _SLAB_ROWS = _build_layout()

_COST_ESTIMATE = pl.CostEstimate(
    flops=1_800_000,                                   # ~1.7 MFLOP of tiny matmuls + elementwise
    transcendentals=8_192,                             # exp / rsqrt / approx-reciprocal
    bytes_accessed=_SLAB_ROWS * SLAB_LANES * 4 + ROWS * 4 + BATCH * FC_PAD * 4,
)


# ---------------------------- in-kernel helpers ----------------------------

def _rows(slab_ref, name, row0, nrows):
    off, _, nc = _LAYOUT[name]
    return slab_ref[off + row0: off + row0 + nrows, 0:nc]


def _full(slab_ref, name):
    off, nr, nc = _LAYOUT[name]
    return slab_ref[off: off + nr, 0:nc]


def _layer_norm(x, slab_ref, name):
    g = _full(slab_ref, name + "_g")          # (1, D)
    b = _full(slab_ref, name + "_b")
    mean = jnp.mean(x, axis=-1, keepdims=True)
    cen = x - mean
    var = jnp.mean(cen * cen, axis=-1, keepdims=True)
    return cen * jax.lax.rsqrt(var + LN_EPS) * g + b


def _softmax_rows(s):
    # pl.reciprocal(approx=True) -> EUP slot; ~1e-4 rel error vs exact softmax (documented).
    s = s - jnp.max(s, axis=-1, keepdims=True)
    p = jnp.exp(s)
    return p * pl.reciprocal(jnp.sum(p, axis=-1, keepdims=True), approx=True)


def _qkt(a, b):
    # a @ b.T with both contraction dims last -> transpose-free on the MXU.
    return jax.lax.dot_general(a, b, (((1,), (1,)), ((), ())),
                               preferred_element_type=jnp.float32)


def _mha(slab_ref, x_q, x_kv, prefix, attn_bias):
    """Multi-head attention with per-head sublane-sliced weights and per-head Wo accumulation."""
    out = None
    for h in range(NUM_HEADS):
        r0 = h * HEAD_DIM
        wq = _rows(slab_ref, prefix + "wq", r0, HEAD_DIM)     # (Hd, D) torch (out,in) rows
        wk = _rows(slab_ref, prefix + "wk", r0, HEAD_DIM)
        wv = _rows(slab_ref, prefix + "wv", r0, HEAD_DIM)
        bq = _rows(slab_ref, prefix + "bq", h, 1)             # (1, Hd)
        bk = _rows(slab_ref, prefix + "bk", h, 1)
        bv = _rows(slab_ref, prefix + "bv", h, 1)

        q = _qkt(x_q, wq) + bq                                # (16, Hd)
        k = _qkt(x_kv, wk) + bk
        v = _qkt(x_kv, wv) + bv

        # both batches at once; cross-batch entries killed by the additive block-diagonal bias
        s = _qkt(q, k) * ATTN_SCALE + attn_bias               # (16, 16)
        p = _softmax_rows(s)
        o_h = jnp.dot(p, v, preferred_element_type=jnp.float32)       # (16, Hd)

        wo_h = _rows(slab_ref, prefix + "wo", r0, HEAD_DIM)   # (Hd, D) rows of W_o^T
        part = jnp.dot(o_h, wo_h, preferred_element_type=jnp.float32)  # (16, D)
        out = part if out is None else out + part             # v7x: MRB-accumulate friendly
    return out + _full(slab_ref, prefix + "bo")


def _ffn(slab_ref, x, prefix):
    w1 = _full(slab_ref, prefix + "w1")
    b1 = _full(slab_ref, prefix + "b1")
    w2 = _full(slab_ref, prefix + "w2")
    b2 = _full(slab_ref, prefix + "b2")
    h = jnp.maximum(jnp.dot(x, w1, preferred_element_type=jnp.float32) + b1, 0.0)
    return jnp.dot(h, w2, preferred_element_type=jnp.float32) + b2


# ---------------------------- fused Pallas kernel ----------------------------

def _fused_forward_kernel(tok_ref, slab_ref, out_ref):
    # ---- embedding gather + positional encoding, fused (one-hot matmul, no host gather) ----
    tok = tok_ref[...]                                                   # (16, 1) int32
    ids = jax.lax.broadcasted_iota(jnp.int32, (ROWS, VOCAB_PAD), 1)
    onehot = jnp.where(tok == ids, 1.0, 0.0).astype(jnp.float32)         # (16, 64)
    emb = _full(slab_ref, "emb")                                         # (64, 32)
    x = jnp.dot(onehot, emb, preferred_element_type=jnp.float32) + _full(slab_ref, "pos")

    attn_bias = _full(slab_ref, "attn_bias")                             # (16, 16)

    # ----- encoder stack (post-norm, ReLU FFN) -----
    src = x
    for l in range(NUM_LAYERS):
        a = _mha(slab_ref, src, src, f"enc{l}_sa_", attn_bias)
        h1 = _layer_norm(src + a, slab_ref, f"enc{l}_ln1")
        f = _ffn(slab_ref, h1, f"enc{l}_")
        src = _layer_norm(h1 + f, slab_ref, f"enc{l}_ln2")
    mem = _layer_norm(src, slab_ref, "enc_norm")

    # ----- decoder stack -----
    tgt = x
    for l in range(NUM_LAYERS):
        a = _mha(slab_ref, tgt, tgt, f"dec{l}_sa_", attn_bias)
        h1 = _layer_norm(tgt + a, slab_ref, f"dec{l}_ln1")
        a = _mha(slab_ref, h1, mem, f"dec{l}_ca_", attn_bias)
        h2 = _layer_norm(h1 + a, slab_ref, f"dec{l}_ln2")
        f = _ffn(slab_ref, h2, f"dec{l}_")
        tgt = _layer_norm(h2 + f, slab_ref, f"dec{l}_ln3")
    dec = _layer_norm(tgt, slab_ref, "dec_norm")

    # ----- fc_out on all rows (one lane-dense matmul), store only the last token per batch -----
    fc_w = _full(slab_ref, "fc_w")                                       # (32, 128)
    fc_b = _full(slab_ref, "fc_b")
    logits = jnp.dot(dec, fc_w, preferred_element_type=jnp.float32) + fc_b   # (16, 128)
    for b in range(BATCH):
        out_ref[b:b + 1, :] = logits[(b + 1) * SEQ - 1:(b + 1) * SEQ, :]


# --------------------------- host-side wrapper ---------------------------

def transformer_model_forward(params, tokens):
    B, S = tokens.shape
    assert B == BATCH and S == SEQ
    tok2d = tokens.reshape(B * S, 1).astype(jnp.int32)

    logits_padded = pl.pallas_call(
        _fused_forward_kernel,
        out_shape=jax.ShapeDtypeStruct((B, FC_PAD), jnp.float32),
        cost_estimate=_COST_ESTIMATE,
    )(tok2d, params["slab"])

    return logits_padded[:, :NUM_TOKENS]


# --------------------------- deterministic init ---------------------------

def init_params(key):
    keys = iter(jax.random.split(key, 128))
    D, F = DIM_MODEL, DIM_FFN

    def rnd(shape):
        return 0.02 * jax.random.normal(next(keys), shape, jnp.float32)

    vals = {}
    emb = jax.random.normal(next(keys), (NUM_TOKENS, D), jnp.float32)
    vals["emb"] = jnp.zeros((VOCAB_PAD, D), jnp.float32).at[:NUM_TOKENS, :].set(emb)
    # positional encoding matches torch.zeros init; pre-tiled over both batch rows
    vals["pos"] = jnp.zeros((ROWS, D), jnp.float32)
    rb = jnp.arange(ROWS) // SEQ
    vals["attn_bias"] = jnp.where(rb[:, None] == rb[None, :], 0.0, NEG_BIG).astype(jnp.float32)

    for p in _ATTN_PREFIXES:
        vals[p + "wq"] = rnd((D, D))                 # (out, in), head-grouped rows
        vals[p + "wk"] = rnd((D, D))
        vals[p + "wv"] = rnd((D, D))
        vals[p + "bq"] = jnp.zeros((NUM_HEADS, HEAD_DIM), jnp.float32)
        vals[p + "bk"] = jnp.zeros((NUM_HEADS, HEAD_DIM), jnp.float32)
        vals[p + "bv"] = jnp.zeros((NUM_HEADS, HEAD_DIM), jnp.float32)
        vals[p + "wo"] = rnd((D, D))                 # stored as W_o^T (in, out)
        vals[p + "bo"] = jnp.zeros((1, D), jnp.float32)
    for p in _FFN_PREFIXES:
        vals[p + "w1"] = rnd((D, F))
        vals[p + "b1"] = jnp.zeros((1, F), jnp.float32)
        vals[p + "w2"] = rnd((F, D))
        vals[p + "b2"] = jnp.zeros((1, D), jnp.float32)
    for n in _LN_NAMES:
        vals[n + "_g"] = jnp.ones((1, D), jnp.float32)
        vals[n + "_b"] = jnp.zeros((1, D), jnp.float32)
    fcw = rnd((D, NUM_TOKENS))
    vals["fc_w"] = jnp.zeros((D, FC_PAD), jnp.float32).at[:, :NUM_TOKENS].set(fcw)
    vals["fc_b"] = jnp.zeros((1, FC_PAD), jnp.float32)

    slab = jnp.zeros((_SLAB_ROWS, SLAB_LANES), jnp.float32)
    for name, (off, nr, nc) in _LAYOUT.items():
        slab = slab.at[off:off + nr, :nc].set(vals[name])
    return {"slab": slab}


if __name__ == "__main__":
    key = jax.random.PRNGKey(0)
    pkey, xkey = jax.random.split(key)
    params = init_params(pkey)
    tokens = jax.random.randint(xkey, (BATCH, SEQ), 0, NUM_TOKENS, dtype=jnp.int32)

    fwd = jax.jit(transformer_model_forward)
    logits = jax.block_until_ready(fwd(params, tokens))
    assert logits.shape == (BATCH, NUM_TOKENS), logits.shape
    assert bool(jnp.all(jnp.isfinite(logits)))
    print("KERNEL_OK")
</pallas_src>

<mosaic_0001>
module attributes {stable_mosaic.version = 11 : i64} {
  func.func @_fused_forward_kernel(%arg0: memref<16x1xi32, #tpu.memory_space<vmem>>, %arg1: memref<1520x128xf32, #tpu.memory_space<vmem>>, %arg2: memref<2x128xf32, #tpu.memory_space<vmem>>) attributes {dimension_semantics = [], scalar_prefetch = 0 : i64, scratch_operands = 0 : i64, tpu.core_type = #tpu.core_type<tc>} {
    %c0 = arith.constant 0 : index
    %c0_0 = arith.constant 0 : index
    %0 = vector.load %arg0[%c0, %c0_0] : memref<16x1xi32, #tpu.memory_space<vmem>>, vector<16x1xi32>
    %1 = tpu.iota {dimensions = array<i32: 1>} : vector<16x64xi32>
    %2 = vector.broadcast %0 : vector<16x1xi32> to vector<16x64xi32>
    %3 = arith.cmpi eq, %2, %1 : vector<16x64xi32>
    %cst = arith.constant 1.000000e+00 : f32
    %cst_1 = arith.constant 0.000000e+00 : f32
    %4 = vector.broadcast %cst : f32 to vector<16x64xf32>
    %5 = vector.broadcast %cst_1 : f32 to vector<16x64xf32>
    %6 = arith.select %3, %4, %5 : vector<16x64xi1>, vector<16x64xf32>
    %c0_2 = arith.constant 0 : index
    %c0_3 = arith.constant 0 : index
    %7 = vector.load %arg1[%c0_2, %c0_3] : memref<1520x128xf32, #tpu.memory_space<vmem>>, vector<64x32xf32>
    %cst_4 = arith.constant dense<0.000000e+00> : vector<16x32xf32>
    %8 = tpu.matmul %6, %7, %cst_4 {dimension_numbers = #tpu.dot_dimension_numbers<[1], [0], [0], [1], [0, 0, 1, 1], [], []>} : vector<16x64xf32>, vector<64x32xf32>, vector<16x32xf32> -> vector<16x32xf32>
    %c64 = arith.constant 64 : index
    %c0_5 = arith.constant 0 : index
    %9 = vector.load %arg1[%c64, %c0_5] : memref<1520x128xf32, #tpu.memory_space<vmem>>, vector<16x32xf32>
    %10 = arith.addf %8, %9 : vector<16x32xf32>
    %c80 = arith.constant 80 : index
    %c0_6 = arith.constant 0 : index
    %11 = vector.load %arg1[%c80, %c0_6] : memref<1520x128xf32, #tpu.memory_space<vmem>>, vector<16x16xf32>
    %c96 = arith.constant 96 : index
    %c0_7 = arith.constant 0 : index
    %12 = vector.load %arg1[%c96, %c0_7] : memref<1520x128xf32, #tpu.memory_space<vmem>>, vector<8x32xf32>
    %c128 = arith.constant 128 : index
    %c0_8 = arith.constant 0 : index
    %13 = vector.load %arg1[%c128, %c0_8] : memref<1520x128xf32, #tpu.memory_space<vmem>>, vector<8x32xf32>
    %c160 = arith.constant 160 : index
    %c0_9 = arith.constant 0 : index
    %14 = vector.load %arg1[%c160, %c0_9] : memref<1520x128xf32, #tpu.memory_space<vmem>>, vector<8x32xf32>
    %c192 = arith.constant 192 : index
    %c0_10 = arith.constant 0 : index
    %15 = vector.load %arg1[%c192, %c0_10] : memref<1520x128xf32, #tpu.memory_space<vmem>>, vector<1x8xf32>
    %c196 = arith.constant 196 : index
    %c0_11 = arith.constant 0 : index
    %16 = vector.load %arg1[%c196, %c0_11] : memref<1520x128xf32, #tpu.memory_space<vmem>>, vector<1x8xf32>
    %c200 = arith.constant 200 : index
    %c0_12 = arith.constant 0 : index
    %17 = vector.load %arg1[%c200, %c0_12] : memref<1520x128xf32, #tpu.memory_space<vmem>>, vector<1x8xf32>
    %cst_13 = arith.constant dense<0.000000e+00> : vector<16x8xf32>
    %18 = tpu.matmul %10, %12, %cst_13 {dimension_numbers = #tpu.dot_dimension_numbers<[1], [1], [0], [0], [0, 0, 1, 0], [], []>} : vector<16x32xf32>, vector<8x32xf32>, vector<16x8xf32> -> vector<16x8xf32>
    %19 = vector.broadcast %15 : vector<1x8xf32> to vector<16x8xf32>
    %20 = arith.addf %18, %19 : vector<16x8xf32>
    %cst_14 = arith.constant dense<0.000000e+00> : vector<16x8xf32>
    %21 = tpu.matmul %10, %13, %cst_14 {dimension_numbers = #tpu.dot_dimension_numbers<[1], [1], [0], [0], [0, 0, 1, 0], [], []>} : vector<16x32xf32>, vector<8x32xf32>, vector<16x8xf32> -> vector<16x8xf32>
    %22 = vector.broadcast %16 : vector<1x8xf32> to vector<16x8xf32>
    %23 = arith.addf %21, %22 : vector<16x8xf32>
    %cst_15 = arith.constant dense<0.000000e+00> : vector<16x8xf32>
    %24 = tpu.matmul %10, %14, %cst_15 {dimension_numbers = #tpu.dot_dimension_numbers<[1], [1], [0], [0], [0, 0, 1, 0], [], []>} : vector<16x32xf32>, vector<8x32xf32>, vector<16x8xf32> -> vector<16x8xf32>
    %25 = vector.broadcast %17 : vector<1x8xf32> to vector<16x8xf32>
    %26 = arith.addf %24, %25 : vector<16x8xf32>
    %cst_16 = arith.constant dense<0.000000e+00> : vector<16x16xf32>
    %27 = tpu.matmul %20, %23, %cst_16 {dimension_numbers = #tpu.dot_dimension_numbers<[1], [1], [0], [0], [0, 0, 1, 0], [], []>} : vector<16x8xf32>, vector<16x8xf32>, vector<16x16xf32> -> vector<16x16xf32>
    %cst_17 = arith.constant 0.353553385 : f32
    %28 = vector.broadcast %cst_17 : f32 to vector<16x16xf32>
    %29 = arith.mulf %27, %28 : vector<16x16xf32>
    %30 = arith.addf %29, %11 : vector<16x16xf32>
    %cst_18 = arith.constant dense<0xFF800000> : vector<16xf32>
    %31 = vector.multi_reduction <maximumf>, %30, %cst_18 [1] : vector<16x16xf32> to vector<16xf32>
    %32 = vector.shape_cast %31 : vector<16xf32> to vector<16x1xf32>
    %33 = vector.broadcast %32 : vector<16x1xf32> to vector<16x16xf32>
    %34 = arith.subf %30, %33 : vector<16x16xf32>
    %35 = math.exp %34 : vector<16x16xf32>
    %cst_19 = arith.constant dense<0.000000e+00> : vector<16xf32>
    %36 = vector.multi_reduction <add>, %35, %cst_19 [1] : vector<16x16xf32> to vector<16xf32>
    %37 = vector.shape_cast %36 : vector<16xf32> to vector<16x1xf32>
    %38 = tpu.reciprocal %37 {approx = true} : vector<16x1xf32> -> vector<16x1xf32>
    %39 = vector.broadcast %38 : vector<16x1xf32> to vector<16x16xf32>
    %40 = arith.mulf %35, %39 : vector<16x16xf32>
    %cst_20 = arith.constant dense<0.000000e+00> : vector<16x8xf32>
    %41 = tpu.matmul %40, %26, %cst_20 {dimension_numbers = #tpu.dot_dimension_numbers<[1], [0], [0], [1], [0, 0, 1, 1], [], []>} : vector<16x16xf32>, vector<16x8xf32>, vector<16x8xf32> -> vector<16x8xf32>
    %c208 = arith.constant 208 : index
    %c0_21 = arith.constant 0 : index
    %42 = vector.load %arg1[%c208, %c0_21] : memref<1520x128xf32, #tpu.memory_space<vmem>>, vector<8x32xf32>
    %cst_22 = arith.constant dense<0.000000e+00> : vector<16x32xf32>
    %43 = tpu.matmul %41, %42, %cst_22 {dimension_numbers = #tpu.dot_dimension_numbers<[1], [0], [0], [1], [0, 0, 1, 1], [], []>} : vector<16x8xf32>, vector<8x32xf32>, vector<16x32xf32> -> vector<16x32xf32>
    %c104 = arith.constant 104 : index
    %c0_23 = arith.constant 0 : index
    %44 = vector.load %arg1[%c104, %c0_23] : memref<1520x128xf32, #tpu.memory_space<vmem>>, vector<8x32xf32>
    %c136 = arith.constant 136 : index
    %c0_24 = arith.constant 0 : index
    %45 = vector.load %arg1[%c136, %c0_24] : memref<1520x128xf32, #tpu.memory_space<vmem>>, vector<8x32xf32>
    %c168 = arith.constant 168 : index
    %c0_25 = arith.constant 0 : index
    %46 = vector.load %arg1[%c168, %c0_25] : memref<1520x128xf32, #tpu.memory_space<vmem>>, vector<8x32xf32>
    %c193 = arith.constant 193 : index
    %c0_26 = arith.constant 0 : index
    %47 = vector.load %arg1[%c193, %c0_26] : memref<1520x128xf32, #tpu.memory_space<vmem>>, vector<1x8xf32>
    %c197 = arith.constant 197 : index
    %c0_27 = arith.constant 0 : index
    %48 = vector.load %arg1[%c197, %c0_27] : memref<1520x128xf32, #tpu.memory_space<vmem>>, vector<1x8xf32>
    %c201 = arith.constant 201 : index
    %c0_28 = arith.constant 0 : index
    %49 = vector.load %arg1[%c201, %c0_28] : memref<1520x128xf32, #tpu.memory_space<vmem>>, vector<1x8xf32>
    %cst_29 = arith.constant dense<0.000000e+00> : vector<16x8xf32>
    %50 = tpu.matmul %10, %44, %cst_29 {dimension_numbers = #tpu.dot_dimension_numbers<[1], [1], [0], [0], [0, 0, 1, 0], [], []>} : vector<16x32xf32>, vector<8x32xf32>, vector<16x8xf32> -> vector<16x8xf32>
    %51 = vector.broadcast %47 : vector<1x8xf32> to vector<16x8xf32>
    %52 = arith.addf %50, %51 : vector<16x8xf32>
    %cst_30 = arith.constant dense<0.000000e+00> : vector<16x8xf32>
    %53 = tpu.matmul %10, %45, %cst_30 {dimension_numbers = #tpu.dot_dimension_numbers<[1], [1], [0], [0], [0, 0, 1, 0], [], []>} : vector<16x32xf32>, vector<8x32xf32>, vector<16x8xf32> -> vector<16x8xf32>
    %54 = vector.broadcast %48 : vector<1x8xf32> to vector<16x8xf32>
    %55 = arith.addf %53, %54 : vector<16x8xf32>
    %cst_31 = arith.constant dense<0.000000e+00> : vector<16x8xf32>
    %56 = tpu.matmul %10, %46, %cst_31 {dimension_numbers = #tpu.dot_dimension_numbers<[1], [1], [0], [0], [0, 0, 1, 0], [], []>} : vector<16x32xf32>, vector<8x32xf32>, vector<16x8xf32> -> vector<16x8xf32>
    %57 = vector.broadcast %49 : vector<1x8xf32> to vector<16x8xf32>
    %58 = arith.addf %56, %57 : vector<16x8xf32>
    %cst_32 = arith.constant dense<0.000000e+00> : vector<16x16xf32>
    %59 = tpu.matmul %52, %55, %cst_32 {dimension_numbers = #tpu.dot_dimension_numbers<[1], [1], [0], [0], [0, 0, 1, 0], [], []>} : vector<16x8xf32>, vector<16x8xf32>, vector<16x16xf32> -> vector<16x16xf32>
    %cst_33 = arith.constant 0.353553385 : f32
    %60 = vector.broadcast %cst_33 : f32 to vector<16x16xf32>
    %61 = arith.mulf %59, %60 : vector<16x16xf32>
    %62 = arith.addf %61, %11 : vector<16x16xf32>
    %cst_34 = arith.constant dense<0xFF800000> : vector<16xf32>
    %63 = vector.multi_reduction <maximumf>, %62, %cst_34 [1] : vector<16x16xf32> to vector<16xf32>
    %64 = vector.shape_cast %63 : vector<16xf32> to vector<16x1xf32>
    %65 = vector.broadcast %64 : vector<16x1xf32> to vector<16x16xf32>
    %66 = arith.subf %62, %65 : vector<16x16xf32>
    %67 = math.exp %66 : vector<16x16xf32>
    %cst_35 = arith.constant dense<0.000000e+00> : vector<16xf32>
    %68 = vector.multi_reduction <add>, %67, %cst_35 [1] : vector<16x16xf32> to vector<16xf32>
    %69 = vector.shape_cast %68 : vector<16xf32> to vector<16x1xf32>
    %70 = tpu.reciprocal %69 {approx = true} : vector<16x1xf32> -> vector<16x1xf32>
    %71 = vector.broadcast %70 : vector<16x1xf32> to vector<16x16xf32>
    %72 = arith.mulf %67, %71 : vector<16x16xf32>
    %cst_36 = arith.constant dense<0.000000e+00> : vector<16x8xf32>
    %73 = tpu.matmul %72, %58, %cst_36 {dimension_numbers = #tpu.dot_dimension_numbers<[1], [0], [0], [1], [0, 0, 1, 1], [], []>} : vector<16x16xf32>, vector<16x8xf32>, vector<16x8xf32> -> vector<16x8xf32>
    %c216 = arith.constant 216 : index
    %c0_37 = arith.constant 0 : index
    %74 = vector.load %arg1[%c216, %c0_37] : memref<1520x128xf32, #tpu.memory_space<vmem>>, vector<8x32xf32>
    %cst_38 = arith.constant dense<0.000000e+00> : vector<16x32xf32>
    %75 = tpu.matmul %73, %74, %cst_38 {dimension_numbers = #tpu.dot_dimension_numbers<[1], [0], [0], [1], [0, 0, 1, 1], [], []>} : vector<16x8xf32>, vector<8x32xf32>, vector<16x32xf32> -> vector<16x32xf32>
    %76 = arith.addf %43, %75 : vector<16x32xf32>
    %c112 = arith.constant 112 : index
    %c0_39 = arith.constant 0 : index
    %77 = vector.load %arg1[%c112, %c0_39] : memref<1520x128xf32, #tpu.memory_space<vmem>>, vector<8x32xf32>
    %c144 = arith.constant 144 : index
    %c0_40 = arith.constant 0 : index
    %78 = vector.load %arg1[%c144, %c0_40] : memref<1520x128xf32, #tpu.memory_space<vmem>>, vector<8x32xf32>
    %c176 = arith.constant 176 : index
    %c0_41 = arith.constant 0 : index
    %79 = vector.load %arg1[%c176, %c0_41] : memref<1520x128xf32, #tpu.memory_space<vmem>>, vector<8x32xf32>
    %c194 = arith.constant 194 : index
    %c0_42 = arith.constant 0 : index
    %80 = vector.load %arg1[%c194, %c0_42] : memref<1520x128xf32, #tpu.memory_space<vmem>>, vector<1x8xf32>
    %c198 = arith.constant 198 : index
    %c0_43 = arith.constant 0 : index
    %81 = vector.load %arg1[%c198, %c0_43] : memref<1520x128xf32, #tpu.memory_space<vmem>>, vector<1x8xf32>
    %c202 = arith.constant 202 : index
    %c0_44 = arith.constant 0 : index
    %82 = vector.load %arg1[%c202, %c0_44] : memref<1520x128xf32, #tpu.memory_space<vmem>>, vector<1x8xf32>
    %cst_45 = arith.constant dense<0.000000e+00> : vector<16x8xf32>
    %83 = tpu.matmul %10, %77, %cst_45 {dimension_numbers = #tpu.dot_dimension_numbers<[1], [1], [0], [0], [0, 0, 1, 0], [], []>} : vector<16x32xf32>, vector<8x32xf32>, vector<16x8xf32> -> vector<16x8xf32>
    %84 = vector.broadcast %80 : vector<1x8xf32> to vector<16x8xf32>
    %85 = arith.addf %83, %84 : vector<16x8xf32>
    %cst_46 = arith.constant dense<0.000000e+00> : vector<16x8xf32>
    %86 = tpu.matmul %10, %78, %cst_46 {dimension_numbers = #tpu.dot_dimension_numbers<[1], [1], [0], [0], [0, 0, 1, 0], [], []>} : vector<16x32xf32>, vector<8x32xf32>, vector<16x8xf32> -> vector<16x8xf32>
    %87 = vector.broadcast %81 : vector<1x8xf32> to vector<16x8xf32>
    %88 = arith.addf %86, %87 : vector<16x8xf32>
    %cst_47 = arith.constant dense<0.000000e+00> : vector<16x8xf32>
    %89 = tpu.matmul %10, %79, %cst_47 {dimension_numbers = #tpu.dot_dimension_numbers<[1], [1], [0], [0], [0, 0, 1, 0], [], []>} : vector<16x32xf32>, vector<8x32xf32>, vector<16x8xf32> -> vector<16x8xf32>
    %90 = vector.broadcast %82 : vector<1x8xf32> to vector<16x8xf32>
    %91 = arith.addf %89, %90 : vector<16x8xf32>
    %cst_48 = arith.constant dense<0.000000e+00> : vector<16x16xf32>
    %92 = tpu.matmul %85, %88, %cst_48 {dimension_numbers = #tpu.dot_dimension_numbers<[1], [1], [0], [0], [0, 0, 1, 0], [], []>} : vector<16x8xf32>, vector<16x8xf32>, vector<16x16xf32> -> vector<16x16xf32>
    %cst_49 = arith.constant 0.353553385 : f32
    %93 = vector.broadcast %cst_49 : f32 to vector<16x16xf32>
    %94 = arith.mulf %92, %93 : vector<16x16xf32>
    %95 = arith.addf %94, %11 : vector<16x16xf32>
    %cst_50 = arith.constant dense<0xFF800000> : vector<16xf32>
    %96 = vector.multi_reduction <maximumf>, %95, %cst_50 [1] : vector<16x16xf32> to vector<16xf32>
    %97 = vector.shape_cast %96 : vector<16xf32> to vector<16x1xf32>
    %98 = vector.broadcast %97 : vector<16x1xf32> to vector<16x16xf32>
    %99 = arith.subf %95, %98 : vector<16x16xf32>
    %100 = math.exp %99 : vector<16x16xf32>
    %cst_51 = arith.constant dense<0.000000e+00> : vector<16xf32>
    %101 = vector.multi_reduction <add>, %100, %cst_51 [1] : vector<16x16xf32> to vector<16xf32>
    %102 = vector.shape_cast %101 : vector<16xf32> to vector<16x1xf32>
    %103 = tpu.reciprocal %102 {approx = true} : vector<16x1xf32> -> vector<16x1xf32>
    %104 = vector.broadcast %103 : vector<16x1xf32> to vector<16x16xf32>
    %105 = arith.mulf %100, %104 : vector<16x16xf32>
    %cst_52 = arith.constant dense<0.000000e+00> : vector<16x8xf32>
    %106 = tpu.matmul %105, %91, %cst_52 {dimension_numbers = #tpu.dot_dimension_numbers<[1], [0], [0], [1], [0, 0, 1, 1], [], []>} : vector<16x16xf32>, vector<16x8xf32>, vector<16x8xf32> -> vector<16x8xf32>
    %c224 = arith.constant 224 : index
    %c0_53 = arith.constant 0 : index
    %107 = vector.load %arg1[%c224, %c0_53] : memref<1520x128xf32, #tpu.memory_space<vmem>>, vector<8x32xf32>
    %cst_54 = arith.constant dense<0.000000e+00> : vector<16x32xf32>
    %108 = tpu.matmul %106, %107, %cst_54 {dimension_numbers = #tpu.dot_dimension_numbers<[1], [0], [0], [1], [0, 0, 1, 1], [], []>} : vector<16x8xf32>, vector<8x32xf32>, vector<16x32xf32> -> vector<16x32xf32>
    %109 = arith.addf %76, %108 : vector<16x32xf32>
    %c120 = arith.constant 120 : index
    %c0_55 = arith.constant 0 : index
    %110 = vector.load %arg1[%c120, %c0_55] : memref<1520x128xf32, #tpu.memory_space<vmem>>, vector<8x32xf32>
    %c152 = arith.constant 152 : index
    %c0_56 = arith.constant 0 : index
    %111 = vector.load %arg1[%c152, %c0_56] : memref<1520x128xf32, #tpu.memory_space<vmem>>, vector<8x32xf32>
    %c184 = arith.constant 184 : index
    %c0_57 = arith.constant 0 : index
    %112 = vector.load %arg1[%c184, %c0_57] : memref<1520x128xf32, #tpu.memory_space<vmem>>, vector<8x32xf32>
    %c195 = arith.constant 195 : index
    %c0_58 = arith.constant 0 : index
    %113 = vector.load %arg1[%c195, %c0_58] : memref<1520x128xf32, #tpu.memory_space<vmem>>, vector<1x8xf32>
    %c199 = arith.constant 199 : index
    %c0_59 = arith.constant 0 : index
    %114 = vector.load %arg1[%c199, %c0_59] : memref<1520x128xf32, #tpu.memory_space<vmem>>, vector<1x8xf32>
    %c203 = arith.constant 203 : index
    %c0_60 = arith.constant 0 : index
    %115 = vector.load %arg1[%c203, %c0_60] : memref<1520x128xf32, #tpu.memory_space<vmem>>, vector<1x8xf32>
    %cst_61 = arith.constant dense<0.000000e+00> : vector<16x8xf32>
    %116 = tpu.matmul %10, %110, %cst_61 {dimension_numbers = #tpu.dot_dimension_numbers<[1], [1], [0], [0], [0, 0, 1, 0], [], []>} : vector<16x32xf32>, vector<8x32xf32>, vector<16x8xf32> -> vector<16x8xf32>
    %117 = vector.broadcast %113 : vector<1x8xf32> to vector<16x8xf32>
    %118 = arith.addf %116, %117 : vector<16x8xf32>
    %cst_62 = arith.constant dense<0.000000e+00> : vector<16x8xf32>
    %119 = tpu.matmul %10, %111, %cst_62 {dimension_numbers = #tpu.dot_dimension_numbers<[1], [1], [0], [0], [0, 0, 1, 0], [], []>} : vector<16x32xf32>, vector<8x32xf32>, vector<16x8xf32> -> vector<16x8xf32>
    %120 = vector.broadcast %114 : vector<1x8xf32> to vector<16x8xf32>
    %121 = arith.addf %119, %120 : vector<16x8xf32>
    %cst_63 = arith.constant dense<0.000000e+00> : vector<16x8xf32>
    %122 = tpu.matmul %10, %112, %cst_63 {dimension_numbers = #tpu.dot_dimension_numbers<[1], [1], [0], [0], [0, 0, 1, 0], [], []>} : vector<16x32xf32>, vector<8x32xf32>, vector<16x8xf32> -> vector<16x8xf32>
    %123 = vector.broadcast %115 : vector<1x8xf32> to vector<16x8xf32>
    %124 = arith.addf %122, %123 : vector<16x8xf32>
    %cst_64 = arith.constant dense<0.000000e+00> : vector<16x16xf32>
    %125 = tpu.matmul %118, %121, %cst_64 {dimension_numbers = #tpu.dot_dimension_numbers<[1], [1], [0], [0], [0, 0, 1, 0], [], []>} : vector<16x8xf32>, vector<16x8xf32>, vector<16x16xf32> -> vector<16x16xf32>
    %cst_65 = arith.constant 0.353553385 : f32
    %126 = vector.broadcast %cst_65 : f32 to vector<16x16xf32>
    %127 = arith.mulf %125, %126 : vector<16x16xf32>
    %128 = arith.addf %127, %11 : vector<16x16xf32>
    %cst_66 = arith.constant dense<0xFF800000> : vector<16xf32>
    %129 = vector.multi_reduction <maximumf>, %128, %cst_66 [1] : vector<16x16xf32> to vector<16xf32>
    %130 = vector.shape_cast %129 : vector<16xf32> to vector<16x1xf32>
    %131 = vector.broadcast %130 : vector<16x1xf32> to vector<16x16xf32>
    %132 = arith.subf %128, %131 : vector<16x16xf32>
    %133 = math.exp %132 : vector<16x16xf32>
    %cst_67 = arith.constant dense<0.000000e+00> : vector<16xf32>
    %134 = vector.multi_reduction <add>, %133, %cst_67 [1] : vector<16x16xf32> to vector<16xf32>
    %135 = vector.shape_cast %134 : vector<16xf32> to vector<16x1xf32>
    %136 = tpu.reciprocal %135 {approx = true} : vector<16x1xf32> -> vector<16x1xf32>
    %137 = vector.broadcast %136 : vector<16x1xf32> to vector<16x16xf32>
    %138 = arith.mulf %133, %137 : vector<16x16xf32>
    %cst_68 = arith.constant dense<0.000000e+00> : vector<16x8xf32>
    %139 = tpu.matmul %138, %124, %cst_68 {dimension_numbers = #tpu.dot_dimension_numbers<[1], [0], [0], [1], [0, 0, 1, 1], [], []>} : vector<16x16xf32>, vector<16x8xf32>, vector<16x8xf32> -> vector<16x8xf32>
    %c232 = arith.constant 232 : index
    %c0_69 = arith.constant 0 : index
    %140 = vector.load %arg1[%c232, %c0_69] : memref<1520x128xf32, #tpu.memory_space<vmem>>, vector<8x32xf32>
    %cst_70 = arith.constant dense<0.000000e+00> : vector<16x32xf32>
    %141 = tpu.matmul %139, %140, %cst_70 {dimension_numbers = #tpu.dot_dimension_numbers<[1], [0], [0], [1], [0, 0, 1, 1], [], []>} : vector<16x8xf32>, vector<8x32xf32>, vector<16x32xf32> -> vector<16x32xf32>
    %142 = arith.addf %109, %141 : vector<16x32xf32>
    %c240 = arith.constant 240 : index
    %c0_71 = arith.constant 0 : index
    %143 = vector.load %arg1[%c240, %c0_71] : memref<1520x128xf32, #tpu.memory_space<vmem>>, vector<1x32xf32>
    %144 = vector.broadcast %143 : vector<1x32xf32> to vector<16x32xf32>
    %145 = arith.addf %142, %144 : vector<16x32xf32>
    %146 = arith.addf %10, %145 : vector<16x32xf32>
    %c1449 = arith.constant 1449 : index
    %c0_72 = arith.constant 0 : index
    %147 = vector.load %arg1[%c1449, %c0_72] : memref<1520x128xf32, #tpu.memory_space<vmem>>, vector<1x32xf32>
    %c1450 = arith.constant 1450 : index
    %c0_73 = arith.constant 0 : index
    %148 = vector.load %arg1[%c1450, %c0_73] : memref<1520x128xf32, #tpu.memory_space<vmem>>, vector<1x32xf32>
    %cst_74 = arith.constant dense<0.000000e+00> : vector<16xf32>
    %149 = vector.multi_reduction <add>, %146, %cst_74 [1] : vector<16x32xf32> to vector<16xf32>
    %150 = vector.shape_cast %149 : vector<16xf32> to vector<16x1xf32>
    %cst_75 = arith.constant 3.200000e+01 : f32
    %151 = vector.broadcast %cst_75 : f32 to vector<16x1xf32>
    %152 = arith.divf %150, %151 : vector<16x1xf32>
    %153 = vector.broadcast %152 : vector<16x1xf32> to vector<16x32xf32>
    %154 = arith.subf %146, %153 : vector<16x32xf32>
    %155 = arith.mulf %154, %154 : vector<16x32xf32>
    %cst_76 = arith.constant dense<0.000000e+00> : vector<16xf32>
    %156 = vector.multi_reduction <add>, %155, %cst_76 [1] : vector<16x32xf32> to vector<16xf32>
    %157 = vector.shape_cast %156 : vector<16xf32> to vector<16x1xf32>
    %cst_77 = arith.constant 3.200000e+01 : f32
    %158 = vector.broadcast %cst_77 : f32 to vector<16x1xf32>
    %159 = arith.divf %157, %158 : vector<16x1xf32>
    %cst_78 = arith.constant 9.99999974E-6 : f32
    %160 = vector.broadcast %cst_78 : f32 to vector<16x1xf32>
    %161 = arith.addf %159, %160 : vector<16x1xf32>
    %162 = math.rsqrt %161 : vector<16x1xf32>
    %163 = vector.broadcast %162 : vector<16x1xf32> to vector<16x32xf32>
    %164 = arith.mulf %154, %163 : vector<16x32xf32>
    %165 = vector.broadcast %147 : vector<1x32xf32> to vector<16x32xf32>
    %166 = arith.mulf %164, %165 : vector<16x32xf32>
    %167 = vector.broadcast %148 : vector<1x32xf32> to vector<16x32xf32>
    %168 = arith.addf %166, %167 : vector<16x32xf32>
    %c1008 = arith.constant 1008 : index
    %c0_79 = arith.constant 0 : index
    %169 = vector.load %arg1[%c1008, %c0_79] : memref<1520x128xf32, #tpu.memory_space<vmem>>, vector<32x64xf32>
    %c1040 = arith.constant 1040 : index
    %c0_80 = arith.constant 0 : index
    %170 = vector.load %arg1[%c1040, %c0_80] : memref<1520x128xf32, #tpu.memory_space<vmem>>, vector<1x64xf32>
    %c1048 = arith.constant 1048 : index
    %c0_81 = arith.constant 0 : index
    %171 = vector.load %arg1[%c1048, %c0_81] : memref<1520x128xf32, #tpu.memory_space<vmem>>, vector<64x32xf32>
    %c1112 = arith.constant 1112 : index
    %c0_82 = arith.constant 0 : index
    %172 = vector.load %arg1[%c1112, %c0_82] : memref<1520x128xf32, #tpu.memory_space<vmem>>, vector<1x32xf32>
    %cst_83 = arith.constant dense<0.000000e+00> : vector<16x64xf32>
    %173 = tpu.matmul %168, %169, %cst_83 {dimension_numbers = #tpu.dot_dimension_numbers<[1], [0], [0], [1], [0, 0, 1, 1], [], []>} : vector<16x32xf32>, vector<32x64xf32>, vector<16x64xf32> -> vector<16x64xf32>
    %174 = vector.broadcast %170 : vector<1x64xf32> to vector<16x64xf32>
    %175 = arith.addf %173, %174 : vector<16x64xf32>
    %cst_84 = arith.constant 0.000000e+00 : f32
    %176 = vector.broadcast %cst_84 : f32 to vector<16x64xf32>
    %177 = arith.maximumf %175, %176 : vector<16x64xf32>
    %cst_85 = arith.constant dense<0.000000e+00> : vector<16x32xf32>
    %178 = tpu.matmul %177, %171, %cst_85 {dimension_numbers = #tpu.dot_dimension_numbers<[1], [0], [0], [1], [0, 0, 1, 1], [], []>} : vector<16x64xf32>, vector<64x32xf32>, vector<16x32xf32> -> vector<16x32xf32>
    %179 = vector.broadcast %172 : vector<1x32xf32> to vector<16x32xf32>
    %180 = arith.addf %178, %179 : vector<16x32xf32>
    %181 = arith.addf %168, %180 : vector<16x32xf32>
    %c1451 = arith.constant 1451 : index
    %c0_86 = arith.constant 0 : index
    %182 = vector.load %arg1[%c1451, %c0_86] : memref<1520x128xf32, #tpu.memory_space<vmem>>, vector<1x32xf32>
    %c1452 = arith.constant 1452 : index
    %c0_87 = arith.constant 0 : index
    %183 = vector.load %arg1[%c1452, %c0_87] : memref<1520x128xf32, #tpu.memory_space<vmem>>, vector<1x32xf32>
    %cst_88 = arith.constant dense<0.000000e+00> : vector<16xf32>
    %184 = vector.multi_reduction <add>, %181, %cst_88 [1] : vector<16x32xf32> to vector<16xf32>
    %185 = vector.shape_cast %184 : vector<16xf32> to vector<16x1xf32>
    %cst_89 = arith.constant 3.200000e+01 : f32
    %186 = vector.broadcast %cst_89 : f32 to vector<16x1xf32>
    %187 = arith.divf %185, %186 : vector<16x1xf32>
    %188 = vector.broadcast %187 : vector<16x1xf32> to vector<16x32xf32>
    %189 = arith.subf %181, %188 : vector<16x32xf32>
    %190 = arith.mulf %189, %189 : vector<16x32xf32>
    %cst_90 = arith.constant dense<0.000000e+00> : vector<16xf32>
    %191 = vector.multi_reduction <add>, %190, %cst_90 [1] : vector<16x32xf32> to vector<16xf32>
    %192 = vector.shape_cast %191 : vector<16xf32> to vector<16x1xf32>
    %cst_91 = arith.constant 3.200000e+01 : f32
    %193 = vector.broadcast %cst_91 : f32 to vector<16x1xf32>
    %194 = arith.divf %192, %193 : vector<16x1xf32>
    %cst_92 = arith.constant 9.99999974E-6 : f32
    %195 = vector.broadcast %cst_92 : f32 to vector<16x1xf32>
    %196 = arith.addf %194, %195 : vector<16x1xf32>
    %197 = math.rsqrt %196 : vector<16x1xf32>
    %198 = vector.broadcast %197 : vector<16x1xf32> to vector<16x32xf32>
    %199 = arith.mulf %189, %198 : vector<16x32xf32>
    %200 = vector.broadcast %182 : vector<1x32xf32> to vector<16x32xf32>
    %201 = arith.mulf %199, %200 : vector<16x32xf32>
    %202 = vector.broadcast %183 : vector<1x32xf32> to vector<16x32xf32>
    %203 = arith.addf %201, %202 : vector<16x32xf32>
    %c248 = arith.constant 248 : index
    %c0_93 = arith.constant 0 : index
    %204 = vector.load %arg1[%c248, %c0_93] : memref<1520x128xf32, #tpu.memory_space<vmem>>, vector<8x32xf32>
    %c280 = arith.constant 280 : index
    %c0_94 = arith.constant 0 : index
    %205 = vector.load %arg1[%c280, %c0_94] : memref<1520x128xf32, #tpu.memory_space<vmem>>, vector<8x32xf32>
    %c312 = arith.constant 312 : index
    %c0_95 = arith.constant 0 : index
    %206 = vector.load %arg1[%c312, %c0_95] : memref<1520x128xf32, #tpu.memory_space<vmem>>, vector<8x32xf32>
    %c344 = arith.constant 344 : index
    %c0_96 = arith.constant 0 : index
    %207 = vector.load %arg1[%c344, %c0_96] : memref<1520x128xf32, #tpu.memory_space<vmem>>, vector<1x8xf32>
    %c348 = arith.constant 348 : index
    %c0_97 = arith.constant 0 : index
    %208 = vector.load %arg1[%c348, %c0_97] : memref<1520x128xf32, #tpu.memory_space<vmem>>, vector<1x8xf32>
    %c352 = arith.constant 352 : index
    %c0_98 = arith.constant 0 : index
    %209 = vector.load %arg1[%c352, %c0_98] : memref<1520x128xf32, #tpu.memory_space<vmem>>, vector<1x8xf32>
    %cst_99 = arith.constant dense<0.000000e+00> : vector<16x8xf32>
    %210 = tpu.matmul %203, %204, %cst_99 {dimension_numbers = #tpu.dot_dimension_numbers<[1], [1], [0], [0], [0, 0, 1, 0], [], []>} : vector<16x32xf32>, vector<8x32xf32>, vector<16x8xf32> -> vector<16x8xf32>
    %211 = vector.broadcast %207 : vector<1x8xf32> to vector<16x8xf32>
    %212 = arith.addf %210, %211 : vector<16x8xf32>
    %cst_100 = arith.constant dense<0.000000e+00> : vector<16x8xf32>
    %213 = tpu.matmul %203, %205, %cst_100 {dimension_numbers = #tpu.dot_dimension_numbers<[1], [1], [0], [0], [0, 0, 1, 0], [], []>} : vector<16x32xf32>, vector<8x32xf32>, vector<16x8xf32> -> vector<16x8xf32>
    %214 = vector.broadcast %208 : vector<1x8xf32> to vector<16x8xf32>
    %215 = arith.addf %213, %214 : vector<16x8xf32>
    %cst_101 = arith.constant dense<0.000000e+00> : vector<16x8xf32>
    %216 = tpu.matmul %203, %206, %cst_101 {dimension_numbers = #tpu.dot_dimension_numbers<[1], [1], [0], [0], [0, 0, 1, 0], [], []>} : vector<16x32xf32>, vector<8x32xf32>, vector<16x8xf32> -> vector<16x8xf32>
    %217 = vector.broadcast %209 : vector<1x8xf32> to vector<16x8xf32>
    %218 = arith.addf %216, %217 : vector<16x8xf32>
    %cst_102 = arith.constant dense<0.000000e+00> : vector<16x16xf32>
    %219 = tpu.matmul %212, %215, %cst_102 {dimension_numbers = #tpu.dot_dimension_numbers<[1], [1], [0], [0], [0, 0, 1, 0], [], []>} : vector<16x8xf32>, vector<16x8xf32>, vector<16x16xf32> -> vector<16x16xf32>
    %cst_103 = arith.constant 0.353553385 : f32
    %220 = vector.broadcast %cst_103 : f32 to vector<16x16xf32>
    %221 = arith.mulf %219, %220 : vector<16x16xf32>
    %222 = arith.addf %221, %11 : vector<16x16xf32>
    %cst_104 = arith.constant dense<0xFF800000> : vector<16xf32>
    %223 = vector.multi_reduction <maximumf>, %222, %cst_104 [1] : vector<16x16xf32> to vector<16xf32>
    %224 = vector.shape_cast %223 : vector<16xf32> to vector<16x1xf32>
    %225 = vector.broadcast %224 : vector<16x1xf32> to vector<16x16xf32>
    %226 = arith.subf %222, %225 : vector<16x16xf32>
    %227 = math.exp %226 : vector<16x16xf32>
    %cst_105 = arith.constant dense<0.000000e+00> : vector<16xf32>
    %228 = vector.multi_reduction <add>, %227, %cst_105 [1] : vector<16x16xf32> to vector<16xf32>
    %229 = vector.shape_cast %228 : vector<16xf32> to vector<16x1xf32>
    %230 = tpu.reciprocal %229 {approx = true} : vector<16x1xf32> -> vector<16x1xf32>
    %231 = vector.broadcast %230 : vector<16x1xf32> to vector<16x16xf32>
    %232 = arith.mulf %227, %231 : vector<16x16xf32>
    %cst_106 = arith.constant dense<0.000000e+00> : vector<16x8xf32>
    %233 = tpu.matmul %232, %218, %cst_106 {dimension_numbers = #tpu.dot_dimension_numbers<[1], [0], [0], [1], [0, 0, 1, 1], [], []>} : vector<16x16xf32>, vector<16x8xf32>, vector<16x8xf32> -> vector<16x8xf32>
    %c360 = arith.constant 360 : index
    %c0_107 = arith.constant 0 : index
    %234 = vector.load %arg1[%c360, %c0_107] : memref<1520x128xf32, #tpu.memory_space<vmem>>, vector<8x32xf32>
    %cst_108 = arith.constant dense<0.000000e+00> : vector<16x32xf32>
    %235 = tpu.matmul %233, %234, %cst_108 {dimension_numbers = #tpu.dot_dimension_numbers<[1], [0], [0], [1], [0, 0, 1, 1], [], []>} : vector<16x8xf32>, vector<8x32xf32>, vector<16x32xf32> -> vector<16x32xf32>
    %c256 = arith.constant 256 : index
    %c0_109 = arith.constant 0 : index
    %236 = vector.load %arg1[%c256, %c0_109] : memref<1520x128xf32, #tpu.memory_space<vmem>>, vector<8x32xf32>
    %c288 = arith.constant 288 : index
    %c0_110 = arith.constant 0 : index
    %237 = vector.load %arg1[%c288, %c0_110] : memref<1520x128xf32, #tpu.memory_space<vmem>>, vector<8x32xf32>
    %c320 = arith.constant 320 : index
    %c0_111 = arith.constant 0 : index
    %238 = vector.load %arg1[%c320, %c0_111] : memref<1520x128xf32, #tpu.memory_space<vmem>>, vector<8x32xf32>
    %c345 = arith.constant 345 : index
    %c0_112 = arith.constant 0 : index
    %239 = vector.load %arg1[%c345, %c0_112] : memref<1520x128xf32, #tpu.memory_space<vmem>>, vector<1x8xf32>
    %c349 = arith.constant 349 : index
    %c0_113 = arith.constant 0 : index
    %240 = vector.load %arg1[%c349, %c0_113] : memref<1520x128xf32, #tpu.memory_space<vmem>>, vector<1x8xf32>
    %c353 = arith.constant 353 : index
    %c0_114 = arith.constant 0 : index
    %241 = vector.load %arg1[%c353, %c0_114] : memref<1520x128xf32, #tpu.memory_space<vmem>>, vector<1x8xf32>
    %cst_115 = arith.constant dense<0.000000e+00> : vector<16x8xf32>
    %242 = tpu.matmul %203, %236, %cst_115 {dimension_numbers = #tpu.dot_dimension_numbers<[1], [1], [0], [0], [0, 0, 1, 0], [], []>} : vector<16x32xf32>, vector<8x32xf32>, vector<16x8xf32> -> vector<16x8xf32>
    %243 = vector.broadcast %239 : vector<1x8xf32> to vector<16x8xf32>
    %244 = arith.addf %242, %243 : vector<16x8xf32>
    %cst_116 = arith.constant dense<0.000000e+00> : vector<16x8xf32>
    %245 = tpu.matmul %203, %237, %cst_116 {dimension_numbers = #tpu.dot_dimension_numbers<[1], [1], [0], [0], [0, 0, 1, 0], [], []>} : vector<16x32xf32>, vector<8x32xf32>, vector<16x8xf32> -> vector<16x8xf32>
    %246 = vector.broadcast %240 : vector<1x8xf32> to vector<16x8xf32>
    %247 = arith.addf %245, %246 : vector<16x8xf32>
    %cst_117 = arith.constant dense<0.000000e+00> : vector<16x8xf32>
    %248 = tpu.matmul %203, %238, %cst_117 {dimension_numbers = #tpu.dot_dimension_numbers<[1], [1], [0], [0], [0, 0, 1, 0], [], []>} : vector<16x32xf32>, vector<8x32xf32>, vector<16x8xf32> -> vector<16x8xf32>
    %249 = vector.broadcast %241 : vector<1x8xf32> to vector<16x8xf32>
    %250 = arith.addf %248, %249 : vector<16x8xf32>
    %cst_118 = arith.constant dense<0.000000e+00> : vector<16x16xf32>
    %251 = tpu.matmul %244, %247, %cst_118 {dimension_numbers = #tpu.dot_dimension_numbers<[1], [1], [0], [0], [0, 0, 1, 0], [], []>} : vector<16x8xf32>, vector<16x8xf32>, vector<16x16xf32> -> vector<16x16xf32>
    %cst_119 = arith.constant 0.353553385 : f32
    %252 = vector.broadcast %cst_119 : f32 to vector<16x16xf32>
    %253 = arith.mulf %251, %252 : vector<16x16xf32>
    %254 = arith.addf %253, %11 : vector<16x16xf32>
    %cst_120 = arith.constant dense<0xFF800000> : vector<16xf32>
    %255 = vector.multi_reduction <maximumf>, %254, %cst_120 [1] : vector<16x16xf32> to vector<16xf32>
    %256 = vector.shape_cast %255 : vector<16xf32> to vector<16x1xf32>
    %257 = vector.broadcast %256 : vector<16x1xf32> to vector<16x16xf32>
    %258 = arith.subf %254, %257 : vector<16x16xf32>
    %259 = math.exp %258 : vector<16x16xf32>
    %cst_121 = arith.constant dense<0.000000e+00> : vector<16xf32>
    %260 = vector.multi_reduction <add>, %259, %cst_121 [1] : vector<16x16xf32> to vector<16xf32>
    %261 = vector.shape_cast %260 : vector<16xf32> to vector<16x1xf32>
    %262 = tpu.reciprocal %261 {approx = true} : vector<16x1xf32> -> vector<16x1xf32>
    %263 = vector.broadcast %262 : vector<16x1xf32> to vector<16x16xf32>
    %264 = arith.mulf %259, %263 : vector<16x16xf32>
    %cst_122 = arith.constant dense<0.000000e+00> : vector<16x8xf32>
    %265 = tpu.matmul %264, %250, %cst_122 {dimension_numbers = #tpu.dot_dimension_numbers<[1], [0], [0], [1], [0, 0, 1, 1], [], []>} : vector<16x16xf32>, vector<16x8xf32>, vector<16x8xf32> -> vector<16x8xf32>
    %c368 = arith.constant 368 : index
    %c0_123 = arith.constant 0 : index
    %266 = vector.load %arg1[%c368, %c0_123] : memref<1520x128xf32, #tpu.memory_space<vmem>>, vector<8x32xf32>
    %cst_124 = arith.constant dense<0.000000e+00> : vector<16x32xf32>
    %267 = tpu.matmul %265, %266, %cst_124 {dimension_numbers = #tpu.dot_dimension_numbers<[1], [0], [0], [1], [0, 0, 1, 1], [], []>} : vector<16x8xf32>, vector<8x32xf32>, vector<16x32xf32> -> vector<16x32xf32>
    %268 = arith.addf %235, %267 : vector<16x32xf32>
    %c264 = arith.constant 264 : index
    %c0_125 = arith.constant 0 : index
    %269 = vector.load %arg1[%c264, %c0_125] : memref<1520x128xf32, #tpu.memory_space<vmem>>, vector<8x32xf32>
    %c296 = arith.constant 296 : index
    %c0_126 = arith.constant 0 : index
    %270 = vector.load %arg1[%c296, %c0_126] : memref<1520x128xf32, #tpu.memory_space<vmem>>, vector<8x32xf32>
    %c328 = arith.constant 328 : index
    %c0_127 = arith.constant 0 : index
    %271 = vector.load %arg1[%c328, %c0_127] : memref<1520x128xf32, #tpu.memory_space<vmem>>, vector<8x32xf32>
    %c346 = arith.constant 346 : index
    %c0_128 = arith.constant 0 : index
    %272 = vector.load %arg1[%c346, %c0_128] : memref<1520x128xf32, #tpu.memory_space<vmem>>, vector<1x8xf32>
    %c350 = arith.constant 350 : index
    %c0_129 = arith.constant 0 : index
    %273 = vector.load %arg1[%c350, %c0_129] : memref<1520x128xf32, #tpu.memory_space<vmem>>, vector<1x8xf32>
    %c354 = arith.constant 354 : index
    %c0_130 = arith.constant 0 : index
    %274 = vector.load %arg1[%c354, %c0_130] : memref<1520x128xf32, #tpu.memory_space<vmem>>, vector<1x8xf32>
    %cst_131 = arith.constant dense<0.000000e+00> : vector<16x8xf32>
    %275 = tpu.matmul %203, %269, %cst_131 {dimension_numbers = #tpu.dot_dimension_numbers<[1], [1], [0], [0], [0, 0, 1, 0], [], []>} : vector<16x32xf32>, vector<8x32xf32>, vector<16x8xf32> -> vector<16x8xf32>
    %276 = vector.broadcast %272 : vector<1x8xf32> to vector<16x8xf32>
    %277 = arith.addf %275, %276 : vector<16x8xf32>
    %cst_132 = arith.constant dense<0.000000e+00> : vector<16x8xf32>
    %278 = tpu.matmul %203, %270, %cst_132 {dimension_numbers = #tpu.dot_dimension_numbers<[1], [1], [0], [0], [0, 0, 1, 0], [], []>} : vector<16x32xf32>, vector<8x32xf32>, vector<16x8xf32> -> vector<16x8xf32>
    %279 = vector.broadcast %273 : vector<1x8xf32> to vector<16x8xf32>
    %280 = arith.addf %278, %279 : vector<16x8xf32>
    %cst_133 = arith.constant dense<0.000000e+00> : vector<16x8xf32>
    %281 = tpu.matmul %203, %271, %cst_133 {dimension_numbers = #tpu.dot_dimension_numbers<[1], [1], [0], [0], [0, 0, 1, 0], [], []>} : vector<16x32xf32>, vector<8x32xf32>, vector<16x8xf32> -> vector<16x8xf32>
    %282 = vector.broadcast %274 : vector<1x8xf32> to vector<16x8xf32>
    %283 = arith.addf %281, %282 : vector<16x8xf32>
    %cst_134 = arith.constant dense<0.000000e+00> : vector<16x16xf32>
    %284 = tpu.matmul %277, %280, %cst_134 {dimension_numbers = #tpu.dot_dimension_numbers<[1], [1], [0], [0], [0, 0, 1, 0], [], []>} : vector<16x8xf32>, vector<16x8xf32>, vector<16x16xf32> -> vector<16x16xf32>
    %cst_135 = arith.constant 0.353553385 : f32
    %285 = vector.broadcast %cst_135 : f32 to vector<16x16xf32>
    %286 = arith.mulf %284, %285 : vector<16x16xf32>
    %287 = arith.addf %286, %11 : vector<16x16xf32>
    %cst_136 = arith.constant dense<0xFF800000> : vector<16xf32>
    %288 = vector.multi_reduction <maximumf>, %287, %cst_136 [1] : vector<16x16xf32> to vector<16xf32>
    %289 = vector.shape_cast %288 : vector<16xf32> to vector<16x1xf32>
    %290 = vector.broadcast %289 : vector<16x1xf32> to vector<16x16xf32>
    %291 = arith.subf %287, %290 : vector<16x16xf32>
    %292 = math.exp %291 : vector<16x16xf32>
    %cst_137 = arith.constant dense<0.000000e+00> : vector<16xf32>
    %293 = vector.multi_reduction <add>, %292, %cst_137 [1] : vector<16x16xf32> to vector<16xf32>
    %294 = vector.shape_cast %293 : vector<16xf32> to vector<16x1xf32>
    %295 = tpu.reciprocal %294 {approx = true} : vector<16x1xf32> -> vector<16x1xf32>
    %296 = vector.broadcast %295 : vector<16x1xf32> to vector<16x16xf32>
    %297 = arith.mulf %292, %296 : vector<16x16xf32>
    %cst_138 = arith.constant dense<0.000000e+00> : vector<16x8xf32>
    %298 = tpu.matmul %297, %283, %cst_138 {dimension_numbers = #tpu.dot_dimension_numbers<[1], [0], [0], [1], [0, 0, 1, 1], [], []>} : vector<16x16xf32>, vector<16x8xf32>, vector<16x8xf32> -> vector<16x8xf32>
    %c376 = arith.constant 376 : index
    %c0_139 = arith.constant 0 : index
    %299 = vector.load %arg1[%c376, %c0_139] : memref<1520x128xf32, #tpu.memory_space<vmem>>, vector<8x32xf32>
    %cst_140 = arith.constant dense<0.000000e+00> : vector<16x32xf32>
    %300 = tpu.matmul %298, %299, %cst_140 {dimension_numbers = #tpu.dot_dimension_numbers<[1], [0], [0], [1], [0, 0, 1, 1], [], []>} : vector<16x8xf32>, vector<8x32xf32>, vector<16x32xf32> -> vector<16x32xf32>
    %301 = arith.addf %268, %300 : vector<16x32xf32>
    %c272 = arith.constant 272 : index
    %c0_141 = arith.constant 0 : index
    %302 = vector.load %arg1[%c272, %c0_141] : memref<1520x128xf32, #tpu.memory_space<vmem>>, vector<8x32xf32>
    %c304 = arith.constant 304 : index
    %c0_142 = arith.constant 0 : index
    %303 = vector.load %arg1[%c304, %c0_142] : memref<1520x128xf32, #tpu.memory_space<vmem>>, vector<8x32xf32>
    %c336 = arith.constant 336 : index
    %c0_143 = arith.constant 0 : index
    %304 = vector.load %arg1[%c336, %c0_143] : memref<1520x128xf32, #tpu.memory_space<vmem>>, vector<8x32xf32>
    %c347 = arith.constant 347 : index
    %c0_144 = arith.constant 0 : index
    %305 = vector.load %arg1[%c347, %c0_144] : memref<1520x128xf32, #tpu.memory_space<vmem>>, vector<1x8xf32>
    %c351 = arith.constant 351 : index
    %c0_145 = arith.constant 0 : index
    %306 = vector.load %arg1[%c351, %c0_145] : memref<1520x128xf32, #tpu.memory_space<vmem>>, vector<1x8xf32>
    %c355 = arith.constant 355 : index
    %c0_146 = arith.constant 0 : index
    %307 = vector.load %arg1[%c355, %c0_146] : memref<1520x128xf32, #tpu.memory_space<vmem>>, vector<1x8xf32>
    %cst_147 = arith.constant dense<0.000000e+00> : vector<16x8xf32>
    %308 = tpu.matmul %203, %302, %cst_147 {dimension_numbers = #tpu.dot_dimension_numbers<[1], [1], [0], [0], [0, 0, 1, 0], [], []>} : vector<16x32xf32>, vector<8x32xf32>, vector<16x8xf32> -> vector<16x8xf32>
    %309 = vector.broadcast %305 : vector<1x8xf32> to vector<16x8xf32>
    %310 = arith.addf %308, %309 : vector<16x8xf32>
    %cst_148 = arith.constant dense<0.000000e+00> : vector<16x8xf32>
    %311 = tpu.matmul %203, %303, %cst_148 {dimension_numbers = #tpu.dot_dimension_numbers<[1], [1], [0], [0], [0, 0, 1, 0], [], []>} : vector<16x32xf32>, vector<8x32xf32>, vector<16x8xf32> -> vector<16x8xf32>
    %312 = vector.broadcast %306 : vector<1x8xf32> to vector<16x8xf32>
    %313 = arith.addf %311, %312 : vector<16x8xf32>
    %cst_149 = arith.constant dense<0.000000e+00> : vector<16x8xf32>
    %314 = tpu.matmul %203, %304, %cst_149 {dimension_numbers = #tpu.dot_dimension_numbers<[1], [1], [0], [0], [0, 0, 1, 0], [], []>} : vector<16x32xf32>, vector<8x32xf32>, vector<16x8xf32> -> vector<16x8xf32>
    %315 = vector.broadcast %307 : vector<1x8xf32> to vector<16x8xf32>
    %316 = arith.addf %314, %315 : vector<16x8xf32>
    %cst_150 = arith.constant dense<0.000000e+00> : vector<16x16xf32>
    %317 = tpu.matmul %310, %313, %cst_150 {dimension_numbers = #tpu.dot_dimension_numbers<[1], [1], [0], [0], [0, 0, 1, 0], [], []>} : vector<16x8xf32>, vector<16x8xf32>, vector<16x16xf32> -> vector<16x16xf32>
    %cst_151 = arith.constant 0.353553385 : f32
    %318 = vector.broadcast %cst_151 : f32 to vector<16x16xf32>
    %319 = arith.mulf %317, %318 : vector<16x16xf32>
    %320 = arith.addf %319, %11 : vector<16x16xf32>
    %cst_152 = arith.constant dense<0xFF800000> : vector<16xf32>
    %321 = vector.multi_reduction <maximumf>, %320, %cst_152 [1] : vector<16x16xf32> to vector<16xf32>
    %322 = vector.shape_cast %321 : vector<16xf32> to vector<16x1xf32>
    %323 = vector.broadcast %322 : vector<16x1xf32> to vector<16x16xf32>
    %324 = arith.subf %320, %323 : vector<16x16xf32>
    %325 = math.exp %324 : vector<16x16xf32>
    %cst_153 = arith.constant dense<0.000000e+00> : vector<16xf32>
    %326 = vector.multi_reduction <add>, %325, %cst_153 [1] : vector<16x16xf32> to vector<16xf32>
    %327 = vector.shape_cast %326 : vector<16xf32> to vector<16x1xf32>
    %328 = tpu.reciprocal %327 {approx = true} : vector<16x1xf32> -> vector<16x1xf32>
    %329 = vector.broadcast %328 : vector<16x1xf32> to vector<16x16xf32>
    %330 = arith.mulf %325, %329 : vector<16x16xf32>
    %cst_154 = arith.constant dense<0.000000e+00> : vector<16x8xf32>
    %331 = tpu.matmul %330, %316, %cst_154 {dimension_numbers = #tpu.dot_dimension_numbers<[1], [0], [0], [1], [0, 0, 1, 1], [], []>} : vector<16x16xf32>, vector<16x8xf32>, vector<16x8xf32> -> vector<16x8xf32>
    %c384 = arith.constant 384 : index
    %c0_155 = arith.constant 0 : index
    %332 = vector.load %arg1[%c384, %c0_155] : memref<1520x128xf32, #tpu.memory_space<vmem>>, vector<8x32xf32>
    %cst_156 = arith.constant dense<0.000000e+00> : vector<16x32xf32>
    %333 = tpu.matmul %331, %332, %cst_156 {dimension_numbers = #tpu.dot_dimension_numbers<[1], [0], [0], [1], [0, 0, 1, 1], [], []>} : vector<16x8xf32>, vector<8x32xf32>, vector<16x32xf32> -> vector<16x32xf32>
    %334 = arith.addf %301, %333 : vector<16x32xf32>
    %c392 = arith.constant 392 : index
    %c0_157 = arith.constant 0 : index
    %335 = vector.load %arg1[%c392, %c0_157] : memref<1520x128xf32, #tpu.memory_space<vmem>>, vector<1x32xf32>
    %336 = vector.broadcast %335 : vector<1x32xf32> to vector<16x32xf32>
    %337 = arith.addf %334, %336 : vector<16x32xf32>
    %338 = arith.addf %203, %337 : vector<16x32xf32>
    %c1453 = arith.constant 1453 : index
    %c0_158 = arith.constant 0 : index
    %339 = vector.load %arg1[%c1453, %c0_158] : memref<1520x128xf32, #tpu.memory_space<vmem>>, vector<1x32xf32>
    %c1454 = arith.constant 1454 : index
    %c0_159 = arith.constant 0 : index
    %340 = vector.load %arg1[%c1454, %c0_159] : memref<1520x128xf32, #tpu.memory_space<vmem>>, vector<1x32xf32>
    %cst_160 = arith.constant dense<0.000000e+00> : vector<16xf32>
    %341 = vector.multi_reduction <add>, %338, %cst_160 [1] : vector<16x32xf32> to vector<16xf32>
    %342 = vector.shape_cast %341 : vector<16xf32> to vector<16x1xf32>
    %cst_161 = arith.constant 3.200000e+01 : f32
    %343 = vector.broadcast %cst_161 : f32 to vector<16x1xf32>
    %344 = arith.divf %342, %343 : vector<16x1xf32>
    %345 = vector.broadcast %344 : vector<16x1xf32> to vector<16x32xf32>
    %346 = arith.subf %338, %345 : vector<16x32xf32>
    %347 = arith.mulf %346, %346 : vector<16x32xf32>
    %cst_162 = arith.constant dense<0.000000e+00> : vector<16xf32>
    %348 = vector.multi_reduction <add>, %347, %cst_162 [1] : vector<16x32xf32> to vector<16xf32>
    %349 = vector.shape_cast %348 : vector<16xf32> to vector<16x1xf32>
    %cst_163 = arith.constant 3.200000e+01 : f32
    %350 = vector.broadcast %cst_163 : f32 to vector<16x1xf32>
    %351 = arith.divf %349, %350 : vector<16x1xf32>
    %cst_164 = arith.constant 9.99999974E-6 : f32
    %352 = vector.broadcast %cst_164 : f32 to vector<16x1xf32>
    %353 = arith.addf %351, %352 : vector<16x1xf32>
    %354 = math.rsqrt %353 : vector<16x1xf32>
    %355 = vector.broadcast %354 : vector<16x1xf32> to vector<16x32xf32>
    %356 = arith.mulf %346, %355 : vector<16x32xf32>
    %357 = vector.broadcast %339 : vector<1x32xf32> to vector<16x32xf32>
    %358 = arith.mulf %356, %357 : vector<16x32xf32>
    %359 = vector.broadcast %340 : vector<1x32xf32> to vector<16x32xf32>
    %360 = arith.addf %358, %359 : vector<16x32xf32>
    %c1120 = arith.constant 1120 : index
    %c0_165 = arith.constant 0 : index
    %361 = vector.load %arg1[%c1120, %c0_165] : memref<1520x128xf32, #tpu.memory_space<vmem>>, vector<32x64xf32>
    %c1152 = arith.constant 1152 : index
    %c0_166 = arith.constant 0 : index
    %362 = vector.load %arg1[%c1152, %c0_166] : memref<1520x128xf32, #tpu.memory_space<vmem>>, vector<1x64xf32>
    %c1160 = arith.constant 1160 : index
    %c0_167 = arith.constant 0 : index
    %363 = vector.load %arg1[%c1160, %c0_167] : memref<1520x128xf32, #tpu.memory_space<vmem>>, vector<64x32xf32>
    %c1224 = arith.constant 1224 : index
    %c0_168 = arith.constant 0 : index
    %364 = vector.load %arg1[%c1224, %c0_168] : memref<1520x128xf32, #tpu.memory_space<vmem>>, vector<1x32xf32>
    %cst_169 = arith.constant dense<0.000000e+00> : vector<16x64xf32>
    %365 = tpu.matmul %360, %361, %cst_169 {dimension_numbers = #tpu.dot_dimension_numbers<[1], [0], [0], [1], [0, 0, 1, 1], [], []>} : vector<16x32xf32>, vector<32x64xf32>, vector<16x64xf32> -> vector<16x64xf32>
    %366 = vector.broadcast %362 : vector<1x64xf32> to vector<16x64xf32>
    %367 = arith.addf %365, %366 : vector<16x64xf32>
    %cst_170 = arith.constant 0.000000e+00 : f32
    %368 = vector.broadcast %cst_170 : f32 to vector<16x64xf32>
    %369 = arith.maximumf %367, %368 : vector<16x64xf32>
    %cst_171 = arith.constant dense<0.000000e+00> : vector<16x32xf32>
    %370 = tpu.matmul %369, %363, %cst_171 {dimension_numbers = #tpu.dot_dimension_numbers<[1], [0], [0], [1], [0, 0, 1, 1], [], []>} : vector<16x64xf32>, vector<64x32xf32>, vector<16x32xf32> -> vector<16x32xf32>
    %371 = vector.broadcast %364 : vector<1x32xf32> to vector<16x32xf32>
    %372 = arith.addf %370, %371 : vector<16x32xf32>
    %373 = arith.addf %360, %372 : vector<16x32xf32>
    %c1455 = arith.constant 1455 : index
    %c0_172 = arith.constant 0 : index
    %374 = vector.load %arg1[%c1455, %c0_172] : memref<1520x128xf32, #tpu.memory_space<vmem>>, vector<1x32xf32>
    %c1456 = arith.constant 1456 : index
    %c0_173 = arith.constant 0 : index
    %375 = vector.load %arg1[%c1456, %c0_173] : memref<1520x128xf32, #tpu.memory_space<vmem>>, vector<1x32xf32>
    %cst_174 = arith.constant dense<0.000000e+00> : vector<16xf32>
    %376 = vector.multi_reduction <add>, %373, %cst_174 [1] : vector<16x32xf32> to vector<16xf32>
    %377 = vector.shape_cast %376 : vector<16xf32> to vector<16x1xf32>
    %cst_175 = arith.constant 3.200000e+01 : f32
    %378 = vector.broadcast %cst_175 : f32 to vector<16x1xf32>
    %379 = arith.divf %377, %378 : vector<16x1xf32>
    %380 = vector.broadcast %379 : vector<16x1xf32> to vector<16x32xf32>
    %381 = arith.subf %373, %380 : vector<16x32xf32>
    %382 = arith.mulf %381, %381 : vector<16x32xf32>
    %cst_176 = arith.constant dense<0.000000e+00> : vector<16xf32>
    %383 = vector.multi_reduction <add>, %382, %cst_176 [1] : vector<16x32xf32> to vector<16xf32>
    %384 = vector.shape_cast %383 : vector<16xf32> to vector<16x1xf32>
    %cst_177 = arith.constant 3.200000e+01 : f32
    %385 = vector.broadcast %cst_177 : f32 to vector<16x1xf32>
    %386 = arith.divf %384, %385 : vector<16x1xf32>
    %cst_178 = arith.constant 9.99999974E-6 : f32
    %387 = vector.broadcast %cst_178 : f32 to vector<16x1xf32>
    %388 = arith.addf %386, %387 : vector<16x1xf32>
    %389 = math.rsqrt %388 : vector<16x1xf32>
    %390 = vector.broadcast %389 : vector<16x1xf32> to vector<16x32xf32>
    %391 = arith.mulf %381, %390 : vector<16x32xf32>
    %392 = vector.broadcast %374 : vector<1x32xf32> to vector<16x32xf32>
    %393 = arith.mulf %391, %392 : vector<16x32xf32>
    %394 = vector.broadcast %375 : vector<1x32xf32> to vector<16x32xf32>
    %395 = arith.addf %393, %394 : vector<16x32xf32>
    %c1469 = arith.constant 1469 : index
    %c0_179 = arith.constant 0 : index
    %396 = vector.load %arg1[%c1469, %c0_179] : memref<1520x128xf32, #tpu.memory_space<vmem>>, vector<1x32xf32>
    %c1470 = arith.constant 1470 : index
    %c0_180 = arith.constant 0 : index
    %397 = vector.load %arg1[%c1470, %c0_180] : memref<1520x128xf32, #tpu.memory_space<vmem>>, vector<1x32xf32>
    %cst_181 = arith.constant dense<0.000000e+00> : vector<16xf32>
    %398 = vector.multi_reduction <add>, %395, %cst_181 [1] : vector<16x32xf32> to vector<16xf32>
    %399 = vector.shape_cast %398 : vector<16xf32> to vector<16x1xf32>
    %cst_182 = arith.constant 3.200000e+01 : f32
    %400 = vector.broadcast %cst_182 : f32 to vector<16x1xf32>
    %401 = arith.divf %399, %400 : vector<16x1xf32>
    %402 = vector.broadcast %401 : vector<16x1xf32> to vector<16x32xf32>
    %403 = arith.subf %395, %402 : vector<16x32xf32>
    %404 = arith.mulf %403, %403 : vector<16x32xf32>
    %cst_183 = arith.constant dense<0.000000e+00> : vector<16xf32>
    %405 = vector.multi_reduction <add>, %404, %cst_183 [1] : vector<16x32xf32> to vector<16xf32>
    %406 = vector.shape_cast %405 : vector<16xf32> to vector<16x1xf32>
    %cst_184 = arith.constant 3.200000e+01 : f32
    %407 = vector.broadcast %cst_184 : f32 to vector<16x1xf32>
    %408 = arith.divf %406, %407 : vector<16x1xf32>
    %cst_185 = arith.constant 9.99999974E-6 : f32
    %409 = vector.broadcast %cst_185 : f32 to vector<16x1xf32>
    %410 = arith.addf %408, %409 : vector<16x1xf32>
    %411 = math.rsqrt %410 : vector<16x1xf32>
    %412 = vector.broadcast %411 : vector<16x1xf32> to vector<16x32xf32>
    %413 = arith.mulf %403, %412 : vector<16x32xf32>
    %414 = vector.broadcast %396 : vector<1x32xf32> to vector<16x32xf32>
    %415 = arith.mulf %413, %414 : vector<16x32xf32>
    %416 = vector.broadcast %397 : vector<1x32xf32> to vector<16x32xf32>
    %417 = arith.addf %415, %416 : vector<16x32xf32>
    %c400 = arith.constant 400 : index
    %c0_186 = arith.constant 0 : index
    %418 = vector.load %arg1[%c400, %c0_186] : memref<1520x128xf32, #tpu.memory_space<vmem>>, vector<8x32xf32>
    %c432 = arith.constant 432 : index
    %c0_187 = arith.constant 0 : index
    %419 = vector.load %arg1[%c432, %c0_187] : memref<1520x128xf32, #tpu.memory_space<vmem>>, vector<8x32xf32>
    %c464 = arith.constant 464 : index
    %c0_188 = arith.constant 0 : index
    %420 = vector.load %arg1[%c464, %c0_188] : memref<1520x128xf32, #tpu.memory_space<vmem>>, vector<8x32xf32>
    %c496 = arith.constant 496 : index
    %c0_189 = arith.constant 0 : index
    %421 = vector.load %arg1[%c496, %c0_189] : memref<1520x128xf32, #tpu.memory_space<vmem>>, vector<1x8xf32>
    %c500 = arith.constant 500 : index
    %c0_190 = arith.constant 0 : index
    %422 = vector.load %arg1[%c500, %c0_190] : memref<1520x128xf32, #tpu.memory_space<vmem>>, vector<1x8xf32>
    %c504 = arith.constant 504 : index
    %c0_191 = arith.constant 0 : index
    %423 = vector.load %arg1[%c504, %c0_191] : memref<1520x128xf32, #tpu.memory_space<vmem>>, vector<1x8xf32>
    %cst_192 = arith.constant dense<0.000000e+00> : vector<16x8xf32>
    %424 = tpu.matmul %10, %418, %cst_192 {dimension_numbers = #tpu.dot_dimension_numbers<[1], [1], [0], [0], [0, 0, 1, 0], [], []>} : vector<16x32xf32>, vector<8x32xf32>, vector<16x8xf32> -> vector<16x8xf32>
    %425 = vector.broadcast %421 : vector<1x8xf32> to vector<16x8xf32>
    %426 = arith.addf %424, %425 : vector<16x8xf32>
    %cst_193 = arith.constant dense<0.000000e+00> : vector<16x8xf32>
    %427 = tpu.matmul %10, %419, %cst_193 {dimension_numbers = #tpu.dot_dimension_numbers<[1], [1], [0], [0], [0, 0, 1, 0], [], []>} : vector<16x32xf32>, vector<8x32xf32>, vector<16x8xf32> -> vector<16x8xf32>
    %428 = vector.broadcast %422 : vector<1x8xf32> to vector<16x8xf32>
    %429 = arith.addf %427, %428 : vector<16x8xf32>
    %cst_194 = arith.constant dense<0.000000e+00> : vector<16x8xf32>
    %430 = tpu.matmul %10, %420, %cst_194 {dimension_numbers = #tpu.dot_dimension_numbers<[1], [1], [0], [0], [0, 0, 1, 0], [], []>} : vector<16x32xf32>, vector<8x32xf32>, vector<16x8xf32> -> vector<16x8xf32>
    %431 = vector.broadcast %423 : vector<1x8xf32> to vector<16x8xf32>
    %432 = arith.addf %430, %431 : vector<16x8xf32>
    %cst_195 = arith.constant dense<0.000000e+00> : vector<16x16xf32>
    %433 = tpu.matmul %426, %429, %cst_195 {dimension_numbers = #tpu.dot_dimension_numbers<[1], [1], [0], [0], [0, 0, 1, 0], [], []>} : vector<16x8xf32>, vector<16x8xf32>, vector<16x16xf32> -> vector<16x16xf32>
    %cst_196 = arith.constant 0.353553385 : f32
    %434 = vector.broadcast %cst_196 : f32 to vector<16x16xf32>
    %435 = arith.mulf %433, %434 : vector<16x16xf32>
    %436 = arith.addf %435, %11 : vector<16x16xf32>
    %cst_197 = arith.constant dense<0xFF800000> : vector<16xf32>
    %437 = vector.multi_reduction <maximumf>, %436, %cst_197 [1] : vector<16x16xf32> to vector<16xf32>
    %438 = vector.shape_cast %437 : vector<16xf32> to vector<16x1xf32>
    %439 = vector.broadcast %438 : vector<16x1xf32> to vector<16x16xf32>
    %440 = arith.subf %436, %439 : vector<16x16xf32>
    %441 = math.exp %440 : vector<16x16xf32>
    %cst_198 = arith.constant dense<0.000000e+00> : vector<16xf32>
    %442 = vector.multi_reduction <add>, %441, %cst_198 [1] : vector<16x16xf32> to vector<16xf32>
    %443 = vector.shape_cast %442 : vector<16xf32> to vector<16x1xf32>
    %444 = tpu.reciprocal %443 {approx = true} : vector<16x1xf32> -> vector<16x1xf32>
    %445 = vector.broadcast %444 : vector<16x1xf32> to vector<16x16xf32>
    %446 = arith.mulf %441, %445 : vector<16x16xf32>
    %cst_199 = arith.constant dense<0.000000e+00> : vector<16x8xf32>
    %447 = tpu.matmul %446, %432, %cst_199 {dimension_numbers = #tpu.dot_dimension_numbers<[1], [0], [0], [1], [0, 0, 1, 1], [], []>} : vector<16x16xf32>, vector<16x8xf32>, vector<16x8xf32> -> vector<16x8xf32>
    %c512 = arith.constant 512 : index
    %c0_200 = arith.constant 0 : index
    %448 = vector.load %arg1[%c512, %c0_200] : memref<1520x128xf32, #tpu.memory_space<vmem>>, vector<8x32xf32>
    %cst_201 = arith.constant dense<0.000000e+00> : vector<16x32xf32>
    %449 = tpu.matmul %447, %448, %cst_201 {dimension_numbers = #tpu.dot_dimension_numbers<[1], [0], [0], [1], [0, 0, 1, 1], [], []>} : vector<16x8xf32>, vector<8x32xf32>, vector<16x32xf32> -> vector<16x32xf32>
    %c408 = arith.constant 408 : index
    %c0_202 = arith.constant 0 : index
    %450 = vector.load %arg1[%c408, %c0_202] : memref<1520x128xf32, #tpu.memory_space<vmem>>, vector<8x32xf32>
    %c440 = arith.constant 440 : index
    %c0_203 = arith.constant 0 : index
    %451 = vector.load %arg1[%c440, %c0_203] : memref<1520x128xf32, #tpu.memory_space<vmem>>, vector<8x32xf32>
    %c472 = arith.constant 472 : index
    %c0_204 = arith.constant 0 : index
    %452 = vector.load %arg1[%c472, %c0_204] : memref<1520x128xf32, #tpu.memory_space<vmem>>, vector<8x32xf32>
    %c497 = arith.constant 497 : index
    %c0_205 = arith.constant 0 : index
    %453 = vector.load %arg1[%c497, %c0_205] : memref<1520x128xf32, #tpu.memory_space<vmem>>, vector<1x8xf32>
    %c501 = arith.constant 501 : index
    %c0_206 = arith.constant 0 : index
    %454 = vector.load %arg1[%c501, %c0_206] : memref<1520x128xf32, #tpu.memory_space<vmem>>, vector<1x8xf32>
    %c505 = arith.constant 505 : index
    %c0_207 = arith.constant 0 : index
    %455 = vector.load %arg1[%c505, %c0_207] : memref<1520x128xf32, #tpu.memory_space<vmem>>, vector<1x8xf32>
    %cst_208 = arith.constant dense<0.000000e+00> : vector<16x8xf32>
    %456 = tpu.matmul %10, %450, %cst_208 {dimension_numbers = #tpu.dot_dimension_numbers<[1], [1], [0], [0], [0, 0, 1, 0], [], []>} : vector<16x32xf32>, vector<8x32xf32>, vector<16x8xf32> -> vector<16x8xf32>
    %457 = vector.broadcast %453 : vector<1x8xf32> to vector<16x8xf32>
    %458 = arith.addf %456, %457 : vector<16x8xf32>
    %cst_209 = arith.constant dense<0.000000e+00> : vector<16x8xf32>
    %459 = tpu.matmul %10, %451, %cst_209 {dimension_numbers = #tpu.dot_dimension_numbers<[1], [1], [0], [0], [0, 0, 1, 0], [], []>} : vector<16x32xf32>, vector<8x32xf32>, vector<16x8xf32> -> vector<16x8xf32>
    %460 = vector.broadcast %454 : vector<1x8xf32> to vector<16x8xf32>
    %461 = arith.addf %459, %460 : vector<16x8xf32>
    %cst_210 = arith.constant dense<0.000000e+00> : vector<16x8xf32>
    %462 = tpu.matmul %10, %452, %cst_210 {dimension_numbers = #tpu.dot_dimension_numbers<[1], [1], [0], [0], [0, 0, 1, 0], [], []>} : vector<16x32xf32>, vector<8x32xf32>, vector<16x8xf32> -> vector<16x8xf32>
    %463 = vector.broadcast %455 : vector<1x8xf32> to vector<16x8xf32>
    %464 = arith.addf %462, %463 : vector<16x8xf32>
    %cst_211 = arith.constant dense<0.000000e+00> : vector<16x16xf32>
    %465 = tpu.matmul %458, %461, %cst_211 {dimension_numbers = #tpu.dot_dimension_numbers<[1], [1], [0], [0], [0, 0, 1, 0], [], []>} : vector<16x8xf32>, vector<16x8xf32>, vector<16x16xf32> -> vector<16x16xf32>
    %cst_212 = arith.constant 0.353553385 : f32
    %466 = vector.broadcast %cst_212 : f32 to vector<16x16xf32>
    %467 = arith.mulf %465, %466 : vector<16x16xf32>
    %468 = arith.addf %467, %11 : vector<16x16xf32>
    %cst_213 = arith.constant dense<0xFF800000> : vector<16xf32>
    %469 = vector.multi_reduction <maximumf>, %468, %cst_213 [1] : vector<16x16xf32> to vector<16xf32>
    %470 = vector.shape_cast %469 : vector<16xf32> to vector<16x1xf32>
    %471 = vector.broadcast %470 : vector<16x1xf32> to vector<16x16xf32>
    %472 = arith.subf %468, %471 : vector<16x16xf32>
    %473 = math.exp %472 : vector<16x16xf32>
    %cst_214 = arith.constant dense<0.000000e+00> : vector<16xf32>
    %474 = vector.multi_reduction <add>, %473, %cst_214 [1] : vector<16x16xf32> to vector<16xf32>
    %475 = vector.shape_cast %474 : vector<16xf32> to vector<16x1xf32>
    %476 = tpu.reciprocal %475 {approx = true} : vector<16x1xf32> -> vector<16x1xf32>
    %477 = vector.broadcast %476 : vector<16x1xf32> to vector<16x16xf32>
    %478 = arith.mulf %473, %477 : vector<16x16xf32>
    %cst_215 = arith.constant dense<0.000000e+00> : vector<16x8xf32>
    %479 = tpu.matmul %478, %464, %cst_215 {dimension_numbers = #tpu.dot_dimension_numbers<[1], [0], [0], [1], [0, 0, 1, 1], [], []>} : vector<16x16xf32>, vector<16x8xf32>, vector<16x8xf32> -> vector<16x8xf32>
    %c520 = arith.constant 520 : index
    %c0_216 = arith.constant 0 : index
    %480 = vector.load %arg1[%c520, %c0_216] : memref<1520x128xf32, #tpu.memory_space<vmem>>, vector<8x32xf32>
    %cst_217 = arith.constant dense<0.000000e+00> : vector<16x32xf32>
    %481 = tpu.matmul %479, %480, %cst_217 {dimension_numbers = #tpu.dot_dimension_numbers<[1], [0], [0], [1], [0, 0, 1, 1], [], []>} : vector<16x8xf32>, vector<8x32xf32>, vector<16x32xf32> -> vector<16x32xf32>
    %482 = arith.addf %449, %481 : vector<16x32xf32>
    %c416 = arith.constant 416 : index
    %c0_218 = arith.constant 0 : index
    %483 = vector.load %arg1[%c416, %c0_218] : memref<1520x128xf32, #tpu.memory_space<vmem>>, vector<8x32xf32>
    %c448 = arith.constant 448 : index
    %c0_219 = arith.constant 0 : index
    %484 = vector.load %arg1[%c448, %c0_219] : memref<1520x128xf32, #tpu.memory_space<vmem>>, vector<8x32xf32>
    %c480 = arith.constant 480 : index
    %c0_220 = arith.constant 0 : index
    %485 = vector.load %arg1[%c480, %c0_220] : memref<1520x128xf32, #tpu.memory_space<vmem>>, vector<8x32xf32>
    %c498 = arith.constant 498 : index
    %c0_221 = arith.constant 0 : index
    %486 = vector.load %arg1[%c498, %c0_221] : memref<1520x128xf32, #tpu.memory_space<vmem>>, vector<1x8xf32>
    %c502 = arith.constant 502 : index
    %c0_222 = arith.constant 0 : index
    %487 = vector.load %arg1[%c502, %c0_222] : memref<1520x128xf32, #tpu.memory_space<vmem>>, vector<1x8xf32>
    %c506 = arith.constant 506 : index
    %c0_223 = arith.constant 0 : index
    %488 = vector.load %arg1[%c506, %c0_223] : memref<1520x128xf32, #tpu.memory_space<vmem>>, vector<1x8xf32>
    %cst_224 = arith.constant dense<0.000000e+00> : vector<16x8xf32>
    %489 = tpu.matmul %10, %483, %cst_224 {dimension_numbers = #tpu.dot_dimension_numbers<[1], [1], [0], [0], [0, 0, 1, 0], [], []>} : vector<16x32xf32>, vector<8x32xf32>, vector<16x8xf32> -> vector<16x8xf32>
    %490 = vector.broadcast %486 : vector<1x8xf32> to vector<16x8xf32>
    %491 = arith.addf %489, %490 : vector<16x8xf32>
    %cst_225 = arith.constant dense<0.000000e+00> : vector<16x8xf32>
    %492 = tpu.matmul %10, %484, %cst_225 {dimension_numbers = #tpu.dot_dimension_numbers<[1], [1], [0], [0], [0, 0, 1, 0], [], []>} : vector<16x32xf32>, vector<8x32xf32>, vector<16x8xf32> -> vector<16x8xf32>
    %493 = vector.broadcast %487 : vector<1x8xf32> to vector<16x8xf32>
    %494 = arith.addf %492, %493 : vector<16x8xf32>
    %cst_226 = arith.constant dense<0.000000e+00> : vector<16x8xf32>
    %495 = tpu.matmul %10, %485, %cst_226 {dimension_numbers = #tpu.dot_dimension_numbers<[1], [1], [0], [0], [0, 0, 1, 0], [], []>} : vector<16x32xf32>, vector<8x32xf32>, vector<16x8xf32> -> vector<16x8xf32>
    %496 = vector.broadcast %488 : vector<1x8xf32> to vector<16x8xf32>
    %497 = arith.addf %495, %496 : vector<16x8xf32>
    %cst_227 = arith.constant dense<0.000000e+00> : vector<16x16xf32>
    %498 = tpu.matmul %491, %494, %cst_227 {dimension_numbers = #tpu.dot_dimension_numbers<[1], [1], [0], [0], [0, 0, 1, 0], [], []>} : vector<16x8xf32>, vector<16x8xf32>, vector<16x16xf32> -> vector<16x16xf32>
    %cst_228 = arith.constant 0.353553385 : f32
    %499 = vector.broadcast %cst_228 : f32 to vector<16x16xf32>
    %500 = arith.mulf %498, %499 : vector<16x16xf32>
    %501 = arith.addf %500, %11 : vector<16x16xf32>
    %cst_229 = arith.constant dense<0xFF800000> : vector<16xf32>
    %502 = vector.multi_reduction <maximumf>, %501, %cst_229 [1] : vector<16x16xf32> to vector<16xf32>
    %503 = vector.shape_cast %502 : vector<16xf32> to vector<16x1xf32>
    %504 = vector.broadcast %503 : vector<16x1xf32> to vector<16x16xf32>
    %505 = arith.subf %501, %504 : vector<16x16xf32>
    %506 = math.exp %505 : vector<16x16xf32>
    %cst_230 = arith.constant dense<0.000000e+00> : vector<16xf32>
    %507 = vector.multi_reduction <add>, %506, %cst_230 [1] : vector<16x16xf32> to vector<16xf32>
    %508 = vector.shape_cast %507 : vector<16xf32> to vector<16x1xf32>
    %509 = tpu.reciprocal %508 {approx = true} : vector<16x1xf32> -> vector<16x1xf32>
    %510 = vector.broadcast %509 : vector<16x1xf32> to vector<16x16xf32>
    %511 = arith.mulf %506, %510 : vector<16x16xf32>
    %cst_231 = arith.constant dense<0.000000e+00> : vector<16x8xf32>
    %512 = tpu.matmul %511, %497, %cst_231 {dimension_numbers = #tpu.dot_dimension_numbers<[1], [0], [0], [1], [0, 0, 1, 1], [], []>} : vector<16x16xf32>, vector<16x8xf32>, vector<16x8xf32> -> vector<16x8xf32>
    %c528 = arith.constant 528 : index
    %c0_232 = arith.constant 0 : index
    %513 = vector.load %arg1[%c528, %c0_232] : memref<1520x128xf32, #tpu.memory_space<vmem>>, vector<8x32xf32>
    %cst_233 = arith.constant dense<0.000000e+00> : vector<16x32xf32>
    %514 = tpu.matmul %512, %513, %cst_233 {dimension_numbers = #tpu.dot_dimension_numbers<[1], [0], [0], [1], [0, 0, 1, 1], [], []>} : vector<16x8xf32>, vector<8x32xf32>, vector<16x32xf32> -> vector<16x32xf32>
    %515 = arith.addf %482, %514 : vector<16x32xf32>
    %c424 = arith.constant 424 : index
    %c0_234 = arith.constant 0 : index
    %516 = vector.load %arg1[%c424, %c0_234] : memref<1520x128xf32, #tpu.memory_space<vmem>>, vector<8x32xf32>
    %c456 = arith.constant 456 : index
    %c0_235 = arith.constant 0 : index
    %517 = vector.load %arg1[%c456, %c0_235] : memref<1520x128xf32, #tpu.memory_space<vmem>>, vector<8x32xf32>
    %c488 = arith.constant 488 : index
    %c0_236 = arith.constant 0 : index
    %518 = vector.load %arg1[%c488, %c0_236] : memref<1520x128xf32, #tpu.memory_space<vmem>>, vector<8x32xf32>
    %c499 = arith.constant 499 : index
    %c0_237 = arith.constant 0 : index
    %519 = vector.load %arg1[%c499, %c0_237] : memref<1520x128xf32, #tpu.memory_space<vmem>>, vector<1x8xf32>
    %c503 = arith.constant 503 : index
    %c0_238 = arith.constant 0 : index
    %520 = vector.load %arg1[%c503, %c0_238] : memref<1520x128xf32, #tpu.memory_space<vmem>>, vector<1x8xf32>
    %c507 = arith.constant 507 : index
    %c0_239 = arith.constant 0 : index
    %521 = vector.load %arg1[%c507, %c0_239] : memref<1520x128xf32, #tpu.memory_space<vmem>>, vector<1x8xf32>
    %cst_240 = arith.constant dense<0.000000e+00> : vector<16x8xf32>
    %522 = tpu.matmul %10, %516, %cst_240 {dimension_numbers = #tpu.dot_dimension_numbers<[1], [1], [0], [0], [0, 0, 1, 0], [], []>} : vector<16x32xf32>, vector<8x32xf32>, vector<16x8xf32> -> vector<16x8xf32>
    %523 = vector.broadcast %519 : vector<1x8xf32> to vector<16x8xf32>
    %524 = arith.addf %522, %523 : vector<16x8xf32>
    %cst_241 = arith.constant dense<0.000000e+00> : vector<16x8xf32>
    %525 = tpu.matmul %10, %517, %cst_241 {dimension_numbers = #tpu.dot_dimension_numbers<[1], [1], [0], [0], [0, 0, 1, 0], [], []>} : vector<16x32xf32>, vector<8x32xf32>, vector<16x8xf32> -> vector<16x8xf32>
    %526 = vector.broadcast %520 : vector<1x8xf32> to vector<16x8xf32>
    %527 = arith.addf %525, %526 : vector<16x8xf32>
    %cst_242 = arith.constant dense<0.000000e+00> : vector<16x8xf32>
    %528 = tpu.matmul %10, %518, %cst_242 {dimension_numbers = #tpu.dot_dimension_numbers<[1], [1], [0], [0], [0, 0, 1, 0], [], []>} : vector<16x32xf32>, vector<8x32xf32>, vector<16x8xf32> -> vector<16x8xf32>
    %529 = vector.broadcast %521 : vector<1x8xf32> to vector<16x8xf32>
    %530 = arith.addf %528, %529 : vector<16x8xf32>
    %cst_243 = arith.constant dense<0.000000e+00> : vector<16x16xf32>
    %531 = tpu.matmul %524, %527, %cst_243 {dimension_numbers = #tpu.dot_dimension_numbers<[1], [1], [0], [0], [0, 0, 1, 0], [], []>} : vector<16x8xf32>, vector<16x8xf32>, vector<16x16xf32> -> vector<16x16xf32>
    %cst_244 = arith.constant 0.353553385 : f32
    %532 = vector.broadcast %cst_244 : f32 to vector<16x16xf32>
    %533 = arith.mulf %531, %532 : vector<16x16xf32>
    %534 = arith.addf %533, %11 : vector<16x16xf32>
    %cst_245 = arith.constant dense<0xFF800000> : vector<16xf32>
    %535 = vector.multi_reduction <maximumf>, %534, %cst_245 [1] : vector<16x16xf32> to vector<16xf32>
    %536 = vector.shape_cast %535 : vector<16xf32> to vector<16x1xf32>
    %537 = vector.broadcast %536 : vector<16x1xf32> to vector<16x16xf32>
    %538 = arith.subf %534, %537 : vector<16x16xf32>
    %539 = math.exp %538 : vector<16x16xf32>
    %cst_246 = arith.constant dense<0.000000e+00> : vector<16xf32>
    %540 = vector.multi_reduction <add>, %539, %cst_246 [1] : vector<16x16xf32> to vector<16xf32>
    %541 = vector.shape_cast %540 : vector<16xf32> to vector<16x1xf32>
    %542 = tpu.reciprocal %541 {approx = true} : vector<16x1xf32> -> vector<16x1xf32>
    %543 = vector.broadcast %542 : vector<16x1xf32> to vector<16x16xf32>
    %544 = arith.mulf %539, %543 : vector<16x16xf32>
    %cst_247 = arith.constant dense<0.000000e+00> : vector<16x8xf32>
    %545 = tpu.matmul %544, %530, %cst_247 {dimension_numbers = #tpu.dot_dimension_numbers<[1], [0], [0], [1], [0, 0, 1, 1], [], []>} : vector<16x16xf32>, vector<16x8xf32>, vector<16x8xf32> -> vector<16x8xf32>
    %c536 = arith.constant 536 : index
    %c0_248 = arith.constant 0 : index
    %546 = vector.load %arg1[%c536, %c0_248] : memref<1520x128xf32, #tpu.memory_space<vmem>>, vector<8x32xf32>
    %cst_249 = arith.constant dense<0.000000e+00> : vector<16x32xf32>
    %547 = tpu.matmul %545, %546, %cst_249 {dimension_numbers = #tpu.dot_dimension_numbers<[1], [0], [0], [1], [0, 0, 1, 1], [], []>} : vector<16x8xf32>, vector<8x32xf32>, vector<16x32xf32> -> vector<16x32xf32>
    %548 = arith.addf %515, %547 : vector<16x32xf32>
    %c544 = arith.constant 544 : index
    %c0_250 = arith.constant 0 : index
    %549 = vector.load %arg1[%c544, %c0_250] : memref<1520x128xf32, #tpu.memory_space<vmem>>, vector<1x32xf32>
    %550 = vector.broadcast %549 : vector<1x32xf32> to vector<16x32xf32>
    %551 = arith.addf %548, %550 : vector<16x32xf32>
    %552 = arith.addf %10, %551 : vector<16x32xf32>
    %c1457 = arith.constant 1457 : index
    %c0_251 = arith.constant 0 : index
    %553 = vector.load %arg1[%c1457, %c0_251] : memref<1520x128xf32, #tpu.memory_space<vmem>>, vector<1x32xf32>
    %c1458 = arith.constant 1458 : index
    %c0_252 = arith.constant 0 : index
    %554 = vector.load %arg1[%c1458, %c0_252] : memref<1520x128xf32, #tpu.memory_space<vmem>>, vector<1x32xf32>
    %cst_253 = arith.constant dense<0.000000e+00> : vector<16xf32>
    %555 = vector.multi_reduction <add>, %552, %cst_253 [1] : vector<16x32xf32> to vector<16xf32>
    %556 = vector.shape_cast %555 : vector<16xf32> to vector<16x1xf32>
    %cst_254 = arith.constant 3.200000e+01 : f32
    %557 = vector.broadcast %cst_254 : f32 to vector<16x1xf32>
    %558 = arith.divf %556, %557 : vector<16x1xf32>
    %559 = vector.broadcast %558 : vector<16x1xf32> to vector<16x32xf32>
    %560 = arith.subf %552, %559 : vector<16x32xf32>
    %561 = arith.mulf %560, %560 : vector<16x32xf32>
    %cst_255 = arith.constant dense<0.000000e+00> : vector<16xf32>
    %562 = vector.multi_reduction <add>, %561, %cst_255 [1] : vector<16x32xf32> to vector<16xf32>
    %563 = vector.shape_cast %562 : vector<16xf32> to vector<16x1xf32>
    %cst_256 = arith.constant 3.200000e+01 : f32
    %564 = vector.broadcast %cst_256 : f32 to vector<16x1xf32>
    %565 = arith.divf %563, %564 : vector<16x1xf32>
    %cst_257 = arith.constant 9.99999974E-6 : f32
    %566 = vector.broadcast %cst_257 : f32 to vector<16x1xf32>
    %567 = arith.addf %565, %566 : vector<16x1xf32>
    %568 = math.rsqrt %567 : vector<16x1xf32>
    %569 = vector.broadcast %568 : vector<16x1xf32> to vector<16x32xf32>
    %570 = arith.mulf %560, %569 : vector<16x32xf32>
    %571 = vector.broadcast %553 : vector<1x32xf32> to vector<16x32xf32>
    %572 = arith.mulf %570, %571 : vector<16x32xf32>
    %573 = vector.broadcast %554 : vector<1x32xf32> to vector<16x32xf32>
    %574 = arith.addf %572, %573 : vector<16x32xf32>
    %c552 = arith.constant 552 : index
    %c0_258 = arith.constant 0 : index
    %575 = vector.load %arg1[%c552, %c0_258] : memref<1520x128xf32, #tpu.memory_space<vmem>>, vector<8x32xf32>
    %c584 = arith.constant 584 : index
    %c0_259 = arith.constant 0 : index
    %576 = vector.load %arg1[%c584, %c0_259] : memref<1520x128xf32, #tpu.memory_space<vmem>>, vector<8x32xf32>
    %c616 = arith.constant 616 : index
    %c0_260 = arith.constant 0 : index
    %577 = vector.load %arg1[%c616, %c0_260] : memref<1520x128xf32, #tpu.memory_space<vmem>>, vector<8x32xf32>
    %c648 = arith.constant 648 : index
    %c0_261 = arith.constant 0 : index
    %578 = vector.load %arg1[%c648, %c0_261] : memref<1520x128xf32, #tpu.memory_space<vmem>>, vector<1x8xf32>
    %c652 = arith.constant 652 : index
    %c0_262 = arith.constant 0 : index
    %579 = vector.load %arg1[%c652, %c0_262] : memref<1520x128xf32, #tpu.memory_space<vmem>>, vector<1x8xf32>
    %c656 = arith.constant 656 : index
    %c0_263 = arith.constant 0 : index
    %580 = vector.load %arg1[%c656, %c0_263] : memref<1520x128xf32, #tpu.memory_space<vmem>>, vector<1x8xf32>
    %cst_264 = arith.constant dense<0.000000e+00> : vector<16x8xf32>
    %581 = tpu.matmul %574, %575, %cst_264 {dimension_numbers = #tpu.dot_dimension_numbers<[1], [1], [0], [0], [0, 0, 1, 0], [], []>} : vector<16x32xf32>, vector<8x32xf32>, vector<16x8xf32> -> vector<16x8xf32>
    %582 = vector.broadcast %578 : vector<1x8xf32> to vector<16x8xf32>
    %583 = arith.addf %581, %582 : vector<16x8xf32>
    %cst_265 = arith.constant dense<0.000000e+00> : vector<16x8xf32>
    %584 = tpu.matmul %417, %576, %cst_265 {dimension_numbers = #tpu.dot_dimension_numbers<[1], [1], [0], [0], [0, 0, 1, 0], [], []>} : vector<16x32xf32>, vector<8x32xf32>, vector<16x8xf32> -> vector<16x8xf32>
    %585 = vector.broadcast %579 : vector<1x8xf32> to vector<16x8xf32>
    %586 = arith.addf %584, %585 : vector<16x8xf32>
    %cst_266 = arith.constant dense<0.000000e+00> : vector<16x8xf32>
    %587 = tpu.matmul %417, %577, %cst_266 {dimension_numbers = #tpu.dot_dimension_numbers<[1], [1], [0], [0], [0, 0, 1, 0], [], []>} : vector<16x32xf32>, vector<8x32xf32>, vector<16x8xf32> -> vector<16x8xf32>
    %588 = vector.broadcast %580 : vector<1x8xf32> to vector<16x8xf32>
    %589 = arith.addf %587, %588 : vector<16x8xf32>
    %cst_267 = arith.constant dense<0.000000e+00> : vector<16x16xf32>
    %590 = tpu.matmul %583, %586, %cst_267 {dimension_numbers = #tpu.dot_dimension_numbers<[1], [1], [0], [0], [0, 0, 1, 0], [], []>} : vector<16x8xf32>, vector<16x8xf32>, vector<16x16xf32> -> vector<16x16xf32>
    %cst_268 = arith.constant 0.353553385 : f32
    %591 = vector.broadcast %cst_268 : f32 to vector<16x16xf32>
    %592 = arith.mulf %590, %591 : vector<16x16xf32>
    %593 = arith.addf %592, %11 : vector<16x16xf32>
    %cst_269 = arith.constant dense<0xFF800000> : vector<16xf32>
    %594 = vector.multi_reduction <maximumf>, %593, %cst_269 [1] : vector<16x16xf32> to vector<16xf32>
    %595 = vector.shape_cast %594 : vector<16xf32> to vector<16x1xf32>
    %596 = vector.broadcast %595 : vector<16x1xf32> to vector<16x16xf32>
    %597 = arith.subf %593, %596 : vector<16x16xf32>
    %598 = math.exp %597 : vector<16x16xf32>
    %cst_270 = arith.constant dense<0.000000e+00> : vector<16xf32>
    %599 = vector.multi_reduction <add>, %598, %cst_270 [1] : vector<16x16xf32> to vector<16xf32>
    %600 = vector.shape_cast %599 : vector<16xf32> to vector<16x1xf32>
    %601 = tpu.reciprocal %600 {approx = true} : vector<16x1xf32> -> vector<16x1xf32>
    %602 = vector.broadcast %601 : vector<16x1xf32> to vector<16x16xf32>
    %603 = arith.mulf %598, %602 : vector<16x16xf32>
    %cst_271 = arith.constant dense<0.000000e+00> : vector<16x8xf32>
    %604 = tpu.matmul %603, %589, %cst_271 {dimension_numbers = #tpu.dot_dimension_numbers<[1], [0], [0], [1], [0, 0, 1, 1], [], []>} : vector<16x16xf32>, vector<16x8xf32>, vector<16x8xf32> -> vector<16x8xf32>
    %c664 = arith.constant 664 : index
    %c0_272 = arith.constant 0 : index
    %605 = vector.load %arg1[%c664, %c0_272] : memref<1520x128xf32, #tpu.memory_space<vmem>>, vector<8x32xf32>
    %cst_273 = arith.constant dense<0.000000e+00> : vector<16x32xf32>
    %606 = tpu.matmul %604, %605, %cst_273 {dimension_numbers = #tpu.dot_dimension_numbers<[1], [0], [0], [1], [0, 0, 1, 1], [], []>} : vector<16x8xf32>, vector<8x32xf32>, vector<16x32xf32> -> vector<16x32xf32>
    %c560 = arith.constant 560 : index
    %c0_274 = arith.constant 0 : index
    %607 = vector.load %arg1[%c560, %c0_274] : memref<1520x128xf32, #tpu.memory_space<vmem>>, vector<8x32xf32>
    %c592 = arith.constant 592 : index
    %c0_275 = arith.constant 0 : index
    %608 = vector.load %arg1[%c592, %c0_275] : memref<1520x128xf32, #tpu.memory_space<vmem>>, vector<8x32xf32>
    %c624 = arith.constant 624 : index
    %c0_276 = arith.constant 0 : index
    %609 = vector.load %arg1[%c624, %c0_276] : memref<1520x128xf32, #tpu.memory_space<vmem>>, vector<8x32xf32>
    %c649 = arith.constant 649 : index
    %c0_277 = arith.constant 0 : index
    %610 = vector.load %arg1[%c649, %c0_277] : memref<1520x128xf32, #tpu.memory_space<vmem>>, vector<1x8xf32>
    %c653 = arith.constant 653 : index
    %c0_278 = arith.constant 0 : index
    %611 = vector.load %arg1[%c653, %c0_278] : memref<1520x128xf32, #tpu.memory_space<vmem>>, vector<1x8xf32>
    %c657 = arith.constant 657 : index
    %c0_279 = arith.constant 0 : index
    %612 = vector.load %arg1[%c657, %c0_279] : memref<1520x128xf32, #tpu.memory_space<vmem>>, vector<1x8xf32>
    %cst_280 = arith.constant dense<0.000000e+00> : vector<16x8xf32>
    %613 = tpu.matmul %574, %607, %cst_280 {dimension_numbers = #tpu.dot_dimension_numbers<[1], [1], [0], [0], [0, 0, 1, 0], [], []>} : vector<16x32xf32>, vector<8x32xf32>, vector<16x8xf32> -> vector<16x8xf32>
    %614 = vector.broadcast %610 : vector<1x8xf32> to vector<16x8xf32>
    %615 = arith.addf %613, %614 : vector<16x8xf32>
    %cst_281 = arith.constant dense<0.000000e+00> : vector<16x8xf32>
    %616 = tpu.matmul %417, %608, %cst_281 {dimension_numbers = #tpu.dot_dimension_numbers<[1], [1], [0], [0], [0, 0, 1, 0], [], []>} : vector<16x32xf32>, vector<8x32xf32>, vector<16x8xf32> -> vector<16x8xf32>
    %617 = vector.broadcast %611 : vector<1x8xf32> to vector<16x8xf32>
    %618 = arith.addf %616, %617 : vector<16x8xf32>
    %cst_282 = arith.constant dense<0.000000e+00> : vector<16x8xf32>
    %619 = tpu.matmul %417, %609, %cst_282 {dimension_numbers = #tpu.dot_dimension_numbers<[1], [1], [0], [0], [0, 0, 1, 0], [], []>} : vector<16x32xf32>, vector<8x32xf32>, vector<16x8xf32> -> vector<16x8xf32>
    %620 = vector.broadcast %612 : vector<1x8xf32> to vector<16x8xf32>
    %621 = arith.addf %619, %620 : vector<16x8xf32>
    %cst_283 = arith.constant dense<0.000000e+00> : vector<16x16xf32>
    %622 = tpu.matmul %615, %618, %cst_283 {dimension_numbers = #tpu.dot_dimension_numbers<[1], [1], [0], [0], [0, 0, 1, 0], [], []>} : vector<16x8xf32>, vector<16x8xf32>, vector<16x16xf32> -> vector<16x16xf32>
    %cst_284 = arith.constant 0.353553385 : f32
    %623 = vector.broadcast %cst_284 : f32 to vector<16x16xf32>
    %624 = arith.mulf %622, %623 : vector<16x16xf32>
    %625 = arith.addf %624, %11 : vector<16x16xf32>
    %cst_285 = arith.constant dense<0xFF800000> : vector<16xf32>
    %626 = vector.multi_reduction <maximumf>, %625, %cst_285 [1] : vector<16x16xf32> to vector<16xf32>
    %627 = vector.shape_cast %626 : vector<16xf32> to vector<16x1xf32>
    %628 = vector.broadcast %627 : vector<16x1xf32> to vector<16x16xf32>
    %629 = arith.subf %625, %628 : vector<16x16xf32>
    %630 = math.exp %629 : vector<16x16xf32>
    %cst_286 = arith.constant dense<0.000000e+00> : vector<16xf32>
    %631 = vector.multi_reduction <add>, %630, %cst_286 [1] : vector<16x16xf32> to vector<16xf32>
    %632 = vector.shape_cast %631 : vector<16xf32> to vector<16x1xf32>
    %633 = tpu.reciprocal %632 {approx = true} : vector<16x1xf32> -> vector<16x1xf32>
    %634 = vector.broadcast %633 : vector<16x1xf32> to vector<16x16xf32>
    %635 = arith.mulf %630, %634 : vector<16x16xf32>
    %cst_287 = arith.constant dense<0.000000e+00> : vector<16x8xf32>
    %636 = tpu.matmul %635, %621, %cst_287 {dimension_numbers = #tpu.dot_dimension_numbers<[1], [0], [0], [1], [0, 0, 1, 1], [], []>} : vector<16x16xf32>, vector<16x8xf32>, vector<16x8xf32> -> vector<16x8xf32>
    %c672 = arith.constant 672 : index
    %c0_288 = arith.constant 0 : index
    %637 = vector.load %arg1[%c672, %c0_288] : memref<1520x128xf32, #tpu.memory_space<vmem>>, vector<8x32xf32>
    %cst_289 = arith.constant dense<0.000000e+00> : vector<16x32xf32>
    %638 = tpu.matmul %636, %637, %cst_289 {dimension_numbers = #tpu.dot_dimension_numbers<[1], [0], [0], [1], [0, 0, 1, 1], [], []>} : vector<16x8xf32>, vector<8x32xf32>, vector<16x32xf32> -> vector<16x32xf32>
    %639 = arith.addf %606, %638 : vector<16x32xf32>
    %c568 = arith.constant 568 : index
    %c0_290 = arith.constant 0 : index
    %640 = vector.load %arg1[%c568, %c0_290] : memref<1520x128xf32, #tpu.memory_space<vmem>>, vector<8x32xf32>
    %c600 = arith.constant 600 : index
    %c0_291 = arith.constant 0 : index
    %641 = vector.load %arg1[%c600, %c0_291] : memref<1520x128xf32, #tpu.memory_space<vmem>>, vector<8x32xf32>
    %c632 = arith.constant 632 : index
    %c0_292 = arith.constant 0 : index
    %642 = vector.load %arg1[%c632, %c0_292] : memref<1520x128xf32, #tpu.memory_space<vmem>>, vector<8x32xf32>
    %c650 = arith.constant 650 : index
    %c0_293 = arith.constant 0 : index
    %643 = vector.load %arg1[%c650, %c0_293] : memref<1520x128xf32, #tpu.memory_space<vmem>>, vector<1x8xf32>
    %c654 = arith.constant 654 : index
    %c0_294 = arith.constant 0 : index
    %644 = vector.load %arg1[%c654, %c0_294] : memref<1520x128xf32, #tpu.memory_space<vmem>>, vector<1x8xf32>
    %c658 = arith.constant 658 : index
    %c0_295 = arith.constant 0 : index
    %645 = vector.load %arg1[%c658, %c0_295] : memref<1520x128xf32, #tpu.memory_space<vmem>>, vector<1x8xf32>
    %cst_296 = arith.constant dense<0.000000e+00> : vector<16x8xf32>
    %646 = tpu.matmul %574, %640, %cst_296 {dimension_numbers = #tpu.dot_dimension_numbers<[1], [1], [0], [0], [0, 0, 1, 0], [], []>} : vector<16x32xf32>, vector<8x32xf32>, vector<16x8xf32> -> vector<16x8xf32>
    %647 = vector.broadcast %643 : vector<1x8xf32> to vector<16x8xf32>
    %648 = arith.addf %646, %647 : vector<16x8xf32>
    %cst_297 = arith.constant dense<0.000000e+00> : vector<16x8xf32>
    %649 = tpu.matmul %417, %641, %cst_297 {dimension_numbers = #tpu.dot_dimension_numbers<[1], [1], [0], [0], [0, 0, 1, 0], [], []>} : vector<16x32xf32>, vector<8x32xf32>, vector<16x8xf32> -> vector<16x8xf32>
    %650 = vector.broadcast %644 : vector<1x8xf32> to vector<16x8xf32>
    %651 = arith.addf %649, %650 : vector<16x8xf32>
    %cst_298 = arith.constant dense<0.000000e+00> : vector<16x8xf32>
    %652 = tpu.matmul %417, %642, %cst_298 {dimension_numbers = #tpu.dot_dimension_numbers<[1], [1], [0], [0], [0, 0, 1, 0], [], []>} : vector<16x32xf32>, vector<8x32xf32>, vector<16x8xf32> -> vector<16x8xf32>
    %653 = vector.broadcast %645 : vector<1x8xf32> to vector<16x8xf32>
    %654 = arith.addf %652, %653 : vector<16x8xf32>
    %cst_299 = arith.constant dense<0.000000e+00> : vector<16x16xf32>
    %655 = tpu.matmul %648, %651, %cst_299 {dimension_numbers = #tpu.dot_dimension_numbers<[1], [1], [0], [0], [0, 0, 1, 0], [], []>} : vector<16x8xf32>, vector<16x8xf32>, vector<16x16xf32> -> vector<16x16xf32>
    %cst_300 = arith.constant 0.353553385 : f32
    %656 = vector.broadcast %cst_300 : f32 to vector<16x16xf32>
    %657 = arith.mulf %655, %656 : vector<16x16xf32>
    %658 = arith.addf %657, %11 : vector<16x16xf32>
    %cst_301 = arith.constant dense<0xFF800000> : vector<16xf32>
    %659 = vector.multi_reduction <maximumf>, %658, %cst_301 [1] : vector<16x16xf32> to vector<16xf32>
    %660 = vector.shape_cast %659 : vector<16xf32> to vector<16x1xf32>
    %661 = vector.broadcast %660 : vector<16x1xf32> to vector<16x16xf32>
    %662 = arith.subf %658, %661 : vector<16x16xf32>
    %663 = math.exp %662 : vector<16x16xf32>
    %cst_302 = arith.constant dense<0.000000e+00> : vector<16xf32>
    %664 = vector.multi_reduction <add>, %663, %cst_302 [1] : vector<16x16xf32> to vector<16xf32>
    %665 = vector.shape_cast %664 : vector<16xf32> to vector<16x1xf32>
    %666 = tpu.reciprocal %665 {approx = true} : vector<16x1xf32> -> vector<16x1xf32>
    %667 = vector.broadcast %666 : vector<16x1xf32> to vector<16x16xf32>
    %668 = arith.mulf %663, %667 : vector<16x16xf32>
    %cst_303 = arith.constant dense<0.000000e+00> : vector<16x8xf32>
    %669 = tpu.matmul %668, %654, %cst_303 {dimension_numbers = #tpu.dot_dimension_numbers<[1], [0], [0], [1], [0, 0, 1, 1], [], []>} : vector<16x16xf32>, vector<16x8xf32>, vector<16x8xf32> -> vector<16x8xf32>
    %c680 = arith.constant 680 : index
    %c0_304 = arith.constant 0 : index
    %670 = vector.load %arg1[%c680, %c0_304] : memref<1520x128xf32, #tpu.memory_space<vmem>>, vector<8x32xf32>
    %cst_305 = arith.constant dense<0.000000e+00> : vector<16x32xf32>
    %671 = tpu.matmul %669, %670, %cst_305 {dimension_numbers = #tpu.dot_dimension_numbers<[1], [0], [0], [1], [0, 0, 1, 1], [], []>} : vector<16x8xf32>, vector<8x32xf32>, vector<16x32xf32> -> vector<16x32xf32>
    %672 = arith.addf %639, %671 : vector<16x32xf32>
    %c576 = arith.constant 576 : index
    %c0_306 = arith.constant 0 : index
    %673 = vector.load %arg1[%c576, %c0_306] : memref<1520x128xf32, #tpu.memory_space<vmem>>, vector<8x32xf32>
    %c608 = arith.constant 608 : index
    %c0_307 = arith.constant 0 : index
    %674 = vector.load %arg1[%c608, %c0_307] : memref<1520x128xf32, #tpu.memory_space<vmem>>, vector<8x32xf32>
    %c640 = arith.constant 640 : index
    %c0_308 = arith.constant 0 : index
    %675 = vector.load %arg1[%c640, %c0_308] : memref<1520x128xf32, #tpu.memory_space<vmem>>, vector<8x32xf32>
    %c651 = arith.constant 651 : index
    %c0_309 = arith.constant 0 : index
    %676 = vector.load %arg1[%c651, %c0_309] : memref<1520x128xf32, #tpu.memory_space<vmem>>, vector<1x8xf32>
    %c655 = arith.constant 655 : index
    %c0_310 = arith.constant 0 : index
    %677 = vector.load %arg1[%c655, %c0_310] : memref<1520x128xf32, #tpu.memory_space<vmem>>, vector<1x8xf32>
    %c659 = arith.constant 659 : index
    %c0_311 = arith.constant 0 : index
    %678 = vector.load %arg1[%c659, %c0_311] : memref<1520x128xf32, #tpu.memory_space<vmem>>, vector<1x8xf32>
    %cst_312 = arith.constant dense<0.000000e+00> : vector<16x8xf32>
    %679 = tpu.matmul %574, %673, %cst_312 {dimension_numbers = #tpu.dot_dimension_numbers<[1], [1], [0], [0], [0, 0, 1, 0], [], []>} : vector<16x32xf32>, vector<8x32xf32>, vector<16x8xf32> -> vector<16x8xf32>
    %680 = vector.broadcast %676 : vector<1x8xf32> to vector<16x8xf32>
    %681 = arith.addf %679, %680 : vector<16x8xf32>
    %cst_313 = arith.constant dense<0.000000e+00> : vector<16x8xf32>
    %682 = tpu.matmul %417, %674, %cst_313 {dimension_numbers = #tpu.dot_dimension_numbers<[1], [1], [0], [0], [0, 0, 1, 0], [], []>} : vector<16x32xf32>, vector<8x32xf32>, vector<16x8xf32> -> vector<16x8xf32>
    %683 = vector.broadcast %677 : vector<1x8xf32> to vector<16x8xf32>
    %684 = arith.addf %682, %683 : vector<16x8xf32>
    %cst_314 = arith.constant dense<0.000000e+00> : vector<16x8xf32>
    %685 = tpu.matmul %417, %675, %cst_314 {dimension_numbers = #tpu.dot_dimension_numbers<[1], [1], [0], [0], [0, 0, 1, 0], [], []>} : vector<16x32xf32>, vector<8x32xf32>, vector<16x8xf32> -> vector<16x8xf32>
    %686 = vector.broadcast %678 : vector<1x8xf32> to vector<16x8xf32>
    %687 = arith.addf %685, %686 : vector<16x8xf32>
    %cst_315 = arith.constant dense<0.000000e+00> : vector<16x16xf32>
    %688 = tpu.matmul %681, %684, %cst_315 {dimension_numbers = #tpu.dot_dimension_numbers<[1], [1], [0], [0], [0, 0, 1, 0], [], []>} : vector<16x8xf32>, vector<16x8xf32>, vector<16x16xf32> -> vector<16x16xf32>
    %cst_316 = arith.constant 0.353553385 : f32
    %689 = vector.broadcast %cst_316 : f32 to vector<16x16xf32>
    %690 = arith.mulf %688, %689 : vector<16x16xf32>
    %691 = arith.addf %690, %11 : vector<16x16xf32>
    %cst_317 = arith.constant dense<0xFF800000> : vector<16xf32>
    %692 = vector.multi_reduction <maximumf>, %691, %cst_317 [1] : vector<16x16xf32> to vector<16xf32>
    %693 = vector.shape_cast %692 : vector<16xf32> to vector<16x1xf32>
    %694 = vector.broadcast %693 : vector<16x1xf32> to vector<16x16xf32>
    %695 = arith.subf %691, %694 : vector<16x16xf32>
    %696 = math.exp %695 : vector<16x16xf32>
    %cst_318 = arith.constant dense<0.000000e+00> : vector<16xf32>
    %697 = vector.multi_reduction <add>, %696, %cst_318 [1] : vector<16x16xf32> to vector<16xf32>
    %698 = vector.shape_cast %697 : vector<16xf32> to vector<16x1xf32>
    %699 = tpu.reciprocal %698 {approx = true} : vector<16x1xf32> -> vector<16x1xf32>
    %700 = vector.broadcast %699 : vector<16x1xf32> to vector<16x16xf32>
    %701 = arith.mulf %696, %700 : vector<16x16xf32>
    %cst_319 = arith.constant dense<0.000000e+00> : vector<16x8xf32>
    %702 = tpu.matmul %701, %687, %cst_319 {dimension_numbers = #tpu.dot_dimension_numbers<[1], [0], [0], [1], [0, 0, 1, 1], [], []>} : vector<16x16xf32>, vector<16x8xf32>, vector<16x8xf32> -> vector<16x8xf32>
    %c688 = arith.constant 688 : index
    %c0_320 = arith.constant 0 : index
    %703 = vector.load %arg1[%c688, %c0_320] : memref<1520x128xf32, #tpu.memory_space<vmem>>, vector<8x32xf32>
    %cst_321 = arith.constant dense<0.000000e+00> : vector<16x32xf32>
    %704 = tpu.matmul %702, %703, %cst_321 {dimension_numbers = #tpu.dot_dimension_numbers<[1], [0], [0], [1], [0, 0, 1, 1], [], []>} : vector<16x8xf32>, vector<8x32xf32>, vector<16x32xf32> -> vector<16x32xf32>
    %705 = arith.addf %672, %704 : vector<16x32xf32>
    %c696 = arith.constant 696 : index
    %c0_322 = arith.constant 0 : index
    %706 = vector.load %arg1[%c696, %c0_322] : memref<1520x128xf32, #tpu.memory_space<vmem>>, vector<1x32xf32>
    %707 = vector.broadcast %706 : vector<1x32xf32> to vector<16x32xf32>
    %708 = arith.addf %705, %707 : vector<16x32xf32>
    %709 = arith.addf %574, %708 : vector<16x32xf32>
    %c1459 = arith.constant 1459 : index
    %c0_323 = arith.constant 0 : index
    %710 = vector.load %arg1[%c1459, %c0_323] : memref<1520x128xf32, #tpu.memory_space<vmem>>, vector<1x32xf32>
    %c1460 = arith.constant 1460 : index
    %c0_324 = arith.constant 0 : index
    %711 = vector.load %arg1[%c1460, %c0_324] : memref<1520x128xf32, #tpu.memory_space<vmem>>, vector<1x32xf32>
    %cst_325 = arith.constant dense<0.000000e+00> : vector<16xf32>
    %712 = vector.multi_reduction <add>, %709, %cst_325 [1] : vector<16x32xf32> to vector<16xf32>
    %713 = vector.shape_cast %712 : vector<16xf32> to vector<16x1xf32>
    %cst_326 = arith.constant 3.200000e+01 : f32
    %714 = vector.broadcast %cst_326 : f32 to vector<16x1xf32>
    %715 = arith.divf %713, %714 : vector<16x1xf32>
    %716 = vector.broadcast %715 : vector<16x1xf32> to vector<16x32xf32>
    %717 = arith.subf %709, %716 : vector<16x32xf32>
    %718 = arith.mulf %717, %717 : vector<16x32xf32>
    %cst_327 = arith.constant dense<0.000000e+00> : vector<16xf32>
    %719 = vector.multi_reduction <add>, %718, %cst_327 [1] : vector<16x32xf32> to vector<16xf32>
    %720 = vector.shape_cast %719 : vector<16xf32> to vector<16x1xf32>
    %cst_328 = arith.constant 3.200000e+01 : f32
    %721 = vector.broadcast %cst_328 : f32 to vector<16x1xf32>
    %722 = arith.divf %720, %721 : vector<16x1xf32>
    %cst_329 = arith.constant 9.99999974E-6 : f32
    %723 = vector.broadcast %cst_329 : f32 to vector<16x1xf32>
    %724 = arith.addf %722, %723 : vector<16x1xf32>
    %725 = math.rsqrt %724 : vector<16x1xf32>
    %726 = vector.broadcast %725 : vector<16x1xf32> to vector<16x32xf32>
    %727 = arith.mulf %717, %726 : vector<16x32xf32>
    %728 = vector.broadcast %710 : vector<1x32xf32> to vector<16x32xf32>
    %729 = arith.mulf %727, %728 : vector<16x32xf32>
    %730 = vector.broadcast %711 : vector<1x32xf32> to vector<16x32xf32>
    %731 = arith.addf %729, %730 : vector<16x32xf32>
    %c1232 = arith.constant 1232 : index
    %c0_330 = arith.constant 0 : index
    %732 = vector.load %arg1[%c1232, %c0_330] : memref<1520x128xf32, #tpu.memory_space<vmem>>, vector<32x64xf32>
    %c1264 = arith.constant 1264 : index
    %c0_331 = arith.constant 0 : index
    %733 = vector.load %arg1[%c1264, %c0_331] : memref<1520x128xf32, #tpu.memory_space<vmem>>, vector<1x64xf32>
    %c1272 = arith.constant 1272 : index
    %c0_332 = arith.constant 0 : index
    %734 = vector.load %arg1[%c1272, %c0_332] : memref<1520x128xf32, #tpu.memory_space<vmem>>, vector<64x32xf32>
    %c1336 = arith.constant 1336 : index
    %c0_333 = arith.constant 0 : index
    %735 = vector.load %arg1[%c1336, %c0_333] : memref<1520x128xf32, #tpu.memory_space<vmem>>, vector<1x32xf32>
    %cst_334 = arith.constant dense<0.000000e+00> : vector<16x64xf32>
    %736 = tpu.matmul %731, %732, %cst_334 {dimension_numbers = #tpu.dot_dimension_numbers<[1], [0], [0], [1], [0, 0, 1, 1], [], []>} : vector<16x32xf32>, vector<32x64xf32>, vector<16x64xf32> -> vector<16x64xf32>
    %737 = vector.broadcast %733 : vector<1x64xf32> to vector<16x64xf32>
    %738 = arith.addf %736, %737 : vector<16x64xf32>
    %cst_335 = arith.constant 0.000000e+00 : f32
    %739 = vector.broadcast %cst_335 : f32 to vector<16x64xf32>
    %740 = arith.maximumf %738, %739 : vector<16x64xf32>
    %cst_336 = arith.constant dense<0.000000e+00> : vector<16x32xf32>
    %741 = tpu.matmul %740, %734, %cst_336 {dimension_numbers = #tpu.dot_dimension_numbers<[1], [0], [0], [1], [0, 0, 1, 1], [], []>} : vector<16x64xf32>, vector<64x32xf32>, vector<16x32xf32> -> vector<16x32xf32>
    %742 = vector.broadcast %735 : vector<1x32xf32> to vector<16x32xf32>
    %743 = arith.addf %741, %742 : vector<16x32xf32>
    %744 = arith.addf %731, %743 : vector<16x32xf32>
    %c1461 = arith.constant 1461 : index
    %c0_337 = arith.constant 0 : index
    %745 = vector.load %arg1[%c1461, %c0_337] : memref<1520x128xf32, #tpu.memory_space<vmem>>, vector<1x32xf32>
    %c1462 = arith.constant 1462 : index
    %c0_338 = arith.constant 0 : index
    %746 = vector.load %arg1[%c1462, %c0_338] : memref<1520x128xf32, #tpu.memory_space<vmem>>, vector<1x32xf32>
    %cst_339 = arith.constant dense<0.000000e+00> : vector<16xf32>
    %747 = vector.multi_reduction <add>, %744, %cst_339 [1] : vector<16x32xf32> to vector<16xf32>
    %748 = vector.shape_cast %747 : vector<16xf32> to vector<16x1xf32>
    %cst_340 = arith.constant 3.200000e+01 : f32
    %749 = vector.broadcast %cst_340 : f32 to vector<16x1xf32>
    %750 = arith.divf %748, %749 : vector<16x1xf32>
    %751 = vector.broadcast %750 : vector<16x1xf32> to vector<16x32xf32>
    %752 = arith.subf %744, %751 : vector<16x32xf32>
    %753 = arith.mulf %752, %752 : vector<16x32xf32>
    %cst_341 = arith.constant dense<0.000000e+00> : vector<16xf32>
    %754 = vector.multi_reduction <add>, %753, %cst_341 [1] : vector<16x32xf32> to vector<16xf32>
    %755 = vector.shape_cast %754 : vector<16xf32> to vector<16x1xf32>
    %cst_342 = arith.constant 3.200000e+01 : f32
    %756 = vector.broadcast %cst_342 : f32 to vector<16x1xf32>
    %757 = arith.divf %755, %756 : vector<16x1xf32>
    %cst_343 = arith.constant 9.99999974E-6 : f32
    %758 = vector.broadcast %cst_343 : f32 to vector<16x1xf32>
    %759 = arith.addf %757, %758 : vector<16x1xf32>
    %760 = math.rsqrt %759 : vector<16x1xf32>
    %761 = vector.broadcast %760 : vector<16x1xf32> to vector<16x32xf32>
    %762 = arith.mulf %752, %761 : vector<16x32xf32>
    %763 = vector.broadcast %745 : vector<1x32xf32> to vector<16x32xf32>
    %764 = arith.mulf %762, %763 : vector<16x32xf32>
    %765 = vector.broadcast %746 : vector<1x32xf32> to vector<16x32xf32>
    %766 = arith.addf %764, %765 : vector<16x32xf32>
    %c704 = arith.constant 704 : index
    %c0_344 = arith.constant 0 : index
    %767 = vector.load %arg1[%c704, %c0_344] : memref<1520x128xf32, #tpu.memory_space<vmem>>, vector<8x32xf32>
    %c736 = arith.constant 736 : index
    %c0_345 = arith.constant 0 : index
    %768 = vector.load %arg1[%c736, %c0_345] : memref<1520x128xf32, #tpu.memory_space<vmem>>, vector<8x32xf32>
    %c768 = arith.constant 768 : index
    %c0_346 = arith.constant 0 : index
    %769 = vector.load %arg1[%c768, %c0_346] : memref<1520x128xf32, #tpu.memory_space<vmem>>, vector<8x32xf32>
    %c800 = arith.constant 800 : index
    %c0_347 = arith.constant 0 : index
    %770 = vector.load %arg1[%c800, %c0_347] : memref<1520x128xf32, #tpu.memory_space<vmem>>, vector<1x8xf32>
    %c804 = arith.constant 804 : index
    %c0_348 = arith.constant 0 : index
    %771 = vector.load %arg1[%c804, %c0_348] : memref<1520x128xf32, #tpu.memory_space<vmem>>, vector<1x8xf32>
    %c808 = arith.constant 808 : index
    %c0_349 = arith.constant 0 : index
    %772 = vector.load %arg1[%c808, %c0_349] : memref<1520x128xf32, #tpu.memory_space<vmem>>, vector<1x8xf32>
    %cst_350 = arith.constant dense<0.000000e+00> : vector<16x8xf32>
    %773 = tpu.matmul %766, %767, %cst_350 {dimension_numbers = #tpu.dot_dimension_numbers<[1], [1], [0], [0], [0, 0, 1, 0], [], []>} : vector<16x32xf32>, vector<8x32xf32>, vector<16x8xf32> -> vector<16x8xf32>
    %774 = vector.broadcast %770 : vector<1x8xf32> to vector<16x8xf32>
    %775 = arith.addf %773, %774 : vector<16x8xf32>
    %cst_351 = arith.constant dense<0.000000e+00> : vector<16x8xf32>
    %776 = tpu.matmul %766, %768, %cst_351 {dimension_numbers = #tpu.dot_dimension_numbers<[1], [1], [0], [0], [0, 0, 1, 0], [], []>} : vector<16x32xf32>, vector<8x32xf32>, vector<16x8xf32> -> vector<16x8xf32>
    %777 = vector.broadcast %771 : vector<1x8xf32> to vector<16x8xf32>
    %778 = arith.addf %776, %777 : vector<16x8xf32>
    %cst_352 = arith.constant dense<0.000000e+00> : vector<16x8xf32>
    %779 = tpu.matmul %766, %769, %cst_352 {dimension_numbers = #tpu.dot_dimension_numbers<[1], [1], [0], [0], [0, 0, 1, 0], [], []>} : vector<16x32xf32>, vector<8x32xf32>, vector<16x8xf32> -> vector<16x8xf32>
    %780 = vector.broadcast %772 : vector<1x8xf32> to vector<16x8xf32>
    %781 = arith.addf %779, %780 : vector<16x8xf32>
    %cst_353 = arith.constant dense<0.000000e+00> : vector<16x16xf32>
    %782 = tpu.matmul %775, %778, %cst_353 {dimension_numbers = #tpu.dot_dimension_numbers<[1], [1], [0], [0], [0, 0, 1, 0], [], []>} : vector<16x8xf32>, vector<16x8xf32>, vector<16x16xf32> -> vector<16x16xf32>
    %cst_354 = arith.constant 0.353553385 : f32
    %783 = vector.broadcast %cst_354 : f32 to vector<16x16xf32>
    %784 = arith.mulf %782, %783 : vector<16x16xf32>
    %785 = arith.addf %784, %11 : vector<16x16xf32>
    %cst_355 = arith.constant dense<0xFF800000> : vector<16xf32>
    %786 = vector.multi_reduction <maximumf>, %785, %cst_355 [1] : vector<16x16xf32> to vector<16xf32>
    %787 = vector.shape_cast %786 : vector<16xf32> to vector<16x1xf32>
    %788 = vector.broadcast %787 : vector<16x1xf32> to vector<16x16xf32>
    %789 = arith.subf %785, %788 : vector<16x16xf32>
    %790 = math.exp %789 : vector<16x16xf32>
    %cst_356 = arith.constant dense<0.000000e+00> : vector<16xf32>
    %791 = vector.multi_reduction <add>, %790, %cst_356 [1] : vector<16x16xf32> to vector<16xf32>
    %792 = vector.shape_cast %791 : vector<16xf32> to vector<16x1xf32>
    %793 = tpu.reciprocal %792 {approx = true} : vector<16x1xf32> -> vector<16x1xf32>
    %794 = vector.broadcast %793 : vector<16x1xf32> to vector<16x16xf32>
    %795 = arith.mulf %790, %794 : vector<16x16xf32>
    %cst_357 = arith.constant dense<0.000000e+00> : vector<16x8xf32>
    %796 = tpu.matmul %795, %781, %cst_357 {dimension_numbers = #tpu.dot_dimension_numbers<[1], [0], [0], [1], [0, 0, 1, 1], [], []>} : vector<16x16xf32>, vector<16x8xf32>, vector<16x8xf32> -> vector<16x8xf32>
    %c816 = arith.constant 816 : index
    %c0_358 = arith.constant 0 : index
    %797 = vector.load %arg1[%c816, %c0_358] : memref<1520x128xf32, #tpu.memory_space<vmem>>, vector<8x32xf32>
    %cst_359 = arith.constant dense<0.000000e+00> : vector<16x32xf32>
    %798 = tpu.matmul %796, %797, %cst_359 {dimension_numbers = #tpu.dot_dimension_numbers<[1], [0], [0], [1], [0, 0, 1, 1], [], []>} : vector<16x8xf32>, vector<8x32xf32>, vector<16x32xf32> -> vector<16x32xf32>
    %c712 = arith.constant 712 : index
    %c0_360 = arith.constant 0 : index
    %799 = vector.load %arg1[%c712, %c0_360] : memref<1520x128xf32, #tpu.memory_space<vmem>>, vector<8x32xf32>
    %c744 = arith.constant 744 : index
    %c0_361 = arith.constant 0 : index
    %800 = vector.load %arg1[%c744, %c0_361] : memref<1520x128xf32, #tpu.memory_space<vmem>>, vector<8x32xf32>
    %c776 = arith.constant 776 : index
    %c0_362 = arith.constant 0 : index
    %801 = vector.load %arg1[%c776, %c0_362] : memref<1520x128xf32, #tpu.memory_space<vmem>>, vector<8x32xf32>
    %c801 = arith.constant 801 : index
    %c0_363 = arith.constant 0 : index
    %802 = vector.load %arg1[%c801, %c0_363] : memref<1520x128xf32, #tpu.memory_space<vmem>>, vector<1x8xf32>
    %c805 = arith.constant 805 : index
    %c0_364 = arith.constant 0 : index
    %803 = vector.load %arg1[%c805, %c0_364] : memref<1520x128xf32, #tpu.memory_space<vmem>>, vector<1x8xf32>
    %c809 = arith.constant 809 : index
    %c0_365 = arith.constant 0 : index
    %804 = vector.load %arg1[%c809, %c0_365] : memref<1520x128xf32, #tpu.memory_space<vmem>>, vector<1x8xf32>
    %cst_366 = arith.constant dense<0.000000e+00> : vector<16x8xf32>
    %805 = tpu.matmul %766, %799, %cst_366 {dimension_numbers = #tpu.dot_dimension_numbers<[1], [1], [0], [0], [0, 0, 1, 0], [], []>} : vector<16x32xf32>, vector<8x32xf32>, vector<16x8xf32> -> vector<16x8xf32>
    %806 = vector.broadcast %802 : vector<1x8xf32> to vector<16x8xf32>
    %807 = arith.addf %805, %806 : vector<16x8xf32>
    %cst_367 = arith.constant dense<0.000000e+00> : vector<16x8xf32>
    %808 = tpu.matmul %766, %800, %cst_367 {dimension_numbers = #tpu.dot_dimension_numbers<[1], [1], [0], [0], [0, 0, 1, 0], [], []>} : vector<16x32xf32>, vector<8x32xf32>, vector<16x8xf32> -> vector<16x8xf32>
    %809 = vector.broadcast %803 : vector<1x8xf32> to vector<16x8xf32>
    %810 = arith.addf %808, %809 : vector<16x8xf32>
    %cst_368 = arith.constant dense<0.000000e+00> : vector<16x8xf32>
    %811 = tpu.matmul %766, %801, %cst_368 {dimension_numbers = #tpu.dot_dimension_numbers<[1], [1], [0], [0], [0, 0, 1, 0], [], []>} : vector<16x32xf32>, vector<8x32xf32>, vector<16x8xf32> -> vector<16x8xf32>
    %812 = vector.broadcast %804 : vector<1x8xf32> to vector<16x8xf32>
    %813 = arith.addf %811, %812 : vector<16x8xf32>
    %cst_369 = arith.constant dense<0.000000e+00> : vector<16x16xf32>
    %814 = tpu.matmul %807, %810, %cst_369 {dimension_numbers = #tpu.dot_dimension_numbers<[1], [1], [0], [0], [0, 0, 1, 0], [], []>} : vector<16x8xf32>, vector<16x8xf32>, vector<16x16xf32> -> vector<16x16xf32>
    %cst_370 = arith.constant 0.353553385 : f32
    %815 = vector.broadcast %cst_370 : f32 to vector<16x16xf32>
    %816 = arith.mulf %814, %815 : vector<16x16xf32>
    %817 = arith.addf %816, %11 : vector<16x16xf32>
    %cst_371 = arith.constant dense<0xFF800000> : vector<16xf32>
    %818 = vector.multi_reduction <maximumf>, %817, %cst_371 [1] : vector<16x16xf32> to vector<16xf32>
    %819 = vector.shape_cast %818 : vector<16xf32> to vector<16x1xf32>
    %820 = vector.broadcast %819 : vector<16x1xf32> to vector<16x16xf32>
    %821 = arith.subf %817, %820 : vector<16x16xf32>
    %822 = math.exp %821 : vector<16x16xf32>
    %cst_372 = arith.constant dense<0.000000e+00> : vector<16xf32>
    %823 = vector.multi_reduction <add>, %822, %cst_372 [1] : vector<16x16xf32> to vector<16xf32>
    %824 = vector.shape_cast %823 : vector<16xf32> to vector<16x1xf32>
    %825 = tpu.reciprocal %824 {approx = true} : vector<16x1xf32> -> vector<16x1xf32>
    %826 = vector.broadcast %825 : vector<16x1xf32> to vector<16x16xf32>
    %827 = arith.mulf %822, %826 : vector<16x16xf32>
    %cst_373 = arith.constant dense<0.000000e+00> : vector<16x8xf32>
    %828 = tpu.matmul %827, %813, %cst_373 {dimension_numbers = #tpu.dot_dimension_numbers<[1], [0], [0], [1], [0, 0, 1, 1], [], []>} : vector<16x16xf32>, vector<16x8xf32>, vector<16x8xf32> -> vector<16x8xf32>
    %c824 = arith.constant 824 : index
    %c0_374 = arith.constant 0 : index
    %829 = vector.load %arg1[%c824, %c0_374] : memref<1520x128xf32, #tpu.memory_space<vmem>>, vector<8x32xf32>
    %cst_375 = arith.constant dense<0.000000e+00> : vector<16x32xf32>
    %830 = tpu.matmul %828, %829, %cst_375 {dimension_numbers = #tpu.dot_dimension_numbers<[1], [0], [0], [1], [0, 0, 1, 1], [], []>} : vector<16x8xf32>, vector<8x32xf32>, vector<16x32xf32> -> vector<16x32xf32>
    %831 = arith.addf %798, %830 : vector<16x32xf32>
    %c720 = arith.constant 720 : index
    %c0_376 = arith.constant 0 : index
    %832 = vector.load %arg1[%c720, %c0_376] : memref<1520x128xf32, #tpu.memory_space<vmem>>, vector<8x32xf32>
    %c752 = arith.constant 752 : index
    %c0_377 = arith.constant 0 : index
    %833 = vector.load %arg1[%c752, %c0_377] : memref<1520x128xf32, #tpu.memory_space<vmem>>, vector<8x32xf32>
    %c784 = arith.constant 784 : index
    %c0_378 = arith.constant 0 : index
    %834 = vector.load %arg1[%c784, %c0_378] : memref<1520x128xf32, #tpu.memory_space<vmem>>, vector<8x32xf32>
    %c802 = arith.constant 802 : index
    %c0_379 = arith.constant 0 : index
    %835 = vector.load %arg1[%c802, %c0_379] : memref<1520x128xf32, #tpu.memory_space<vmem>>, vector<1x8xf32>
    %c806 = arith.constant 806 : index
    %c0_380 = arith.constant 0 : index
    %836 = vector.load %arg1[%c806, %c0_380] : memref<1520x128xf32, #tpu.memory_space<vmem>>, vector<1x8xf32>
    %c810 = arith.constant 810 : index
    %c0_381 = arith.constant 0 : index
    %837 = vector.load %arg1[%c810, %c0_381] : memref<1520x128xf32, #tpu.memory_space<vmem>>, vector<1x8xf32>
    %cst_382 = arith.constant dense<0.000000e+00> : vector<16x8xf32>
    %838 = tpu.matmul %766, %832, %cst_382 {dimension_numbers = #tpu.dot_dimension_numbers<[1], [1], [0], [0], [0, 0, 1, 0], [], []>} : vector<16x32xf32>, vector<8x32xf32>, vector<16x8xf32> -> vector<16x8xf32>
    %839 = vector.broadcast %835 : vector<1x8xf32> to vector<16x8xf32>
    %840 = arith.addf %838, %839 : vector<16x8xf32>
    %cst_383 = arith.constant dense<0.000000e+00> : vector<16x8xf32>
    %841 = tpu.matmul %766, %833, %cst_383 {dimension_numbers = #tpu.dot_dimension_numbers<[1], [1], [0], [0], [0, 0, 1, 0], [], []>} : vector<16x32xf32>, vector<8x32xf32>, vector<16x8xf32> -> vector<16x8xf32>
    %842 = vector.broadcast %836 : vector<1x8xf32> to vector<16x8xf32>
    %843 = arith.addf %841, %842 : vector<16x8xf32>
    %cst_384 = arith.constant dense<0.000000e+00> : vector<16x8xf32>
    %844 = tpu.matmul %766, %834, %cst_384 {dimension_numbers = #tpu.dot_dimension_numbers<[1], [1], [0], [0], [0, 0, 1, 0], [], []>} : vector<16x32xf32>, vector<8x32xf32>, vector<16x8xf32> -> vector<16x8xf32>
    %845 = vector.broadcast %837 : vector<1x8xf32> to vector<16x8xf32>
    %846 = arith.addf %844, %845 : vector<16x8xf32>
    %cst_385 = arith.constant dense<0.000000e+00> : vector<16x16xf32>
    %847 = tpu.matmul %840, %843, %cst_385 {dimension_numbers = #tpu.dot_dimension_numbers<[1], [1], [0], [0], [0, 0, 1, 0], [], []>} : vector<16x8xf32>, vector<16x8xf32>, vector<16x16xf32> -> vector<16x16xf32>
    %cst_386 = arith.constant 0.353553385 : f32
    %848 = vector.broadcast %cst_386 : f32 to vector<16x16xf32>
    %849 = arith.mulf %847, %848 : vector<16x16xf32>
    %850 = arith.addf %849, %11 : vector<16x16xf32>
    %cst_387 = arith.constant dense<0xFF800000> : vector<16xf32>
    %851 = vector.multi_reduction <maximumf>, %850, %cst_387 [1] : vector<16x16xf32> to vector<16xf32>
    %852 = vector.shape_cast %851 : vector<16xf32> to vector<16x1xf32>
    %853 = vector.broadcast %852 : vector<16x1xf32> to vector<16x16xf32>
    %854 = arith.subf %850, %853 : vector<16x16xf32>
    %855 = math.exp %854 : vector<16x16xf32>
    %cst_388 = arith.constant dense<0.000000e+00> : vector<16xf32>
    %856 = vector.multi_reduction <add>, %855, %cst_388 [1] : vector<16x16xf32> to vector<16xf32>
    %857 = vector.shape_cast %856 : vector<16xf32> to vector<16x1xf32>
    %858 = tpu.reciprocal %857 {approx = true} : vector<16x1xf32> -> vector<16x1xf32>
    %859 = vector.broadcast %858 : vector<16x1xf32> to vector<16x16xf32>
    %860 = arith.mulf %855, %859 : vector<16x16xf32>
    %cst_389 = arith.constant dense<0.000000e+00> : vector<16x8xf32>
    %861 = tpu.matmul %860, %846, %cst_389 {dimension_numbers = #tpu.dot_dimension_numbers<[1], [0], [0], [1], [0, 0, 1, 1], [], []>} : vector<16x16xf32>, vector<16x8xf32>, vector<16x8xf32> -> vector<16x8xf32>
    %c832 = arith.constant 832 : index
    %c0_390 = arith.constant 0 : index
    %862 = vector.load %arg1[%c832, %c0_390] : memref<1520x128xf32, #tpu.memory_space<vmem>>, vector<8x32xf32>
    %cst_391 = arith.constant dense<0.000000e+00> : vector<16x32xf32>
    %863 = tpu.matmul %861, %862, %cst_391 {dimension_numbers = #tpu.dot_dimension_numbers<[1], [0], [0], [1], [0, 0, 1, 1], [], []>} : vector<16x8xf32>, vector<8x32xf32>, vector<16x32xf32> -> vector<16x32xf32>
    %864 = arith.addf %831, %863 : vector<16x32xf32>
    %c728 = arith.constant 728 : index
    %c0_392 = arith.constant 0 : index
    %865 = vector.load %arg1[%c728, %c0_392] : memref<1520x128xf32, #tpu.memory_space<vmem>>, vector<8x32xf32>
    %c760 = arith.constant 760 : index
    %c0_393 = arith.constant 0 : index
    %866 = vector.load %arg1[%c760, %c0_393] : memref<1520x128xf32, #tpu.memory_space<vmem>>, vector<8x32xf32>
    %c792 = arith.constant 792 : index
    %c0_394 = arith.constant 0 : index
    %867 = vector.load %arg1[%c792, %c0_394] : memref<1520x128xf32, #tpu.memory_space<vmem>>, vector<8x32xf32>
    %c803 = arith.constant 803 : index
    %c0_395 = arith.constant 0 : index
    %868 = vector.load %arg1[%c803, %c0_395] : memref<1520x128xf32, #tpu.memory_space<vmem>>, vector<1x8xf32>
    %c807 = arith.constant 807 : index
    %c0_396 = arith.constant 0 : index
    %869 = vector.load %arg1[%c807, %c0_396] : memref<1520x128xf32, #tpu.memory_space<vmem>>, vector<1x8xf32>
    %c811 = arith.constant 811 : index
    %c0_397 = arith.constant 0 : index
    %870 = vector.load %arg1[%c811, %c0_397] : memref<1520x128xf32, #tpu.memory_space<vmem>>, vector<1x8xf32>
    %cst_398 = arith.constant dense<0.000000e+00> : vector<16x8xf32>
    %871 = tpu.matmul %766, %865, %cst_398 {dimension_numbers = #tpu.dot_dimension_numbers<[1], [1], [0], [0], [0, 0, 1, 0], [], []>} : vector<16x32xf32>, vector<8x32xf32>, vector<16x8xf32> -> vector<16x8xf32>
    %872 = vector.broadcast %868 : vector<1x8xf32> to vector<16x8xf32>
    %873 = arith.addf %871, %872 : vector<16x8xf32>
    %cst_399 = arith.constant dense<0.000000e+00> : vector<16x8xf32>
    %874 = tpu.matmul %766, %866, %cst_399 {dimension_numbers = #tpu.dot_dimension_numbers<[1], [1], [0], [0], [0, 0, 1, 0], [], []>} : vector<16x32xf32>, vector<8x32xf32>, vector<16x8xf32> -> vector<16x8xf32>
    %875 = vector.broadcast %869 : vector<1x8xf32> to vector<16x8xf32>
    %876 = arith.addf %874, %875 : vector<16x8xf32>
    %cst_400 = arith.constant dense<0.000000e+00> : vector<16x8xf32>
    %877 = tpu.matmul %766, %867, %cst_400 {dimension_numbers = #tpu.dot_dimension_numbers<[1], [1], [0], [0], [0, 0, 1, 0], [], []>} : vector<16x32xf32>, vector<8x32xf32>, vector<16x8xf32> -> vector<16x8xf32>
    %878 = vector.broadcast %870 : vector<1x8xf32> to vector<16x8xf32>
    %879 = arith.addf %877, %878 : vector<16x8xf32>
    %cst_401 = arith.constant dense<0.000000e+00> : vector<16x16xf32>
    %880 = tpu.matmul %873, %876, %cst_401 {dimension_numbers = #tpu.dot_dimension_numbers<[1], [1], [0], [0], [0, 0, 1, 0], [], []>} : vector<16x8xf32>, vector<16x8xf32>, vector<16x16xf32> -> vector<16x16xf32>
    %cst_402 = arith.constant 0.353553385 : f32
    %881 = vector.broadcast %cst_402 : f32 to vector<16x16xf32>
    %882 = arith.mulf %880, %881 : vector<16x16xf32>
    %883 = arith.addf %882, %11 : vector<16x16xf32>
    %cst_403 = arith.constant dense<0xFF800000> : vector<16xf32>
    %884 = vector.multi_reduction <maximumf>, %883, %cst_403 [1] : vector<16x16xf32> to vector<16xf32>
    %885 = vector.shape_cast %884 : vector<16xf32> to vector<16x1xf32>
    %886 = vector.broadcast %885 : vector<16x1xf32> to vector<16x16xf32>
    %887 = arith.subf %883, %886 : vector<16x16xf32>
    %888 = math.exp %887 : vector<16x16xf32>
    %cst_404 = arith.constant dense<0.000000e+00> : vector<16xf32>
    %889 = vector.multi_reduction <add>, %888, %cst_404 [1] : vector<16x16xf32> to vector<16xf32>
    %890 = vector.shape_cast %889 : vector<16xf32> to vector<16x1xf32>
    %891 = tpu.reciprocal %890 {approx = true} : vector<16x1xf32> -> vector<16x1xf32>
    %892 = vector.broadcast %891 : vector<16x1xf32> to vector<16x16xf32>
    %893 = arith.mulf %888, %892 : vector<16x16xf32>
    %cst_405 = arith.constant dense<0.000000e+00> : vector<16x8xf32>
    %894 = tpu.matmul %893, %879, %cst_405 {dimension_numbers = #tpu.dot_dimension_numbers<[1], [0], [0], [1], [0, 0, 1, 1], [], []>} : vector<16x16xf32>, vector<16x8xf32>, vector<16x8xf32> -> vector<16x8xf32>
    %c840 = arith.constant 840 : index
    %c0_406 = arith.constant 0 : index
    %895 = vector.load %arg1[%c840, %c0_406] : memref<1520x128xf32, #tpu.memory_space<vmem>>, vector<8x32xf32>
    %cst_407 = arith.constant dense<0.000000e+00> : vector<16x32xf32>
    %896 = tpu.matmul %894, %895, %cst_407 {dimension_numbers = #tpu.dot_dimension_numbers<[1], [0], [0], [1], [0, 0, 1, 1], [], []>} : vector<16x8xf32>, vector<8x32xf32>, vector<16x32xf32> -> vector<16x32xf32>
    %897 = arith.addf %864, %896 : vector<16x32xf32>
    %c848 = arith.constant 848 : index
    %c0_408 = arith.constant 0 : index
    %898 = vector.load %arg1[%c848, %c0_408] : memref<1520x128xf32, #tpu.memory_space<vmem>>, vector<1x32xf32>
    %899 = vector.broadcast %898 : vector<1x32xf32> to vector<16x32xf32>
    %900 = arith.addf %897, %899 : vector<16x32xf32>
    %901 = arith.addf %766, %900 : vector<16x32xf32>
    %c1463 = arith.constant 1463 : index
    %c0_409 = arith.constant 0 : index
    %902 = vector.load %arg1[%c1463, %c0_409] : memref<1520x128xf32, #tpu.memory_space<vmem>>, vector<1x32xf32>
    %c1464 = arith.constant 1464 : index
    %c0_410 = arith.constant 0 : index
    %903 = vector.load %arg1[%c1464, %c0_410] : memref<1520x128xf32, #tpu.memory_space<vmem>>, vector<1x32xf32>
    %cst_411 = arith.constant dense<0.000000e+00> : vector<16xf32>
    %904 = vector.multi_reduction <add>, %901, %cst_411 [1] : vector<16x32xf32> to vector<16xf32>
    %905 = vector.shape_cast %904 : vector<16xf32> to vector<16x1xf32>
    %cst_412 = arith.constant 3.200000e+01 : f32
    %906 = vector.broadcast %cst_412 : f32 to vector<16x1xf32>
    %907 = arith.divf %905, %906 : vector<16x1xf32>
    %908 = vector.broadcast %907 : vector<16x1xf32> to vector<16x32xf32>
    %909 = arith.subf %901, %908 : vector<16x32xf32>
    %910 = arith.mulf %909, %909 : vector<16x32xf32>
    %cst_413 = arith.constant dense<0.000000e+00> : vector<16xf32>
    %911 = vector.multi_reduction <add>, %910, %cst_413 [1] : vector<16x32xf32> to vector<16xf32>
    %912 = vector.shape_cast %911 : vector<16xf32> to vector<16x1xf32>
    %cst_414 = arith.constant 3.200000e+01 : f32
    %913 = vector.broadcast %cst_414 : f32 to vector<16x1xf32>
    %914 = arith.divf %912, %913 : vector<16x1xf32>
    %cst_415 = arith.constant 9.99999974E-6 : f32
    %915 = vector.broadcast %cst_415 : f32 to vector<16x1xf32>
    %916 = arith.addf %914, %915 : vector<16x1xf32>
    %917 = math.rsqrt %916 : vector<16x1xf32>
    %918 = vector.broadcast %917 : vector<16x1xf32> to vector<16x32xf32>
    %919 = arith.mulf %909, %918 : vector<16x32xf32>
    %920 = vector.broadcast %902 : vector<1x32xf32> to vector<16x32xf32>
    %921 = arith.mulf %919, %920 : vector<16x32xf32>
    %922 = vector.broadcast %903 : vector<1x32xf32> to vector<16x32xf32>
    %923 = arith.addf %921, %922 : vector<16x32xf32>
    %c856 = arith.constant 856 : index
    %c0_416 = arith.constant 0 : index
    %924 = vector.load %arg1[%c856, %c0_416] : memref<1520x128xf32, #tpu.memory_space<vmem>>, vector<8x32xf32>
    %c888 = arith.constant 888 : index
    %c0_417 = arith.constant 0 : index
    %925 = vector.load %arg1[%c888, %c0_417] : memref<1520x128xf32, #tpu.memory_space<vmem>>, vector<8x32xf32>
    %c920 = arith.constant 920 : index
    %c0_418 = arith.constant 0 : index
    %926 = vector.load %arg1[%c920, %c0_418] : memref<1520x128xf32, #tpu.memory_space<vmem>>, vector<8x32xf32>
    %c952 = arith.constant 952 : index
    %c0_419 = arith.constant 0 : index
    %927 = vector.load %arg1[%c952, %c0_419] : memref<1520x128xf32, #tpu.memory_space<vmem>>, vector<1x8xf32>
    %c956 = arith.constant 956 : index
    %c0_420 = arith.constant 0 : index
    %928 = vector.load %arg1[%c956, %c0_420] : memref<1520x128xf32, #tpu.memory_space<vmem>>, vector<1x8xf32>
    %c960 = arith.constant 960 : index
    %c0_421 = arith.constant 0 : index
    %929 = vector.load %arg1[%c960, %c0_421] : memref<1520x128xf32, #tpu.memory_space<vmem>>, vector<1x8xf32>
    %cst_422 = arith.constant dense<0.000000e+00> : vector<16x8xf32>
    %930 = tpu.matmul %923, %924, %cst_422 {dimension_numbers = #tpu.dot_dimension_numbers<[1], [1], [0], [0], [0, 0, 1, 0], [], []>} : vector<16x32xf32>, vector<8x32xf32>, vector<16x8xf32> -> vector<16x8xf32>
    %931 = vector.broadcast %927 : vector<1x8xf32> to vector<16x8xf32>
    %932 = arith.addf %930, %931 : vector<16x8xf32>
    %cst_423 = arith.constant dense<0.000000e+00> : vector<16x8xf32>
    %933 = tpu.matmul %417, %925, %cst_423 {dimension_numbers = #tpu.dot_dimension_numbers<[1], [1], [0], [0], [0, 0, 1, 0], [], []>} : vector<16x32xf32>, vector<8x32xf32>, vector<16x8xf32> -> vector<16x8xf32>
    %934 = vector.broadcast %928 : vector<1x8xf32> to vector<16x8xf32>
    %935 = arith.addf %933, %934 : vector<16x8xf32>
    %cst_424 = arith.constant dense<0.000000e+00> : vector<16x8xf32>
    %936 = tpu.matmul %417, %926, %cst_424 {dimension_numbers = #tpu.dot_dimension_numbers<[1], [1], [0], [0], [0, 0, 1, 0], [], []>} : vector<16x32xf32>, vector<8x32xf32>, vector<16x8xf32> -> vector<16x8xf32>
    %937 = vector.broadcast %929 : vector<1x8xf32> to vector<16x8xf32>
    %938 = arith.addf %936, %937 : vector<16x8xf32>
    %cst_425 = arith.constant dense<0.000000e+00> : vector<16x16xf32>
    %939 = tpu.matmul %932, %935, %cst_425 {dimension_numbers = #tpu.dot_dimension_numbers<[1], [1], [0], [0], [0, 0, 1, 0], [], []>} : vector<16x8xf32>, vector<16x8xf32>, vector<16x16xf32> -> vector<16x16xf32>
    %cst_426 = arith.constant 0.353553385 : f32
    %940 = vector.broadcast %cst_426 : f32 to vector<16x16xf32>
    %941 = arith.mulf %939, %940 : vector<16x16xf32>
    %942 = arith.addf %941, %11 : vector<16x16xf32>
    %cst_427 = arith.constant dense<0xFF800000> : vector<16xf32>
    %943 = vector.multi_reduction <maximumf>, %942, %cst_427 [1] : vector<16x16xf32> to vector<16xf32>
    %944 = vector.shape_cast %943 : vector<16xf32> to vector<16x1xf32>
    %945 = vector.broadcast %944 : vector<16x1xf32> to vector<16x16xf32>
    %946 = arith.subf %942, %945 : vector<16x16xf32>
    %947 = math.exp %946 : vector<16x16xf32>
    %cst_428 = arith.constant dense<0.000000e+00> : vector<16xf32>
    %948 = vector.multi_reduction <add>, %947, %cst_428 [1] : vector<16x16xf32> to vector<16xf32>
    %949 = vector.shape_cast %948 : vector<16xf32> to vector<16x1xf32>
    %950 = tpu.reciprocal %949 {approx = true} : vector<16x1xf32> -> vector<16x1xf32>
    %951 = vector.broadcast %950 : vector<16x1xf32> to vector<16x16xf32>
    %952 = arith.mulf %947, %951 : vector<16x16xf32>
    %cst_429 = arith.constant dense<0.000000e+00> : vector<16x8xf32>
    %953 = tpu.matmul %952, %938, %cst_429 {dimension_numbers = #tpu.dot_dimension_numbers<[1], [0], [0], [1], [0, 0, 1, 1], [], []>} : vector<16x16xf32>, vector<16x8xf32>, vector<16x8xf32> -> vector<16x8xf32>
    %c968 = arith.constant 968 : index
    %c0_430 = arith.constant 0 : index
    %954 = vector.load %arg1[%c968, %c0_430] : memref<1520x128xf32, #tpu.memory_space<vmem>>, vector<8x32xf32>
    %cst_431 = arith.constant dense<0.000000e+00> : vector<16x32xf32>
    %955 = tpu.matmul %953, %954, %cst_431 {dimension_numbers = #tpu.dot_dimension_numbers<[1], [0], [0], [1], [0, 0, 1, 1], [], []>} : vector<16x8xf32>, vector<8x32xf32>, vector<16x32xf32> -> vector<16x32xf32>
    %c864 = arith.constant 864 : index
    %c0_432 = arith.constant 0 : index
    %956 = vector.load %arg1[%c864, %c0_432] : memref<1520x128xf32, #tpu.memory_space<vmem>>, vector<8x32xf32>
    %c896 = arith.constant 896 : index
    %c0_433 = arith.constant 0 : index
    %957 = vector.load %arg1[%c896, %c0_433] : memref<1520x128xf32, #tpu.memory_space<vmem>>, vector<8x32xf32>
    %c928 = arith.constant 928 : index
    %c0_434 = arith.constant 0 : index
    %958 = vector.load %arg1[%c928, %c0_434] : memref<1520x128xf32, #tpu.memory_space<vmem>>, vector<8x32xf32>
    %c953 = arith.constant 953 : index
    %c0_435 = arith.constant 0 : index
    %959 = vector.load %arg1[%c953, %c0_435] : memref<1520x128xf32, #tpu.memory_space<vmem>>, vector<1x8xf32>
    %c957 = arith.constant 957 : index
    %c0_436 = arith.constant 0 : index
    %960 = vector.load %arg1[%c957, %c0_436] : memref<1520x128xf32, #tpu.memory_space<vmem>>, vector<1x8xf32>
    %c961 = arith.constant 961 : index
    %c0_437 = arith.constant 0 : index
    %961 = vector.load %arg1[%c961, %c0_437] : memref<1520x128xf32, #tpu.memory_space<vmem>>, vector<1x8xf32>
    %cst_438 = arith.constant dense<0.000000e+00> : vector<16x8xf32>
    %962 = tpu.matmul %923, %956, %cst_438 {dimension_numbers = #tpu.dot_dimension_numbers<[1], [1], [0], [0], [0, 0, 1, 0], [], []>} : vector<16x32xf32>, vector<8x32xf32>, vector<16x8xf32> -> vector<16x8xf32>
    %963 = vector.broadcast %959 : vector<1x8xf32> to vector<16x8xf32>
    %964 = arith.addf %962, %963 : vector<16x8xf32>
    %cst_439 = arith.constant dense<0.000000e+00> : vector<16x8xf32>
    %965 = tpu.matmul %417, %957, %cst_439 {dimension_numbers = #tpu.dot_dimension_numbers<[1], [1], [0], [0], [0, 0, 1, 0], [], []>} : vector<16x32xf32>, vector<8x32xf32>, vector<16x8xf32> -> vector<16x8xf32>
    %966 = vector.broadcast %960 : vector<1x8xf32> to vector<16x8xf32>
    %967 = arith.addf %965, %966 : vector<16x8xf32>
    %cst_440 = arith.constant dense<0.000000e+00> : vector<16x8xf32>
    %968 = tpu.matmul %417, %958, %cst_440 {dimension_numbers = #tpu.dot_dimension_numbers<[1], [1], [0], [0], [0, 0, 1, 0], [], []>} : vector<16x32xf32>, vector<8x32xf32>, vector<16x8xf32> -> vector<16x8xf32>
    %969 = vector.broadcast %961 : vector<1x8xf32> to vector<16x8xf32>
    %970 = arith.addf %968, %969 : vector<16x8xf32>
    %cst_441 = arith.constant dense<0.000000e+00> : vector<16x16xf32>
    %971 = tpu.matmul %964, %967, %cst_441 {dimension_numbers = #tpu.dot_dimension_numbers<[1], [1], [0], [0], [0, 0, 1, 0], [], []>} : vector<16x8xf32>, vector<16x8xf32>, vector<16x16xf32> -> vector<16x16xf32>
    %cst_442 = arith.constant 0.353553385 : f32
    %972 = vector.broadcast %cst_442 : f32 to vector<16x16xf32>
    %973 = arith.mulf %971, %972 : vector<16x16xf32>
    %974 = arith.addf %973, %11 : vector<16x16xf32>
    %cst_443 = arith.constant dense<0xFF800000> : vector<16xf32>
    %975 = vector.multi_reduction <maximumf>, %974, %cst_443 [1] : vector<16x16xf32> to vector<16xf32>
    %976 = vector.shape_cast %975 : vector<16xf32> to vector<16x1xf32>
    %977 = vector.broadcast %976 : vector<16x1xf32> to vector<16x16xf32>
    %978 = arith.subf %974, %977 : vector<16x16xf32>
    %979 = math.exp %978 : vector<16x16xf32>
    %cst_444 = arith.constant dense<0.000000e+00> : vector<16xf32>
    %980 = vector.multi_reduction <add>, %979, %cst_444 [1] : vector<16x16xf32> to vector<16xf32>
    %981 = vector.shape_cast %980 : vector<16xf32> to vector<16x1xf32>
    %982 = tpu.reciprocal %981 {approx = true} : vector<16x1xf32> -> vector<16x1xf32>
    %983 = vector.broadcast %982 : vector<16x1xf32> to vector<16x16xf32>
    %984 = arith.mulf %979, %983 : vector<16x16xf32>
    %cst_445 = arith.constant dense<0.000000e+00> : vector<16x8xf32>
    %985 = tpu.matmul %984, %970, %cst_445 {dimension_numbers = #tpu.dot_dimension_numbers<[1], [0], [0], [1], [0, 0, 1, 1], [], []>} : vector<16x16xf32>, vector<16x8xf32>, vector<16x8xf32> -> vector<16x8xf32>
    %c976 = arith.constant 976 : index
    %c0_446 = arith.constant 0 : index
    %986 = vector.load %arg1[%c976, %c0_446] : memref<1520x128xf32, #tpu.memory_space<vmem>>, vector<8x32xf32>
    %cst_447 = arith.constant dense<0.000000e+00> : vector<16x32xf32>
    %987 = tpu.matmul %985, %986, %cst_447 {dimension_numbers = #tpu.dot_dimension_numbers<[1], [0], [0], [1], [0, 0, 1, 1], [], []>} : vector<16x8xf32>, vector<8x32xf32>, vector<16x32xf32> -> vector<16x32xf32>
    %988 = arith.addf %955, %987 : vector<16x32xf32>
    %c872 = arith.constant 872 : index
    %c0_448 = arith.constant 0 : index
    %989 = vector.load %arg1[%c872, %c0_448] : memref<1520x128xf32, #tpu.memory_space<vmem>>, vector<8x32xf32>
    %c904 = arith.constant 904 : index
    %c0_449 = arith.constant 0 : index
    %990 = vector.load %arg1[%c904, %c0_449] : memref<1520x128xf32, #tpu.memory_space<vmem>>, vector<8x32xf32>
    %c936 = arith.constant 936 : index
    %c0_450 = arith.constant 0 : index
    %991 = vector.load %arg1[%c936, %c0_450] : memref<1520x128xf32, #tpu.memory_space<vmem>>, vector<8x32xf32>
    %c954 = arith.constant 954 : index
    %c0_451 = arith.constant 0 : index
    %992 = vector.load %arg1[%c954, %c0_451] : memref<1520x128xf32, #tpu.memory_space<vmem>>, vector<1x8xf32>
    %c958 = arith.constant 958 : index
    %c0_452 = arith.constant 0 : index
    %993 = vector.load %arg1[%c958, %c0_452] : memref<1520x128xf32, #tpu.memory_space<vmem>>, vector<1x8xf32>
    %c962 = arith.constant 962 : index
    %c0_453 = arith.constant 0 : index
    %994 = vector.load %arg1[%c962, %c0_453] : memref<1520x128xf32, #tpu.memory_space<vmem>>, vector<1x8xf32>
    %cst_454 = arith.constant dense<0.000000e+00> : vector<16x8xf32>
    %995 = tpu.matmul %923, %989, %cst_454 {dimension_numbers = #tpu.dot_dimension_numbers<[1], [1], [0], [0], [0, 0, 1, 0], [], []>} : vector<16x32xf32>, vector<8x32xf32>, vector<16x8xf32> -> vector<16x8xf32>
    %996 = vector.broadcast %992 : vector<1x8xf32> to vector<16x8xf32>
    %997 = arith.addf %995, %996 : vector<16x8xf32>
    %cst_455 = arith.constant dense<0.000000e+00> : vector<16x8xf32>
    %998 = tpu.matmul %417, %990, %cst_455 {dimension_numbers = #tpu.dot_dimension_numbers<[1], [1], [0], [0], [0, 0, 1, 0], [], []>} : vector<16x32xf32>, vector<8x32xf32>, vector<16x8xf32> -> vector<16x8xf32>
    %999 = vector.broadcast %993 : vector<1x8xf32> to vector<16x8xf32>
    %1000 = arith.addf %998, %999 : vector<16x8xf32>
    %cst_456 = arith.constant dense<0.000000e+00> : vector<16x8xf32>
    %1001 = tpu.matmul %417, %991, %cst_456 {dimension_numbers = #tpu.dot_dimension_numbers<[1], [1], [0], [0], [0, 0, 1, 0], [], []>} : vector<16x32xf32>, vector<8x32xf32>, vector<16x8xf32> -> vector<16x8xf32>
    %1002 = vector.broadcast %994 : vector<1x8xf32> to vector<16x8xf32>
    %1003 = arith.addf %1001, %1002 : vector<16x8xf32>
    %cst_457 = arith.constant dense<0.000000e+00> : vector<16x16xf32>
    %1004 = tpu.matmul %997, %1000, %cst_457 {dimension_numbers = #tpu.dot_dimension_numbers<[1], [1], [0], [0], [0, 0, 1, 0], [], []>} : vector<16x8xf32>, vector<16x8xf32>, vector<16x16xf32> -> vector<16x16xf32>
    %cst_458 = arith.constant 0.353553385 : f32
    %1005 = vector.broadcast %cst_458 : f32 to vector<16x16xf32>
    %1006 = arith.mulf %1004, %1005 : vector<16x16xf32>
    %1007 = arith.addf %1006, %11 : vector<16x16xf32>
    %cst_459 = arith.constant dense<0xFF800000> : vector<16xf32>
    %1008 = vector.multi_reduction <maximumf>, %1007, %cst_459 [1] : vector<16x16xf32> to vector<16xf32>
    %1009 = vector.shape_cast %1008 : vector<16xf32> to vector<16x1xf32>
    %1010 = vector.broadcast %1009 : vector<16x1xf32> to vector<16x16xf32>
    %1011 = arith.subf %1007, %1010 : vector<16x16xf32>
    %1012 = math.exp %1011 : vector<16x16xf32>
    %cst_460 = arith.constant dense<0.000000e+00> : vector<16xf32>
    %1013 = vector.multi_reduction <add>, %1012, %cst_460 [1] : vector<16x16xf32> to vector<16xf32>
    %1014 = vector.shape_cast %1013 : vector<16xf32> to vector<16x1xf32>
    %1015 = tpu.reciprocal %1014 {approx = true} : vector<16x1xf32> -> vector<16x1xf32>
    %1016 = vector.broadcast %1015 : vector<16x1xf32> to vector<16x16xf32>
    %1017 = arith.mulf %1012, %1016 : vector<16x16xf32>
    %cst_461 = arith.constant dense<0.000000e+00> : vector<16x8xf32>
    %1018 = tpu.matmul %1017, %1003, %cst_461 {dimension_numbers = #tpu.dot_dimension_numbers<[1], [0], [0], [1], [0, 0, 1, 1], [], []>} : vector<16x16xf32>, vector<16x8xf32>, vector<16x8xf32> -> vector<16x8xf32>
    %c984 = arith.constant 984 : index
    %c0_462 = arith.constant 0 : index
    %1019 = vector.load %arg1[%c984, %c0_462] : memref<1520x128xf32, #tpu.memory_space<vmem>>, vector<8x32xf32>
    %cst_463 = arith.constant dense<0.000000e+00> : vector<16x32xf32>
    %1020 = tpu.matmul %1018, %1019, %cst_463 {dimension_numbers = #tpu.dot_dimension_numbers<[1], [0], [0], [1], [0, 0, 1, 1], [], []>} : vector<16x8xf32>, vector<8x32xf32>, vector<16x32xf32> -> vector<16x32xf32>
    %1021 = arith.addf %988, %1020 : vector<16x32xf32>
    %c880 = arith.constant 880 : index
    %c0_464 = arith.constant 0 : index
    %1022 = vector.load %arg1[%c880, %c0_464] : memref<1520x128xf32, #tpu.memory_space<vmem>>, vector<8x32xf32>
    %c912 = arith.constant 912 : index
    %c0_465 = arith.constant 0 : index
    %1023 = vector.load %arg1[%c912, %c0_465] : memref<1520x128xf32, #tpu.memory_space<vmem>>, vector<8x32xf32>
    %c944 = arith.constant 944 : index
    %c0_466 = arith.constant 0 : index
    %1024 = vector.load %arg1[%c944, %c0_466] : memref<1520x128xf32, #tpu.memory_space<vmem>>, vector<8x32xf32>
    %c955 = arith.constant 955 : index
    %c0_467 = arith.constant 0 : index
    %1025 = vector.load %arg1[%c955, %c0_467] : memref<1520x128xf32, #tpu.memory_space<vmem>>, vector<1x8xf32>
    %c959 = arith.constant 959 : index
    %c0_468 = arith.constant 0 : index
    %1026 = vector.load %arg1[%c959, %c0_468] : memref<1520x128xf32, #tpu.memory_space<vmem>>, vector<1x8xf32>
    %c963 = arith.constant 963 : index
    %c0_469 = arith.constant 0 : index
    %1027 = vector.load %arg1[%c963, %c0_469] : memref<1520x128xf32, #tpu.memory_space<vmem>>, vector<1x8xf32>
    %cst_470 = arith.constant dense<0.000000e+00> : vector<16x8xf32>
    %1028 = tpu.matmul %923, %1022, %cst_470 {dimension_numbers = #tpu.dot_dimension_numbers<[1], [1], [0], [0], [0, 0, 1, 0], [], []>} : vector<16x32xf32>, vector<8x32xf32>, vector<16x8xf32> -> vector<16x8xf32>
    %1029 = vector.broadcast %1025 : vector<1x8xf32> to vector<16x8xf32>
    %1030 = arith.addf %1028, %1029 : vector<16x8xf32>
    %cst_471 = arith.constant dense<0.000000e+00> : vector<16x8xf32>
    %1031 = tpu.matmul %417, %1023, %cst_471 {dimension_numbers = #tpu.dot_dimension_numbers<[1], [1], [0], [0], [0, 0, 1, 0], [], []>} : vector<16x32xf32>, vector<8x32xf32>, vector<16x8xf32> -> vector<16x8xf32>
    %1032 = vector.broadcast %1026 : vector<1x8xf32> to vector<16x8xf32>
    %1033 = arith.addf %1031, %1032 : vector<16x8xf32>
    %cst_472 = arith.constant dense<0.000000e+00> : vector<16x8xf32>
    %1034 = tpu.matmul %417, %1024, %cst_472 {dimension_numbers = #tpu.dot_dimension_numbers<[1], [1], [0], [0], [0, 0, 1, 0], [], []>} : vector<16x32xf32>, vector<8x32xf32>, vector<16x8xf32> -> vector<16x8xf32>
    %1035 = vector.broadcast %1027 : vector<1x8xf32> to vector<16x8xf32>
    %1036 = arith.addf %1034, %1035 : vector<16x8xf32>
    %cst_473 = arith.constant dense<0.000000e+00> : vector<16x16xf32>
    %1037 = tpu.matmul %1030, %1033, %cst_473 {dimension_numbers = #tpu.dot_dimension_numbers<[1], [1], [0], [0], [0, 0, 1, 0], [], []>} : vector<16x8xf32>, vector<16x8xf32>, vector<16x16xf32> -> vector<16x16xf32>
    %cst_474 = arith.constant 0.353553385 : f32
    %1038 = vector.broadcast %cst_474 : f32 to vector<16x16xf32>
    %1039 = arith.mulf %1037, %1038 : vector<16x16xf32>
    %1040 = arith.addf %1039, %11 : vector<16x16xf32>
    %cst_475 = arith.constant dense<0xFF800000> : vector<16xf32>
    %1041 = vector.multi_reduction <maximumf>, %1040, %cst_475 [1] : vector<16x16xf32> to vector<16xf32>
    %1042 = vector.shape_cast %1041 : vector<16xf32> to vector<16x1xf32>
    %1043 = vector.broadcast %1042 : vector<16x1xf32> to vector<16x16xf32>
    %1044 = arith.subf %1040, %1043 : vector<16x16xf32>
    %1045 = math.exp %1044 : vector<16x16xf32>
    %cst_476 = arith.constant dense<0.000000e+00> : vector<16xf32>
    %1046 = vector.multi_reduction <add>, %1045, %cst_476 [1] : vector<16x16xf32> to vector<16xf32>
    %1047 = vector.shape_cast %1046 : vector<16xf32> to vector<16x1xf32>
    %1048 = tpu.reciprocal %1047 {approx = true} : vector<16x1xf32> -> vector<16x1xf32>
    %1049 = vector.broadcast %1048 : vector<16x1xf32> to vector<16x16xf32>
    %1050 = arith.mulf %1045, %1049 : vector<16x16xf32>
    %cst_477 = arith.constant dense<0.000000e+00> : vector<16x8xf32>
    %1051 = tpu.matmul %1050, %1036, %cst_477 {dimension_numbers = #tpu.dot_dimension_numbers<[1], [0], [0], [1], [0, 0, 1, 1], [], []>} : vector<16x16xf32>, vector<16x8xf32>, vector<16x8xf32> -> vector<16x8xf32>
    %c992 = arith.constant 992 : index
    %c0_478 = arith.constant 0 : index
    %1052 = vector.load %arg1[%c992, %c0_478] : memref<1520x128xf32, #tpu.memory_space<vmem>>, vector<8x32xf32>
    %cst_479 = arith.constant dense<0.000000e+00> : vector<16x32xf32>
    %1053 = tpu.matmul %1051, %1052, %cst_479 {dimension_numbers = #tpu.dot_dimension_numbers<[1], [0], [0], [1], [0, 0, 1, 1], [], []>} : vector<16x8xf32>, vector<8x32xf32>, vector<16x32xf32> -> vector<16x32xf32>
    %1054 = arith.addf %1021, %1053 : vector<16x32xf32>
    %c1000 = arith.constant 1000 : index
    %c0_480 = arith.constant 0 : index
    %1055 = vector.load %arg1[%c1000, %c0_480] : memref<1520x128xf32, #tpu.memory_space<vmem>>, vector<1x32xf32>
    %1056 = vector.broadcast %1055 : vector<1x32xf32> to vector<16x32xf32>
    %1057 = arith.addf %1054, %1056 : vector<16x32xf32>
    %1058 = arith.addf %923, %1057 : vector<16x32xf32>
    %c1465 = arith.constant 1465 : index
    %c0_481 = arith.constant 0 : index
    %1059 = vector.load %arg1[%c1465, %c0_481] : memref<1520x128xf32, #tpu.memory_space<vmem>>, vector<1x32xf32>
    %c1466 = arith.constant 1466 : index
    %c0_482 = arith.constant 0 : index
    %1060 = vector.load %arg1[%c1466, %c0_482] : memref<1520x128xf32, #tpu.memory_space<vmem>>, vector<1x32xf32>
    %cst_483 = arith.constant dense<0.000000e+00> : vector<16xf32>
    %1061 = vector.multi_reduction <add>, %1058, %cst_483 [1] : vector<16x32xf32> to vector<16xf32>
    %1062 = vector.shape_cast %1061 : vector<16xf32> to vector<16x1xf32>
    %cst_484 = arith.constant 3.200000e+01 : f32
    %1063 = vector.broadcast %cst_484 : f32 to vector<16x1xf32>
    %1064 = arith.divf %1062, %1063 : vector<16x1xf32>
    %1065 = vector.broadcast %1064 : vector<16x1xf32> to vector<16x32xf32>
    %1066 = arith.subf %1058, %1065 : vector<16x32xf32>
    %1067 = arith.mulf %1066, %1066 : vector<16x32xf32>
    %cst_485 = arith.constant dense<0.000000e+00> : vector<16xf32>
    %1068 = vector.multi_reduction <add>, %1067, %cst_485 [1] : vector<16x32xf32> to vector<16xf32>
    %1069 = vector.shape_cast %1068 : vector<16xf32> to vector<16x1xf32>
    %cst_486 = arith.constant 3.200000e+01 : f32
    %1070 = vector.broadcast %cst_486 : f32 to vector<16x1xf32>
    %1071 = arith.divf %1069, %1070 : vector<16x1xf32>
    %cst_487 = arith.constant 9.99999974E-6 : f32
    %1072 = vector.broadcast %cst_487 : f32 to vector<16x1xf32>
    %1073 = arith.addf %1071, %1072 : vector<16x1xf32>
    %1074 = math.rsqrt %1073 : vector<16x1xf32>
    %1075 = vector.broadcast %1074 : vector<16x1xf32> to vector<16x32xf32>
    %1076 = arith.mulf %1066, %1075 : vector<16x32xf32>
    %1077 = vector.broadcast %1059 : vector<1x32xf32> to vector<16x32xf32>
    %1078 = arith.mulf %1076, %1077 : vector<16x32xf32>
    %1079 = vector.broadcast %1060 : vector<1x32xf32> to vector<16x32xf32>
    %1080 = arith.addf %1078, %1079 : vector<16x32xf32>
    %c1344 = arith.constant 1344 : index
    %c0_488 = arith.constant 0 : index
    %1081 = vector.load %arg1[%c1344, %c0_488] : memref<1520x128xf32, #tpu.memory_space<vmem>>, vector<32x64xf32>
    %c1376 = arith.constant 1376 : index
    %c0_489 = arith.constant 0 : index
    %1082 = vector.load %arg1[%c1376, %c0_489] : memref<1520x128xf32, #tpu.memory_space<vmem>>, vector<1x64xf32>
    %c1384 = arith.constant 1384 : index
    %c0_490 = arith.constant 0 : index
    %1083 = vector.load %arg1[%c1384, %c0_490] : memref<1520x128xf32, #tpu.memory_space<vmem>>, vector<64x32xf32>
    %c1448 = arith.constant 1448 : index
    %c0_491 = arith.constant 0 : index
    %1084 = vector.load %arg1[%c1448, %c0_491] : memref<1520x128xf32, #tpu.memory_space<vmem>>, vector<1x32xf32>
    %cst_492 = arith.constant dense<0.000000e+00> : vector<16x64xf32>
    %1085 = tpu.matmul %1080, %1081, %cst_492 {dimension_numbers = #tpu.dot_dimension_numbers<[1], [0], [0], [1], [0, 0, 1, 1], [], []>} : vector<16x32xf32>, vector<32x64xf32>, vector<16x64xf32> -> vector<16x64xf32>
    %1086 = vector.broadcast %1082 : vector<1x64xf32> to vector<16x64xf32>
    %1087 = arith.addf %1085, %1086 : vector<16x64xf32>
    %cst_493 = arith.constant 0.000000e+00 : f32
    %1088 = vector.broadcast %cst_493 : f32 to vector<16x64xf32>
    %1089 = arith.maximumf %1087, %1088 : vector<16x64xf32>
    %cst_494 = arith.constant dense<0.000000e+00> : vector<16x32xf32>
    %1090 = tpu.matmul %1089, %1083, %cst_494 {dimension_numbers = #tpu.dot_dimension_numbers<[1], [0], [0], [1], [0, 0, 1, 1], [], []>} : vector<16x64xf32>, vector<64x32xf32>, vector<16x32xf32> -> vector<16x32xf32>
    %1091 = vector.broadcast %1084 : vector<1x32xf32> to vector<16x32xf32>
    %1092 = arith.addf %1090, %1091 : vector<16x32xf32>
    %1093 = arith.addf %1080, %1092 : vector<16x32xf32>
    %c1467 = arith.constant 1467 : index
    %c0_495 = arith.constant 0 : index
    %1094 = vector.load %arg1[%c1467, %c0_495] : memref<1520x128xf32, #tpu.memory_space<vmem>>, vector<1x32xf32>
    %c1468 = arith.constant 1468 : index
    %c0_496 = arith.constant 0 : index
    %1095 = vector.load %arg1[%c1468, %c0_496] : memref<1520x128xf32, #tpu.memory_space<vmem>>, vector<1x32xf32>
    %cst_497 = arith.constant dense<0.000000e+00> : vector<16xf32>
    %1096 = vector.multi_reduction <add>, %1093, %cst_497 [1] : vector<16x32xf32> to vector<16xf32>
    %1097 = vector.shape_cast %1096 : vector<16xf32> to vector<16x1xf32>
    %cst_498 = arith.constant 3.200000e+01 : f32
    %1098 = vector.broadcast %cst_498 : f32 to vector<16x1xf32>
    %1099 = arith.divf %1097, %1098 : vector<16x1xf32>
    %1100 = vector.broadcast %1099 : vector<16x1xf32> to vector<16x32xf32>
    %1101 = arith.subf %1093, %1100 : vector<16x32xf32>
    %1102 = arith.mulf %1101, %1101 : vector<16x32xf32>
    %cst_499 = arith.constant dense<0.000000e+00> : vector<16xf32>
    %1103 = vector.multi_reduction <add>, %1102, %cst_499 [1] : vector<16x32xf32> to vector<16xf32>
    %1104 = vector.shape_cast %1103 : vector<16xf32> to vector<16x1xf32>
    %cst_500 = arith.constant 3.200000e+01 : f32
    %1105 = vector.broadcast %cst_500 : f32 to vector<16x1xf32>
    %1106 = arith.divf %1104, %1105 : vector<16x1xf32>
    %cst_501 = arith.constant 9.99999974E-6 : f32
    %1107 = vector.broadcast %cst_501 : f32 to vector<16x1xf32>
    %1108 = arith.addf %1106, %1107 : vector<16x1xf32>
    %1109 = math.rsqrt %1108 : vector<16x1xf32>
    %1110 = vector.broadcast %1109 : vector<16x1xf32> to vector<16x32xf32>
    %1111 = arith.mulf %1101, %1110 : vector<16x32xf32>
    %1112 = vector.broadcast %1094 : vector<1x32xf32> to vector<16x32xf32>
    %1113 = arith.mulf %1111, %1112 : vector<16x32xf32>
    %1114 = vector.broadcast %1095 : vector<1x32xf32> to vector<16x32xf32>
    %1115 = arith.addf %1113, %1114 : vector<16x32xf32>
    %c1471 = arith.constant 1471 : index
    %c0_502 = arith.constant 0 : index
    %1116 = vector.load %arg1[%c1471, %c0_502] : memref<1520x128xf32, #tpu.memory_space<vmem>>, vector<1x32xf32>
    %c1472 = arith.constant 1472 : index
    %c0_503 = arith.constant 0 : index
    %1117 = vector.load %arg1[%c1472, %c0_503] : memref<1520x128xf32, #tpu.memory_space<vmem>>, vector<1x32xf32>
    %cst_504 = arith.constant dense<0.000000e+00> : vector<16xf32>
    %1118 = vector.multi_reduction <add>, %1115, %cst_504 [1] : vector<16x32xf32> to vector<16xf32>
    %1119 = vector.shape_cast %1118 : vector<16xf32> to vector<16x1xf32>
    %cst_505 = arith.constant 3.200000e+01 : f32
    %1120 = vector.broadcast %cst_505 : f32 to vector<16x1xf32>
    %1121 = arith.divf %1119, %1120 : vector<16x1xf32>
    %1122 = vector.broadcast %1121 : vector<16x1xf32> to vector<16x32xf32>
    %1123 = arith.subf %1115, %1122 : vector<16x32xf32>
    %1124 = arith.mulf %1123, %1123 : vector<16x32xf32>
    %cst_506 = arith.constant dense<0.000000e+00> : vector<16xf32>
    %1125 = vector.multi_reduction <add>, %1124, %cst_506 [1] : vector<16x32xf32> to vector<16xf32>
    %1126 = vector.shape_cast %1125 : vector<16xf32> to vector<16x1xf32>
    %cst_507 = arith.constant 3.200000e+01 : f32
    %1127 = vector.broadcast %cst_507 : f32 to vector<16x1xf32>
    %1128 = arith.divf %1126, %1127 : vector<16x1xf32>
    %cst_508 = arith.constant 9.99999974E-6 : f32
    %1129 = vector.broadcast %cst_508 : f32 to vector<16x1xf32>
    %1130 = arith.addf %1128, %1129 : vector<16x1xf32>
    %1131 = math.rsqrt %1130 : vector<16x1xf32>
    %1132 = vector.broadcast %1131 : vector<16x1xf32> to vector<16x32xf32>
    %1133 = arith.mulf %1123, %1132 : vector<16x32xf32>
    %1134 = vector.broadcast %1116 : vector<1x32xf32> to vector<16x32xf32>
    %1135 = arith.mulf %1133, %1134 : vector<16x32xf32>
    %1136 = vector.broadcast %1117 : vector<1x32xf32> to vector<16x32xf32>
    %1137 = arith.addf %1135, %1136 : vector<16x32xf32>
    %c1480 = arith.constant 1480 : index
    %c0_509 = arith.constant 0 : index
    %1138 = vector.load %arg1[%c1480, %c0_509] : memref<1520x128xf32, #tpu.memory_space<vmem>>, vector<32x128xf32>
    %c1512 = arith.constant 1512 : index
    %c0_510 = arith.constant 0 : index
    %1139 = vector.load %arg1[%c1512, %c0_510] : memref<1520x128xf32, #tpu.memory_space<vmem>>, vector<1x128xf32>
    %cst_511 = arith.constant dense<0.000000e+00> : vector<16x128xf32>
    %1140 = tpu.matmul %1137, %1138, %cst_511 {dimension_numbers = #tpu.dot_dimension_numbers<[1], [0], [0], [1], [0, 0, 1, 1], [], []>} : vector<16x32xf32>, vector<32x128xf32>, vector<16x128xf32> -> vector<16x128xf32>
    %1141 = vector.broadcast %1139 : vector<1x128xf32> to vector<16x128xf32>
    %1142 = arith.addf %1140, %1141 : vector<16x128xf32>
    %1143 = vector.extract_strided_slice %1142 {offsets = [7, 0], sizes = [1, 128], strides = [1, 1]} : vector<16x128xf32> to vector<1x128xf32>
    %c0_512 = arith.constant 0 : index
    %c0_513 = arith.constant 0 : index
    %1144 = vector.load %arg2[%c0_512, %c0_513] : memref<2x128xf32, #tpu.memory_space<vmem>>, vector<1x128xf32>
    tpu.vector_store %arg2[%c0_512, %c0_513], %1143 {strides = array<i32>} : memref<2x128xf32, #tpu.memory_space<vmem>>, vector<1x128xf32>,
    %1145 = vector.extract_strided_slice %1142 {offsets = [15, 0], sizes = [1, 128], strides = [1, 1]} : vector<16x128xf32> to vector<1x128xf32>
    %c1 = arith.constant 1 : index
    %c0_514 = arith.constant 0 : index
    %1146 = vector.load %arg2[%c1, %c0_514] : memref<2x128xf32, #tpu.memory_space<vmem>>, vector<1x128xf32>
    tpu.vector_store %arg2[%c1, %c0_514], %1145 {strides = array<i32>} : memref<2x128xf32, #tpu.memory_space<vmem>>, vector<1x128xf32>,
    return
  }
}

</mosaic_0001>

<llo_original>
// kernel: transformer_model_forward.1
$region0: #{transformer_model_forward.1}
  #allocation0 [shape = 'u32[]', space=smem, size = 0x4, offset = 0x4, fixed_abs, tag = 'smem constant byte address 0x4 - core index']
  #allocation1 [shape = 'u32[72,128]{1,0:T(1,128)}', space=vmem, size = 0x9000, scoped, tag = 'internal scratch']
  %s0 = inlined_call_operand.vmem [shape: s32[16,1], index: 0, kind: input, shape index: {}]
  %s1 = inlined_call_operand.hbm [shape: f32[1520,128], index: 1, kind: input, shape index: {}]
  %s2 = inlined_call_operand.hbm [shape: f32[2,128], index: 2, kind: output, shape index: {}]
  %s3 = sld [smem:[#allocation0]]
  $region22: #{transformer_model_forward.1} parent=0
    _
  %s5 = ssub.s32 1, %s3
  %s6 = scalar_select 0, %s5, %s3
  $region1: #{transformer_model_forward.1} parent=0
    #allocation2 [shape = 'u8[778240]{0}', space=vmem, size = 0xbe000, scoped, tag = 'input window, operand 1, single buffered']
    #allocation3 [shape = 's32[1]{0}', space=sflag, size = 0x4, scoped, tag = 'scoped memory for transformer_model_forward.1']
    #allocation4 [shape = 's32[1]{0}', space=sflag, size = 0x4, scoped, tag = 'scoped memory for transformer_model_forward.1']
    #allocation5 [shape = 'u8[1024]{0}', space=vmem, size = 0x400, scoped, tag = 'output window, operand 0, single buffered']
    %7 = vsyncpa [#allocation3], 0
    %8 = vsyncpa [#allocation4], 0
    // Predicated region
    $region2: #{transformer_model_forward.1} parent=1 // pred_check
      _
    $region3: #{transformer_model_forward.1} parent=1 // pred_check_branch
      %10 = sbr.rel (0) target = $region5
    $region4: #{transformer_model_forward.1} parent=1 // pred_region
      _
    $region5: #{transformer_model_forward.1} parent=1 // pred_fallthru
      _
    // Predicated region
    $region6: #{transformer_model_forward.1} parent=1 // pred_check
      _
    $region7: #{transformer_model_forward.1} parent=1 // pred_check_branch
      %12 = sbr.rel (0) target = $region9
    $region8: #{transformer_model_forward.1} parent=1 // pred_region
      %14 = vsyncadd [#allocation3], 0
      %s15 = sshll.u32 %s1, 4
      %s16 = int_to_ptr.hbm [resolvable:$true] %s15
      %s17 = sshll.u32 [#allocation2], 4
      %s18 = int_to_ptr.vmem [resolvable:$true] %s17
      %23 = dma.hbm_to_vmem [thread:$0]  %s16, 24320, %s18, [#allocation3], 128, 128, 8
    $region9: #{transformer_model_forward.1} parent=1 // pred_fallthru
      _
    // Predicated region
    $region10: #{transformer_model_forward.1} parent=1 // pred_check
      _
    $region11: #{transformer_model_forward.1} parent=1 // pred_check_branch
      %25 = sbr.rel (0) target = $region13
    $region12: #{transformer_model_forward.1} parent=1 // pred_region
      %27 = dma.done [#allocation3], 24320
    $region13: #{transformer_model_forward.1} parent=1 // pred_fallthru
      _
    %v28 = vld [vmem:[%s0] sm:$0xff]
    %v29 = vld [vmem:[%s0 + $0x8] sm:$0xff]
    %v30 = vlaneseq
    %v31 = vand.u32 %v30, 127
    %32 = vset.pattern.permute.xlu0 0
    %33 = vperm.xlu0 %32, %v28
    %v34 = vpop.permute.xlu0 %33
    %35 = vset.pattern.permute.xlu0 0
    %36 = vperm.xlu0 %35, %v29
    %v37 = vpop.permute.xlu0 %36
    %vm38 = vcmp.eq.s32.totalorder %v34, %v31
    %vm39 = vcmp.eq.s32.totalorder %v37, %v31
    %v40 = vsel %vm38, 1.0, 0.0
    %v41 = vsel %vm39, 1.0, 0.0
    %v42 = vld [vmem:[#allocation2] sm:$0xff]
    %v43 = vld [vmem:[#allocation2 + $0x8] sm:$0xff]
    %v44 = vld [vmem:[#allocation2 + $0x10] sm:$0xff]
    %v45 = vld [vmem:[#allocation2 + $0x18] sm:$0xff]
    %v46 = vld [vmem:[#allocation2 + $0x20] sm:$0xff]
    %v47 = vld [vmem:[#allocation2 + $0x28] sm:$0xff]
    %v48 = vld [vmem:[#allocation2 + $0x30] sm:$0xff]
    %v49 = vld [vmem:[#allocation2 + $0x38] sm:$0xff]
    %v50 = vld [vmem:[#allocation2 + $0x40] sm:$0xff]
    %v51 = vld [vmem:[#allocation2 + $0x48] sm:$0xff]
    %vm52 = vcmask 523264
    %v54 = vsel %vm52, %v40, 0
    %v57 = vsel %vm52, %v41, 0
    %59 = vmatpush.msra.mxu0 0.0
    %60 = vmatpush.msra.mxu0 0.0
    %61 = vmatpush.msra.mxu0 0.0
    %62 = vmatpush.msra.mxu0 0.0
    %63 = vmatpush.msra.mxu0 0.0
    %64 = vmatpush.msra.mxu0 0.0
    %65 = vmatpush.msra.mxu0 0.0
    %66 = vmatpush.msra.mxu0 0.0
    %67 = vmatpush.msra.mxu0 %v49
    %68 = vmatpush.msra.mxu0 %v48
    %69 = vmatpush.msra.mxu0 %v47
    %70 = vmatpush.msra.mxu0 %v46
    %71 = vmatpush.msra.mxu0 %v45
    %72 = vmatpush.msra.mxu0 %v44
    %73 = vmatpush.msra.mxu0 %v43
    %74 = vmatpush.msra.mxu0 %v42
    %75 = vmatmul.f32.gmra.mxu0 %v54
    %v76 = vpop.f32.mrf.mxu0
    %v77 = vadd.f32 %v50, %v76
    %78 = vmatmul.f32.gmra.mxu0 %v57
    %v79 = vpop.f32.mrf.mxu0
    %v80 = vadd.f32 %v51, %v79
    %81 = vdwg.mxu0
    %v82 = vld [vmem:[#allocation2 + $0x50] sm:$0xff]
    %v83 = vld [vmem:[#allocation2 + $0x58] sm:$0xff]
    %v84 = vld [vmem:[#allocation2 + $0x60] sm:$0xff]
    %v85 = vld [vmem:[#allocation2 + $0x80] sm:$0xff]
    %v86 = vld [vmem:[#allocation2 + $0xa0] sm:$0xff]
    %v87 = vld [vmem:[#allocation2 + $0xc0] sm:$0x1]
    %v88 = vld [vmem:[#allocation2 + $0xc4] sm:$0x1]
    %v89 = vld [vmem:[#allocation2 + $0xc8] sm:$0x1]
    %v90 = vperm.slane %v87, 0
    %vm91 = vcmask 261120
    %v93 = vsel %vm91, %v77, 0
    %v96 = vsel %vm91, %v80, 0
    %v99 = vsel %vm91, %v84, 0
    %101 = vmatpush.xpose.msra.mxu0 0.0
    %102 = vmatpush.xpose.msra.mxu0 0.0
    %103 = vmatpush.xpose.msra.mxu0 0.0
    %104 = vmatpush.xpose.msra.mxu0 0.0
    %105 = vmatpush.xpose.msra.mxu0 0.0
    %106 = vmatpush.xpose.msra.mxu0 0.0
    %107 = vmatpush.xpose.msra.mxu0 0.0
    %108 = vmatpush.xpose.msra.mxu0 0.0
    %109 = vmatpush.xpose.msra.mxu0 0.0
    %110 = vmatpush.xpose.msra.mxu0 0.0
    %111 = vmatpush.xpose.msra.mxu0 0.0
    %112 = vmatpush.xpose.msra.mxu0 0.0
    %113 = vmatpush.xpose.msra.mxu0 0.0
    %114 = vmatpush.xpose.msra.mxu0 0.0
    %115 = vmatpush.xpose.msra.mxu0 0.0
    %116 = vmatpush.xpose.msra.mxu0 %v99
    %117 = vmatmul.f32.gmra.mxu0 %v93
    %v118 = vpop.f32.mrf.mxu0
    %v119 = vadd.f32 %v90, %v118
    %120 = vmatmul.f32.gmra.mxu0 %v96
    %v121 = vpop.f32.mrf.mxu0
    %v122 = vadd.f32 %v90, %v121
    %123 = vdwg.mxu0
    %v124 = vperm.slane %v88, 0
    %v126 = vsel %vm91, %v85, 0
    %128 = vmatpush.xpose.msra.mxu0 0.0
    %129 = vmatpush.xpose.msra.mxu0 0.0
    %130 = vmatpush.xpose.msra.mxu0 0.0
    %131 = vmatpush.xpose.msra.mxu0 0.0
    %132 = vmatpush.xpose.msra.mxu0 0.0
    %133 = vmatpush.xpose.msra.mxu0 0.0
    %134 = vmatpush.xpose.msra.mxu0 0.0
    %135 = vmatpush.xpose.msra.mxu0 0.0
    %136 = vmatpush.xpose.msra.mxu0 0.0
    %137 = vmatpush.xpose.msra.mxu0 0.0
    %138 = vmatpush.xpose.msra.mxu0 0.0
    %139 = vmatpush.xpose.msra.mxu0 0.0
    %140 = vmatpush.xpose.msra.mxu0 0.0
    %141 = vmatpush.xpose.msra.mxu0 0.0
    %142 = vmatpush.xpose.msra.mxu0 0.0
    %143 = vmatpush.xpose.msra.mxu0 %v126
    %144 = vmatmul.f32.gmra.mxu0 %v93
    %v145 = vpop.f32.mrf.mxu0
    %v146 = vadd.f32 %v124, %v145
    %147 = vmatmul.f32.gmra.mxu0 %v96
    %v148 = vpop.f32.mrf.mxu0
    %v149 = vadd.f32 %v124, %v148
    %150 = vdwg.mxu0
    %v151 = vperm.slane %v89, 0
    %v153 = vsel %vm91, %v86, 0
    %155 = vmatpush.xpose.msra.mxu0 0.0
    %156 = vmatpush.xpose.msra.mxu0 0.0
    %157 = vmatpush.xpose.msra.mxu0 0.0
    %158 = vmatpush.xpose.msra.mxu0 0.0
    %159 = vmatpush.xpose.msra.mxu0 0.0
    %160 = vmatpush.xpose.msra.mxu0 0.0
    %161 = vmatpush.xpose.msra.mxu0 0.0
    %162 = vmatpush.xpose.msra.mxu0 0.0
    %163 = vmatpush.xpose.msra.mxu0 0.0
    %164 = vmatpush.xpose.msra.mxu0 0.0
    %165 = vmatpush.xpose.msra.mxu0 0.0
    %166 = vmatpush.xpose.msra.mxu0 0.0
    %167 = vmatpush.xpose.msra.mxu0 0.0
    %168 = vmatpush.xpose.msra.mxu0 0.0
    %169 = vmatpush.xpose.msra.mxu0 0.0
    %170 = vmatpush.xpose.msra.mxu0 %v153
    %171 = vmatmul.f32.gmra.mxu0 %v93
    %v172 = vpop.f32.mrf.mxu0
    %v173 = vadd.f32 %v151, %v172
    %174 = vmatmul.f32.gmra.mxu0 %v96
    %v175 = vpop.f32.mrf.mxu0
    %v176 = vadd.f32 %v151, %v175
    %177 = vdwg.mxu0
    %vm178 = vcmask 64512
    %v180 = vsel %vm178, %v119, 0
    %v183 = vsel %vm178, %v122, 0
    %v186 = vsel %vm178, %v146, 0
    %v189 = vsel %vm178, %v149, 0
    %191 = vmatpush.xpose.msra.mxu0 0.0
    %192 = vmatpush.xpose.msra.mxu0 0.0
    %193 = vmatpush.xpose.msra.mxu0 0.0
    %194 = vmatpush.xpose.msra.mxu0 0.0
    %195 = vmatpush.xpose.msra.mxu0 0.0
    %196 = vmatpush.xpose.msra.mxu0 0.0
    %197 = vmatpush.xpose.msra.mxu0 0.0
    %198 = vmatpush.xpose.msra.mxu0 0.0
    %199 = vmatpush.xpose.msra.mxu0 0.0
    %200 = vmatpush.xpose.msra.mxu0 0.0
    %201 = vmatpush.xpose.msra.mxu0 0.0
    %202 = vmatpush.xpose.msra.mxu0 0.0
    %203 = vmatpush.xpose.msra.mxu0 0.0
    %204 = vmatpush.xpose.msra.mxu0 0.0
    %205 = vmatpush.xpose.msra.mxu0 %v189
    %206 = vmatpush.xpose.msra.mxu0 %v186
    %207 = vmatmul.f32.gmra.mxu0 %v180
    %v208 = vpop.f32.mrf.mxu0
    %v209 = vadd.f32 0.0, %v208
    %210 = vmatmul.f32.gmra.mxu0 %v183
    %v211 = vpop.f32.mrf.mxu0
    %v212 = vadd.f32 0.0, %v211
    %213 = vdwg.mxu0
    %v214 = vmul.f32 %v209, 0.35355338
    %v215 = vmul.f32 %v212, 0.35355338
    %v216 = vadd.f32 %v214, %v82
    %v217 = vadd.f32 %v215, %v83
    %vm218 = vcmask 130048
    %v219 = vsel %vm218, %v216, -inf
    %220 = vmax.xlane.f32.xlu0 %v219
    %v221 = vpop.xlane.xlu0 %220
    %v222 = vsel %vm218, %v217, -inf
    %223 = vmax.xlane.f32.xlu0 %v222
    %v224 = vpop.xlane.xlu0 %223
    %v225 = vsub.f32 %v216, %v221
    %v226 = vsub.f32 %v217, %v224
    %v227 = vmul.f32 %v225, 1.442695
    %v228 = vpow.pop %v227
    %v229 = vmul.f32 %v226, 1.442695
    %v230 = vpow.pop %v229
    %v231 = vsel %vm218, %v228, 0.0
    %232 = vadd.xlane.f32.xlu0 %v231
    %v233 = vpop.xlane.xlu0 %232
    %v234 = vsel %vm218, %v230, 0.0
    %235 = vadd.xlane.f32.xlu0 %v234
    %v236 = vpop.xlane.xlu0 %235
    %v237 = vrcp.pop %v233
    %v238 = vrcp.pop %v236
    %v239 = vmul.f32 %v228, %v237
    %v240 = vmul.f32 %v230, %v238
    %v242 = vsel %vm218, %v239, 0
    %v245 = vsel %vm218, %v240, 0
    %247 = vmatpush.msra.mxu0 0.0
    %248 = vmatpush.msra.mxu0 0.0
    %249 = vmatpush.msra.mxu0 0.0
    %250 = vmatpush.msra.mxu0 0.0
    %251 = vmatpush.msra.mxu0 0.0
    %252 = vmatpush.msra.mxu0 0.0
    %253 = vmatpush.msra.mxu0 0.0
    %254 = vmatpush.msra.mxu0 0.0
    %255 = vmatpush.msra.mxu0 0.0
    %256 = vmatpush.msra.mxu0 0.0
    %257 = vmatpush.msra.mxu0 0.0
    %258 = vmatpush.msra.mxu0 0.0
    %259 = vmatpush.msra.mxu0 0.0
    %260 = vmatpush.msra.mxu0 0.0
    %261 = vmatpush.msra.mxu0 %v176
    %262 = vmatpush.msra.mxu0 %v173
    %263 = vmatmul.f32.gmra.mxu0 %v242
    %v264 = vpop.f32.mrf.mxu0
    %v265 = vadd.f32 0.0, %v264
    %266 = vmatmul.f32.gmra.mxu0 %v245
    %v267 = vpop.f32.mrf.mxu0
    %v268 = vadd.f32 0.0, %v267
    %269 = vdwg.mxu0
    %v270 = vld [vmem:[#allocation2 + $0xd0] sm:$0xff]
    %v271 = vld [vmem:[#allocation2 + $0x68] sm:$0xff]
    %v272 = vld [vmem:[#allocation2 + $0x88] sm:$0xff]
    %v273 = vld [vmem:[#allocation2 + $0xa8] sm:$0xff]
    %v274 = vld [vmem:[#allocation2 + $0xc1] sm:$0x1]
    %v275 = vld [vmem:[#allocation2 + $0xc5] sm:$0x1]
    %v276 = vld [vmem:[#allocation2 + $0xc9] sm:$0x1]
    %v277 = vperm.slane %v274, 0
    %v279 = vsel %vm91, %v271, 0
    %281 = vmatpush.xpose.msra.mxu0 0.0
    %282 = vmatpush.xpose.msra.mxu0 0.0
    %283 = vmatpush.xpose.msra.mxu0 0.0
    %284 = vmatpush.xpose.msra.mxu0 0.0
    %285 = vmatpush.xpose.msra.mxu0 0.0
    %286 = vmatpush.xpose.msra.mxu0 0.0
    %287 = vmatpush.xpose.msra.mxu0 0.0
    %288 = vmatpush.xpose.msra.mxu0 0.0
    %289 = vmatpush.xpose.msra.mxu0 0.0
    %290 = vmatpush.xpose.msra.mxu0 0.0
    %291 = vmatpush.xpose.msra.mxu0 0.0
    %292 = vmatpush.xpose.msra.mxu0 0.0
    %293 = vmatpush.xpose.msra.mxu0 0.0
    %294 = vmatpush.xpose.msra.mxu0 0.0
    %295 = vmatpush.xpose.msra.mxu0 0.0
    %296 = vmatpush.xpose.msra.mxu0 %v279
    %297 = vmatmul.f32.gmra.mxu0 %v93
    %v298 = vpop.f32.mrf.mxu0
    %v299 = vadd.f32 %v277, %v298
    %300 = vmatmul.f32.gmra.mxu0 %v96
    %v301 = vpop.f32.mrf.mxu0
    %v302 = vadd.f32 %v277, %v301
    %303 = vdwg.mxu0
    %v304 = vperm.slane %v275, 0
    %v306 = vsel %vm91, %v272, 0
    %308 = vmatpush.xpose.msra.mxu0 0.0
    %309 = vmatpush.xpose.msra.mxu0 0.0
    %310 = vmatpush.xpose.msra.mxu0 0.0
    %311 = vmatpush.xpose.msra.mxu0 0.0
    %312 = vmatpush.xpose.msra.mxu0 0.0
    %313 = vmatpush.xpose.msra.mxu0 0.0
    %314 = vmatpush.xpose.msra.mxu0 0.0
    %315 = vmatpush.xpose.msra.mxu0 0.0
    %316 = vmatpush.xpose.msra.mxu0 0.0
    %317 = vmatpush.xpose.msra.mxu0 0.0
    %318 = vmatpush.xpose.msra.mxu0 0.0
    %319 = vmatpush.xpose.msra.mxu0 0.0
    %320 = vmatpush.xpose.msra.mxu0 0.0
    %321 = vmatpush.xpose.msra.mxu0 0.0
    %322 = vmatpush.xpose.msra.mxu0 0.0
    %323 = vmatpush.xpose.msra.mxu0 %v306
    %324 = vmatmul.f32.gmra.mxu0 %v93
    %v325 = vpop.f32.mrf.mxu0
    %v326 = vadd.f32 %v304, %v325
    %327 = vmatmul.f32.gmra.mxu0 %v96
    %v328 = vpop.f32.mrf.mxu0
    %v329 = vadd.f32 %v304, %v328
    %330 = vdwg.mxu0
    %v331 = vperm.slane %v276, 0
    %v333 = vsel %vm91, %v273, 0
    %335 = vmatpush.xpose.msra.mxu0 0.0
    %336 = vmatpush.xpose.msra.mxu0 0.0
    %337 = vmatpush.xpose.msra.mxu0 0.0
    %338 = vmatpush.xpose.msra.mxu0 0.0
    %339 = vmatpush.xpose.msra.mxu0 0.0
    %340 = vmatpush.xpose.msra.mxu0 0.0
    %341 = vmatpush.xpose.msra.mxu0 0.0
    %342 = vmatpush.xpose.msra.mxu0 0.0
    %343 = vmatpush.xpose.msra.mxu0 0.0
    %344 = vmatpush.xpose.msra.mxu0 0.0
    %345 = vmatpush.xpose.msra.mxu0 0.0
    %346 = vmatpush.xpose.msra.mxu0 0.0
    %347 = vmatpush.xpose.msra.mxu0 0.0
    %348 = vmatpush.xpose.msra.mxu0 0.0
    %349 = vmatpush.xpose.msra.mxu0 0.0
    %350 = vmatpush.xpose.msra.mxu0 %v333
    %351 = vmatmul.f32.gmra.mxu0 %v93
    %v352 = vpop.f32.mrf.mxu0
    %v353 = vadd.f32 %v331, %v352
    %354 = vmatmul.f32.gmra.mxu0 %v96
    %v355 = vpop.f32.mrf.mxu0
    %v356 = vadd.f32 %v331, %v355
    %357 = vdwg.mxu0
    %v359 = vsel %vm178, %v299, 0
    %v362 = vsel %vm178, %v302, 0
    %v365 = vsel %vm178, %v326, 0
    %v368 = vsel %vm178, %v329, 0
    %370 = vmatpush.xpose.msra.mxu0 0.0
    %371 = vmatpush.xpose.msra.mxu0 0.0
    %372 = vmatpush.xpose.msra.mxu0 0.0
    %373 = vmatpush.xpose.msra.mxu0 0.0
    %374 = vmatpush.xpose.msra.mxu0 0.0
    %375 = vmatpush.xpose.msra.mxu0 0.0
    %376 = vmatpush.xpose.msra.mxu0 0.0
    %377 = vmatpush.xpose.msra.mxu0 0.0
    %378 = vmatpush.xpose.msra.mxu0 0.0
    %379 = vmatpush.xpose.msra.mxu0 0.0
    %380 = vmatpush.xpose.msra.mxu0 0.0
    %381 = vmatpush.xpose.msra.mxu0 0.0
    %382 = vmatpush.xpose.msra.mxu0 0.0
    %383 = vmatpush.xpose.msra.mxu0 0.0
    %384 = vmatpush.xpose.msra.mxu0 %v368
    %385 = vmatpush.xpose.msra.mxu0 %v365
    %386 = vmatmul.f32.gmra.mxu0 %v359
    %v387 = vpop.f32.mrf.mxu0
    %v388 = vadd.f32 0.0, %v387
    %389 = vmatmul.f32.gmra.mxu0 %v362
    %v390 = vpop.f32.mrf.mxu0
    %v391 = vadd.f32 0.0, %v390
    %392 = vdwg.mxu0
    %v393 = vmul.f32 %v388, 0.35355338
    %v394 = vmul.f32 %v391, 0.35355338
    %v395 = vadd.f32 %v393, %v82
    %v396 = vadd.f32 %v394, %v83
    %v397 = vsel %vm218, %v395, -inf
    %398 = vmax.xlane.f32.xlu0 %v397
    %v399 = vpop.xlane.xlu0 %398
    %v400 = vsel %vm218, %v396, -inf
    %401 = vmax.xlane.f32.xlu0 %v400
    %v402 = vpop.xlane.xlu0 %401
    %v403 = vsub.f32 %v395, %v399
    %v404 = vsub.f32 %v396, %v402
    %v405 = vmul.f32 %v403, 1.442695
    %v406 = vpow.pop %v405
    %v407 = vmul.f32 %v404, 1.442695
    %v408 = vpow.pop %v407
    %v409 = vsel %vm218, %v406, 0.0
    %410 = vadd.xlane.f32.xlu0 %v409
    %v411 = vpop.xlane.xlu0 %410
    %v412 = vsel %vm218, %v408, 0.0
    %413 = vadd.xlane.f32.xlu0 %v412
    %v414 = vpop.xlane.xlu0 %413
    %v415 = vrcp.pop %v411
    %v416 = vrcp.pop %v414
    %v417 = vmul.f32 %v406, %v415
    %v418 = vmul.f32 %v408, %v416
    %v420 = vsel %vm218, %v417, 0
    %v423 = vsel %vm218, %v418, 0
    %425 = vmatpush.msra.mxu0 0.0
    %426 = vmatpush.msra.mxu0 0.0
    %427 = vmatpush.msra.mxu0 0.0
    %428 = vmatpush.msra.mxu0 0.0
    %429 = vmatpush.msra.mxu0 0.0
    %430 = vmatpush.msra.mxu0 0.0
    %431 = vmatpush.msra.mxu0 0.0
    %432 = vmatpush.msra.mxu0 0.0
    %433 = vmatpush.msra.mxu0 0.0
    %434 = vmatpush.msra.mxu0 0.0
    %435 = vmatpush.msra.mxu0 0.0
    %436 = vmatpush.msra.mxu0 0.0
    %437 = vmatpush.msra.mxu0 0.0
    %438 = vmatpush.msra.mxu0 0.0
    %439 = vmatpush.msra.mxu0 %v356
    %440 = vmatpush.msra.mxu0 %v353
    %441 = vmatmul.f32.gmra.mxu0 %v420
    %v442 = vpop.f32.mrf.mxu0
    %v443 = vadd.f32 0.0, %v442
    %444 = vmatmul.f32.gmra.mxu0 %v423
    %v445 = vpop.f32.mrf.mxu0
    %v446 = vadd.f32 0.0, %v445
    %447 = vdwg.mxu0
    %v448 = vld [vmem:[#allocation2 + $0xd8] sm:$0xff]
    %v450 = vsel %vm178, %v443, 0
    %v453 = vsel %vm178, %v446, 0
    %455 = vmatpush.msra.mxu0 0.0
    %456 = vmatpush.msra.mxu0 0.0
    %457 = vmatpush.msra.mxu0 0.0
    %458 = vmatpush.msra.mxu0 0.0
    %459 = vmatpush.msra.mxu0 0.0
    %460 = vmatpush.msra.mxu0 0.0
    %461 = vmatpush.msra.mxu0 0.0
    %462 = vmatpush.msra.mxu0 0.0
    %463 = vmatpush.msra.mxu0 0.0
    %464 = vmatpush.msra.mxu0 0.0
    %465 = vmatpush.msra.mxu0 0.0
    %466 = vmatpush.msra.mxu0 0.0
    %467 = vmatpush.msra.mxu0 0.0
    %468 = vmatpush.msra.mxu0 0.0
    %469 = vmatpush.msra.mxu0 0.0
    %470 = vmatpush.msra.mxu0 %v448
    %471 = vmatmul.f32.gmra.mxu0 %v450
    %v472 = vpop.f32.mrf.mxu0
    %v473 = vadd.f32 0.0, %v472
    %474 = vmatmul.f32.gmra.mxu0 %v453
    %v475 = vpop.f32.mrf.mxu0
    %v476 = vadd.f32 0.0, %v475
    %477 = vdwg.mxu0
    %v479 = vsel %vm178, %v265, 0
    %v482 = vsel %vm178, %v268, 0
    %484 = vmatpush.msra.mxu0 0.0
    %485 = vmatpush.msra.mxu0 0.0
    %486 = vmatpush.msra.mxu0 0.0
    %487 = vmatpush.msra.mxu0 0.0
    %488 = vmatpush.msra.mxu0 0.0
    %489 = vmatpush.msra.mxu0 0.0
    %490 = vmatpush.msra.mxu0 0.0
    %491 = vmatpush.msra.mxu0 0.0
    %492 = vmatpush.msra.mxu0 0.0
    %493 = vmatpush.msra.mxu0 0.0
    %494 = vmatpush.msra.mxu0 0.0
    %495 = vmatpush.msra.mxu0 0.0
    %496 = vmatpush.msra.mxu0 0.0
    %497 = vmatpush.msra.mxu0 0.0
    %498 = vmatpush.msra.mxu0 0.0
    %499 = vmatpush.msra.mxu0 %v270
    %500 = vmatmul.f32.gmra.mxu0 %v479
    %v501 = vpop.f32.mrf.mxu0
    %v502 = vadd.f32 %v473, %v501
    %503 = vmatmul.f32.gmra.mxu0 %v482
    %v504 = vpop.f32.mrf.mxu0
    %v505 = vadd.f32 %v476, %v504
    %506 = vdwg.mxu0
    %v507 = vld [vmem:[#allocation2 + $0x70] sm:$0xff]
    %v508 = vld [vmem:[#allocation2 + $0x90] sm:$0xff]
    %v509 = vld [vmem:[#allocation2 + $0xb0] sm:$0xff]
    %v510 = vld [vmem:[#allocation2 + $0xc2] sm:$0x1]
    %v511 = vld [vmem:[#allocation2 + $0xc6] sm:$0x1]
    %v512 = vld [vmem:[#allocation2 + $0xca] sm:$0x1]
    %v513 = vperm.slane %v510, 0
    %v515 = vsel %vm91, %v507, 0
    %517 = vmatpush.xpose.msra.mxu0 0.0
    %518 = vmatpush.xpose.msra.mxu0 0.0
    %519 = vmatpush.xpose.msra.mxu0 0.0
    %520 = vmatpush.xpose.msra.mxu0 0.0
    %521 = vmatpush.xpose.msra.mxu0 0.0
    %522 = vmatpush.xpose.msra.mxu0 0.0
    %523 = vmatpush.xpose.msra.mxu0 0.0
    %524 = vmatpush.xpose.msra.mxu0 0.0
    %525 = vmatpush.xpose.msra.mxu0 0.0
    %526 = vmatpush.xpose.msra.mxu0 0.0
    %527 = vmatpush.xpose.msra.mxu0 0.0
    %528 = vmatpush.xpose.msra.mxu0 0.0
    %529 = vmatpush.xpose.msra.mxu0 0.0
    %530 = vmatpush.xpose.msra.mxu0 0.0
    %531 = vmatpush.xpose.msra.mxu0 0.0
    %532 = vmatpush.xpose.msra.mxu0 %v515
    %533 = vmatmul.f32.gmra.mxu0 %v93
    %v534 = vpop.f32.mrf.mxu0
    %v535 = vadd.f32 %v513, %v534
    %536 = vmatmul.f32.gmra.mxu0 %v96
    %v537 = vpop.f32.mrf.mxu0
    %v538 = vadd.f32 %v513, %v537
    %539 = vdwg.mxu0
    %v540 = vperm.slane %v511, 0
    %v542 = vsel %vm91, %v508, 0
    %544 = vmatpush.xpose.msra.mxu0 0.0
    %545 = vmatpush.xpose.msra.mxu0 0.0
    %546 = vmatpush.xpose.msra.mxu0 0.0
    %547 = vmatpush.xpose.msra.mxu0 0.0
    %548 = vmatpush.xpose.msra.mxu0 0.0
    %549 = vmatpush.xpose.msra.mxu0 0.0
    %550 = vmatpush.xpose.msra.mxu0 0.0
    %551 = vmatpush.xpose.msra.mxu0 0.0
    %552 = vmatpush.xpose.msra.mxu0 0.0
    %553 = vmatpush.xpose.msra.mxu0 0.0
    %554 = vmatpush.xpose.msra.mxu0 0.0
    %555 = vmatpush.xpose.msra.mxu0 0.0
    %556 = vmatpush.xpose.msra.mxu0 0.0
    %557 = vmatpush.xpose.msra.mxu0 0.0
    %558 = vmatpush.xpose.msra.mxu0 0.0
    %559 = vmatpush.xpose.msra.mxu0 %v542
    %560 = vmatmul.f32.gmra.mxu0 %v93
    %v561 = vpop.f32.mrf.mxu0
    %v562 = vadd.f32 %v540, %v561
    %563 = vmatmul.f32.gmra.mxu0 %v96
    %v564 = vpop.f32.mrf.mxu0
    %v565 = vadd.f32 %v540, %v564
    %566 = vdwg.mxu0
    %v567 = vperm.slane %v512, 0
    %v569 = vsel %vm91, %v509, 0
    %571 = vmatpush.xpose.msra.mxu0 0.0
    %572 = vmatpush.xpose.msra.mxu0 0.0
    %573 = vmatpush.xpose.msra.mxu0 0.0
    %574 = vmatpush.xpose.msra.mxu0 0.0
    %575 = vmatpush.xpose.msra.mxu0 0.0
    %576 = vmatpush.xpose.msra.mxu0 0.0
    %577 = vmatpush.xpose.msra.mxu0 0.0
    %578 = vmatpush.xpose.msra.mxu0 0.0
    %579 = vmatpush.xpose.msra.mxu0 0.0
    %580 = vmatpush.xpose.msra.mxu0 0.0
    %581 = vmatpush.xpose.msra.mxu0 0.0
    %582 = vmatpush.xpose.msra.mxu0 0.0
    %583 = vmatpush.xpose.msra.mxu0 0.0
    %584 = vmatpush.xpose.msra.mxu0 0.0
    %585 = vmatpush.xpose.msra.mxu0 0.0
    %586 = vmatpush.xpose.msra.mxu0 %v569
    %587 = vmatmul.f32.gmra.mxu0 %v93
    %v588 = vpop.f32.mrf.mxu0
    %v589 = vadd.f32 %v567, %v588
    %590 = vmatmul.f32.gmra.mxu0 %v96
    %v591 = vpop.f32.mrf.mxu0
    %v592 = vadd.f32 %v567, %v591
    %593 = vdwg.mxu0
    %v595 = vsel %vm178, %v535, 0
    %v598 = vsel %vm178, %v538, 0
    %v601 = vsel %vm178, %v562, 0
    %v604 = vsel %vm178, %v565, 0
    %606 = vmatpush.xpose.msra.mxu0 0.0
    %607 = vmatpush.xpose.msra.mxu0 0.0
    %608 = vmatpush.xpose.msra.mxu0 0.0
    %609 = vmatpush.xpose.msra.mxu0 0.0
    %610 = vmatpush.xpose.msra.mxu0 0.0
    %611 = vmatpush.xpose.msra.mxu0 0.0
    %612 = vmatpush.xpose.msra.mxu0 0.0
    %613 = vmatpush.xpose.msra.mxu0 0.0
    %614 = vmatpush.xpose.msra.mxu0 0.0
    %615 = vmatpush.xpose.msra.mxu0 0.0
    %616 = vmatpush.xpose.msra.mxu0 0.0
    %617 = vmatpush.xpose.msra.mxu0 0.0
    %618 = vmatpush.xpose.msra.mxu0 0.0
    %619 = vmatpush.xpose.msra.mxu0 0.0
    %620 = vmatpush.xpose.msra.mxu0 %v604
    %621 = vmatpush.xpose.msra.mxu0 %v601
    %622 = vmatmul.f32.gmra.mxu0 %v595
    %v623 = vpop.f32.mrf.mxu0
    %v624 = vadd.f32 0.0, %v623
    %625 = vmatmul.f32.gmra.mxu0 %v598
    %v626 = vpop.f32.mrf.mxu0
    %v627 = vadd.f32 0.0, %v626
    %628 = vdwg.mxu0
    %v629 = vmul.f32 %v624, 0.35355338
    %v630 = vmul.f32 %v627, 0.35355338
    %v631 = vadd.f32 %v629, %v82
    %v632 = vadd.f32 %v630, %v83
    %v633 = vsel %vm218, %v631, -inf
    %634 = vmax.xlane.f32.xlu0 %v633
    %v635 = vpop.xlane.xlu0 %634
    %v636 = vsel %vm218, %v632, -inf
    %637 = vmax.xlane.f32.xlu0 %v636
    %v638 = vpop.xlane.xlu0 %637
    %v639 = vsub.f32 %v631, %v635
    %v640 = vsub.f32 %v632, %v638
    %v641 = vmul.f32 %v639, 1.442695
    %v642 = vpow.pop %v641
    %v643 = vmul.f32 %v640, 1.442695
    %v644 = vpow.pop %v643
    %v645 = vsel %vm218, %v642, 0.0
    %646 = vadd.xlane.f32.xlu0 %v645
    %v647 = vpop.xlane.xlu0 %646
    %v648 = vsel %vm218, %v644, 0.0
    %649 = vadd.xlane.f32.xlu0 %v648
    %v650 = vpop.xlane.xlu0 %649
    %v651 = vrcp.pop %v647
    %v652 = vrcp.pop %v650
    %v653 = vmul.f32 %v642, %v651
    %v654 = vmul.f32 %v644, %v652
    %v656 = vsel %vm218, %v653, 0
    %v659 = vsel %vm218, %v654, 0
    %661 = vmatpush.msra.mxu0 0.0
    %662 = vmatpush.msra.mxu0 0.0
    %663 = vmatpush.msra.mxu0 0.0
    %664 = vmatpush.msra.mxu0 0.0
    %665 = vmatpush.msra.mxu0 0.0
    %666 = vmatpush.msra.mxu0 0.0
    %667 = vmatpush.msra.mxu0 0.0
    %668 = vmatpush.msra.mxu0 0.0
    %669 = vmatpush.msra.mxu0 0.0
    %670 = vmatpush.msra.mxu0 0.0
    %671 = vmatpush.msra.mxu0 0.0
    %672 = vmatpush.msra.mxu0 0.0
    %673 = vmatpush.msra.mxu0 0.0
    %674 = vmatpush.msra.mxu0 0.0
    %675 = vmatpush.msra.mxu0 %v592
    %676 = vmatpush.msra.mxu0 %v589
    %677 = vmatmul.f32.gmra.mxu0 %v656
    %v678 = vpop.f32.mrf.mxu0
    %v679 = vadd.f32 0.0, %v678
    %680 = vmatmul.f32.gmra.mxu0 %v659
    %v681 = vpop.f32.mrf.mxu0
    %v682 = vadd.f32 0.0, %v681
    %683 = vdwg.mxu0
    %v684 = vld [vmem:[#allocation2 + $0xe0] sm:$0xff]
    %v686 = vsel %vm178, %v679, 0
    %v689 = vsel %vm178, %v682, 0
    %691 = vmatpush.msra.mxu0 0.0
    %692 = vmatpush.msra.mxu0 0.0
    %693 = vmatpush.msra.mxu0 0.0
    %694 = vmatpush.msra.mxu0 0.0
    %695 = vmatpush.msra.mxu0 0.0
    %696 = vmatpush.msra.mxu0 0.0
    %697 = vmatpush.msra.mxu0 0.0
    %698 = vmatpush.msra.mxu0 0.0
    %699 = vmatpush.msra.mxu0 0.0
    %700 = vmatpush.msra.mxu0 0.0
    %701 = vmatpush.msra.mxu0 0.0
    %702 = vmatpush.msra.mxu0 0.0
    %703 = vmatpush.msra.mxu0 0.0
    %704 = vmatpush.msra.mxu0 0.0
    %705 = vmatpush.msra.mxu0 0.0
    %706 = vmatpush.msra.mxu0 %v684
    %707 = vmatmul.f32.gmra.mxu0 %v686
    %v708 = vpop.f32.mrf.mxu0
    %v709 = vadd.f32 0.0, %v708
    %710 = vmatmul.f32.gmra.mxu0 %v689
    %v711 = vpop.f32.mrf.mxu0
    %v712 = vadd.f32 0.0, %v711
    %713 = vdwg.mxu0
    %v714 = vadd.f32 %v502, %v709
    %v715 = vadd.f32 %v505, %v712
    %v716 = vld [vmem:[#allocation2 + $0x78] sm:$0xff]
    %v717 = vld [vmem:[#allocation2 + $0x98] sm:$0xff]
    %v718 = vld [vmem:[#allocation2 + $0xb8] sm:$0xff]
    %v719 = vld [vmem:[#allocation2 + $0xc3] sm:$0x1]
    %v720 = vld [vmem:[#allocation2 + $0xc7] sm:$0x1]
    %v721 = vld [vmem:[#allocation2 + $0xcb] sm:$0x1]
    %v722 = vperm.slane %v719, 0
    %v724 = vsel %vm91, %v716, 0
    %726 = vmatpush.xpose.msra.mxu0 0.0
    %727 = vmatpush.xpose.msra.mxu0 0.0
    %728 = vmatpush.xpose.msra.mxu0 0.0
    %729 = vmatpush.xpose.msra.mxu0 0.0
    %730 = vmatpush.xpose.msra.mxu0 0.0
    %731 = vmatpush.xpose.msra.mxu0 0.0
    %732 = vmatpush.xpose.msra.mxu0 0.0
    %733 = vmatpush.xpose.msra.mxu0 0.0
    %734 = vmatpush.xpose.msra.mxu0 0.0
    %735 = vmatpush.xpose.msra.mxu0 0.0
    %736 = vmatpush.xpose.msra.mxu0 0.0
    %737 = vmatpush.xpose.msra.mxu0 0.0
    %738 = vmatpush.xpose.msra.mxu0 0.0
    %739 = vmatpush.xpose.msra.mxu0 0.0
    %740 = vmatpush.xpose.msra.mxu0 0.0
    %741 = vmatpush.xpose.msra.mxu0 %v724
    %742 = vmatmul.f32.gmra.mxu0 %v93
    %v743 = vpop.f32.mrf.mxu0
    %v744 = vadd.f32 %v722, %v743
    %745 = vmatmul.f32.gmra.mxu0 %v96
    %v746 = vpop.f32.mrf.mxu0
    %v747 = vadd.f32 %v722, %v746
    %748 = vdwg.mxu0
    %v749 = vperm.slane %v720, 0
    %v751 = vsel %vm91, %v717, 0
    %753 = vmatpush.xpose.msra.mxu0 0.0
    %754 = vmatpush.xpose.msra.mxu0 0.0
    %755 = vmatpush.xpose.msra.mxu0 0.0
    %756 = vmatpush.xpose.msra.mxu0 0.0
    %757 = vmatpush.xpose.msra.mxu0 0.0
    %758 = vmatpush.xpose.msra.mxu0 0.0
    %759 = vmatpush.xpose.msra.mxu0 0.0
    %760 = vmatpush.xpose.msra.mxu0 0.0
    %761 = vmatpush.xpose.msra.mxu0 0.0
    %762 = vmatpush.xpose.msra.mxu0 0.0
    %763 = vmatpush.xpose.msra.mxu0 0.0
    %764 = vmatpush.xpose.msra.mxu0 0.0
    %765 = vmatpush.xpose.msra.mxu0 0.0
    %766 = vmatpush.xpose.msra.mxu0 0.0
    %767 = vmatpush.xpose.msra.mxu0 0.0
    %768 = vmatpush.xpose.msra.mxu0 %v751
    %769 = vmatmul.f32.gmra.mxu0 %v93
    %v770 = vpop.f32.mrf.mxu0
    %v771 = vadd.f32 %v749, %v770
    %772 = vmatmul.f32.gmra.mxu0 %v96
    %v773 = vpop.f32.mrf.mxu0
    %v774 = vadd.f32 %v749, %v773
    %775 = vdwg.mxu0
    %v776 = vperm.slane %v721, 0
    %v778 = vsel %vm91, %v718, 0
    %780 = vmatpush.xpose.msra.mxu0 0.0
    %781 = vmatpush.xpose.msra.mxu0 0.0
    %782 = vmatpush.xpose.msra.mxu0 0.0
    %783 = vmatpush.xpose.msra.mxu0 0.0
    %784 = vmatpush.xpose.msra.mxu0 0.0
    %785 = vmatpush.xpose.msra.mxu0 0.0
    %786 = vmatpush.xpose.msra.mxu0 0.0
    %787 = vmatpush.xpose.msra.mxu0 0.0
    %788 = vmatpush.xpose.msra.mxu0 0.0
    %789 = vmatpush.xpose.msra.mxu0 0.0
    %790 = vmatpush.xpose.msra.mxu0 0.0
    %791 = vmatpush.xpose.msra.mxu0 0.0
    %792 = vmatpush.xpose.msra.mxu0 0.0
    %793 = vmatpush.xpose.msra.mxu0 0.0
    %794 = vmatpush.xpose.msra.mxu0 0.0
    %795 = vmatpush.xpose.msra.mxu0 %v778
    %796 = vmatmul.f32.gmra.mxu0 %v93
    %v797 = vpop.f32.mrf.mxu0
    %v798 = vadd.f32 %v776, %v797
    %799 = vmatmul.f32.gmra.mxu0 %v96
    %v800 = vpop.f32.mrf.mxu0
    %v801 = vadd.f32 %v776, %v800
    %802 = vdwg.mxu0
    %v804 = vsel %vm178, %v744, 0
    %v807 = vsel %vm178, %v747, 0
    %v810 = vsel %vm178, %v771, 0
    %v813 = vsel %vm178, %v774, 0
    %815 = vmatpush.xpose.msra.mxu0 0.0
    %816 = vmatpush.xpose.msra.mxu0 0.0
    %817 = vmatpush.xpose.msra.mxu0 0.0
    %818 = vmatpush.xpose.msra.mxu0 0.0
    %819 = vmatpush.xpose.msra.mxu0 0.0
    %820 = vmatpush.xpose.msra.mxu0 0.0
    %821 = vmatpush.xpose.msra.mxu0 0.0
    %822 = vmatpush.xpose.msra.mxu0 0.0
    %823 = vmatpush.xpose.msra.mxu0 0.0
    %824 = vmatpush.xpose.msra.mxu0 0.0
    %825 = vmatpush.xpose.msra.mxu0 0.0
    %826 = vmatpush.xpose.msra.mxu0 0.0
    %827 = vmatpush.xpose.msra.mxu0 0.0
    %828 = vmatpush.xpose.msra.mxu0 0.0
    %829 = vmatpush.xpose.msra.mxu0 %v813
    %830 = vmatpush.xpose.msra.mxu0 %v810
    %831 = vmatmul.f32.gmra.mxu0 %v804
    %v832 = vpop.f32.mrf.mxu0
    %v833 = vadd.f32 0.0, %v832
    %834 = vmatmul.f32.gmra.mxu0 %v807
    %v835 = vpop.f32.mrf.mxu0
    %v836 = vadd.f32 0.0, %v835
    %837 = vdwg.mxu0
    %v838 = vmul.f32 %v833, 0.35355338
    %v839 = vmul.f32 %v836, 0.35355338
    %v840 = vadd.f32 %v838, %v82
    %v841 = vadd.f32 %v839, %v83
    %v842 = vsel %vm218, %v840, -inf
    %843 = vmax.xlane.f32.xlu0 %v842
    %v844 = vpop.xlane.xlu0 %843
    %v845 = vsel %vm218, %v841, -inf
    %846 = vmax.xlane.f32.xlu0 %v845
    %v847 = vpop.xlane.xlu0 %846
    %v848 = vsub.f32 %v840, %v844
    %v849 = vsub.f32 %v841, %v847
    %v850 = vmul.f32 %v848, 1.442695
    %v851 = vpow.pop %v850
    %v852 = vmul.f32 %v849, 1.442695
    %v853 = vpow.pop %v852
    %v854 = vsel %vm218, %v851, 0.0
    %855 = vadd.xlane.f32.xlu0 %v854
    %v856 = vpop.xlane.xlu0 %855
    %v857 = vsel %vm218, %v853, 0.0
    %858 = vadd.xlane.f32.xlu0 %v857
    %v859 = vpop.xlane.xlu0 %858
    %v860 = vrcp.pop %v856
    %v861 = vrcp.pop %v859
    %v862 = vmul.f32 %v851, %v860
    %v863 = vmul.f32 %v853, %v861
    %v865 = vsel %vm218, %v862, 0
    %v868 = vsel %vm218, %v863, 0
    %870 = vmatpush.msra.mxu0 0.0
    %871 = vmatpush.msra.mxu0 0.0
    %872 = vmatpush.msra.mxu0 0.0
    %873 = vmatpush.msra.mxu0 0.0
    %874 = vmatpush.msra.mxu0 0.0
    %875 = vmatpush.msra.mxu0 0.0
    %876 = vmatpush.msra.mxu0 0.0
    %877 = vmatpush.msra.mxu0 0.0
    %878 = vmatpush.msra.mxu0 0.0
    %879 = vmatpush.msra.mxu0 0.0
    %880 = vmatpush.msra.mxu0 0.0
    %881 = vmatpush.msra.mxu0 0.0
    %882 = vmatpush.msra.mxu0 0.0
    %883 = vmatpush.msra.mxu0 0.0
    %884 = vmatpush.msra.mxu0 %v801
    %885 = vmatpush.msra.mxu0 %v798
    %886 = vmatmul.f32.gmra.mxu0 %v865
    %v887 = vpop.f32.mrf.mxu0
    %v888 = vadd.f32 0.0, %v887
    %889 = vmatmul.f32.gmra.mxu0 %v868
    %v890 = vpop.f32.mrf.mxu0
    %v891 = vadd.f32 0.0, %v890
    %892 = vdwg.mxu0
    %v893 = vld [vmem:[#allocation2 + $0xe8] sm:$0xff]
    %v895 = vsel %vm178, %v888, 0
    %v898 = vsel %vm178, %v891, 0
    %900 = vmatpush.msra.mxu0 0.0
    %901 = vmatpush.msra.mxu0 0.0
    %902 = vmatpush.msra.mxu0 0.0
    %903 = vmatpush.msra.mxu0 0.0
    %904 = vmatpush.msra.mxu0 0.0
    %905 = vmatpush.msra.mxu0 0.0
    %906 = vmatpush.msra.mxu0 0.0
    %907 = vmatpush.msra.mxu0 0.0
    %908 = vmatpush.msra.mxu0 0.0
    %909 = vmatpush.msra.mxu0 0.0
    %910 = vmatpush.msra.mxu0 0.0
    %911 = vmatpush.msra.mxu0 0.0
    %912 = vmatpush.msra.mxu0 0.0
    %913 = vmatpush.msra.mxu0 0.0
    %914 = vmatpush.msra.mxu0 0.0
    %915 = vmatpush.msra.mxu0 %v893
    %916 = vmatmul.f32.gmra.mxu0 %v895
    %v917 = vpop.f32.mrf.mxu0
    %v918 = vadd.f32 0.0, %v917
    %919 = vmatmul.f32.gmra.mxu0 %v898
    %v920 = vpop.f32.mrf.mxu0
    %v921 = vadd.f32 0.0, %v920
    %922 = vdwg.mxu0
    %v923 = vadd.f32 %v714, %v918
    %v924 = vadd.f32 %v715, %v921
    %v925 = vld [vmem:[#allocation2 + $0xf0] sm:$0x1]
    %v926 = vperm.slane %v925, 0
    %v927 = vadd.f32 %v923, %v926
    %v928 = vadd.f32 %v924, %v926
    %v929 = vadd.f32 %v77, %v927
    %v930 = vadd.f32 %v80, %v928
    %v931 = vld [vmem:[#allocation2 + $0x5a9] sm:$0x1]
    %v932 = vld [vmem:[#allocation2 + $0x5aa] sm:$0x1]
    %v933 = vsel %vm91, %v929, 0.0
    %934 = vadd.xlane.f32.xlu0 %v933
    %v935 = vpop.xlane.xlu0 %934
    %v936 = vsel %vm91, %v930, 0.0
    %937 = vadd.xlane.f32.xlu0 %v936
    %v938 = vpop.xlane.xlu0 %937
    %v939 = vrcp.pop 32.0
    %v940 = vmul.f32 32.0, %v939
    %v941 = vsub.f32 1.0, %v940
    %v942 = vmul.f32 %v939, %v941
    %v943 = vadd.f32 %v939, %v942
    %vm944 = vweird.f32 %v939
    %v945 = vsel %vm944, %v939, %v943
    %v946 = vmul.f32 %v935, %v945
    %v947 = vmul.f32 %v938, %v945
    %v948 = vsub.f32 %v929, %v946
    %v949 = vsub.f32 %v930, %v947
    %v950 = vmul.f32 %v948, %v948
    %v951 = vmul.f32 %v949, %v949
    %v952 = vsel %vm91, %v950, 0.0
    %953 = vadd.xlane.f32.xlu0 %v952
    %v954 = vpop.xlane.xlu0 %953
    %v955 = vsel %vm91, %v951, 0.0
    %956 = vadd.xlane.f32.xlu0 %v955
    %v957 = vpop.xlane.xlu0 %956
    %v958 = vmul.f32 %v954, %v945
    %v959 = vmul.f32 %v957, %v945
    %v960 = vadd.f32 %v958, 1e-05
    %v961 = vadd.f32 %v959, 1e-05
    %v962 = vrsqrt.pop %v960
    %v963 = vmul.f32 %v962, %v960
    %v964 = vmul.f32 %v963, %v962
    %v965 = vmul.f32 0.5, %v964
    %v966 = vsub.f32 1.5, %v965
    %v967 = vmul.f32 %v962, %v966
    %vm968 = vweird.f32 %v960
    %vm969 = vweird.f32 %v962
    %vm970 = vmor %vm968, %vm969
    %v971 = vsel %vm970, %v962, %v967
    %v972 = vrsqrt.pop %v961
    %v973 = vmul.f32 %v972, %v961
    %v974 = vmul.f32 %v973, %v972
    %v975 = vmul.f32 0.5, %v974
    %v976 = vsub.f32 1.5, %v975
    %v977 = vmul.f32 %v972, %v976
    %vm978 = vweird.f32 %v961
    %vm979 = vweird.f32 %v972
    %vm980 = vmor %vm978, %vm979
    %v981 = vsel %vm980, %v972, %v977
    %v982 = vmul.f32 %v948, %v971
    %v983 = vmul.f32 %v949, %v981
    %v984 = vperm.slane %v931, 0
    %v985 = vmul.f32 %v982, %v984
    %v986 = vmul.f32 %v983, %v984
    %v987 = vperm.slane %v932, 0
    %v988 = vadd.f32 %v985, %v987
    %v989 = vadd.f32 %v986, %v987
    %v990 = vld [vmem:[#allocation2 + $0x3f0] sm:$0xff]
    %v991 = vld [vmem:[#allocation2 + $0x3f8] sm:$0xff]
    %v992 = vld [vmem:[#allocation2 + $0x400] sm:$0xff]
    %v993 = vld [vmem:[#allocation2 + $0x408] sm:$0xff]
    %v994 = vld [vmem:[#allocation2 + $0x410] sm:$0x1]
    %v995 = vld [vmem:[#allocation2 + $0x418] sm:$0xff]
    %v996 = vld [vmem:[#allocation2 + $0x420] sm:$0xff]
    %v997 = vld [vmem:[#allocation2 + $0x428] sm:$0xff]
    %v998 = vld [vmem:[#allocation2 + $0x430] sm:$0xff]
    %v999 = vld [vmem:[#allocation2 + $0x438] sm:$0xff]
    %v1000 = vld [vmem:[#allocation2 + $0x440] sm:$0xff]
    %v1001 = vld [vmem:[#allocation2 + $0x448] sm:$0xff]
    %v1002 = vld [vmem:[#allocation2 + $0x450] sm:$0xff]
    %v1003 = vld [vmem:[#allocation2 + $0x458] sm:$0x1]
    %v1004 = vperm.slane %v994, 0
    %v1006 = vsel %vm91, %v988, 0
    %v1009 = vsel %vm91, %v989, 0
    %1011 = vmatpush.msra.mxu0 0.0
    %1012 = vmatpush.msra.mxu0 0.0
    %1013 = vmatpush.msra.mxu0 0.0
    %1014 = vmatpush.msra.mxu0 0.0
    %1015 = vmatpush.msra.mxu0 0.0
    %1016 = vmatpush.msra.mxu0 0.0
    %1017 = vmatpush.msra.mxu0 0.0
    %1018 = vmatpush.msra.mxu0 0.0
    %1019 = vmatpush.msra.mxu0 0.0
    %1020 = vmatpush.msra.mxu0 0.0
    %1021 = vmatpush.msra.mxu0 0.0
    %1022 = vmatpush.msra.mxu0 0.0
    %1023 = vmatpush.msra.mxu0 %v993
    %1024 = vmatpush.msra.mxu0 %v992
    %1025 = vmatpush.msra.mxu0 %v991
    %1026 = vmatpush.msra.mxu0 %v990
    %1027 = vmatmul.f32.gmra.mxu0 %v1006
    %v1028 = vpop.f32.mrf.mxu0
    %v1029 = vadd.f32 %v1004, %v1028
    %1030 = vmatmul.f32.gmra.mxu0 %v1009
    %v1031 = vpop.f32.mrf.mxu0
    %v1032 = vadd.f32 %v1004, %v1031
    %1033 = vdwg.mxu0
    %v1034 = vmax.f32 %v1029, 0.0
    %v1035 = vmax.f32 %v1032, 0.0
    %v1036 = vperm.slane %v1003, 0
    %v1038 = vsel %vm52, %v1034, 0
    %v1041 = vsel %vm52, %v1035, 0
    %1043 = vmatpush.msra.mxu0 0.0
    %1044 = vmatpush.msra.mxu0 0.0
    %1045 = vmatpush.msra.mxu0 0.0
    %1046 = vmatpush.msra.mxu0 0.0
    %1047 = vmatpush.msra.mxu0 0.0
    %1048 = vmatpush.msra.mxu0 0.0
    %1049 = vmatpush.msra.mxu0 0.0
    %1050 = vmatpush.msra.mxu0 0.0
    %1051 = vmatpush.msra.mxu0 %v1002
    %1052 = vmatpush.msra.mxu0 %v1001
    %1053 = vmatpush.msra.mxu0 %v1000
    %1054 = vmatpush.msra.mxu0 %v999
    %1055 = vmatpush.msra.mxu0 %v998
    %1056 = vmatpush.msra.mxu0 %v997
    %1057 = vmatpush.msra.mxu0 %v996
    %1058 = vmatpush.msra.mxu0 %v995
    %1059 = vmatmul.f32.gmra.mxu0 %v1038
    %v1060 = vpop.f32.mrf.mxu0
    %v1061 = vadd.f32 %v1036, %v1060
    %1062 = vmatmul.f32.gmra.mxu0 %v1041
    %v1063 = vpop.f32.mrf.mxu0
    %v1064 = vadd.f32 %v1036, %v1063
    %1065 = vdwg.mxu0
    %v1066 = vadd.f32 %v988, %v1061
    %v1067 = vadd.f32 %v989, %v1064
    %v1068 = vld [vmem:[#allocation2 + $0x5ab] sm:$0x1]
    %v1069 = vld [vmem:[#allocation2 + $0x5ac] sm:$0x1]
    %v1070 = vsel %vm91, %v1066, 0.0
    %1071 = vadd.xlane.f32.xlu0 %v1070
    %v1072 = vpop.xlane.xlu0 %1071
    %v1073 = vsel %vm91, %v1067, 0.0
    %1074 = vadd.xlane.f32.xlu0 %v1073
    %v1075 = vpop.xlane.xlu0 %1074
    %v1076 = vmul.f32 %v1072, %v945
    %v1077 = vmul.f32 %v1075, %v945
    %v1078 = vsub.f32 %v1066, %v1076
    %v1079 = vsub.f32 %v1067, %v1077
    %v1080 = vmul.f32 %v1078, %v1078
    %v1081 = vmul.f32 %v1079, %v1079
    %v1082 = vsel %vm91, %v1080, 0.0
    %1083 = vadd.xlane.f32.xlu0 %v1082
    %v1084 = vpop.xlane.xlu0 %1083
    %v1085 = vsel %vm91, %v1081, 0.0
    %1086 = vadd.xlane.f32.xlu0 %v1085
    %v1087 = vpop.xlane.xlu0 %1086
    %v1088 = vmul.f32 %v1084, %v945
    %v1089 = vmul.f32 %v1087, %v945
    %v1090 = vadd.f32 %v1088, 1e-05
    %v1091 = vadd.f32 %v1089, 1e-05
    %v1092 = vrsqrt.pop %v1090
    %v1093 = vmul.f32 %v1092, %v1090
    %v1094 = vmul.f32 %v1093, %v1092
    %v1095 = vmul.f32 0.5, %v1094
    %v1096 = vsub.f32 1.5, %v1095
    %v1097 = vmul.f32 %v1092, %v1096
    %vm1098 = vweird.f32 %v1090
    %vm1099 = vweird.f32 %v1092
    %vm1100 = vmor %vm1098, %vm1099
    %v1101 = vsel %vm1100, %v1092, %v1097
    %v1102 = vrsqrt.pop %v1091
    %v1103 = vmul.f32 %v1102, %v1091
    %v1104 = vmul.f32 %v1103, %v1102
    %v1105 = vmul.f32 0.5, %v1104
    %v1106 = vsub.f32 1.5, %v1105
    %v1107 = vmul.f32 %v1102, %v1106
    %vm1108 = vweird.f32 %v1091
    %vm1109 = vweird.f32 %v1102
    %vm1110 = vmor %vm1108, %vm1109
    %v1111 = vsel %vm1110, %v1102, %v1107
    %v1112 = vmul.f32 %v1078, %v1101
    %v1113 = vmul.f32 %v1079, %v1111
    %v1114 = vperm.slane %v1068, 0
    %v1115 = vmul.f32 %v1112, %v1114
    %v1116 = vmul.f32 %v1113, %v1114
    %v1117 = vperm.slane %v1069, 0
    %v1118 = vadd.f32 %v1115, %v1117
    %v1119 = vadd.f32 %v1116, %v1117
    %v1120 = vld [vmem:[#allocation2 + $0xf8] sm:$0xff]
    %v1121 = vld [vmem:[#allocation2 + $0x118] sm:$0xff]
    %v1122 = vld [vmem:[#allocation2 + $0x138] sm:$0xff]
    %v1123 = vld [vmem:[#allocation2 + $0x158] sm:$0x1]
    %v1124 = vld [vmem:[#allocation2 + $0x15c] sm:$0x1]
    %v1125 = vld [vmem:[#allocation2 + $0x160] sm:$0x1]
    %v1126 = vperm.slane %v1123, 0
    %v1128 = vsel %vm91, %v1118, 0
    %v1131 = vsel %vm91, %v1119, 0
    %v1134 = vsel %vm91, %v1120, 0
    %1136 = vmatpush.xpose.msra.mxu0 0.0
    %1137 = vmatpush.xpose.msra.mxu0 0.0
    %1138 = vmatpush.xpose.msra.mxu0 0.0
    %1139 = vmatpush.xpose.msra.mxu0 0.0
    %1140 = vmatpush.xpose.msra.mxu0 0.0
    %1141 = vmatpush.xpose.msra.mxu0 0.0
    %1142 = vmatpush.xpose.msra.mxu0 0.0
    %1143 = vmatpush.xpose.msra.mxu0 0.0
    %1144 = vmatpush.xpose.msra.mxu0 0.0
    %1145 = vmatpush.xpose.msra.mxu0 0.0
    %1146 = vmatpush.xpose.msra.mxu0 0.0
    %1147 = vmatpush.xpose.msra.mxu0 0.0
    %1148 = vmatpush.xpose.msra.mxu0 0.0
    %1149 = vmatpush.xpose.msra.mxu0 0.0
    %1150 = vmatpush.xpose.msra.mxu0 0.0
    %1151 = vmatpush.xpose.msra.mxu0 %v1134
    %1152 = vmatmul.f32.gmra.mxu0 %v1128
    %v1153 = vpop.f32.mrf.mxu0
    %v1154 = vadd.f32 %v1126, %v1153
    %1155 = vmatmul.f32.gmra.mxu0 %v1131
    %v1156 = vpop.f32.mrf.mxu0
    %v1157 = vadd.f32 %v1126, %v1156
    %1158 = vdwg.mxu0
    %v1159 = vperm.slane %v1124, 0
    %v1161 = vsel %vm91, %v1121, 0
    %1163 = vmatpush.xpose.msra.mxu0 0.0
    %1164 = vmatpush.xpose.msra.mxu0 0.0
    %1165 = vmatpush.xpose.msra.mxu0 0.0
    %1166 = vmatpush.xpose.msra.mxu0 0.0
    %1167 = vmatpush.xpose.msra.mxu0 0.0
    %1168 = vmatpush.xpose.msra.mxu0 0.0
    %1169 = vmatpush.xpose.msra.mxu0 0.0
    %1170 = vmatpush.xpose.msra.mxu0 0.0
    %1171 = vmatpush.xpose.msra.mxu0 0.0
    %1172 = vmatpush.xpose.msra.mxu0 0.0
    %1173 = vmatpush.xpose.msra.mxu0 0.0
    %1174 = vmatpush.xpose.msra.mxu0 0.0
    %1175 = vmatpush.xpose.msra.mxu0 0.0
    %1176 = vmatpush.xpose.msra.mxu0 0.0
    %1177 = vmatpush.xpose.msra.mxu0 0.0
    %1178 = vmatpush.xpose.msra.mxu0 %v1161
    %1179 = vmatmul.f32.gmra.mxu0 %v1128
    %v1180 = vpop.f32.mrf.mxu0
    %v1181 = vadd.f32 %v1159, %v1180
    %1182 = vmatmul.f32.gmra.mxu0 %v1131
    %v1183 = vpop.f32.mrf.mxu0
    %v1184 = vadd.f32 %v1159, %v1183
    %1185 = vdwg.mxu0
    %v1186 = vperm.slane %v1125, 0
    %v1188 = vsel %vm91, %v1122, 0
    %1190 = vmatpush.xpose.msra.mxu0 0.0
    %1191 = vmatpush.xpose.msra.mxu0 0.0
    %1192 = vmatpush.xpose.msra.mxu0 0.0
    %1193 = vmatpush.xpose.msra.mxu0 0.0
    %1194 = vmatpush.xpose.msra.mxu0 0.0
    %1195 = vmatpush.xpose.msra.mxu0 0.0
    %1196 = vmatpush.xpose.msra.mxu0 0.0
    %1197 = vmatpush.xpose.msra.mxu0 0.0
    %1198 = vmatpush.xpose.msra.mxu0 0.0
    %1199 = vmatpush.xpose.msra.mxu0 0.0
    %1200 = vmatpush.xpose.msra.mxu0 0.0
    %1201 = vmatpush.xpose.msra.mxu0 0.0
    %1202 = vmatpush.xpose.msra.mxu0 0.0
    %1203 = vmatpush.xpose.msra.mxu0 0.0
    %1204 = vmatpush.xpose.msra.mxu0 0.0
    %1205 = vmatpush.xpose.msra.mxu0 %v1188
    %1206 = vmatmul.f32.gmra.mxu0 %v1128
    %v1207 = vpop.f32.mrf.mxu0
    %v1208 = vadd.f32 %v1186, %v1207
    %1209 = vmatmul.f32.gmra.mxu0 %v1131
    %v1210 = vpop.f32.mrf.mxu0
    %v1211 = vadd.f32 %v1186, %v1210
    %1212 = vdwg.mxu0
    %v1214 = vsel %vm178, %v1154, 0
    %v1217 = vsel %vm178, %v1157, 0
    %v1220 = vsel %vm178, %v1181, 0
    %v1223 = vsel %vm178, %v1184, 0
    %1225 = vmatpush.xpose.msra.mxu0 0.0
    %1226 = vmatpush.xpose.msra.mxu0 0.0
    %1227 = vmatpush.xpose.msra.mxu0 0.0
    %1228 = vmatpush.xpose.msra.mxu0 0.0
    %1229 = vmatpush.xpose.msra.mxu0 0.0
    %1230 = vmatpush.xpose.msra.mxu0 0.0
    %1231 = vmatpush.xpose.msra.mxu0 0.0
    %1232 = vmatpush.xpose.msra.mxu0 0.0
    %1233 = vmatpush.xpose.msra.mxu0 0.0
    %1234 = vmatpush.xpose.msra.mxu0 0.0
    %1235 = vmatpush.xpose.msra.mxu0 0.0
    %1236 = vmatpush.xpose.msra.mxu0 0.0
    %1237 = vmatpush.xpose.msra.mxu0 0.0
    %1238 = vmatpush.xpose.msra.mxu0 0.0
    %1239 = vmatpush.xpose.msra.mxu0 %v1223
    %1240 = vmatpush.xpose.msra.mxu0 %v1220
    %1241 = vmatmul.f32.gmra.mxu0 %v1214
    %v1242 = vpop.f32.mrf.mxu0
    %v1243 = vadd.f32 0.0, %v1242
    %1244 = vmatmul.f32.gmra.mxu0 %v1217
    %v1245 = vpop.f32.mrf.mxu0
    %v1246 = vadd.f32 0.0, %v1245
    %1247 = vdwg.mxu0
    %v1248 = vmul.f32 %v1243, 0.35355338
    %v1249 = vmul.f32 %v1246, 0.35355338
    %v1250 = vadd.f32 %v1248, %v82
    %v1251 = vadd.f32 %v1249, %v83
    %v1252 = vsel %vm218, %v1250, -inf
    %1253 = vmax.xlane.f32.xlu0 %v1252
    %v1254 = vpop.xlane.xlu0 %1253
    %v1255 = vsel %vm218, %v1251, -inf
    %1256 = vmax.xlane.f32.xlu0 %v1255
    %v1257 = vpop.xlane.xlu0 %1256
    %v1258 = vsub.f32 %v1250, %v1254
    %v1259 = vsub.f32 %v1251, %v1257
    %v1260 = vmul.f32 %v1258, 1.442695
    %v1261 = vpow.pop %v1260
    %v1262 = vmul.f32 %v1259, 1.442695
    %v1263 = vpow.pop %v1262
    %v1264 = vsel %vm218, %v1261, 0.0
    %1265 = vadd.xlane.f32.xlu0 %v1264
    %v1266 = vpop.xlane.xlu0 %1265
    %v1267 = vsel %vm218, %v1263, 0.0
    %1268 = vadd.xlane.f32.xlu0 %v1267
    %v1269 = vpop.xlane.xlu0 %1268
    %v1270 = vrcp.pop %v1266
    %v1271 = vrcp.pop %v1269
    %v1272 = vmul.f32 %v1261, %v1270
    %v1273 = vmul.f32 %v1263, %v1271
    %v1275 = vsel %vm218, %v1272, 0
    %v1278 = vsel %vm218, %v1273, 0
    %1280 = vmatpush.msra.mxu0 0.0
    %1281 = vmatpush.msra.mxu0 0.0
    %1282 = vmatpush.msra.mxu0 0.0
    %1283 = vmatpush.msra.mxu0 0.0
    %1284 = vmatpush.msra.mxu0 0.0
    %1285 = vmatpush.msra.mxu0 0.0
    %1286 = vmatpush.msra.mxu0 0.0
    %1287 = vmatpush.msra.mxu0 0.0
    %1288 = vmatpush.msra.mxu0 0.0
    %1289 = vmatpush.msra.mxu0 0.0
    %1290 = vmatpush.msra.mxu0 0.0
    %1291 = vmatpush.msra.mxu0 0.0
    %1292 = vmatpush.msra.mxu0 0.0
    %1293 = vmatpush.msra.mxu0 0.0
    %1294 = vmatpush.msra.mxu0 %v1211
    %1295 = vmatpush.msra.mxu0 %v1208
    %1296 = vmatmul.f32.gmra.mxu0 %v1275
    %v1297 = vpop.f32.mrf.mxu0
    %v1298 = vadd.f32 0.0, %v1297
    %1299 = vmatmul.f32.gmra.mxu0 %v1278
    %v1300 = vpop.f32.mrf.mxu0
    %v1301 = vadd.f32 0.0, %v1300
    %1302 = vdwg.mxu0
    %v1303 = vld [vmem:[#allocation2 + $0x168] sm:$0xff]
    %v1304 = vld [vmem:[#allocation2 + $0x100] sm:$0xff]
    %v1305 = vld [vmem:[#allocation2 + $0x120] sm:$0xff]
    %v1306 = vld [vmem:[#allocation2 + $0x140] sm:$0xff]
    %v1307 = vld [vmem:[#allocation2 + $0x159] sm:$0x1]
    %v1308 = vld [vmem:[#allocation2 + $0x15d] sm:$0x1]
    %v1309 = vld [vmem:[#allocation2 + $0x161] sm:$0x1]
    %v1310 = vperm.slane %v1307, 0
    %v1312 = vsel %vm91, %v1304, 0
    %1314 = vmatpush.xpose.msra.mxu0 0.0
    %1315 = vmatpush.xpose.msra.mxu0 0.0
    %1316 = vmatpush.xpose.msra.mxu0 0.0
    %1317 = vmatpush.xpose.msra.mxu0 0.0
    %1318 = vmatpush.xpose.msra.mxu0 0.0
    %1319 = vmatpush.xpose.msra.mxu0 0.0
    %1320 = vmatpush.xpose.msra.mxu0 0.0
    %1321 = vmatpush.xpose.msra.mxu0 0.0
    %1322 = vmatpush.xpose.msra.mxu0 0.0
    %1323 = vmatpush.xpose.msra.mxu0 0.0
    %1324 = vmatpush.xpose.msra.mxu0 0.0
    %1325 = vmatpush.xpose.msra.mxu0 0.0
    %1326 = vmatpush.xpose.msra.mxu0 0.0
    %1327 = vmatpush.xpose.msra.mxu0 0.0
    %1328 = vmatpush.xpose.msra.mxu0 0.0
    %1329 = vmatpush.xpose.msra.mxu0 %v1312
    %1330 = vmatmul.f32.gmra.mxu0 %v1128
    %v1331 = vpop.f32.mrf.mxu0
    %v1332 = vadd.f32 %v1310, %v1331
    %1333 = vmatmul.f32.gmra.mxu0 %v1131
    %v1334 = vpop.f32.mrf.mxu0
    %v1335 = vadd.f32 %v1310, %v1334
    %1336 = vdwg.mxu0
    %v1337 = vperm.slane %v1308, 0
    %v1339 = vsel %vm91, %v1305, 0
    %1341 = vmatpush.xpose.msra.mxu0 0.0
    %1342 = vmatpush.xpose.msra.mxu0 0.0
    %1343 = vmatpush.xpose.msra.mxu0 0.0
    %1344 = vmatpush.xpose.msra.mxu0 0.0
    %1345 = vmatpush.xpose.msra.mxu0 0.0
    %1346 = vmatpush.xpose.msra.mxu0 0.0
    %1347 = vmatpush.xpose.msra.mxu0 0.0
    %1348 = vmatpush.xpose.msra.mxu0 0.0
    %1349 = vmatpush.xpose.msra.mxu0 0.0
    %1350 = vmatpush.xpose.msra.mxu0 0.0
    %1351 = vmatpush.xpose.msra.mxu0 0.0
    %1352 = vmatpush.xpose.msra.mxu0 0.0
    %1353 = vmatpush.xpose.msra.mxu0 0.0
    %1354 = vmatpush.xpose.msra.mxu0 0.0
    %1355 = vmatpush.xpose.msra.mxu0 0.0
    %1356 = vmatpush.xpose.msra.mxu0 %v1339
    %1357 = vmatmul.f32.gmra.mxu0 %v1128
    %v1358 = vpop.f32.mrf.mxu0
    %v1359 = vadd.f32 %v1337, %v1358
    %1360 = vmatmul.f32.gmra.mxu0 %v1131
    %v1361 = vpop.f32.mrf.mxu0
    %v1362 = vadd.f32 %v1337, %v1361
    %1363 = vdwg.mxu0
    %v1364 = vperm.slane %v1309, 0
    %v1366 = vsel %vm91, %v1306, 0
    %1368 = vmatpush.xpose.msra.mxu0 0.0
    %1369 = vmatpush.xpose.msra.mxu0 0.0
    %1370 = vmatpush.xpose.msra.mxu0 0.0
    %1371 = vmatpush.xpose.msra.mxu0 0.0
    %1372 = vmatpush.xpose.msra.mxu0 0.0
    %1373 = vmatpush.xpose.msra.mxu0 0.0
    %1374 = vmatpush.xpose.msra.mxu0 0.0
    %1375 = vmatpush.xpose.msra.mxu0 0.0
    %1376 = vmatpush.xpose.msra.mxu0 0.0
    %1377 = vmatpush.xpose.msra.mxu0 0.0
    %1378 = vmatpush.xpose.msra.mxu0 0.0
    %1379 = vmatpush.xpose.msra.mxu0 0.0
    %1380 = vmatpush.xpose.msra.mxu0 0.0
    %1381 = vmatpush.xpose.msra.mxu0 0.0
    %1382 = vmatpush.xpose.msra.mxu0 0.0
    %1383 = vmatpush.xpose.msra.mxu0 %v1366
    %1384 = vmatmul.f32.gmra.mxu0 %v1128
    %v1385 = vpop.f32.mrf.mxu0
    %v1386 = vadd.f32 %v1364, %v1385
    %1387 = vmatmul.f32.gmra.mxu0 %v1131
    %v1388 = vpop.f32.mrf.mxu0
    %v1389 = vadd.f32 %v1364, %v1388
    %1390 = vdwg.mxu0
    %v1392 = vsel %vm178, %v1332, 0
    %v1395 = vsel %vm178, %v1335, 0
    %v1398 = vsel %vm178, %v1359, 0
    %v1401 = vsel %vm178, %v1362, 0
    %1403 = vmatpush.xpose.msra.mxu0 0.0
    %1404 = vmatpush.xpose.msra.mxu0 0.0
    %1405 = vmatpush.xpose.msra.mxu0 0.0
    %1406 = vmatpush.xpose.msra.mxu0 0.0
    %1407 = vmatpush.xpose.msra.mxu0 0.0
    %1408 = vmatpush.xpose.msra.mxu0 0.0
    %1409 = vmatpush.xpose.msra.mxu0 0.0
    %1410 = vmatpush.xpose.msra.mxu0 0.0
    %1411 = vmatpush.xpose.msra.mxu0 0.0
    %1412 = vmatpush.xpose.msra.mxu0 0.0
    %1413 = vmatpush.xpose.msra.mxu0 0.0
    %1414 = vmatpush.xpose.msra.mxu0 0.0
    %1415 = vmatpush.xpose.msra.mxu0 0.0
    %1416 = vmatpush.xpose.msra.mxu0 0.0
    %1417 = vmatpush.xpose.msra.mxu0 %v1401
    %1418 = vmatpush.xpose.msra.mxu0 %v1398
    %1419 = vmatmul.f32.gmra.mxu0 %v1392
    %v1420 = vpop.f32.mrf.mxu0
    %v1421 = vadd.f32 0.0, %v1420
    %1422 = vmatmul.f32.gmra.mxu0 %v1395
    %v1423 = vpop.f32.mrf.mxu0
    %v1424 = vadd.f32 0.0, %v1423
    %1425 = vdwg.mxu0
    %v1426 = vmul.f32 %v1421, 0.35355338
    %v1427 = vmul.f32 %v1424, 0.35355338
    %v1428 = vadd.f32 %v1426, %v82
    %v1429 = vadd.f32 %v1427, %v83
    %v1430 = vsel %vm218, %v1428, -inf
    %1431 = vmax.xlane.f32.xlu0 %v1430
    %v1432 = vpop.xlane.xlu0 %1431
    %v1433 = vsel %vm218, %v1429, -inf
    %1434 = vmax.xlane.f32.xlu0 %v1433
    %v1435 = vpop.xlane.xlu0 %1434
    %v1436 = vsub.f32 %v1428, %v1432
    %v1437 = vsub.f32 %v1429, %v1435
    %v1438 = vmul.f32 %v1436, 1.442695
    %v1439 = vpow.pop %v1438
    %v1440 = vmul.f32 %v1437, 1.442695
    %v1441 = vpow.pop %v1440
    %v1442 = vsel %vm218, %v1439, 0.0
    %1443 = vadd.xlane.f32.xlu0 %v1442
    %v1444 = vpop.xlane.xlu0 %1443
    %v1445 = vsel %vm218, %v1441, 0.0
    %1446 = vadd.xlane.f32.xlu0 %v1445
    %v1447 = vpop.xlane.xlu0 %1446
    %v1448 = vrcp.pop %v1444
    %v1449 = vrcp.pop %v1447
    %v1450 = vmul.f32 %v1439, %v1448
    %v1451 = vmul.f32 %v1441, %v1449
    %v1453 = vsel %vm218, %v1450, 0
    %v1456 = vsel %vm218, %v1451, 0
    %1458 = vmatpush.msra.mxu0 0.0
    %1459 = vmatpush.msra.mxu0 0.0
    %1460 = vmatpush.msra.mxu0 0.0
    %1461 = vmatpush.msra.mxu0 0.0
    %1462 = vmatpush.msra.mxu0 0.0
    %1463 = vmatpush.msra.mxu0 0.0
    %1464 = vmatpush.msra.mxu0 0.0
    %1465 = vmatpush.msra.mxu0 0.0
    %1466 = vmatpush.msra.mxu0 0.0
    %1467 = vmatpush.msra.mxu0 0.0
    %1468 = vmatpush.msra.mxu0 0.0
    %1469 = vmatpush.msra.mxu0 0.0
    %1470 = vmatpush.msra.mxu0 0.0
    %1471 = vmatpush.msra.mxu0 0.0
    %1472 = vmatpush.msra.mxu0 %v1389
    %1473 = vmatpush.msra.mxu0 %v1386
    %1474 = vmatmul.f32.gmra.mxu0 %v1453
    %v1475 = vpop.f32.mrf.mxu0
    %v1476 = vadd.f32 0.0, %v1475
    %1477 = vmatmul.f32.gmra.mxu0 %v1456
    %v1478 = vpop.f32.mrf.mxu0
    %v1479 = vadd.f32 0.0, %v1478
    %1480 = vdwg.mxu0
    %v1481 = vld [vmem:[#allocation2 + $0x170] sm:$0xff]
    %v1483 = vsel %vm178, %v1476, 0
    %v1486 = vsel %vm178, %v1479, 0
    %1488 = vmatpush.msra.mxu0 0.0
    %1489 = vmatpush.msra.mxu0 0.0
    %1490 = vmatpush.msra.mxu0 0.0
    %1491 = vmatpush.msra.mxu0 0.0
    %1492 = vmatpush.msra.mxu0 0.0
    %1493 = vmatpush.msra.mxu0 0.0
    %1494 = vmatpush.msra.mxu0 0.0
    %1495 = vmatpush.msra.mxu0 0.0
    %1496 = vmatpush.msra.mxu0 0.0
    %1497 = vmatpush.msra.mxu0 0.0
    %1498 = vmatpush.msra.mxu0 0.0
    %1499 = vmatpush.msra.mxu0 0.0
    %1500 = vmatpush.msra.mxu0 0.0
    %1501 = vmatpush.msra.mxu0 0.0
    %1502 = vmatpush.msra.mxu0 0.0
    %1503 = vmatpush.msra.mxu0 %v1481
    %1504 = vmatmul.f32.gmra.mxu0 %v1483
    %v1505 = vpop.f32.mrf.mxu0
    %v1506 = vadd.f32 0.0, %v1505
    %1507 = vmatmul.f32.gmra.mxu0 %v1486
    %v1508 = vpop.f32.mrf.mxu0
    %v1509 = vadd.f32 0.0, %v1508
    %1510 = vdwg.mxu0
    %v1512 = vsel %vm178, %v1298, 0
    %v1515 = vsel %vm178, %v1301, 0
    %1517 = vmatpush.msra.mxu0 0.0
    %1518 = vmatpush.msra.mxu0 0.0
    %1519 = vmatpush.msra.mxu0 0.0
    %1520 = vmatpush.msra.mxu0 0.0
    %1521 = vmatpush.msra.mxu0 0.0
    %1522 = vmatpush.msra.mxu0 0.0
    %1523 = vmatpush.msra.mxu0 0.0
    %1524 = vmatpush.msra.mxu0 0.0
    %1525 = vmatpush.msra.mxu0 0.0
    %1526 = vmatpush.msra.mxu0 0.0
    %1527 = vmatpush.msra.mxu0 0.0
    %1528 = vmatpush.msra.mxu0 0.0
    %1529 = vmatpush.msra.mxu0 0.0
    %1530 = vmatpush.msra.mxu0 0.0
    %1531 = vmatpush.msra.mxu0 0.0
    %1532 = vmatpush.msra.mxu0 %v1303
    %1533 = vmatmul.f32.gmra.mxu0 %v1512
    %v1534 = vpop.f32.mrf.mxu0
    %v1535 = vadd.f32 %v1506, %v1534
    %1536 = vmatmul.f32.gmra.mxu0 %v1515
    %v1537 = vpop.f32.mrf.mxu0
    %v1538 = vadd.f32 %v1509, %v1537
    %1539 = vdwg.mxu0
    %v1540 = vld [vmem:[#allocation2 + $0x108] sm:$0xff]
    %v1541 = vld [vmem:[#allocation2 + $0x128] sm:$0xff]
    %v1542 = vld [vmem:[#allocation2 + $0x148] sm:$0xff]
    %v1543 = vld [vmem:[#allocation2 + $0x15a] sm:$0x1]
    %v1544 = vld [vmem:[#allocation2 + $0x15e] sm:$0x1]
    %v1545 = vld [vmem:[#allocation2 + $0x162] sm:$0x1]
    %v1546 = vperm.slane %v1543, 0
    %v1548 = vsel %vm91, %v1540, 0
    %1550 = vmatpush.xpose.msra.mxu0 0.0
    %1551 = vmatpush.xpose.msra.mxu0 0.0
    %1552 = vmatpush.xpose.msra.mxu0 0.0
    %1553 = vmatpush.xpose.msra.mxu0 0.0
    %1554 = vmatpush.xpose.msra.mxu0 0.0
    %1555 = vmatpush.xpose.msra.mxu0 0.0
    %1556 = vmatpush.xpose.msra.mxu0 0.0
    %1557 = vmatpush.xpose.msra.mxu0 0.0
    %1558 = vmatpush.xpose.msra.mxu0 0.0
    %1559 = vmatpush.xpose.msra.mxu0 0.0
    %1560 = vmatpush.xpose.msra.mxu0 0.0
    %1561 = vmatpush.xpose.msra.mxu0 0.0
    %1562 = vmatpush.xpose.msra.mxu0 0.0
    %1563 = vmatpush.xpose.msra.mxu0 0.0
    %1564 = vmatpush.xpose.msra.mxu0 0.0
    %1565 = vmatpush.xpose.msra.mxu0 %v1548
    %1566 = vmatmul.f32.gmra.mxu0 %v1128
    %v1567 = vpop.f32.mrf.mxu0
    %v1568 = vadd.f32 %v1546, %v1567
    %1569 = vmatmul.f32.gmra.mxu0 %v1131
    %v1570 = vpop.f32.mrf.mxu0
    %v1571 = vadd.f32 %v1546, %v1570
    %1572 = vdwg.mxu0
    %v1573 = vperm.slane %v1544, 0
    %v1575 = vsel %vm91, %v1541, 0
    %1577 = vmatpush.xpose.msra.mxu0 0.0
    %1578 = vmatpush.xpose.msra.mxu0 0.0
    %1579 = vmatpush.xpose.msra.mxu0 0.0
    %1580 = vmatpush.xpose.msra.mxu0 0.0
    %1581 = vmatpush.xpose.msra.mxu0 0.0
    %1582 = vmatpush.xpose.msra.mxu0 0.0
    %1583 = vmatpush.xpose.msra.mxu0 0.0
    %1584 = vmatpush.xpose.msra.mxu0 0.0
    %1585 = vmatpush.xpose.msra.mxu0 0.0
    %1586 = vmatpush.xpose.msra.mxu0 0.0
    %1587 = vmatpush.xpose.msra.mxu0 0.0
    %1588 = vmatpush.xpose.msra.mxu0 0.0
    %1589 = vmatpush.xpose.msra.mxu0 0.0
    %1590 = vmatpush.xpose.msra.mxu0 0.0
    %1591 = vmatpush.xpose.msra.mxu0 0.0
    %1592 = vmatpush.xpose.msra.mxu0 %v1575
    %1593 = vmatmul.f32.gmra.mxu0 %v1128
    %v1594 = vpop.f32.mrf.mxu0
    %v1595 = vadd.f32 %v1573, %v1594
    %1596 = vmatmul.f32.gmra.mxu0 %v1131
    %v1597 = vpop.f32.mrf.mxu0
    %v1598 = vadd.f32 %v1573, %v1597
    %1599 = vdwg.mxu0
    %v1600 = vperm.slane %v1545, 0
    %v1602 = vsel %vm91, %v1542, 0
    %1604 = vmatpush.xpose.msra.mxu0 0.0
    %1605 = vmatpush.xpose.msra.mxu0 0.0
    %1606 = vmatpush.xpose.msra.mxu0 0.0
    %1607 = vmatpush.xpose.msra.mxu0 0.0
    %1608 = vmatpush.xpose.msra.mxu0 0.0
    %1609 = vmatpush.xpose.msra.mxu0 0.0
    %1610 = vmatpush.xpose.msra.mxu0 0.0
    %1611 = vmatpush.xpose.msra.mxu0 0.0
    %1612 = vmatpush.xpose.msra.mxu0 0.0
    %1613 = vmatpush.xpose.msra.mxu0 0.0
    %1614 = vmatpush.xpose.msra.mxu0 0.0
    %1615 = vmatpush.xpose.msra.mxu0 0.0
    %1616 = vmatpush.xpose.msra.mxu0 0.0
    %1617 = vmatpush.xpose.msra.mxu0 0.0
    %1618 = vmatpush.xpose.msra.mxu0 0.0
    %1619 = vmatpush.xpose.msra.mxu0 %v1602
    %1620 = vmatmul.f32.gmra.mxu0 %v1128
    %v1621 = vpop.f32.mrf.mxu0
    %v1622 = vadd.f32 %v1600, %v1621
    %1623 = vmatmul.f32.gmra.mxu0 %v1131
    %v1624 = vpop.f32.mrf.mxu0
    %v1625 = vadd.f32 %v1600, %v1624
    %1626 = vdwg.mxu0
    %v1628 = vsel %vm178, %v1568, 0
    %v1631 = vsel %vm178, %v1571, 0
    %v1634 = vsel %vm178, %v1595, 0
    %v1637 = vsel %vm178, %v1598, 0
    %1639 = vmatpush.xpose.msra.mxu0 0.0
    %1640 = vmatpush.xpose.msra.mxu0 0.0
    %1641 = vmatpush.xpose.msra.mxu0 0.0
    %1642 = vmatpush.xpose.msra.mxu0 0.0
    %1643 = vmatpush.xpose.msra.mxu0 0.0
    %1644 = vmatpush.xpose.msra.mxu0 0.0
    %1645 = vmatpush.xpose.msra.mxu0 0.0
    %1646 = vmatpush.xpose.msra.mxu0 0.0
    %1647 = vmatpush.xpose.msra.mxu0 0.0
    %1648 = vmatpush.xpose.msra.mxu0 0.0
    %1649 = vmatpush.xpose.msra.mxu0 0.0
    %1650 = vmatpush.xpose.msra.mxu0 0.0
    %1651 = vmatpush.xpose.msra.mxu0 0.0
    %1652 = vmatpush.xpose.msra.mxu0 0.0
    %1653 = vmatpush.xpose.msra.mxu0 %v1637
    %1654 = vmatpush.xpose.msra.mxu0 %v1634
    %1655 = vmatmul.f32.gmra.mxu0 %v1628
    %v1656 = vpop.f32.mrf.mxu0
    %v1657 = vadd.f32 0.0, %v1656
    %1658 = vmatmul.f32.gmra.mxu0 %v1631
    %v1659 = vpop.f32.mrf.mxu0
    %v1660 = vadd.f32 0.0, %v1659
    %1661 = vdwg.mxu0
    %v1662 = vmul.f32 %v1657, 0.35355338
    %v1663 = vmul.f32 %v1660, 0.35355338
    %v1664 = vadd.f32 %v1662, %v82
    %v1665 = vadd.f32 %v1663, %v83
    %v1666 = vsel %vm218, %v1664, -inf
    %1667 = vmax.xlane.f32.xlu0 %v1666
    %v1668 = vpop.xlane.xlu0 %1667
    %v1669 = vsel %vm218, %v1665, -inf
    %1670 = vmax.xlane.f32.xlu0 %v1669
    %v1671 = vpop.xlane.xlu0 %1670
    %v1672 = vsub.f32 %v1664, %v1668
    %v1673 = vsub.f32 %v1665, %v1671
    %v1674 = vmul.f32 %v1672, 1.442695
    %v1675 = vpow.pop %v1674
    %v1676 = vmul.f32 %v1673, 1.442695
    %v1677 = vpow.pop %v1676
    %v1678 = vsel %vm218, %v1675, 0.0
    %1679 = vadd.xlane.f32.xlu0 %v1678
    %v1680 = vpop.xlane.xlu0 %1679
    %v1681 = vsel %vm218, %v1677, 0.0
    %1682 = vadd.xlane.f32.xlu0 %v1681
    %v1683 = vpop.xlane.xlu0 %1682
    %v1684 = vrcp.pop %v1680
    %v1685 = vrcp.pop %v1683
    %v1686 = vmul.f32 %v1675, %v1684
    %v1687 = vmul.f32 %v1677, %v1685
    %v1689 = vsel %vm218, %v1686, 0
    %v1692 = vsel %vm218, %v1687, 0
    %1694 = vmatpush.msra.mxu0 0.0
    %1695 = vmatpush.msra.mxu0 0.0
    %1696 = vmatpush.msra.mxu0 0.0
    %1697 = vmatpush.msra.mxu0 0.0
    %1698 = vmatpush.msra.mxu0 0.0
    %1699 = vmatpush.msra.mxu0 0.0
    %1700 = vmatpush.msra.mxu0 0.0
    %1701 = vmatpush.msra.mxu0 0.0
    %1702 = vmatpush.msra.mxu0 0.0
    %1703 = vmatpush.msra.mxu0 0.0
    %1704 = vmatpush.msra.mxu0 0.0
    %1705 = vmatpush.msra.mxu0 0.0
    %1706 = vmatpush.msra.mxu0 0.0
    %1707 = vmatpush.msra.mxu0 0.0
    %1708 = vmatpush.msra.mxu0 %v1625
    %1709 = vmatpush.msra.mxu0 %v1622
    %1710 = vmatmul.f32.gmra.mxu0 %v1689
    %v1711 = vpop.f32.mrf.mxu0
    %v1712 = vadd.f32 0.0, %v1711
    %1713 = vmatmul.f32.gmra.mxu0 %v1692
    %v1714 = vpop.f32.mrf.mxu0
    %v1715 = vadd.f32 0.0, %v1714
    %1716 = vdwg.mxu0
    %v1717 = vld [vmem:[#allocation2 + $0x178] sm:$0xff]
    %v1719 = vsel %vm178, %v1712, 0
    %v1722 = vsel %vm178, %v1715, 0
    %1724 = vmatpush.msra.mxu0 0.0
    %1725 = vmatpush.msra.mxu0 0.0
    %1726 = vmatpush.msra.mxu0 0.0
    %1727 = vmatpush.msra.mxu0 0.0
    %1728 = vmatpush.msra.mxu0 0.0
    %1729 = vmatpush.msra.mxu0 0.0
    %1730 = vmatpush.msra.mxu0 0.0
    %1731 = vmatpush.msra.mxu0 0.0
    %1732 = vmatpush.msra.mxu0 0.0
    %1733 = vmatpush.msra.mxu0 0.0
    %1734 = vmatpush.msra.mxu0 0.0
    %1735 = vmatpush.msra.mxu0 0.0
    %1736 = vmatpush.msra.mxu0 0.0
    %1737 = vmatpush.msra.mxu0 0.0
    %1738 = vmatpush.msra.mxu0 0.0
    %1739 = vmatpush.msra.mxu0 %v1717
    %1740 = vmatmul.f32.gmra.mxu0 %v1719
    %v1741 = vpop.f32.mrf.mxu0
    %v1742 = vadd.f32 0.0, %v1741
    %1743 = vmatmul.f32.gmra.mxu0 %v1722
    %v1744 = vpop.f32.mrf.mxu0
    %v1745 = vadd.f32 0.0, %v1744
    %1746 = vdwg.mxu0
    %v1747 = vadd.f32 %v1535, %v1742
    %v1748 = vadd.f32 %v1538, %v1745
    %v1749 = vld [vmem:[#allocation2 + $0x110] sm:$0xff]
    %v1750 = vld [vmem:[#allocation2 + $0x130] sm:$0xff]
    %v1751 = vld [vmem:[#allocation2 + $0x150] sm:$0xff]
    %v1752 = vld [vmem:[#allocation2 + $0x15b] sm:$0x1]
    %v1753 = vld [vmem:[#allocation2 + $0x15f] sm:$0x1]
    %v1754 = vld [vmem:[#allocation2 + $0x163] sm:$0x1]
    %v1755 = vperm.slane %v1752, 0
    %v1757 = vsel %vm91, %v1749, 0
    %1759 = vmatpush.xpose.msra.mxu0 0.0
    %1760 = vmatpush.xpose.msra.mxu0 0.0
    %1761 = vmatpush.xpose.msra.mxu0 0.0
    %1762 = vmatpush.xpose.msra.mxu0 0.0
    %1763 = vmatpush.xpose.msra.mxu0 0.0
    %1764 = vmatpush.xpose.msra.mxu0 0.0
    %1765 = vmatpush.xpose.msra.mxu0 0.0
    %1766 = vmatpush.xpose.msra.mxu0 0.0
    %1767 = vmatpush.xpose.msra.mxu0 0.0
    %1768 = vmatpush.xpose.msra.mxu0 0.0
    %1769 = vmatpush.xpose.msra.mxu0 0.0
    %1770 = vmatpush.xpose.msra.mxu0 0.0
    %1771 = vmatpush.xpose.msra.mxu0 0.0
    %1772 = vmatpush.xpose.msra.mxu0 0.0
    %1773 = vmatpush.xpose.msra.mxu0 0.0
    %1774 = vmatpush.xpose.msra.mxu0 %v1757
    %1775 = vmatmul.f32.gmra.mxu0 %v1128
    %v1776 = vpop.f32.mrf.mxu0
    %v1777 = vadd.f32 %v1755, %v1776
    %1778 = vmatmul.f32.gmra.mxu0 %v1131
    %v1779 = vpop.f32.mrf.mxu0
    %v1780 = vadd.f32 %v1755, %v1779
    %1781 = vdwg.mxu0
    %v1782 = vperm.slane %v1753, 0
    %v1784 = vsel %vm91, %v1750, 0
    %1786 = vmatpush.xpose.msra.mxu0 0.0
    %1787 = vmatpush.xpose.msra.mxu0 0.0
    %1788 = vmatpush.xpose.msra.mxu0 0.0
    %1789 = vmatpush.xpose.msra.mxu0 0.0
    %1790 = vmatpush.xpose.msra.mxu0 0.0
    %1791 = vmatpush.xpose.msra.mxu0 0.0
    %1792 = vmatpush.xpose.msra.mxu0 0.0
    %1793 = vmatpush.xpose.msra.mxu0 0.0
    %1794 = vmatpush.xpose.msra.mxu0 0.0
    %1795 = vmatpush.xpose.msra.mxu0 0.0
    %1796 = vmatpush.xpose.msra.mxu0 0.0
    %1797 = vmatpush.xpose.msra.mxu0 0.0
    %1798 = vmatpush.xpose.msra.mxu0 0.0
    %1799 = vmatpush.xpose.msra.mxu0 0.0
    %1800 = vmatpush.xpose.msra.mxu0 0.0
    %1801 = vmatpush.xpose.msra.mxu0 %v1784
    %1802 = vmatmul.f32.gmra.mxu0 %v1128
    %v1803 = vpop.f32.mrf.mxu0
    %v1804 = vadd.f32 %v1782, %v1803
    %1805 = vmatmul.f32.gmra.mxu0 %v1131
    %v1806 = vpop.f32.mrf.mxu0
    %v1807 = vadd.f32 %v1782, %v1806
    %1808 = vdwg.mxu0
    %v1809 = vperm.slane %v1754, 0
    %v1811 = vsel %vm91, %v1751, 0
    %1813 = vmatpush.xpose.msra.mxu0 0.0
    %1814 = vmatpush.xpose.msra.mxu0 0.0
    %1815 = vmatpush.xpose.msra.mxu0 0.0
    %1816 = vmatpush.xpose.msra.mxu0 0.0
    %1817 = vmatpush.xpose.msra.mxu0 0.0
    %1818 = vmatpush.xpose.msra.mxu0 0.0
    %1819 = vmatpush.xpose.msra.mxu0 0.0
    %1820 = vmatpush.xpose.msra.mxu0 0.0
    %1821 = vmatpush.xpose.msra.mxu0 0.0
    %1822 = vmatpush.xpose.msra.mxu0 0.0
    %1823 = vmatpush.xpose.msra.mxu0 0.0
    %1824 = vmatpush.xpose.msra.mxu0 0.0
    %1825 = vmatpush.xpose.msra.mxu0 0.0
    %1826 = vmatpush.xpose.msra.mxu0 0.0
    %1827 = vmatpush.xpose.msra.mxu0 0.0
    %1828 = vmatpush.xpose.msra.mxu0 %v1811
    %1829 = vmatmul.f32.gmra.mxu0 %v1128
    %v1830 = vpop.f32.mrf.mxu0
    %v1831 = vadd.f32 %v1809, %v1830
    %1832 = vmatmul.f32.gmra.mxu0 %v1131
    %v1833 = vpop.f32.mrf.mxu0
    %v1834 = vadd.f32 %v1809, %v1833
    %1835 = vdwg.mxu0
    %v1837 = vsel %vm178, %v1777, 0
    %v1840 = vsel %vm178, %v1780, 0
    %v1843 = vsel %vm178, %v1804, 0
    %v1846 = vsel %vm178, %v1807, 0
    %1848 = vmatpush.xpose.msra.mxu0 0.0
    %1849 = vmatpush.xpose.msra.mxu0 0.0
    %1850 = vmatpush.xpose.msra.mxu0 0.0
    %1851 = vmatpush.xpose.msra.mxu0 0.0
    %1852 = vmatpush.xpose.msra.mxu0 0.0
    %1853 = vmatpush.xpose.msra.mxu0 0.0
    %1854 = vmatpush.xpose.msra.mxu0 0.0
    %1855 = vmatpush.xpose.msra.mxu0 0.0
    %1856 = vmatpush.xpose.msra.mxu0 0.0
    %1857 = vmatpush.xpose.msra.mxu0 0.0
    %1858 = vmatpush.xpose.msra.mxu0 0.0
    %1859 = vmatpush.xpose.msra.mxu0 0.0
    %1860 = vmatpush.xpose.msra.mxu0 0.0
    %1861 = vmatpush.xpose.msra.mxu0 0.0
    %1862 = vmatpush.xpose.msra.mxu0 %v1846
    %1863 = vmatpush.xpose.msra.mxu0 %v1843
    %1864 = vmatmul.f32.gmra.mxu0 %v1837
    %v1865 = vpop.f32.mrf.mxu0
    %v1866 = vadd.f32 0.0, %v1865
    %1867 = vmatmul.f32.gmra.mxu0 %v1840
    %v1868 = vpop.f32.mrf.mxu0
    %v1869 = vadd.f32 0.0, %v1868
    %1870 = vdwg.mxu0
    %v1871 = vmul.f32 %v1866, 0.35355338
    %v1872 = vmul.f32 %v1869, 0.35355338
    %v1873 = vadd.f32 %v1871, %v82
    %v1874 = vadd.f32 %v1872, %v83
    %v1875 = vsel %vm218, %v1873, -inf
    %1876 = vmax.xlane.f32.xlu0 %v1875
    %v1877 = vpop.xlane.xlu0 %1876
    %v1878 = vsel %vm218, %v1874, -inf
    %1879 = vmax.xlane.f32.xlu0 %v1878
    %v1880 = vpop.xlane.xlu0 %1879
    %v1881 = vsub.f32 %v1873, %v1877
    %v1882 = vsub.f32 %v1874, %v1880
    %v1883 = vmul.f32 %v1881, 1.442695
    %v1884 = vpow.pop %v1883
    %v1885 = vmul.f32 %v1882, 1.442695
    %v1886 = vpow.pop %v1885
    %v1887 = vsel %vm218, %v1884, 0.0
    %1888 = vadd.xlane.f32.xlu0 %v1887
    %v1889 = vpop.xlane.xlu0 %1888
    %v1890 = vsel %vm218, %v1886, 0.0
    %1891 = vadd.xlane.f32.xlu0 %v1890
    %v1892 = vpop.xlane.xlu0 %1891
    %v1893 = vrcp.pop %v1889
    %v1894 = vrcp.pop %v1892
    %v1895 = vmul.f32 %v1884, %v1893
    %v1896 = vmul.f32 %v1886, %v1894
    %v1898 = vsel %vm218, %v1895, 0
    %v1901 = vsel %vm218, %v1896, 0
    %1903 = vmatpush.msra.mxu0 0.0
    %1904 = vmatpush.msra.mxu0 0.0
    %1905 = vmatpush.msra.mxu0 0.0
    %1906 = vmatpush.msra.mxu0 0.0
    %1907 = vmatpush.msra.mxu0 0.0
    %1908 = vmatpush.msra.mxu0 0.0
    %1909 = vmatpush.msra.mxu0 0.0
    %1910 = vmatpush.msra.mxu0 0.0
    %1911 = vmatpush.msra.mxu0 0.0
    %1912 = vmatpush.msra.mxu0 0.0
    %1913 = vmatpush.msra.mxu0 0.0
    %1914 = vmatpush.msra.mxu0 0.0
    %1915 = vmatpush.msra.mxu0 0.0
    %1916 = vmatpush.msra.mxu0 0.0
    %1917 = vmatpush.msra.mxu0 %v1834
    %1918 = vmatpush.msra.mxu0 %v1831
    %1919 = vmatmul.f32.gmra.mxu0 %v1898
    %v1920 = vpop.f32.mrf.mxu0
    %v1921 = vadd.f32 0.0, %v1920
    %1922 = vmatmul.f32.gmra.mxu0 %v1901
    %v1923 = vpop.f32.mrf.mxu0
    %v1924 = vadd.f32 0.0, %v1923
    %1925 = vdwg.mxu0
    %v1926 = vld [vmem:[#allocation2 + $0x180] sm:$0xff]
    %v1928 = vsel %vm178, %v1921, 0
    %v1931 = vsel %vm178, %v1924, 0
    %1933 = vmatpush.msra.mxu0 0.0
    %1934 = vmatpush.msra.mxu0 0.0
    %1935 = vmatpush.msra.mxu0 0.0
    %1936 = vmatpush.msra.mxu0 0.0
    %1937 = vmatpush.msra.mxu0 0.0
    %1938 = vmatpush.msra.mxu0 0.0
    %1939 = vmatpush.msra.mxu0 0.0
    %1940 = vmatpush.msra.mxu0 0.0
    %1941 = vmatpush.msra.mxu0 0.0
    %1942 = vmatpush.msra.mxu0 0.0
    %1943 = vmatpush.msra.mxu0 0.0
    %1944 = vmatpush.msra.mxu0 0.0
    %1945 = vmatpush.msra.mxu0 0.0
    %1946 = vmatpush.msra.mxu0 0.0
    %1947 = vmatpush.msra.mxu0 0.0
    %1948 = vmatpush.msra.mxu0 %v1926
    %1949 = vmatmul.f32.gmra.mxu0 %v1928
    %v1950 = vpop.f32.mrf.mxu0
    %v1951 = vadd.f32 0.0, %v1950
    %1952 = vmatmul.f32.gmra.mxu0 %v1931
    %v1953 = vpop.f32.mrf.mxu0
    %v1954 = vadd.f32 0.0, %v1953
    %1955 = vdwg.mxu0
    %v1956 = vadd.f32 %v1747, %v1951
    %v1957 = vadd.f32 %v1748, %v1954
    %v1958 = vld [vmem:[#allocation2 + $0x188] sm:$0x1]
    %v1959 = vperm.slane %v1958, 0
    %v1960 = vadd.f32 %v1956, %v1959
    %v1961 = vadd.f32 %v1957, %v1959
    %v1962 = vadd.f32 %v1118, %v1960
    %v1963 = vadd.f32 %v1119, %v1961
    %v1964 = vld [vmem:[#allocation2 + $0x5ad] sm:$0x1]
    %v1965 = vld [vmem:[#allocation2 + $0x5ae] sm:$0x1]
    %v1966 = vsel %vm91, %v1962, 0.0
    %1967 = vadd.xlane.f32.xlu0 %v1966
    %v1968 = vpop.xlane.xlu0 %1967
    %v1969 = vsel %vm91, %v1963, 0.0
    %1970 = vadd.xlane.f32.xlu0 %v1969
    %v1971 = vpop.xlane.xlu0 %1970
    %v1972 = vmul.f32 %v1968, %v945
    %v1973 = vmul.f32 %v1971, %v945
    %v1974 = vsub.f32 %v1962, %v1972
    %v1975 = vsub.f32 %v1963, %v1973
    %v1976 = vmul.f32 %v1974, %v1974
    %v1977 = vmul.f32 %v1975, %v1975
    %v1978 = vsel %vm91, %v1976, 0.0
    %1979 = vadd.xlane.f32.xlu0 %v1978
    %v1980 = vpop.xlane.xlu0 %1979
    %v1981 = vsel %vm91, %v1977, 0.0
    %1982 = vadd.xlane.f32.xlu0 %v1981
    %v1983 = vpop.xlane.xlu0 %1982
    %v1984 = vmul.f32 %v1980, %v945
    %v1985 = vmul.f32 %v1983, %v945
    %v1986 = vadd.f32 %v1984, 1e-05
    %v1987 = vadd.f32 %v1985, 1e-05
    %v1988 = vrsqrt.pop %v1986
    %v1989 = vmul.f32 %v1988, %v1986
    %v1990 = vmul.f32 %v1989, %v1988
    %v1991 = vmul.f32 0.5, %v1990
    %v1992 = vsub.f32 1.5, %v1991
    %v1993 = vmul.f32 %v1988, %v1992
    %vm1994 = vweird.f32 %v1986
    %vm1995 = vweird.f32 %v1988
    %vm1996 = vmor %vm1994, %vm1995
    %v1997 = vsel %vm1996, %v1988, %v1993
    %v1998 = vrsqrt.pop %v1987
    %v1999 = vmul.f32 %v1998, %v1987
    %v2000 = vmul.f32 %v1999, %v1998
    %v2001 = vmul.f32 0.5, %v2000
    %v2002 = vsub.f32 1.5, %v2001
    %v2003 = vmul.f32 %v1998, %v2002
    %vm2004 = vweird.f32 %v1987
    %vm2005 = vweird.f32 %v1998
    %vm2006 = vmor %vm2004, %vm2005
    %v2007 = vsel %vm2006, %v1998, %v2003
    %v2008 = vmul.f32 %v1974, %v1997
    %v2009 = vmul.f32 %v1975, %v2007
    %v2010 = vperm.slane %v1964, 0
    %v2011 = vmul.f32 %v2008, %v2010
    %v2012 = vmul.f32 %v2009, %v2010
    %v2013 = vperm.slane %v1965, 0
    %v2014 = vadd.f32 %v2011, %v2013
    %v2015 = vadd.f32 %v2012, %v2013
    %v2016 = vld [vmem:[#allocation2 + $0x460] sm:$0xff]
    %v2017 = vld [vmem:[#allocation2 + $0x468] sm:$0xff]
    %v2018 = vld [vmem:[#allocation2 + $0x470] sm:$0xff]
    %v2019 = vld [vmem:[#allocation2 + $0x478] sm:$0xff]
    %v2020 = vld [vmem:[#allocation2 + $0x480] sm:$0x1]
    %v2021 = vld [vmem:[#allocation2 + $0x488] sm:$0xff]
    %v2022 = vld [vmem:[#allocation2 + $0x490] sm:$0xff]
    %v2023 = vld [vmem:[#allocation2 + $0x498] sm:$0xff]
    %v2024 = vld [vmem:[#allocation2 + $0x4a0] sm:$0xff]
    %v2025 = vld [vmem:[#allocation2 + $0x4a8] sm:$0xff]
    %v2026 = vld [vmem:[#allocation2 + $0x4b0] sm:$0xff]
    %v2027 = vld [vmem:[#allocation2 + $0x4b8] sm:$0xff]
    %v2028 = vld [vmem:[#allocation2 + $0x4c0] sm:$0xff]
    %v2029 = vld [vmem:[#allocation2 + $0x4c8] sm:$0x1]
    %v2030 = vperm.slane %v2020, 0
    %v2032 = vsel %vm91, %v2014, 0
    %v2035 = vsel %vm91, %v2015, 0
    %2037 = vmatpush.msra.mxu0 0.0
    %2038 = vmatpush.msra.mxu0 0.0
    %2039 = vmatpush.msra.mxu0 0.0
    %2040 = vmatpush.msra.mxu0 0.0
    %2041 = vmatpush.msra.mxu0 0.0
    %2042 = vmatpush.msra.mxu0 0.0
    %2043 = vmatpush.msra.mxu0 0.0
    %2044 = vmatpush.msra.mxu0 0.0
    %2045 = vmatpush.msra.mxu0 0.0
    %2046 = vmatpush.msra.mxu0 0.0
    %2047 = vmatpush.msra.mxu0 0.0
    %2048 = vmatpush.msra.mxu0 0.0
    %2049 = vmatpush.msra.mxu0 %v2019
    %2050 = vmatpush.msra.mxu0 %v2018
    %2051 = vmatpush.msra.mxu0 %v2017
    %2052 = vmatpush.msra.mxu0 %v2016
    %2053 = vmatmul.f32.gmra.mxu0 %v2032
    %v2054 = vpop.f32.mrf.mxu0
    %v2055 = vadd.f32 %v2030, %v2054
    %2056 = vmatmul.f32.gmra.mxu0 %v2035
    %v2057 = vpop.f32.mrf.mxu0
    %v2058 = vadd.f32 %v2030, %v2057
    %2059 = vdwg.mxu0
    %v2060 = vmax.f32 %v2055, 0.0
    %v2061 = vmax.f32 %v2058, 0.0
    %v2062 = vperm.slane %v2029, 0
    %v2064 = vsel %vm52, %v2060, 0
    %v2067 = vsel %vm52, %v2061, 0
    %2069 = vmatpush.msra.mxu0 0.0
    %2070 = vmatpush.msra.mxu0 0.0
    %2071 = vmatpush.msra.mxu0 0.0
    %2072 = vmatpush.msra.mxu0 0.0
    %2073 = vmatpush.msra.mxu0 0.0
    %2074 = vmatpush.msra.mxu0 0.0
    %2075 = vmatpush.msra.mxu0 0.0
    %2076 = vmatpush.msra.mxu0 0.0
    %2077 = vmatpush.msra.mxu0 %v2028
    %2078 = vmatpush.msra.mxu0 %v2027
    %2079 = vmatpush.msra.mxu0 %v2026
    %2080 = vmatpush.msra.mxu0 %v2025
    %2081 = vmatpush.msra.mxu0 %v2024
    %2082 = vmatpush.msra.mxu0 %v2023
    %2083 = vmatpush.msra.mxu0 %v2022
    %2084 = vmatpush.msra.mxu0 %v2021
    %2085 = vmatmul.f32.gmra.mxu0 %v2064
    %v2086 = vpop.f32.mrf.mxu0
    %v2087 = vadd.f32 %v2062, %v2086
    %2088 = vmatmul.f32.gmra.mxu0 %v2067
    %v2089 = vpop.f32.mrf.mxu0
    %v2090 = vadd.f32 %v2062, %v2089
    %2091 = vdwg.mxu0
    %v2092 = vadd.f32 %v2014, %v2087
    %v2093 = vadd.f32 %v2015, %v2090
    %v2094 = vld [vmem:[#allocation2 + $0x5af] sm:$0x1]
    %v2095 = vld [vmem:[#allocation2 + $0x5b0] sm:$0x1]
    %v2096 = vsel %vm91, %v2092, 0.0
    %2097 = vadd.xlane.f32.xlu0 %v2096
    %v2098 = vpop.xlane.xlu0 %2097
    %v2099 = vsel %vm91, %v2093, 0.0
    %2100 = vadd.xlane.f32.xlu0 %v2099
    %v2101 = vpop.xlane.xlu0 %2100
    %v2102 = vmul.f32 %v2098, %v945
    %v2103 = vmul.f32 %v2101, %v945
    %v2104 = vsub.f32 %v2092, %v2102
    %v2105 = vsub.f32 %v2093, %v2103
    %v2106 = vmul.f32 %v2104, %v2104
    %v2107 = vmul.f32 %v2105, %v2105
    %v2108 = vsel %vm91, %v2106, 0.0
    %2109 = vadd.xlane.f32.xlu0 %v2108
    %v2110 = vpop.xlane.xlu0 %2109
    %v2111 = vsel %vm91, %v2107, 0.0
    %2112 = vadd.xlane.f32.xlu0 %v2111
    %v2113 = vpop.xlane.xlu0 %2112
    %v2114 = vmul.f32 %v2110, %v945
    %v2115 = vmul.f32 %v2113, %v945
    %v2116 = vadd.f32 %v2114, 1e-05
    %v2117 = vadd.f32 %v2115, 1e-05
    %v2118 = vrsqrt.pop %v2116
    %v2119 = vmul.f32 %v2118, %v2116
    %v2120 = vmul.f32 %v2119, %v2118
    %v2121 = vmul.f32 0.5, %v2120
    %v2122 = vsub.f32 1.5, %v2121
    %v2123 = vmul.f32 %v2118, %v2122
    %vm2124 = vweird.f32 %v2116
    %vm2125 = vweird.f32 %v2118
    %vm2126 = vmor %vm2124, %vm2125
    %v2127 = vsel %vm2126, %v2118, %v2123
    %v2128 = vrsqrt.pop %v2117
    %v2129 = vmul.f32 %v2128, %v2117
    %v2130 = vmul.f32 %v2129, %v2128
    %v2131 = vmul.f32 0.5, %v2130
    %v2132 = vsub.f32 1.5, %v2131
    %v2133 = vmul.f32 %v2128, %v2132
    %vm2134 = vweird.f32 %v2117
    %vm2135 = vweird.f32 %v2128
    %vm2136 = vmor %vm2134, %vm2135
    %v2137 = vsel %vm2136, %v2128, %v2133
    %v2138 = vmul.f32 %v2104, %v2127
    %v2139 = vmul.f32 %v2105, %v2137
    %v2140 = vperm.slane %v2094, 0
    %v2141 = vmul.f32 %v2138, %v2140
    %v2142 = vmul.f32 %v2139, %v2140
    %v2143 = vperm.slane %v2095, 0
    %v2144 = vadd.f32 %v2141, %v2143
    %v2145 = vadd.f32 %v2142, %v2143
    %v2146 = vld [vmem:[#allocation2 + $0x5bd] sm:$0x1]
    %v2147 = vld [vmem:[#allocation2 + $0x5be] sm:$0x1]
    %v2148 = vsel %vm91, %v2144, 0.0
    %2149 = vadd.xlane.f32.xlu0 %v2148
    %v2150 = vpop.xlane.xlu0 %2149
    %v2151 = vsel %vm91, %v2145, 0.0
    %2152 = vadd.xlane.f32.xlu0 %v2151
    %v2153 = vpop.xlane.xlu0 %2152
    %v2154 = vmul.f32 %v2150, %v945
    %v2155 = vmul.f32 %v2153, %v945
    %v2156 = vsub.f32 %v2144, %v2154
    %v2157 = vsub.f32 %v2145, %v2155
    %v2158 = vmul.f32 %v2156, %v2156
    %v2159 = vmul.f32 %v2157, %v2157
    %v2160 = vsel %vm91, %v2158, 0.0
    %2161 = vadd.xlane.f32.xlu0 %v2160
    %v2162 = vpop.xlane.xlu0 %2161
    %v2163 = vsel %vm91, %v2159, 0.0
    %2164 = vadd.xlane.f32.xlu0 %v2163
    %v2165 = vpop.xlane.xlu0 %2164
    %v2166 = vmul.f32 %v2162, %v945
    %v2167 = vmul.f32 %v2165, %v945
    %v2168 = vadd.f32 %v2166, 1e-05
    %v2169 = vadd.f32 %v2167, 1e-05
    %v2170 = vrsqrt.pop %v2168
    %v2171 = vmul.f32 %v2170, %v2168
    %v2172 = vmul.f32 %v2171, %v2170
    %v2173 = vmul.f32 0.5, %v2172
    %v2174 = vsub.f32 1.5, %v2173
    %v2175 = vmul.f32 %v2170, %v2174
    %vm2176 = vweird.f32 %v2168
    %vm2177 = vweird.f32 %v2170
    %vm2178 = vmor %vm2176, %vm2177
    %v2179 = vsel %vm2178, %v2170, %v2175
    %v2180 = vrsqrt.pop %v2169
    %v2181 = vmul.f32 %v2180, %v2169
    %v2182 = vmul.f32 %v2181, %v2180
    %v2183 = vmul.f32 0.5, %v2182
    %v2184 = vsub.f32 1.5, %v2183
    %v2185 = vmul.f32 %v2180, %v2184
    %vm2186 = vweird.f32 %v2169
    %vm2187 = vweird.f32 %v2180
    %vm2188 = vmor %vm2186, %vm2187
    %v2189 = vsel %vm2188, %v2180, %v2185
    %v2190 = vmul.f32 %v2156, %v2179
    %v2191 = vmul.f32 %v2157, %v2189
    %v2192 = vperm.slane %v2146, 0
    %v2193 = vmul.f32 %v2190, %v2192
    %v2194 = vmul.f32 %v2191, %v2192
    %v2195 = vperm.slane %v2147, 0
    %v2196 = vadd.f32 %v2193, %v2195
    %v2197 = vadd.f32 %v2194, %v2195
    %v2198 = vld [vmem:[#allocation2 + $0x190] sm:$0xff]
    %v2199 = vld [vmem:[#allocation2 + $0x1b0] sm:$0xff]
    %v2200 = vld [vmem:[#allocation2 + $0x1d0] sm:$0xff]
    %v2201 = vld [vmem:[#allocation2 + $0x1f0] sm:$0x1]
    %v2202 = vld [vmem:[#allocation2 + $0x1f4] sm:$0x1]
    %v2203 = vld [vmem:[#allocation2 + $0x1f8] sm:$0x1]
    %v2204 = vperm.slane %v2201, 0
    %v2206 = vsel %vm91, %v2198, 0
    %2208 = vmatpush.xpose.msra.mxu0 0.0
    %2209 = vmatpush.xpose.msra.mxu0 0.0
    %2210 = vmatpush.xpose.msra.mxu0 0.0
    %2211 = vmatpush.xpose.msra.mxu0 0.0
    %2212 = vmatpush.xpose.msra.mxu0 0.0
    %2213 = vmatpush.xpose.msra.mxu0 0.0
    %2214 = vmatpush.xpose.msra.mxu0 0.0
    %2215 = vmatpush.xpose.msra.mxu0 0.0
    %2216 = vmatpush.xpose.msra.mxu0 0.0
    %2217 = vmatpush.xpose.msra.mxu0 0.0
    %2218 = vmatpush.xpose.msra.mxu0 0.0
    %2219 = vmatpush.xpose.msra.mxu0 0.0
    %2220 = vmatpush.xpose.msra.mxu0 0.0
    %2221 = vmatpush.xpose.msra.mxu0 0.0
    %2222 = vmatpush.xpose.msra.mxu0 0.0
    %2223 = vmatpush.xpose.msra.mxu0 %v2206
    %2224 = vmatmul.f32.gmra.mxu0 %v93
    %v2225 = vpop.f32.mrf.mxu0
    %v2226 = vadd.f32 %v2204, %v2225
    %2227 = vmatmul.f32.gmra.mxu0 %v96
    %v2228 = vpop.f32.mrf.mxu0
    %v2229 = vadd.f32 %v2204, %v2228
    %2230 = vdwg.mxu0
    %v2231 = vperm.slane %v2202, 0
    %v2233 = vsel %vm91, %v2199, 0
    %2235 = vmatpush.xpose.msra.mxu0 0.0
    %2236 = vmatpush.xpose.msra.mxu0 0.0
    %2237 = vmatpush.xpose.msra.mxu0 0.0
    %2238 = vmatpush.xpose.msra.mxu0 0.0
    %2239 = vmatpush.xpose.msra.mxu0 0.0
    %2240 = vmatpush.xpose.msra.mxu0 0.0
    %2241 = vmatpush.xpose.msra.mxu0 0.0
    %2242 = vmatpush.xpose.msra.mxu0 0.0
    %2243 = vmatpush.xpose.msra.mxu0 0.0
    %2244 = vmatpush.xpose.msra.mxu0 0.0
    %2245 = vmatpush.xpose.msra.mxu0 0.0
    %2246 = vmatpush.xpose.msra.mxu0 0.0
    %2247 = vmatpush.xpose.msra.mxu0 0.0
    %2248 = vmatpush.xpose.msra.mxu0 0.0
    %2249 = vmatpush.xpose.msra.mxu0 0.0
    %2250 = vmatpush.xpose.msra.mxu0 %v2233
    %2251 = vmatmul.f32.gmra.mxu0 %v93
    %v2252 = vpop.f32.mrf.mxu0
    %v2253 = vadd.f32 %v2231, %v2252
    %2254 = vmatmul.f32.gmra.mxu0 %v96
    %v2255 = vpop.f32.mrf.mxu0
    %v2256 = vadd.f32 %v2231, %v2255
    %2257 = vdwg.mxu0
    %v2258 = vperm.slane %v2203, 0
    %v2260 = vsel %vm91, %v2200, 0
    %2262 = vmatpush.xpose.msra.mxu0 0.0
    %2263 = vmatpush.xpose.msra.mxu0 0.0
    %2264 = vmatpush.xpose.msra.mxu0 0.0
    %2265 = vmatpush.xpose.msra.mxu0 0.0
    %2266 = vmatpush.xpose.msra.mxu0 0.0
    %2267 = vmatpush.xpose.msra.mxu0 0.0
    %2268 = vmatpush.xpose.msra.mxu0 0.0
    %2269 = vmatpush.xpose.msra.mxu0 0.0
    %2270 = vmatpush.xpose.msra.mxu0 0.0
    %2271 = vmatpush.xpose.msra.mxu0 0.0
    %2272 = vmatpush.xpose.msra.mxu0 0.0
    %2273 = vmatpush.xpose.msra.mxu0 0.0
    %2274 = vmatpush.xpose.msra.mxu0 0.0
    %2275 = vmatpush.xpose.msra.mxu0 0.0
    %2276 = vmatpush.xpose.msra.mxu0 0.0
    %2277 = vmatpush.xpose.msra.mxu0 %v2260
    %2278 = vmatmul.f32.gmra.mxu0 %v93
    %v2279 = vpop.f32.mrf.mxu0
    %v2280 = vadd.f32 %v2258, %v2279
    %2281 = vmatmul.f32.gmra.mxu0 %v96
    %v2282 = vpop.f32.mrf.mxu0
    %v2283 = vadd.f32 %v2258, %v2282
    %2284 = vdwg.mxu0
    %v2286 = vsel %vm178, %v2226, 0
    %v2289 = vsel %vm178, %v2229, 0
    %v2292 = vsel %vm178, %v2253, 0
    %v2295 = vsel %vm178, %v2256, 0
    %2297 = vmatpush.xpose.msra.mxu0 0.0
    %2298 = vmatpush.xpose.msra.mxu0 0.0
    %2299 = vmatpush.xpose.msra.mxu0 0.0
    %2300 = vmatpush.xpose.msra.mxu0 0.0
    %2301 = vmatpush.xpose.msra.mxu0 0.0
    %2302 = vmatpush.xpose.msra.mxu0 0.0
    %2303 = vmatpush.xpose.msra.mxu0 0.0
    %2304 = vmatpush.xpose.msra.mxu0 0.0
    %2305 = vmatpush.xpose.msra.mxu0 0.0
    %2306 = vmatpush.xpose.msra.mxu0 0.0
    %2307 = vmatpush.xpose.msra.mxu0 0.0
    %2308 = vmatpush.xpose.msra.mxu0 0.0
    %2309 = vmatpush.xpose.msra.mxu0 0.0
    %2310 = vmatpush.xpose.msra.mxu0 0.0
    %2311 = vmatpush.xpose.msra.mxu0 %v2295
    %2312 = vmatpush.xpose.msra.mxu0 %v2292
    %2313 = vmatmul.f32.gmra.mxu0 %v2286
    %v2314 = vpop.f32.mrf.mxu0
    %v2315 = vadd.f32 0.0, %v2314
    %2316 = vmatmul.f32.gmra.mxu0 %v2289
    %v2317 = vpop.f32.mrf.mxu0
    %v2318 = vadd.f32 0.0, %v2317
    %2319 = vdwg.mxu0
    %v2320 = vmul.f32 %v2315, 0.35355338
    %v2321 = vmul.f32 %v2318, 0.35355338
    %v2322 = vadd.f32 %v2320, %v82
    %v2323 = vadd.f32 %v2321, %v83
    %v2324 = vsel %vm218, %v2322, -inf
    %2325 = vmax.xlane.f32.xlu0 %v2324
    %v2326 = vpop.xlane.xlu0 %2325
    %v2327 = vsel %vm218, %v2323, -inf
    %2328 = vmax.xlane.f32.xlu0 %v2327
    %v2329 = vpop.xlane.xlu0 %2328
    %v2330 = vsub.f32 %v2322, %v2326
    %v2331 = vsub.f32 %v2323, %v2329
    %v2332 = vmul.f32 %v2330, 1.442695
    %v2333 = vpow.pop %v2332
    %v2334 = vmul.f32 %v2331, 1.442695
    %v2335 = vpow.pop %v2334
    %v2336 = vsel %vm218, %v2333, 0.0
    %2337 = vadd.xlane.f32.xlu0 %v2336
    %v2338 = vpop.xlane.xlu0 %2337
    %v2339 = vsel %vm218, %v2335, 0.0
    %2340 = vadd.xlane.f32.xlu0 %v2339
    %v2341 = vpop.xlane.xlu0 %2340
    %v2342 = vrcp.pop %v2338
    %v2343 = vrcp.pop %v2341
    %v2344 = vmul.f32 %v2333, %v2342
    %v2345 = vmul.f32 %v2335, %v2343
    %v2347 = vsel %vm218, %v2344, 0
    %v2350 = vsel %vm218, %v2345, 0
    %2352 = vmatpush.msra.mxu0 0.0
    %2353 = vmatpush.msra.mxu0 0.0
    %2354 = vmatpush.msra.mxu0 0.0
    %2355 = vmatpush.msra.mxu0 0.0
    %2356 = vmatpush.msra.mxu0 0.0
    %2357 = vmatpush.msra.mxu0 0.0
    %2358 = vmatpush.msra.mxu0 0.0
    %2359 = vmatpush.msra.mxu0 0.0
    %2360 = vmatpush.msra.mxu0 0.0
    %2361 = vmatpush.msra.mxu0 0.0
    %2362 = vmatpush.msra.mxu0 0.0
    %2363 = vmatpush.msra.mxu0 0.0
    %2364 = vmatpush.msra.mxu0 0.0
    %2365 = vmatpush.msra.mxu0 0.0
    %2366 = vmatpush.msra.mxu0 %v2283
    %2367 = vmatpush.msra.mxu0 %v2280
    %2368 = vmatmul.f32.gmra.mxu0 %v2347
    %v2369 = vpop.f32.mrf.mxu0
    %v2370 = vadd.f32 0.0, %v2369
    %2371 = vmatmul.f32.gmra.mxu0 %v2350
    %v2372 = vpop.f32.mrf.mxu0
    %v2373 = vadd.f32 0.0, %v2372
    %2374 = vdwg.mxu0
    %v2375 = vld [vmem:[#allocation2 + $0x200] sm:$0xff]
    %v2376 = vld [vmem:[#allocation2 + $0x198] sm:$0xff]
    %v2377 = vld [vmem:[#allocation2 + $0x1b8] sm:$0xff]
    %v2378 = vld [vmem:[#allocation2 + $0x1d8] sm:$0xff]
    %v2379 = vld [vmem:[#allocation2 + $0x1f1] sm:$0x1]
    %v2380 = vld [vmem:[#allocation2 + $0x1f5] sm:$0x1]
    %v2381 = vld [vmem:[#allocation2 + $0x1f9] sm:$0x1]
    %v2382 = vperm.slane %v2379, 0
    %v2384 = vsel %vm91, %v2376, 0
    %2386 = vmatpush.xpose.msra.mxu0 0.0
    %2387 = vmatpush.xpose.msra.mxu0 0.0
    %2388 = vmatpush.xpose.msra.mxu0 0.0
    %2389 = vmatpush.xpose.msra.mxu0 0.0
    %2390 = vmatpush.xpose.msra.mxu0 0.0
    %2391 = vmatpush.xpose.msra.mxu0 0.0
    %2392 = vmatpush.xpose.msra.mxu0 0.0
    %2393 = vmatpush.xpose.msra.mxu0 0.0
    %2394 = vmatpush.xpose.msra.mxu0 0.0
    %2395 = vmatpush.xpose.msra.mxu0 0.0
    %2396 = vmatpush.xpose.msra.mxu0 0.0
    %2397 = vmatpush.xpose.msra.mxu0 0.0
    %2398 = vmatpush.xpose.msra.mxu0 0.0
    %2399 = vmatpush.xpose.msra.mxu0 0.0
    %2400 = vmatpush.xpose.msra.mxu0 0.0
    %2401 = vmatpush.xpose.msra.mxu0 %v2384
    %2402 = vmatmul.f32.gmra.mxu0 %v93
    %v2403 = vpop.f32.mrf.mxu0
    %v2404 = vadd.f32 %v2382, %v2403
    %2405 = vmatmul.f32.gmra.mxu0 %v96
    %v2406 = vpop.f32.mrf.mxu0
    %v2407 = vadd.f32 %v2382, %v2406
    %2408 = vdwg.mxu0
    %v2409 = vperm.slane %v2380, 0
    %v2411 = vsel %vm91, %v2377, 0
    %2413 = vmatpush.xpose.msra.mxu0 0.0
    %2414 = vmatpush.xpose.msra.mxu0 0.0
    %2415 = vmatpush.xpose.msra.mxu0 0.0
    %2416 = vmatpush.xpose.msra.mxu0 0.0
    %2417 = vmatpush.xpose.msra.mxu0 0.0
    %2418 = vmatpush.xpose.msra.mxu0 0.0
    %2419 = vmatpush.xpose.msra.mxu0 0.0
    %2420 = vmatpush.xpose.msra.mxu0 0.0
    %2421 = vmatpush.xpose.msra.mxu0 0.0
    %2422 = vmatpush.xpose.msra.mxu0 0.0
    %2423 = vmatpush.xpose.msra.mxu0 0.0
    %2424 = vmatpush.xpose.msra.mxu0 0.0
    %2425 = vmatpush.xpose.msra.mxu0 0.0
    %2426 = vmatpush.xpose.msra.mxu0 0.0
    %2427 = vmatpush.xpose.msra.mxu0 0.0
    %2428 = vmatpush.xpose.msra.mxu0 %v2411
    %2429 = vmatmul.f32.gmra.mxu0 %v93
    %v2430 = vpop.f32.mrf.mxu0
    %v2431 = vadd.f32 %v2409, %v2430
    %2432 = vmatmul.f32.gmra.mxu0 %v96
    %v2433 = vpop.f32.mrf.mxu0
    %v2434 = vadd.f32 %v2409, %v2433
    %2435 = vdwg.mxu0
    %v2436 = vperm.slane %v2381, 0
    %v2438 = vsel %vm91, %v2378, 0
    %2440 = vmatpush.xpose.msra.mxu0 0.0
    %2441 = vmatpush.xpose.msra.mxu0 0.0
    %2442 = vmatpush.xpose.msra.mxu0 0.0
    %2443 = vmatpush.xpose.msra.mxu0 0.0
    %2444 = vmatpush.xpose.msra.mxu0 0.0
    %2445 = vmatpush.xpose.msra.mxu0 0.0
    %2446 = vmatpush.xpose.msra.mxu0 0.0
    %2447 = vmatpush.xpose.msra.mxu0 0.0
    %2448 = vmatpush.xpose.msra.mxu0 0.0
    %2449 = vmatpush.xpose.msra.mxu0 0.0
    %2450 = vmatpush.xpose.msra.mxu0 0.0
    %2451 = vmatpush.xpose.msra.mxu0 0.0
    %2452 = vmatpush.xpose.msra.mxu0 0.0
    %2453 = vmatpush.xpose.msra.mxu0 0.0
    %2454 = vmatpush.xpose.msra.mxu0 0.0
    %2455 = vmatpush.xpose.msra.mxu0 %v2438
    %2456 = vmatmul.f32.gmra.mxu0 %v93
    %v2457 = vpop.f32.mrf.mxu0
    %v2458 = vadd.f32 %v2436, %v2457
    %2459 = vmatmul.f32.gmra.mxu0 %v96
    %v2460 = vpop.f32.mrf.mxu0
    %v2461 = vadd.f32 %v2436, %v2460
    %2462 = vdwg.mxu0
    %v2464 = vsel %vm178, %v2404, 0
    %v2467 = vsel %vm178, %v2407, 0
    %v2470 = vsel %vm178, %v2431, 0
    %v2473 = vsel %vm178, %v2434, 0
    %2475 = vmatpush.xpose.msra.mxu0 0.0
    %2476 = vmatpush.xpose.msra.mxu0 0.0
    %2477 = vmatpush.xpose.msra.mxu0 0.0
    %2478 = vmatpush.xpose.msra.mxu0 0.0
    %2479 = vmatpush.xpose.msra.mxu0 0.0
    %2480 = vmatpush.xpose.msra.mxu0 0.0
    %2481 = vmatpush.xpose.msra.mxu0 0.0
    %2482 = vmatpush.xpose.msra.mxu0 0.0
    %2483 = vmatpush.xpose.msra.mxu0 0.0
    %2484 = vmatpush.xpose.msra.mxu0 0.0
    %2485 = vmatpush.xpose.msra.mxu0 0.0
    %2486 = vmatpush.xpose.msra.mxu0 0.0
    %2487 = vmatpush.xpose.msra.mxu0 0.0
    %2488 = vmatpush.xpose.msra.mxu0 0.0
    %2489 = vmatpush.xpose.msra.mxu0 %v2473
    %2490 = vmatpush.xpose.msra.mxu0 %v2470
    %2491 = vmatmul.f32.gmra.mxu0 %v2464
    %v2492 = vpop.f32.mrf.mxu0
    %v2493 = vadd.f32 0.0, %v2492
    %2494 = vmatmul.f32.gmra.mxu0 %v2467
    %v2495 = vpop.f32.mrf.mxu0
    %v2496 = vadd.f32 0.0, %v2495
    %2497 = vdwg.mxu0
    %v2498 = vmul.f32 %v2493, 0.35355338
    %v2499 = vmul.f32 %v2496, 0.35355338
    %v2500 = vadd.f32 %v2498, %v82
    %v2501 = vadd.f32 %v2499, %v83
    %v2502 = vsel %vm218, %v2500, -inf
    %2503 = vmax.xlane.f32.xlu0 %v2502
    %v2504 = vpop.xlane.xlu0 %2503
    %v2505 = vsel %vm218, %v2501, -inf
    %2506 = vmax.xlane.f32.xlu0 %v2505
    %v2507 = vpop.xlane.xlu0 %2506
    %v2508 = vsub.f32 %v2500, %v2504
    %v2509 = vsub.f32 %v2501, %v2507
    %v2510 = vmul.f32 %v2508, 1.442695
    %v2511 = vpow.pop %v2510
    %v2512 = vmul.f32 %v2509, 1.442695
    %v2513 = vpow.pop %v2512
    %v2514 = vsel %vm218, %v2511, 0.0
    %2515 = vadd.xlane.f32.xlu0 %v2514
    %v2516 = vpop.xlane.xlu0 %2515
    %v2517 = vsel %vm218, %v2513, 0.0
    %2518 = vadd.xlane.f32.xlu0 %v2517
    %v2519 = vpop.xlane.xlu0 %2518
    %v2520 = vrcp.pop %v2516
    %v2521 = vrcp.pop %v2519
    %v2522 = vmul.f32 %v2511, %v2520
    %v2523 = vmul.f32 %v2513, %v2521
    %v2525 = vsel %vm218, %v2522, 0
    %v2528 = vsel %vm218, %v2523, 0
    %2530 = vmatpush.msra.mxu0 0.0
    %2531 = vmatpush.msra.mxu0 0.0
    %2532 = vmatpush.msra.mxu0 0.0
    %2533 = vmatpush.msra.mxu0 0.0
    %2534 = vmatpush.msra.mxu0 0.0
    %2535 = vmatpush.msra.mxu0 0.0
    %2536 = vmatpush.msra.mxu0 0.0
    %2537 = vmatpush.msra.mxu0 0.0
    %2538 = vmatpush.msra.mxu0 0.0
    %2539 = vmatpush.msra.mxu0 0.0
    %2540 = vmatpush.msra.mxu0 0.0
    %2541 = vmatpush.msra.mxu0 0.0
    %2542 = vmatpush.msra.mxu0 0.0
    %2543 = vmatpush.msra.mxu0 0.0
    %2544 = vmatpush.msra.mxu0 %v2461
    %2545 = vmatpush.msra.mxu0 %v2458
    %2546 = vmatmul.f32.gmra.mxu0 %v2525
    %v2547 = vpop.f32.mrf.mxu0
    %v2548 = vadd.f32 0.0, %v2547
    %2549 = vmatmul.f32.gmra.mxu0 %v2528
    %v2550 = vpop.f32.mrf.mxu0
    %v2551 = vadd.f32 0.0, %v2550
    %2552 = vdwg.mxu0
    %v2553 = vld [vmem:[#allocation2 + $0x208] sm:$0xff]
    %v2555 = vsel %vm178, %v2548, 0
    %v2558 = vsel %vm178, %v2551, 0
    %2560 = vmatpush.msra.mxu0 0.0
    %2561 = vmatpush.msra.mxu0 0.0
    %2562 = vmatpush.msra.mxu0 0.0
    %2563 = vmatpush.msra.mxu0 0.0
    %2564 = vmatpush.msra.mxu0 0.0
    %2565 = vmatpush.msra.mxu0 0.0
    %2566 = vmatpush.msra.mxu0 0.0
    %2567 = vmatpush.msra.mxu0 0.0
    %2568 = vmatpush.msra.mxu0 0.0
    %2569 = vmatpush.msra.mxu0 0.0
    %2570 = vmatpush.msra.mxu0 0.0
    %2571 = vmatpush.msra.mxu0 0.0
    %2572 = vmatpush.msra.mxu0 0.0
    %2573 = vmatpush.msra.mxu0 0.0
    %2574 = vmatpush.msra.mxu0 0.0
    %2575 = vmatpush.msra.mxu0 %v2553
    %2576 = vmatmul.f32.gmra.mxu0 %v2555
    %v2577 = vpop.f32.mrf.mxu0
    %v2578 = vadd.f32 0.0, %v2577
    %2579 = vmatmul.f32.gmra.mxu0 %v2558
    %v2580 = vpop.f32.mrf.mxu0
    %v2581 = vadd.f32 0.0, %v2580
    %2582 = vdwg.mxu0
    %v2584 = vsel %vm178, %v2370, 0
    %v2587 = vsel %vm178, %v2373, 0
    %2589 = vmatpush.msra.mxu0 0.0
    %2590 = vmatpush.msra.mxu0 0.0
    %2591 = vmatpush.msra.mxu0 0.0
    %2592 = vmatpush.msra.mxu0 0.0
    %2593 = vmatpush.msra.mxu0 0.0
    %2594 = vmatpush.msra.mxu0 0.0
    %2595 = vmatpush.msra.mxu0 0.0
    %2596 = vmatpush.msra.mxu0 0.0
    %2597 = vmatpush.msra.mxu0 0.0
    %2598 = vmatpush.msra.mxu0 0.0
    %2599 = vmatpush.msra.mxu0 0.0
    %2600 = vmatpush.msra.mxu0 0.0
    %2601 = vmatpush.msra.mxu0 0.0
    %2602 = vmatpush.msra.mxu0 0.0
    %2603 = vmatpush.msra.mxu0 0.0
    %2604 = vmatpush.msra.mxu0 %v2375
    %2605 = vmatmul.f32.gmra.mxu0 %v2584
    %v2606 = vpop.f32.mrf.mxu0
    %v2607 = vadd.f32 %v2578, %v2606
    %2608 = vmatmul.f32.gmra.mxu0 %v2587
    %v2609 = vpop.f32.mrf.mxu0
    %v2610 = vadd.f32 %v2581, %v2609
    %2611 = vdwg.mxu0
    %v2612 = vld [vmem:[#allocation2 + $0x1a0] sm:$0xff]
    %v2613 = vld [vmem:[#allocation2 + $0x1c0] sm:$0xff]
    %v2614 = vld [vmem:[#allocation2 + $0x1e0] sm:$0xff]
    %v2615 = vld [vmem:[#allocation2 + $0x1f2] sm:$0x1]
    %v2616 = vld [vmem:[#allocation2 + $0x1f6] sm:$0x1]
    %v2617 = vld [vmem:[#allocation2 + $0x1fa] sm:$0x1]
    %v2618 = vperm.slane %v2615, 0
    %v2620 = vsel %vm91, %v2612, 0
    %2622 = vmatpush.xpose.msra.mxu0 0.0
    %2623 = vmatpush.xpose.msra.mxu0 0.0
    %2624 = vmatpush.xpose.msra.mxu0 0.0
    %2625 = vmatpush.xpose.msra.mxu0 0.0
    %2626 = vmatpush.xpose.msra.mxu0 0.0
    %2627 = vmatpush.xpose.msra.mxu0 0.0
    %2628 = vmatpush.xpose.msra.mxu0 0.0
    %2629 = vmatpush.xpose.msra.mxu0 0.0
    %2630 = vmatpush.xpose.msra.mxu0 0.0
    %2631 = vmatpush.xpose.msra.mxu0 0.0
    %2632 = vmatpush.xpose.msra.mxu0 0.0
    %2633 = vmatpush.xpose.msra.mxu0 0.0
    %2634 = vmatpush.xpose.msra.mxu0 0.0
    %2635 = vmatpush.xpose.msra.mxu0 0.0
    %2636 = vmatpush.xpose.msra.mxu0 0.0
    %2637 = vmatpush.xpose.msra.mxu0 %v2620
    %2638 = vmatmul.f32.gmra.mxu0 %v93
    %v2639 = vpop.f32.mrf.mxu0
    %v2640 = vadd.f32 %v2618, %v2639
    %2641 = vmatmul.f32.gmra.mxu0 %v96
    %v2642 = vpop.f32.mrf.mxu0
    %v2643 = vadd.f32 %v2618, %v2642
    %2644 = vdwg.mxu0
    %v2645 = vperm.slane %v2616, 0
    %v2647 = vsel %vm91, %v2613, 0
    %2649 = vmatpush.xpose.msra.mxu0 0.0
    %2650 = vmatpush.xpose.msra.mxu0 0.0
    %2651 = vmatpush.xpose.msra.mxu0 0.0
    %2652 = vmatpush.xpose.msra.mxu0 0.0
    %2653 = vmatpush.xpose.msra.mxu0 0.0
    %2654 = vmatpush.xpose.msra.mxu0 0.0
    %2655 = vmatpush.xpose.msra.mxu0 0.0
    %2656 = vmatpush.xpose.msra.mxu0 0.0
    %2657 = vmatpush.xpose.msra.mxu0 0.0
    %2658 = vmatpush.xpose.msra.mxu0 0.0
    %2659 = vmatpush.xpose.msra.mxu0 0.0
    %2660 = vmatpush.xpose.msra.mxu0 0.0
    %2661 = vmatpush.xpose.msra.mxu0 0.0
    %2662 = vmatpush.xpose.msra.mxu0 0.0
    %2663 = vmatpush.xpose.msra.mxu0 0.0
    %2664 = vmatpush.xpose.msra.mxu0 %v2647
    %2665 = vmatmul.f32.gmra.mxu0 %v93
    %v2666 = vpop.f32.mrf.mxu0
    %v2667 = vadd.f32 %v2645, %v2666
    %2668 = vmatmul.f32.gmra.mxu0 %v96
    %v2669 = vpop.f32.mrf.mxu0
    %v2670 = vadd.f32 %v2645, %v2669
    %2671 = vdwg.mxu0
    %v2672 = vperm.slane %v2617, 0
    %v2674 = vsel %vm91, %v2614, 0
    %2676 = vmatpush.xpose.msra.mxu0 0.0
    %2677 = vmatpush.xpose.msra.mxu0 0.0
    %2678 = vmatpush.xpose.msra.mxu0 0.0
    %2679 = vmatpush.xpose.msra.mxu0 0.0
    %2680 = vmatpush.xpose.msra.mxu0 0.0
    %2681 = vmatpush.xpose.msra.mxu0 0.0
    %2682 = vmatpush.xpose.msra.mxu0 0.0
    %2683 = vmatpush.xpose.msra.mxu0 0.0
    %2684 = vmatpush.xpose.msra.mxu0 0.0
    %2685 = vmatpush.xpose.msra.mxu0 0.0
    %2686 = vmatpush.xpose.msra.mxu0 0.0
    %2687 = vmatpush.xpose.msra.mxu0 0.0
    %2688 = vmatpush.xpose.msra.mxu0 0.0
    %2689 = vmatpush.xpose.msra.mxu0 0.0
    %2690 = vmatpush.xpose.msra.mxu0 0.0
    %2691 = vmatpush.xpose.msra.mxu0 %v2674
    %2692 = vmatmul.f32.gmra.mxu0 %v93
    %v2693 = vpop.f32.mrf.mxu0
    %v2694 = vadd.f32 %v2672, %v2693
    %2695 = vmatmul.f32.gmra.mxu0 %v96
    %v2696 = vpop.f32.mrf.mxu0
    %v2697 = vadd.f32 %v2672, %v2696
    %2698 = vdwg.mxu0
    %v2700 = vsel %vm178, %v2640, 0
    %v2703 = vsel %vm178, %v2643, 0
    %v2706 = vsel %vm178, %v2667, 0
    %v2709 = vsel %vm178, %v2670, 0
    %2711 = vmatpush.xpose.msra.mxu0 0.0
    %2712 = vmatpush.xpose.msra.mxu0 0.0
    %2713 = vmatpush.xpose.msra.mxu0 0.0
    %2714 = vmatpush.xpose.msra.mxu0 0.0
    %2715 = vmatpush.xpose.msra.mxu0 0.0
    %2716 = vmatpush.xpose.msra.mxu0 0.0
    %2717 = vmatpush.xpose.msra.mxu0 0.0
    %2718 = vmatpush.xpose.msra.mxu0 0.0
    %2719 = vmatpush.xpose.msra.mxu0 0.0
    %2720 = vmatpush.xpose.msra.mxu0 0.0
    %2721 = vmatpush.xpose.msra.mxu0 0.0
    %2722 = vmatpush.xpose.msra.mxu0 0.0
    %2723 = vmatpush.xpose.msra.mxu0 0.0
    %2724 = vmatpush.xpose.msra.mxu0 0.0
    %2725 = vmatpush.xpose.msra.mxu0 %v2709
    %2726 = vmatpush.xpose.msra.mxu0 %v2706
    %2727 = vmatmul.f32.gmra.mxu0 %v2700
    %v2728 = vpop.f32.mrf.mxu0
    %v2729 = vadd.f32 0.0, %v2728
    %2730 = vmatmul.f32.gmra.mxu0 %v2703
    %v2731 = vpop.f32.mrf.mxu0
    %v2732 = vadd.f32 0.0, %v2731
    %2733 = vdwg.mxu0
    %v2734 = vmul.f32 %v2729, 0.35355338
    %v2735 = vmul.f32 %v2732, 0.35355338
    %v2736 = vadd.f32 %v2734, %v82
    %v2737 = vadd.f32 %v2735, %v83
    %v2738 = vsel %vm218, %v2736, -inf
    %2739 = vmax.xlane.f32.xlu0 %v2738
    %v2740 = vpop.xlane.xlu0 %2739
    %v2741 = vsel %vm218, %v2737, -inf
    %2742 = vmax.xlane.f32.xlu0 %v2741
    %v2743 = vpop.xlane.xlu0 %2742
    %v2744 = vsub.f32 %v2736, %v2740
    %v2745 = vsub.f32 %v2737, %v2743
    %v2746 = vmul.f32 %v2744, 1.442695
    %v2747 = vpow.pop %v2746
    %v2748 = vmul.f32 %v2745, 1.442695
    %v2749 = vpow.pop %v2748
    %v2750 = vsel %vm218, %v2747, 0.0
    %2751 = vadd.xlane.f32.xlu0 %v2750
    %v2752 = vpop.xlane.xlu0 %2751
    %v2753 = vsel %vm218, %v2749, 0.0
    %2754 = vadd.xlane.f32.xlu0 %v2753
    %v2755 = vpop.xlane.xlu0 %2754
    %v2756 = vrcp.pop %v2752
    %v2757 = vrcp.pop %v2755
    %v2758 = vmul.f32 %v2747, %v2756
    %v2759 = vmul.f32 %v2749, %v2757
    %v2761 = vsel %vm218, %v2758, 0
    %v2764 = vsel %vm218, %v2759, 0
    %2766 = vmatpush.msra.mxu0 0.0
    %2767 = vmatpush.msra.mxu0 0.0
    %2768 = vmatpush.msra.mxu0 0.0
    %2769 = vmatpush.msra.mxu0 0.0
    %2770 = vmatpush.msra.mxu0 0.0
    %2771 = vmatpush.msra.mxu0 0.0
    %2772 = vmatpush.msra.mxu0 0.0
    %2773 = vmatpush.msra.mxu0 0.0
    %2774 = vmatpush.msra.mxu0 0.0
    %2775 = vmatpush.msra.mxu0 0.0
    %2776 = vmatpush.msra.mxu0 0.0
    %2777 = vmatpush.msra.mxu0 0.0
    %2778 = vmatpush.msra.mxu0 0.0
    %2779 = vmatpush.msra.mxu0 0.0
    %2780 = vmatpush.msra.mxu0 %v2697
    %2781 = vmatpush.msra.mxu0 %v2694
    %2782 = vmatmul.f32.gmra.mxu0 %v2761
    %v2783 = vpop.f32.mrf.mxu0
    %v2784 = vadd.f32 0.0, %v2783
    %2785 = vmatmul.f32.gmra.mxu0 %v2764
    %v2786 = vpop.f32.mrf.mxu0
    %v2787 = vadd.f32 0.0, %v2786
    %2788 = vdwg.mxu0
    %v2789 = vld [vmem:[#allocation2 + $0x210] sm:$0xff]
    %v2791 = vsel %vm178, %v2784, 0
    %v2794 = vsel %vm178, %v2787, 0
    %2796 = vmatpush.msra.mxu0 0.0
    %2797 = vmatpush.msra.mxu0 0.0
    %2798 = vmatpush.msra.mxu0 0.0
    %2799 = vmatpush.msra.mxu0 0.0
    %2800 = vmatpush.msra.mxu0 0.0
    %2801 = vmatpush.msra.mxu0 0.0
    %2802 = vmatpush.msra.mxu0 0.0
    %2803 = vmatpush.msra.mxu0 0.0
    %2804 = vmatpush.msra.mxu0 0.0
    %2805 = vmatpush.msra.mxu0 0.0
    %2806 = vmatpush.msra.mxu0 0.0
    %2807 = vmatpush.msra.mxu0 0.0
    %2808 = vmatpush.msra.mxu0 0.0
    %2809 = vmatpush.msra.mxu0 0.0
    %2810 = vmatpush.msra.mxu0 0.0
    %2811 = vmatpush.msra.mxu0 %v2789
    %2812 = vmatmul.f32.gmra.mxu0 %v2791
    %v2813 = vpop.f32.mrf.mxu0
    %v2814 = vadd.f32 0.0, %v2813
    %2815 = vmatmul.f32.gmra.mxu0 %v2794
    %v2816 = vpop.f32.mrf.mxu0
    %v2817 = vadd.f32 0.0, %v2816
    %2818 = vdwg.mxu0
    %v2819 = vadd.f32 %v2607, %v2814
    %v2820 = vadd.f32 %v2610, %v2817
    %v2821 = vld [vmem:[#allocation2 + $0x1a8] sm:$0xff]
    %v2822 = vld [vmem:[#allocation2 + $0x1c8] sm:$0xff]
    %v2823 = vld [vmem:[#allocation2 + $0x1e8] sm:$0xff]
    %v2824 = vld [vmem:[#allocation2 + $0x1f3] sm:$0x1]
    %v2825 = vld [vmem:[#allocation2 + $0x1f7] sm:$0x1]
    %v2826 = vld [vmem:[#allocation2 + $0x1fb] sm:$0x1]
    %v2827 = vperm.slane %v2824, 0
    %v2829 = vsel %vm91, %v2821, 0
    %2831 = vmatpush.xpose.msra.mxu0 0.0
    %2832 = vmatpush.xpose.msra.mxu0 0.0
    %2833 = vmatpush.xpose.msra.mxu0 0.0
    %2834 = vmatpush.xpose.msra.mxu0 0.0
    %2835 = vmatpush.xpose.msra.mxu0 0.0
    %2836 = vmatpush.xpose.msra.mxu0 0.0
    %2837 = vmatpush.xpose.msra.mxu0 0.0
    %2838 = vmatpush.xpose.msra.mxu0 0.0
    %2839 = vmatpush.xpose.msra.mxu0 0.0
    %2840 = vmatpush.xpose.msra.mxu0 0.0
    %2841 = vmatpush.xpose.msra.mxu0 0.0
    %2842 = vmatpush.xpose.msra.mxu0 0.0
    %2843 = vmatpush.xpose.msra.mxu0 0.0
    %2844 = vmatpush.xpose.msra.mxu0 0.0
    %2845 = vmatpush.xpose.msra.mxu0 0.0
    %2846 = vmatpush.xpose.msra.mxu0 %v2829
    %2847 = vmatmul.f32.gmra.mxu0 %v93
    %v2848 = vpop.f32.mrf.mxu0
    %v2849 = vadd.f32 %v2827, %v2848
    %2850 = vmatmul.f32.gmra.mxu0 %v96
    %v2851 = vpop.f32.mrf.mxu0
    %v2852 = vadd.f32 %v2827, %v2851
    %2853 = vdwg.mxu0
    %v2854 = vperm.slane %v2825, 0
    %v2856 = vsel %vm91, %v2822, 0
    %2858 = vmatpush.xpose.msra.mxu0 0.0
    %2859 = vmatpush.xpose.msra.mxu0 0.0
    %2860 = vmatpush.xpose.msra.mxu0 0.0
    %2861 = vmatpush.xpose.msra.mxu0 0.0
    %2862 = vmatpush.xpose.msra.mxu0 0.0
    %2863 = vmatpush.xpose.msra.mxu0 0.0
    %2864 = vmatpush.xpose.msra.mxu0 0.0
    %2865 = vmatpush.xpose.msra.mxu0 0.0
    %2866 = vmatpush.xpose.msra.mxu0 0.0
    %2867 = vmatpush.xpose.msra.mxu0 0.0
    %2868 = vmatpush.xpose.msra.mxu0 0.0
    %2869 = vmatpush.xpose.msra.mxu0 0.0
    %2870 = vmatpush.xpose.msra.mxu0 0.0
    %2871 = vmatpush.xpose.msra.mxu0 0.0
    %2872 = vmatpush.xpose.msra.mxu0 0.0
    %2873 = vmatpush.xpose.msra.mxu0 %v2856
    %2874 = vmatmul.f32.gmra.mxu0 %v93
    %v2875 = vpop.f32.mrf.mxu0
    %v2876 = vadd.f32 %v2854, %v2875
    %2877 = vmatmul.f32.gmra.mxu0 %v96
    %v2878 = vpop.f32.mrf.mxu0
    %v2879 = vadd.f32 %v2854, %v2878
    %2880 = vdwg.mxu0
    %v2881 = vperm.slane %v2826, 0
    %v2883 = vsel %vm91, %v2823, 0
    %2885 = vmatpush.xpose.msra.mxu0 0.0
    %2886 = vmatpush.xpose.msra.mxu0 0.0
    %2887 = vmatpush.xpose.msra.mxu0 0.0
    %2888 = vmatpush.xpose.msra.mxu0 0.0
    %2889 = vmatpush.xpose.msra.mxu0 0.0
    %2890 = vmatpush.xpose.msra.mxu0 0.0
    %2891 = vmatpush.xpose.msra.mxu0 0.0
    %2892 = vmatpush.xpose.msra.mxu0 0.0
    %2893 = vmatpush.xpose.msra.mxu0 0.0
    %2894 = vmatpush.xpose.msra.mxu0 0.0
    %2895 = vmatpush.xpose.msra.mxu0 0.0
    %2896 = vmatpush.xpose.msra.mxu0 0.0
    %2897 = vmatpush.xpose.msra.mxu0 0.0
    %2898 = vmatpush.xpose.msra.mxu0 0.0
    %2899 = vmatpush.xpose.msra.mxu0 0.0
    %2900 = vmatpush.xpose.msra.mxu0 %v2883
    %2901 = vmatmul.f32.gmra.mxu0 %v93
    %v2902 = vpop.f32.mrf.mxu0
    %v2903 = vadd.f32 %v2881, %v2902
    %2904 = vmatmul.f32.gmra.mxu0 %v96
    %v2905 = vpop.f32.mrf.mxu0
    %v2906 = vadd.f32 %v2881, %v2905
    %2907 = vdwg.mxu0
    %v2909 = vsel %vm178, %v2849, 0
    %v2912 = vsel %vm178, %v2852, 0
    %v2915 = vsel %vm178, %v2876, 0
    %v2918 = vsel %vm178, %v2879, 0
    %2920 = vmatpush.xpose.msra.mxu0 0.0
    %2921 = vmatpush.xpose.msra.mxu0 0.0
    %2922 = vmatpush.xpose.msra.mxu0 0.0
    %2923 = vmatpush.xpose.msra.mxu0 0.0
    %2924 = vmatpush.xpose.msra.mxu0 0.0
    %2925 = vmatpush.xpose.msra.mxu0 0.0
    %2926 = vmatpush.xpose.msra.mxu0 0.0
    %2927 = vmatpush.xpose.msra.mxu0 0.0
    %2928 = vmatpush.xpose.msra.mxu0 0.0
    %2929 = vmatpush.xpose.msra.mxu0 0.0
    %2930 = vmatpush.xpose.msra.mxu0 0.0
    %2931 = vmatpush.xpose.msra.mxu0 0.0
    %2932 = vmatpush.xpose.msra.mxu0 0.0
    %2933 = vmatpush.xpose.msra.mxu0 0.0
    %2934 = vmatpush.xpose.msra.mxu0 %v2918
    %2935 = vmatpush.xpose.msra.mxu0 %v2915
    %2936 = vmatmul.f32.gmra.mxu0 %v2909
    %v2937 = vpop.f32.mrf.mxu0
    %v2938 = vadd.f32 0.0, %v2937
    %2939 = vmatmul.f32.gmra.mxu0 %v2912
    %v2940 = vpop.f32.mrf.mxu0
    %v2941 = vadd.f32 0.0, %v2940
    %2942 = vdwg.mxu0
    %v2943 = vmul.f32 %v2938, 0.35355338
    %v2944 = vmul.f32 %v2941, 0.35355338
    %v2945 = vadd.f32 %v2943, %v82
    %v2946 = vadd.f32 %v2944, %v83
    %v2947 = vsel %vm218, %v2945, -inf
    %2948 = vmax.xlane.f32.xlu0 %v2947
    %v2949 = vpop.xlane.xlu0 %2948
    %v2950 = vsel %vm218, %v2946, -inf
    %2951 = vmax.xlane.f32.xlu0 %v2950
    %v2952 = vpop.xlane.xlu0 %2951
    %v2953 = vsub.f32 %v2945, %v2949
    %v2954 = vsub.f32 %v2946, %v2952
    %v2955 = vmul.f32 %v2953, 1.442695
    %v2956 = vpow.pop %v2955
    %v2957 = vmul.f32 %v2954, 1.442695
    %v2958 = vpow.pop %v2957
    %v2959 = vsel %vm218, %v2956, 0.0
    %2960 = vadd.xlane.f32.xlu0 %v2959
    %v2961 = vpop.xlane.xlu0 %2960
    %v2962 = vsel %vm218, %v2958, 0.0
    %2963 = vadd.xlane.f32.xlu0 %v2962
    %v2964 = vpop.xlane.xlu0 %2963
    %v2965 = vrcp.pop %v2961
    %v2966 = vrcp.pop %v2964
    %v2967 = vmul.f32 %v2956, %v2965
    %v2968 = vmul.f32 %v2958, %v2966
    %v2970 = vsel %vm218, %v2967, 0
    %v2973 = vsel %vm218, %v2968, 0
    %2975 = vmatpush.msra.mxu0 0.0
    %2976 = vmatpush.msra.mxu0 0.0
    %2977 = vmatpush.msra.mxu0 0.0
    %2978 = vmatpush.msra.mxu0 0.0
    %2979 = vmatpush.msra.mxu0 0.0
    %2980 = vmatpush.msra.mxu0 0.0
    %2981 = vmatpush.msra.mxu0 0.0
    %2982 = vmatpush.msra.mxu0 0.0
    %2983 = vmatpush.msra.mxu0 0.0
    %2984 = vmatpush.msra.mxu0 0.0
    %2985 = vmatpush.msra.mxu0 0.0
    %2986 = vmatpush.msra.mxu0 0.0
    %2987 = vmatpush.msra.mxu0 0.0
    %2988 = vmatpush.msra.mxu0 0.0
    %2989 = vmatpush.msra.mxu0 %v2906
    %2990 = vmatpush.msra.mxu0 %v2903
    %2991 = vmatmul.f32.gmra.mxu0 %v2970
    %v2992 = vpop.f32.mrf.mxu0
    %v2993 = vadd.f32 0.0, %v2992
    %2994 = vmatmul.f32.gmra.mxu0 %v2973
    %v2995 = vpop.f32.mrf.mxu0
    %v2996 = vadd.f32 0.0, %v2995
    %2997 = vdwg.mxu0
    %v2998 = vld [vmem:[#allocation2 + $0x218] sm:$0xff]
    %v3000 = vsel %vm178, %v2993, 0
    %v3003 = vsel %vm178, %v2996, 0
    %3005 = vmatpush.msra.mxu0 0.0
    %3006 = vmatpush.msra.mxu0 0.0
    %3007 = vmatpush.msra.mxu0 0.0
    %3008 = vmatpush.msra.mxu0 0.0
    %3009 = vmatpush.msra.mxu0 0.0
    %3010 = vmatpush.msra.mxu0 0.0
    %3011 = vmatpush.msra.mxu0 0.0
    %3012 = vmatpush.msra.mxu0 0.0
    %3013 = vmatpush.msra.mxu0 0.0
    %3014 = vmatpush.msra.mxu0 0.0
    %3015 = vmatpush.msra.mxu0 0.0
    %3016 = vmatpush.msra.mxu0 0.0
    %3017 = vmatpush.msra.mxu0 0.0
    %3018 = vmatpush.msra.mxu0 0.0
    %3019 = vmatpush.msra.mxu0 0.0
    %3020 = vmatpush.msra.mxu0 %v2998
    %3021 = vmatmul.f32.gmra.mxu0 %v3000
    %v3022 = vpop.f32.mrf.mxu0
    %v3023 = vadd.f32 0.0, %v3022
    %3024 = vmatmul.f32.gmra.mxu0 %v3003
    %v3025 = vpop.f32.mrf.mxu0
    %v3026 = vadd.f32 0.0, %v3025
    %3027 = vdwg.mxu0
    %v3028 = vadd.f32 %v2819, %v3023
    %v3029 = vadd.f32 %v2820, %v3026
    %v3030 = vld [vmem:[#allocation2 + $0x220] sm:$0x1]
    %v3031 = vperm.slane %v3030, 0
    %v3032 = vadd.f32 %v3028, %v3031
    %v3033 = vadd.f32 %v3029, %v3031
    %v3034 = vadd.f32 %v77, %v3032
    %v3035 = vadd.f32 %v80, %v3033
    %v3036 = vld [vmem:[#allocation2 + $0x5b1] sm:$0x1]
    %v3037 = vld [vmem:[#allocation2 + $0x5b2] sm:$0x1]
    %v3038 = vsel %vm91, %v3034, 0.0
    %3039 = vadd.xlane.f32.xlu0 %v3038
    %v3040 = vpop.xlane.xlu0 %3039
    %v3041 = vsel %vm91, %v3035, 0.0
    %3042 = vadd.xlane.f32.xlu0 %v3041
    %v3043 = vpop.xlane.xlu0 %3042
    %v3044 = vmul.f32 %v3040, %v945
    %v3045 = vmul.f32 %v3043, %v945
    %v3046 = vsub.f32 %v3034, %v3044
    %v3047 = vsub.f32 %v3035, %v3045
    %v3048 = vmul.f32 %v3046, %v3046
    %v3049 = vmul.f32 %v3047, %v3047
    %v3050 = vsel %vm91, %v3048, 0.0
    %3051 = vadd.xlane.f32.xlu0 %v3050
    %v3052 = vpop.xlane.xlu0 %3051
    %v3053 = vsel %vm91, %v3049, 0.0
    %3054 = vadd.xlane.f32.xlu0 %v3053
    %v3055 = vpop.xlane.xlu0 %3054
    %v3056 = vmul.f32 %v3052, %v945
    %v3057 = vmul.f32 %v3055, %v945
    %v3058 = vadd.f32 %v3056, 1e-05
    %v3059 = vadd.f32 %v3057, 1e-05
    %v3060 = vrsqrt.pop %v3058
    %v3061 = vmul.f32 %v3060, %v3058
    %v3062 = vmul.f32 %v3061, %v3060
    %v3063 = vmul.f32 0.5, %v3062
    %v3064 = vsub.f32 1.5, %v3063
    %v3065 = vmul.f32 %v3060, %v3064
    %vm3066 = vweird.f32 %v3058
    %vm3067 = vweird.f32 %v3060
    %vm3068 = vmor %vm3066, %vm3067
    %v3069 = vsel %vm3068, %v3060, %v3065
    %v3070 = vrsqrt.pop %v3059
    %v3071 = vmul.f32 %v3070, %v3059
    %v3072 = vmul.f32 %v3071, %v3070
    %v3073 = vmul.f32 0.5, %v3072
    %v3074 = vsub.f32 1.5, %v3073
    %v3075 = vmul.f32 %v3070, %v3074
    %vm3076 = vweird.f32 %v3059
    %vm3077 = vweird.f32 %v3070
    %vm3078 = vmor %vm3076, %vm3077
    %v3079 = vsel %vm3078, %v3070, %v3075
    %v3080 = vmul.f32 %v3046, %v3069
    %v3081 = vmul.f32 %v3047, %v3079
    %v3082 = vperm.slane %v3036, 0
    %v3083 = vmul.f32 %v3080, %v3082
    %v3084 = vmul.f32 %v3081, %v3082
    %v3085 = vperm.slane %v3037, 0
    %v3086 = vadd.f32 %v3083, %v3085
    %v3087 = vadd.f32 %v3084, %v3085
    %v3088 = vld [vmem:[#allocation2 + $0x228] sm:$0xff]
    %v3089 = vld [vmem:[#allocation2 + $0x248] sm:$0xff]
    %v3090 = vld [vmem:[#allocation2 + $0x268] sm:$0xff]
    %v3091 = vld [vmem:[#allocation2 + $0x288] sm:$0x1]
    %v3092 = vld [vmem:[#allocation2 + $0x28c] sm:$0x1]
    %v3093 = vld [vmem:[#allocation2 + $0x290] sm:$0x1]
    %v3094 = vperm.slane %v3091, 0
    %v3096 = vsel %vm91, %v3086, 0
    %v3099 = vsel %vm91, %v3087, 0
    %v3102 = vsel %vm91, %v3088, 0
    %3104 = vmatpush.xpose.msra.mxu0 0.0
    %3105 = vmatpush.xpose.msra.mxu0 0.0
    %3106 = vmatpush.xpose.msra.mxu0 0.0
    %3107 = vmatpush.xpose.msra.mxu0 0.0
    %3108 = vmatpush.xpose.msra.mxu0 0.0
    %3109 = vmatpush.xpose.msra.mxu0 0.0
    %3110 = vmatpush.xpose.msra.mxu0 0.0
    %3111 = vmatpush.xpose.msra.mxu0 0.0
    %3112 = vmatpush.xpose.msra.mxu0 0.0
    %3113 = vmatpush.xpose.msra.mxu0 0.0
    %3114 = vmatpush.xpose.msra.mxu0 0.0
    %3115 = vmatpush.xpose.msra.mxu0 0.0
    %3116 = vmatpush.xpose.msra.mxu0 0.0
    %3117 = vmatpush.xpose.msra.mxu0 0.0
    %3118 = vmatpush.xpose.msra.mxu0 0.0
    %3119 = vmatpush.xpose.msra.mxu0 %v3102
    %3120 = vmatmul.f32.gmra.mxu0 %v3096
    %v3121 = vpop.f32.mrf.mxu0
    %v3122 = vadd.f32 %v3094, %v3121
    %3123 = vmatmul.f32.gmra.mxu0 %v3099
    %v3124 = vpop.f32.mrf.mxu0
    %v3125 = vadd.f32 %v3094, %v3124
    %3126 = vdwg.mxu0
    %v3127 = vperm.slane %v3092, 0
    %v3129 = vsel %vm91, %v2196, 0
    %v3132 = vsel %vm91, %v2197, 0
    %v3135 = vsel %vm91, %v3089, 0
    %3137 = vmatpush.xpose.msra.mxu0 0.0
    %3138 = vmatpush.xpose.msra.mxu0 0.0
    %3139 = vmatpush.xpose.msra.mxu0 0.0
    %3140 = vmatpush.xpose.msra.mxu0 0.0
    %3141 = vmatpush.xpose.msra.mxu0 0.0
    %3142 = vmatpush.xpose.msra.mxu0 0.0
    %3143 = vmatpush.xpose.msra.mxu0 0.0
    %3144 = vmatpush.xpose.msra.mxu0 0.0
    %3145 = vmatpush.xpose.msra.mxu0 0.0
    %3146 = vmatpush.xpose.msra.mxu0 0.0
    %3147 = vmatpush.xpose.msra.mxu0 0.0
    %3148 = vmatpush.xpose.msra.mxu0 0.0
    %3149 = vmatpush.xpose.msra.mxu0 0.0
    %3150 = vmatpush.xpose.msra.mxu0 0.0
    %3151 = vmatpush.xpose.msra.mxu0 0.0
    %3152 = vmatpush.xpose.msra.mxu0 %v3135
    %3153 = vmatmul.f32.gmra.mxu0 %v3129
    %v3154 = vpop.f32.mrf.mxu0
    %v3155 = vadd.f32 %v3127, %v3154
    %3156 = vmatmul.f32.gmra.mxu0 %v3132
    %v3157 = vpop.f32.mrf.mxu0
    %v3158 = vadd.f32 %v3127, %v3157
    %3159 = vdwg.mxu0
    %v3160 = vperm.slane %v3093, 0
    %v3162 = vsel %vm91, %v3090, 0
    %3164 = vmatpush.xpose.msra.mxu0 0.0
    %3165 = vmatpush.xpose.msra.mxu0 0.0
    %3166 = vmatpush.xpose.msra.mxu0 0.0
    %3167 = vmatpush.xpose.msra.mxu0 0.0
    %3168 = vmatpush.xpose.msra.mxu0 0.0
    %3169 = vmatpush.xpose.msra.mxu0 0.0
    %3170 = vmatpush.xpose.msra.mxu0 0.0
    %3171 = vmatpush.xpose.msra.mxu0 0.0
    %3172 = vmatpush.xpose.msra.mxu0 0.0
    %3173 = vmatpush.xpose.msra.mxu0 0.0
    %3174 = vmatpush.xpose.msra.mxu0 0.0
    %3175 = vmatpush.xpose.msra.mxu0 0.0
    %3176 = vmatpush.xpose.msra.mxu0 0.0
    %3177 = vmatpush.xpose.msra.mxu0 0.0
    %3178 = vmatpush.xpose.msra.mxu0 0.0
    %3179 = vmatpush.xpose.msra.mxu0 %v3162
    %3180 = vmatmul.f32.gmra.mxu0 %v3129
    %v3181 = vpop.f32.mrf.mxu0
    %v3182 = vadd.f32 %v3160, %v3181
    %3183 = vmatmul.f32.gmra.mxu0 %v3132
    %v3184 = vpop.f32.mrf.mxu0
    %v3185 = vadd.f32 %v3160, %v3184
    %3186 = vdwg.mxu0
    %v3188 = vsel %vm178, %v3122, 0
    %v3191 = vsel %vm178, %v3125, 0
    %v3194 = vsel %vm178, %v3155, 0
    %v3197 = vsel %vm178, %v3158, 0
    %3199 = vmatpush.xpose.msra.mxu0 0.0
    %3200 = vmatpush.xpose.msra.mxu0 0.0
    %3201 = vmatpush.xpose.msra.mxu0 0.0
    %3202 = vmatpush.xpose.msra.mxu0 0.0
    %3203 = vmatpush.xpose.msra.mxu0 0.0
    %3204 = vmatpush.xpose.msra.mxu0 0.0
    %3205 = vmatpush.xpose.msra.mxu0 0.0
    %3206 = vmatpush.xpose.msra.mxu0 0.0
    %3207 = vmatpush.xpose.msra.mxu0 0.0
    %3208 = vmatpush.xpose.msra.mxu0 0.0
    %3209 = vmatpush.xpose.msra.mxu0 0.0
    %3210 = vmatpush.xpose.msra.mxu0 0.0
    %3211 = vmatpush.xpose.msra.mxu0 0.0
    %3212 = vmatpush.xpose.msra.mxu0 0.0
    %3213 = vmatpush.xpose.msra.mxu0 %v3197
    %3214 = vmatpush.xpose.msra.mxu0 %v3194
    %3215 = vmatmul.f32.gmra.mxu0 %v3188
    %v3216 = vpop.f32.mrf.mxu0
    %v3217 = vadd.f32 0.0, %v3216
    %3218 = vmatmul.f32.gmra.mxu0 %v3191
    %v3219 = vpop.f32.mrf.mxu0
    %v3220 = vadd.f32 0.0, %v3219
    %3221 = vdwg.mxu0
    %v3222 = vmul.f32 %v3217, 0.35355338
    %v3223 = vmul.f32 %v3220, 0.35355338
    %v3224 = vadd.f32 %v3222, %v82
    %v3225 = vadd.f32 %v3223, %v83
    %v3226 = vsel %vm218, %v3224, -inf
    %3227 = vmax.xlane.f32.xlu0 %v3226
    %v3228 = vpop.xlane.xlu0 %3227
    %v3229 = vsel %vm218, %v3225, -inf
    %3230 = vmax.xlane.f32.xlu0 %v3229
    %v3231 = vpop.xlane.xlu0 %3230
    %v3232 = vsub.f32 %v3224, %v3228
    %v3233 = vsub.f32 %v3225, %v3231
    %v3234 = vmul.f32 %v3232, 1.442695
    %v3235 = vpow.pop %v3234
    %v3236 = vmul.f32 %v3233, 1.442695
    %v3237 = vpow.pop %v3236
    %v3238 = vsel %vm218, %v3235, 0.0
    %3239 = vadd.xlane.f32.xlu0 %v3238
    %v3240 = vpop.xlane.xlu0 %3239
    %v3241 = vsel %vm218, %v3237, 0.0
    %3242 = vadd.xlane.f32.xlu0 %v3241
    %v3243 = vpop.xlane.xlu0 %3242
    %v3244 = vrcp.pop %v3240
    %v3245 = vrcp.pop %v3243
    %v3246 = vmul.f32 %v3235, %v3244
    %v3247 = vmul.f32 %v3237, %v3245
    %v3249 = vsel %vm218, %v3246, 0
    %v3252 = vsel %vm218, %v3247, 0
    %3254 = vmatpush.msra.mxu0 0.0
    %3255 = vmatpush.msra.mxu0 0.0
    %3256 = vmatpush.msra.mxu0 0.0
    %3257 = vmatpush.msra.mxu0 0.0
    %3258 = vmatpush.msra.mxu0 0.0
    %3259 = vmatpush.msra.mxu0 0.0
    %3260 = vmatpush.msra.mxu0 0.0
    %3261 = vmatpush.msra.mxu0 0.0
    %3262 = vmatpush.msra.mxu0 0.0
    %3263 = vmatpush.msra.mxu0 0.0
    %3264 = vmatpush.msra.mxu0 0.0
    %3265 = vmatpush.msra.mxu0 0.0
    %3266 = vmatpush.msra.mxu0 0.0
    %3267 = vmatpush.msra.mxu0 0.0
    %3268 = vmatpush.msra.mxu0 %v3185
    %3269 = vmatpush.msra.mxu0 %v3182
    %3270 = vmatmul.f32.gmra.mxu0 %v3249
    %v3271 = vpop.f32.mrf.mxu0
    %v3272 = vadd.f32 0.0, %v3271
    %3273 = vmatmul.f32.gmra.mxu0 %v3252
    %v3274 = vpop.f32.mrf.mxu0
    %v3275 = vadd.f32 0.0, %v3274
    %3276 = vdwg.mxu0
    %v3277 = vld [vmem:[#allocation2 + $0x298] sm:$0xff]
    %v3278 = vld [vmem:[#allocation2 + $0x230] sm:$0xff]
    %v3279 = vld [vmem:[#allocation2 + $0x250] sm:$0xff]
    %v3280 = vld [vmem:[#allocation2 + $0x270] sm:$0xff]
    %v3281 = vld [vmem:[#allocation2 + $0x289] sm:$0x1]
    %v3282 = vld [vmem:[#allocation2 + $0x28d] sm:$0x1]
    %v3283 = vld [vmem:[#allocation2 + $0x291] sm:$0x1]
    %v3284 = vperm.slane %v3281, 0
    %v3286 = vsel %vm91, %v3278, 0
    %3288 = vmatpush.xpose.msra.mxu0 0.0
    %3289 = vmatpush.xpose.msra.mxu0 0.0
    %3290 = vmatpush.xpose.msra.mxu0 0.0
    %3291 = vmatpush.xpose.msra.mxu0 0.0
    %3292 = vmatpush.xpose.msra.mxu0 0.0
    %3293 = vmatpush.xpose.msra.mxu0 0.0
    %3294 = vmatpush.xpose.msra.mxu0 0.0
    %3295 = vmatpush.xpose.msra.mxu0 0.0
    %3296 = vmatpush.xpose.msra.mxu0 0.0
    %3297 = vmatpush.xpose.msra.mxu0 0.0
    %3298 = vmatpush.xpose.msra.mxu0 0.0
    %3299 = vmatpush.xpose.msra.mxu0 0.0
    %3300 = vmatpush.xpose.msra.mxu0 0.0
    %3301 = vmatpush.xpose.msra.mxu0 0.0
    %3302 = vmatpush.xpose.msra.mxu0 0.0
    %3303 = vmatpush.xpose.msra.mxu0 %v3286
    %3304 = vmatmul.f32.gmra.mxu0 %v3096
    %v3305 = vpop.f32.mrf.mxu0
    %v3306 = vadd.f32 %v3284, %v3305
    %3307 = vmatmul.f32.gmra.mxu0 %v3099
    %v3308 = vpop.f32.mrf.mxu0
    %v3309 = vadd.f32 %v3284, %v3308
    %3310 = vdwg.mxu0
    %v3311 = vperm.slane %v3282, 0
    %v3313 = vsel %vm91, %v3279, 0
    %3315 = vmatpush.xpose.msra.mxu0 0.0
    %3316 = vmatpush.xpose.msra.mxu0 0.0
    %3317 = vmatpush.xpose.msra.mxu0 0.0
    %3318 = vmatpush.xpose.msra.mxu0 0.0
    %3319 = vmatpush.xpose.msra.mxu0 0.0
    %3320 = vmatpush.xpose.msra.mxu0 0.0
    %3321 = vmatpush.xpose.msra.mxu0 0.0
    %3322 = vmatpush.xpose.msra.mxu0 0.0
    %3323 = vmatpush.xpose.msra.mxu0 0.0
    %3324 = vmatpush.xpose.msra.mxu0 0.0
    %3325 = vmatpush.xpose.msra.mxu0 0.0
    %3326 = vmatpush.xpose.msra.mxu0 0.0
    %3327 = vmatpush.xpose.msra.mxu0 0.0
    %3328 = vmatpush.xpose.msra.mxu0 0.0
    %3329 = vmatpush.xpose.msra.mxu0 0.0
    %3330 = vmatpush.xpose.msra.mxu0 %v3313
    %3331 = vmatmul.f32.gmra.mxu0 %v3129
    %v3332 = vpop.f32.mrf.mxu0
    %v3333 = vadd.f32 %v3311, %v3332
    %3334 = vmatmul.f32.gmra.mxu0 %v3132
    %v3335 = vpop.f32.mrf.mxu0
    %v3336 = vadd.f32 %v3311, %v3335
    %3337 = vdwg.mxu0
    %v3338 = vperm.slane %v3283, 0
    %v3340 = vsel %vm91, %v3280, 0
    %3342 = vmatpush.xpose.msra.mxu0 0.0
    %3343 = vmatpush.xpose.msra.mxu0 0.0
    %3344 = vmatpush.xpose.msra.mxu0 0.0
    %3345 = vmatpush.xpose.msra.mxu0 0.0
    %3346 = vmatpush.xpose.msra.mxu0 0.0
    %3347 = vmatpush.xpose.msra.mxu0 0.0
    %3348 = vmatpush.xpose.msra.mxu0 0.0
    %3349 = vmatpush.xpose.msra.mxu0 0.0
    %3350 = vmatpush.xpose.msra.mxu0 0.0
    %3351 = vmatpush.xpose.msra.mxu0 0.0
    %3352 = vmatpush.xpose.msra.mxu0 0.0
    %3353 = vmatpush.xpose.msra.mxu0 0.0
    %3354 = vmatpush.xpose.msra.mxu0 0.0
    %3355 = vmatpush.xpose.msra.mxu0 0.0
    %3356 = vmatpush.xpose.msra.mxu0 0.0
    %3357 = vmatpush.xpose.msra.mxu0 %v3340
    %3358 = vmatmul.f32.gmra.mxu0 %v3129
    %v3359 = vpop.f32.mrf.mxu0
    %v3360 = vadd.f32 %v3338, %v3359
    %3361 = vmatmul.f32.gmra.mxu0 %v3132
    %v3362 = vpop.f32.mrf.mxu0
    %v3363 = vadd.f32 %v3338, %v3362
    %3364 = vdwg.mxu0
    %v3366 = vsel %vm178, %v3306, 0
    %v3369 = vsel %vm178, %v3309, 0
    %v3372 = vsel %vm178, %v3333, 0
    %v3375 = vsel %vm178, %v3336, 0
    %3377 = vmatpush.xpose.msra.mxu0 0.0
    %3378 = vmatpush.xpose.msra.mxu0 0.0
    %3379 = vmatpush.xpose.msra.mxu0 0.0
    %3380 = vmatpush.xpose.msra.mxu0 0.0
    %3381 = vmatpush.xpose.msra.mxu0 0.0
    %3382 = vmatpush.xpose.msra.mxu0 0.0
    %3383 = vmatpush.xpose.msra.mxu0 0.0
    %3384 = vmatpush.xpose.msra.mxu0 0.0
    %3385 = vmatpush.xpose.msra.mxu0 0.0
    %3386 = vmatpush.xpose.msra.mxu0 0.0
    %3387 = vmatpush.xpose.msra.mxu0 0.0
    %3388 = vmatpush.xpose.msra.mxu0 0.0
    %3389 = vmatpush.xpose.msra.mxu0 0.0
    %3390 = vmatpush.xpose.msra.mxu0 0.0
    %3391 = vmatpush.xpose.msra.mxu0 %v3375
    %3392 = vmatpush.xpose.msra.mxu0 %v3372
    %3393 = vmatmul.f32.gmra.mxu0 %v3366
    %v3394 = vpop.f32.mrf.mxu0
    %v3395 = vadd.f32 0.0, %v3394
    %3396 = vmatmul.f32.gmra.mxu0 %v3369
    %v3397 = vpop.f32.mrf.mxu0
    %v3398 = vadd.f32 0.0, %v3397
    %3399 = vdwg.mxu0
    %v3400 = vmul.f32 %v3395, 0.35355338
    %v3401 = vmul.f32 %v3398, 0.35355338
    %v3402 = vadd.f32 %v3400, %v82
    %v3403 = vadd.f32 %v3401, %v83
    %v3404 = vsel %vm218, %v3402, -inf
    %3405 = vmax.xlane.f32.xlu0 %v3404
    %v3406 = vpop.xlane.xlu0 %3405
    %v3407 = vsel %vm218, %v3403, -inf
    %3408 = vmax.xlane.f32.xlu0 %v3407
    %v3409 = vpop.xlane.xlu0 %3408
    %v3410 = vsub.f32 %v3402, %v3406
    %v3411 = vsub.f32 %v3403, %v3409
    %v3412 = vmul.f32 %v3410, 1.442695
    %v3413 = vpow.pop %v3412
    %v3414 = vmul.f32 %v3411, 1.442695
    %v3415 = vpow.pop %v3414
    %v3416 = vsel %vm218, %v3413, 0.0
    %3417 = vadd.xlane.f32.xlu0 %v3416
    %v3418 = vpop.xlane.xlu0 %3417
    %v3419 = vsel %vm218, %v3415, 0.0
    %3420 = vadd.xlane.f32.xlu0 %v3419
    %v3421 = vpop.xlane.xlu0 %3420
    %v3422 = vrcp.pop %v3418
    %v3423 = vrcp.pop %v3421
    %v3424 = vmul.f32 %v3413, %v3422
    %v3425 = vmul.f32 %v3415, %v3423
    %v3427 = vsel %vm218, %v3424, 0
    %v3430 = vsel %vm218, %v3425, 0
    %3432 = vmatpush.msra.mxu0 0.0
    %3433 = vmatpush.msra.mxu0 0.0
    %3434 = vmatpush.msra.mxu0 0.0
    %3435 = vmatpush.msra.mxu0 0.0
    %3436 = vmatpush.msra.mxu0 0.0
    %3437 = vmatpush.msra.mxu0 0.0
    %3438 = vmatpush.msra.mxu0 0.0
    %3439 = vmatpush.msra.mxu0 0.0
    %3440 = vmatpush.msra.mxu0 0.0
    %3441 = vmatpush.msra.mxu0 0.0
    %3442 = vmatpush.msra.mxu0 0.0
    %3443 = vmatpush.msra.mxu0 0.0
    %3444 = vmatpush.msra.mxu0 0.0
    %3445 = vmatpush.msra.mxu0 0.0
    %3446 = vmatpush.msra.mxu0 %v3363
    %3447 = vmatpush.msra.mxu0 %v3360
    %3448 = vmatmul.f32.gmra.mxu0 %v3427
    %v3449 = vpop.f32.mrf.mxu0
    %v3450 = vadd.f32 0.0, %v3449
    %3451 = vmatmul.f32.gmra.mxu0 %v3430
    %v3452 = vpop.f32.mrf.mxu0
    %v3453 = vadd.f32 0.0, %v3452
    %3454 = vdwg.mxu0
    %v3455 = vld [vmem:[#allocation2 + $0x2a0] sm:$0xff]
    %v3457 = vsel %vm178, %v3450, 0
    %v3460 = vsel %vm178, %v3453, 0
    %3462 = vmatpush.msra.mxu0 0.0
    %3463 = vmatpush.msra.mxu0 0.0
    %3464 = vmatpush.msra.mxu0 0.0
    %3465 = vmatpush.msra.mxu0 0.0
    %3466 = vmatpush.msra.mxu0 0.0
    %3467 = vmatpush.msra.mxu0 0.0
    %3468 = vmatpush.msra.mxu0 0.0
    %3469 = vmatpush.msra.mxu0 0.0
    %3470 = vmatpush.msra.mxu0 0.0
    %3471 = vmatpush.msra.mxu0 0.0
    %3472 = vmatpush.msra.mxu0 0.0
    %3473 = vmatpush.msra.mxu0 0.0
    %3474 = vmatpush.msra.mxu0 0.0
    %3475 = vmatpush.msra.mxu0 0.0
    %3476 = vmatpush.msra.mxu0 0.0
    %3477 = vmatpush.msra.mxu0 %v3455
    %3478 = vmatmul.f32.gmra.mxu0 %v3457
    %v3479 = vpop.f32.mrf.mxu0
    %v3480 = vadd.f32 0.0, %v3479
    %3481 = vmatmul.f32.gmra.mxu0 %v3460
    %v3482 = vpop.f32.mrf.mxu0
    %v3483 = vadd.f32 0.0, %v3482
    %3484 = vdwg.mxu0
    %v3486 = vsel %vm178, %v3272, 0
    %v3489 = vsel %vm178, %v3275, 0
    %3491 = vmatpush.msra.mxu0 0.0
    %3492 = vmatpush.msra.mxu0 0.0
    %3493 = vmatpush.msra.mxu0 0.0
    %3494 = vmatpush.msra.mxu0 0.0
    %3495 = vmatpush.msra.mxu0 0.0
    %3496 = vmatpush.msra.mxu0 0.0
    %3497 = vmatpush.msra.mxu0 0.0
    %3498 = vmatpush.msra.mxu0 0.0
    %3499 = vmatpush.msra.mxu0 0.0
    %3500 = vmatpush.msra.mxu0 0.0
    %3501 = vmatpush.msra.mxu0 0.0
    %3502 = vmatpush.msra.mxu0 0.0
    %3503 = vmatpush.msra.mxu0 0.0
    %3504 = vmatpush.msra.mxu0 0.0
    %3505 = vmatpush.msra.mxu0 0.0
    %3506 = vmatpush.msra.mxu0 %v3277
    %3507 = vmatmul.f32.gmra.mxu0 %v3486
    %v3508 = vpop.f32.mrf.mxu0
    %v3509 = vadd.f32 %v3480, %v3508
    %3510 = vmatmul.f32.gmra.mxu0 %v3489
    %v3511 = vpop.f32.mrf.mxu0
    %v3512 = vadd.f32 %v3483, %v3511
    %3513 = vdwg.mxu0
    %v3514 = vld [vmem:[#allocation2 + $0x238] sm:$0xff]
    %v3515 = vld [vmem:[#allocation2 + $0x258] sm:$0xff]
    %v3516 = vld [vmem:[#allocation2 + $0x278] sm:$0xff]
    %v3517 = vld [vmem:[#allocation2 + $0x28a] sm:$0x1]
    %v3518 = vld [vmem:[#allocation2 + $0x28e] sm:$0x1]
    %v3519 = vld [vmem:[#allocation2 + $0x292] sm:$0x1]
    %v3520 = vperm.slane %v3517, 0
    %v3522 = vsel %vm91, %v3514, 0
    %3524 = vmatpush.xpose.msra.mxu0 0.0
    %3525 = vmatpush.xpose.msra.mxu0 0.0
    %3526 = vmatpush.xpose.msra.mxu0 0.0
    %3527 = vmatpush.xpose.msra.mxu0 0.0
    %3528 = vmatpush.xpose.msra.mxu0 0.0
    %3529 = vmatpush.xpose.msra.mxu0 0.0
    %3530 = vmatpush.xpose.msra.mxu0 0.0
    %3531 = vmatpush.xpose.msra.mxu0 0.0
    %3532 = vmatpush.xpose.msra.mxu0 0.0
    %3533 = vmatpush.xpose.msra.mxu0 0.0
    %3534 = vmatpush.xpose.msra.mxu0 0.0
    %3535 = vmatpush.xpose.msra.mxu0 0.0
    %3536 = vmatpush.xpose.msra.mxu0 0.0
    %3537 = vmatpush.xpose.msra.mxu0 0.0
    %3538 = vmatpush.xpose.msra.mxu0 0.0
    %3539 = vmatpush.xpose.msra.mxu0 %v3522
    %3540 = vmatmul.f32.gmra.mxu0 %v3096
    %v3541 = vpop.f32.mrf.mxu0
    %v3542 = vadd.f32 %v3520, %v3541
    %3543 = vmatmul.f32.gmra.mxu0 %v3099
    %v3544 = vpop.f32.mrf.mxu0
    %v3545 = vadd.f32 %v3520, %v3544
    %3546 = vdwg.mxu0
    %v3547 = vperm.slane %v3518, 0
    %v3549 = vsel %vm91, %v3515, 0
    %3551 = vmatpush.xpose.msra.mxu0 0.0
    %3552 = vmatpush.xpose.msra.mxu0 0.0
    %3553 = vmatpush.xpose.msra.mxu0 0.0
    %3554 = vmatpush.xpose.msra.mxu0 0.0
    %3555 = vmatpush.xpose.msra.mxu0 0.0
    %3556 = vmatpush.xpose.msra.mxu0 0.0
    %3557 = vmatpush.xpose.msra.mxu0 0.0
    %3558 = vmatpush.xpose.msra.mxu0 0.0
    %3559 = vmatpush.xpose.msra.mxu0 0.0
    %3560 = vmatpush.xpose.msra.mxu0 0.0
    %3561 = vmatpush.xpose.msra.mxu0 0.0
    %3562 = vmatpush.xpose.msra.mxu0 0.0
    %3563 = vmatpush.xpose.msra.mxu0 0.0
    %3564 = vmatpush.xpose.msra.mxu0 0.0
    %3565 = vmatpush.xpose.msra.mxu0 0.0
    %3566 = vmatpush.xpose.msra.mxu0 %v3549
    %3567 = vmatmul.f32.gmra.mxu0 %v3129
    %v3568 = vpop.f32.mrf.mxu0
    %v3569 = vadd.f32 %v3547, %v3568
    %3570 = vmatmul.f32.gmra.mxu0 %v3132
    %v3571 = vpop.f32.mrf.mxu0
    %v3572 = vadd.f32 %v3547, %v3571
    %3573 = vdwg.mxu0
    %v3574 = vperm.slane %v3519, 0
    %v3576 = vsel %vm91, %v3516, 0
    %3578 = vmatpush.xpose.msra.mxu0 0.0
    %3579 = vmatpush.xpose.msra.mxu0 0.0
    %3580 = vmatpush.xpose.msra.mxu0 0.0
    %3581 = vmatpush.xpose.msra.mxu0 0.0
    %3582 = vmatpush.xpose.msra.mxu0 0.0
    %3583 = vmatpush.xpose.msra.mxu0 0.0
    %3584 = vmatpush.xpose.msra.mxu0 0.0
    %3585 = vmatpush.xpose.msra.mxu0 0.0
    %3586 = vmatpush.xpose.msra.mxu0 0.0
    %3587 = vmatpush.xpose.msra.mxu0 0.0
    %3588 = vmatpush.xpose.msra.mxu0 0.0
    %3589 = vmatpush.xpose.msra.mxu0 0.0
    %3590 = vmatpush.xpose.msra.mxu0 0.0
    %3591 = vmatpush.xpose.msra.mxu0 0.0
    %3592 = vmatpush.xpose.msra.mxu0 0.0
    %3593 = vmatpush.xpose.msra.mxu0 %v3576
    %3594 = vmatmul.f32.gmra.mxu0 %v3129
    %v3595 = vpop.f32.mrf.mxu0
    %v3596 = vadd.f32 %v3574, %v3595
    %3597 = vmatmul.f32.gmra.mxu0 %v3132
    %v3598 = vpop.f32.mrf.mxu0
    %v3599 = vadd.f32 %v3574, %v3598
    %3600 = vdwg.mxu0
    %v3602 = vsel %vm178, %v3542, 0
    %v3605 = vsel %vm178, %v3545, 0
    %v3608 = vsel %vm178, %v3569, 0
    %v3611 = vsel %vm178, %v3572, 0
    %3613 = vmatpush.xpose.msra.mxu0 0.0
    %3614 = vmatpush.xpose.msra.mxu0 0.0
    %3615 = vmatpush.xpose.msra.mxu0 0.0
    %3616 = vmatpush.xpose.msra.mxu0 0.0
    %3617 = vmatpush.xpose.msra.mxu0 0.0
    %3618 = vmatpush.xpose.msra.mxu0 0.0
    %3619 = vmatpush.xpose.msra.mxu0 0.0
    %3620 = vmatpush.xpose.msra.mxu0 0.0
    %3621 = vmatpush.xpose.msra.mxu0 0.0
    %3622 = vmatpush.xpose.msra.mxu0 0.0
    %3623 = vmatpush.xpose.msra.mxu0 0.0
    %3624 = vmatpush.xpose.msra.mxu0 0.0
    %3625 = vmatpush.xpose.msra.mxu0 0.0
    %3626 = vmatpush.xpose.msra.mxu0 0.0
    %3627 = vmatpush.xpose.msra.mxu0 %v3611
    %3628 = vmatpush.xpose.msra.mxu0 %v3608
    %3629 = vmatmul.f32.gmra.mxu0 %v3602
    %v3630 = vpop.f32.mrf.mxu0
    %v3631 = vadd.f32 0.0, %v3630
    %3632 = vmatmul.f32.gmra.mxu0 %v3605
    %v3633 = vpop.f32.mrf.mxu0
    %v3634 = vadd.f32 0.0, %v3633
    %3635 = vdwg.mxu0
    %v3636 = vmul.f32 %v3631, 0.35355338
    %v3637 = vmul.f32 %v3634, 0.35355338
    %v3638 = vadd.f32 %v3636, %v82
    %v3639 = vadd.f32 %v3637, %v83
    %v3640 = vsel %vm218, %v3638, -inf
    %3641 = vmax.xlane.f32.xlu0 %v3640
    %v3642 = vpop.xlane.xlu0 %3641
    %v3643 = vsel %vm218, %v3639, -inf
    %3644 = vmax.xlane.f32.xlu0 %v3643
    %v3645 = vpop.xlane.xlu0 %3644
    %v3646 = vsub.f32 %v3638, %v3642
    %v3647 = vsub.f32 %v3639, %v3645
    %v3648 = vmul.f32 %v3646, 1.442695
    %v3649 = vpow.pop %v3648
    %v3650 = vmul.f32 %v3647, 1.442695
    %v3651 = vpow.pop %v3650
    %v3652 = vsel %vm218, %v3649, 0.0
    %3653 = vadd.xlane.f32.xlu0 %v3652
    %v3654 = vpop.xlane.xlu0 %3653
    %v3655 = vsel %vm218, %v3651, 0.0
    %3656 = vadd.xlane.f32.xlu0 %v3655
    %v3657 = vpop.xlane.xlu0 %3656
    %v3658 = vrcp.pop %v3654
    %v3659 = vrcp.pop %v3657
    %v3660 = vmul.f32 %v3649, %v3658
    %v3661 = vmul.f32 %v3651, %v3659
    %v3663 = vsel %vm218, %v3660, 0
    %v3666 = vsel %vm218, %v3661, 0
    %3668 = vmatpush.msra.mxu0 0.0
    %3669 = vmatpush.msra.mxu0 0.0
    %3670 = vmatpush.msra.mxu0 0.0
    %3671 = vmatpush.msra.mxu0 0.0
    %3672 = vmatpush.msra.mxu0 0.0
    %3673 = vmatpush.msra.mxu0 0.0
    %3674 = vmatpush.msra.mxu0 0.0
    %3675 = vmatpush.msra.mxu0 0.0
    %3676 = vmatpush.msra.mxu0 0.0
    %3677 = vmatpush.msra.mxu0 0.0
    %3678 = vmatpush.msra.mxu0 0.0
    %3679 = vmatpush.msra.mxu0 0.0
    %3680 = vmatpush.msra.mxu0 0.0
    %3681 = vmatpush.msra.mxu0 0.0
    %3682 = vmatpush.msra.mxu0 %v3599
    %3683 = vmatpush.msra.mxu0 %v3596
    %3684 = vmatmul.f32.gmra.mxu0 %v3663
    %v3685 = vpop.f32.mrf.mxu0
    %v3686 = vadd.f32 0.0, %v3685
    %3687 = vmatmul.f32.gmra.mxu0 %v3666
    %v3688 = vpop.f32.mrf.mxu0
    %v3689 = vadd.f32 0.0, %v3688
    %3690 = vdwg.mxu0
    %v3691 = vld [vmem:[#allocation2 + $0x2a8] sm:$0xff]
    %v3693 = vsel %vm178, %v3686, 0
    %v3696 = vsel %vm178, %v3689, 0
    %3698 = vmatpush.msra.mxu0 0.0
    %3699 = vmatpush.msra.mxu0 0.0
    %3700 = vmatpush.msra.mxu0 0.0
    %3701 = vmatpush.msra.mxu0 0.0
    %3702 = vmatpush.msra.mxu0 0.0
    %3703 = vmatpush.msra.mxu0 0.0
    %3704 = vmatpush.msra.mxu0 0.0
    %3705 = vmatpush.msra.mxu0 0.0
    %3706 = vmatpush.msra.mxu0 0.0
    %3707 = vmatpush.msra.mxu0 0.0
    %3708 = vmatpush.msra.mxu0 0.0
    %3709 = vmatpush.msra.mxu0 0.0
    %3710 = vmatpush.msra.mxu0 0.0
    %3711 = vmatpush.msra.mxu0 0.0
    %3712 = vmatpush.msra.mxu0 0.0
    %3713 = vmatpush.msra.mxu0 %v3691
    %3714 = vmatmul.f32.gmra.mxu0 %v3693
    %v3715 = vpop.f32.mrf.mxu0
    %v3716 = vadd.f32 0.0, %v3715
    %3717 = vmatmul.f32.gmra.mxu0 %v3696
    %v3718 = vpop.f32.mrf.mxu0
    %v3719 = vadd.f32 0.0, %v3718
    %3720 = vdwg.mxu0
    %v3721 = vadd.f32 %v3509, %v3716
    %v3722 = vadd.f32 %v3512, %v3719
    %v3723 = vld [vmem:[#allocation2 + $0x240] sm:$0xff]
    %v3724 = vld [vmem:[#allocation2 + $0x260] sm:$0xff]
    %v3725 = vld [vmem:[#allocation2 + $0x280] sm:$0xff]
    %v3726 = vld [vmem:[#allocation2 + $0x28b] sm:$0x1]
    %v3727 = vld [vmem:[#allocation2 + $0x28f] sm:$0x1]
    %v3728 = vld [vmem:[#allocation2 + $0x293] sm:$0x1]
    %v3729 = vperm.slane %v3726, 0
    %v3731 = vsel %vm91, %v3723, 0
    %3733 = vmatpush.xpose.msra.mxu0 0.0
    %3734 = vmatpush.xpose.msra.mxu0 0.0
    %3735 = vmatpush.xpose.msra.mxu0 0.0
    %3736 = vmatpush.xpose.msra.mxu0 0.0
    %3737 = vmatpush.xpose.msra.mxu0 0.0
    %3738 = vmatpush.xpose.msra.mxu0 0.0
    %3739 = vmatpush.xpose.msra.mxu0 0.0
    %3740 = vmatpush.xpose.msra.mxu0 0.0
    %3741 = vmatpush.xpose.msra.mxu0 0.0
    %3742 = vmatpush.xpose.msra.mxu0 0.0
    %3743 = vmatpush.xpose.msra.mxu0 0.0
    %3744 = vmatpush.xpose.msra.mxu0 0.0
    %3745 = vmatpush.xpose.msra.mxu0 0.0
    %3746 = vmatpush.xpose.msra.mxu0 0.0
    %3747 = vmatpush.xpose.msra.mxu0 0.0
    %3748 = vmatpush.xpose.msra.mxu0 %v3731
    %3749 = vmatmul.f32.gmra.mxu0 %v3096
    %v3750 = vpop.f32.mrf.mxu0
    %v3751 = vadd.f32 %v3729, %v3750
    %3752 = vmatmul.f32.gmra.mxu0 %v3099
    %v3753 = vpop.f32.mrf.mxu0
    %v3754 = vadd.f32 %v3729, %v3753
    %3755 = vdwg.mxu0
    %v3756 = vperm.slane %v3727, 0
    %v3758 = vsel %vm91, %v3724, 0
    %3760 = vmatpush.xpose.msra.mxu0 0.0
    %3761 = vmatpush.xpose.msra.mxu0 0.0
    %3762 = vmatpush.xpose.msra.mxu0 0.0
    %3763 = vmatpush.xpose.msra.mxu0 0.0
    %3764 = vmatpush.xpose.msra.mxu0 0.0
    %3765 = vmatpush.xpose.msra.mxu0 0.0
    %3766 = vmatpush.xpose.msra.mxu0 0.0
    %3767 = vmatpush.xpose.msra.mxu0 0.0
    %3768 = vmatpush.xpose.msra.mxu0 0.0
    %3769 = vmatpush.xpose.msra.mxu0 0.0
    %3770 = vmatpush.xpose.msra.mxu0 0.0
    %3771 = vmatpush.xpose.msra.mxu0 0.0
    %3772 = vmatpush.xpose.msra.mxu0 0.0
    %3773 = vmatpush.xpose.msra.mxu0 0.0
    %3774 = vmatpush.xpose.msra.mxu0 0.0
    %3775 = vmatpush.xpose.msra.mxu0 %v3758
    %3776 = vmatmul.f32.gmra.mxu0 %v3129
    %v3777 = vpop.f32.mrf.mxu0
    %v3778 = vadd.f32 %v3756, %v3777
    %3779 = vmatmul.f32.gmra.mxu0 %v3132
    %v3780 = vpop.f32.mrf.mxu0
    %v3781 = vadd.f32 %v3756, %v3780
    %3782 = vdwg.mxu0
    %v3783 = vperm.slane %v3728, 0
    %v3785 = vsel %vm91, %v3725, 0
    %3787 = vmatpush.xpose.msra.mxu0 0.0
    %3788 = vmatpush.xpose.msra.mxu0 0.0
    %3789 = vmatpush.xpose.msra.mxu0 0.0
    %3790 = vmatpush.xpose.msra.mxu0 0.0
    %3791 = vmatpush.xpose.msra.mxu0 0.0
    %3792 = vmatpush.xpose.msra.mxu0 0.0
    %3793 = vmatpush.xpose.msra.mxu0 0.0
    %3794 = vmatpush.xpose.msra.mxu0 0.0
    %3795 = vmatpush.xpose.msra.mxu0 0.0
    %3796 = vmatpush.xpose.msra.mxu0 0.0
    %3797 = vmatpush.xpose.msra.mxu0 0.0
    %3798 = vmatpush.xpose.msra.mxu0 0.0
    %3799 = vmatpush.xpose.msra.mxu0 0.0
    %3800 = vmatpush.xpose.msra.mxu0 0.0
    %3801 = vmatpush.xpose.msra.mxu0 0.0
    %3802 = vmatpush.xpose.msra.mxu0 %v3785
    %3803 = vmatmul.f32.gmra.mxu0 %v3129
    %v3804 = vpop.f32.mrf.mxu0
    %v3805 = vadd.f32 %v3783, %v3804
    %3806 = vmatmul.f32.gmra.mxu0 %v3132
    %v3807 = vpop.f32.mrf.mxu0
    %v3808 = vadd.f32 %v3783, %v3807
    %3809 = vdwg.mxu0
    %v3811 = vsel %vm178, %v3751, 0
    %v3814 = vsel %vm178, %v3754, 0
    %v3817 = vsel %vm178, %v3778, 0
    %v3820 = vsel %vm178, %v3781, 0
    %3822 = vmatpush.xpose.msra.mxu0 0.0
    %3823 = vmatpush.xpose.msra.mxu0 0.0
    %3824 = vmatpush.xpose.msra.mxu0 0.0
    %3825 = vmatpush.xpose.msra.mxu0 0.0
    %3826 = vmatpush.xpose.msra.mxu0 0.0
    %3827 = vmatpush.xpose.msra.mxu0 0.0
    %3828 = vmatpush.xpose.msra.mxu0 0.0
    %3829 = vmatpush.xpose.msra.mxu0 0.0
    %3830 = vmatpush.xpose.msra.mxu0 0.0
    %3831 = vmatpush.xpose.msra.mxu0 0.0
    %3832 = vmatpush.xpose.msra.mxu0 0.0
    %3833 = vmatpush.xpose.msra.mxu0 0.0
    %3834 = vmatpush.xpose.msra.mxu0 0.0
    %3835 = vmatpush.xpose.msra.mxu0 0.0
    %3836 = vmatpush.xpose.msra.mxu0 %v3820
    %3837 = vmatpush.xpose.msra.mxu0 %v3817
    %3838 = vmatmul.f32.gmra.mxu0 %v3811
    %v3839 = vpop.f32.mrf.mxu0
    %v3840 = vadd.f32 0.0, %v3839
    %3841 = vmatmul.f32.gmra.mxu0 %v3814
    %v3842 = vpop.f32.mrf.mxu0
    %v3843 = vadd.f32 0.0, %v3842
    %3844 = vdwg.mxu0
    %v3845 = vmul.f32 %v3840, 0.35355338
    %v3846 = vmul.f32 %v3843, 0.35355338
    %v3847 = vadd.f32 %v3845, %v82
    %v3848 = vadd.f32 %v3846, %v83
    %v3849 = vsel %vm218, %v3847, -inf
    %3850 = vmax.xlane.f32.xlu0 %v3849
    %v3851 = vpop.xlane.xlu0 %3850
    %v3852 = vsel %vm218, %v3848, -inf
    %3853 = vmax.xlane.f32.xlu0 %v3852
    %v3854 = vpop.xlane.xlu0 %3853
    %v3855 = vsub.f32 %v3847, %v3851
    %v3856 = vsub.f32 %v3848, %v3854
    %v3857 = vmul.f32 %v3855, 1.442695
    %v3858 = vpow.pop %v3857
    %v3859 = vmul.f32 %v3856, 1.442695
    %v3860 = vpow.pop %v3859
    %v3861 = vsel %vm218, %v3858, 0.0
    %3862 = vadd.xlane.f32.xlu0 %v3861
    %v3863 = vpop.xlane.xlu0 %3862
    %v3864 = vsel %vm218, %v3860, 0.0
    %3865 = vadd.xlane.f32.xlu0 %v3864
    %v3866 = vpop.xlane.xlu0 %3865
    %v3867 = vrcp.pop %v3863
    %v3868 = vrcp.pop %v3866
    %v3869 = vmul.f32 %v3858, %v3867
    %v3870 = vmul.f32 %v3860, %v3868
    %v3872 = vsel %vm218, %v3869, 0
    %v3875 = vsel %vm218, %v3870, 0
    %3877 = vmatpush.msra.mxu0 0.0
    %3878 = vmatpush.msra.mxu0 0.0
    %3879 = vmatpush.msra.mxu0 0.0
    %3880 = vmatpush.msra.mxu0 0.0
    %3881 = vmatpush.msra.mxu0 0.0
    %3882 = vmatpush.msra.mxu0 0.0
    %3883 = vmatpush.msra.mxu0 0.0
    %3884 = vmatpush.msra.mxu0 0.0
    %3885 = vmatpush.msra.mxu0 0.0
    %3886 = vmatpush.msra.mxu0 0.0
    %3887 = vmatpush.msra.mxu0 0.0
    %3888 = vmatpush.msra.mxu0 0.0
    %3889 = vmatpush.msra.mxu0 0.0
    %3890 = vmatpush.msra.mxu0 0.0
    %3891 = vmatpush.msra.mxu0 %v3808
    %3892 = vmatpush.msra.mxu0 %v3805
    %3893 = vmatmul.f32.gmra.mxu0 %v3872
    %v3894 = vpop.f32.mrf.mxu0
    %v3895 = vadd.f32 0.0, %v3894
    %3896 = vmatmul.f32.gmra.mxu0 %v3875
    %v3897 = vpop.f32.mrf.mxu0
    %v3898 = vadd.f32 0.0, %v3897
    %3899 = vdwg.mxu0
    %v3900 = vld [vmem:[#allocation2 + $0x2b0] sm:$0xff]
    %v3902 = vsel %vm178, %v3895, 0
    %v3905 = vsel %vm178, %v3898, 0
    %3907 = vmatpush.msra.mxu0 0.0
    %3908 = vmatpush.msra.mxu0 0.0
    %3909 = vmatpush.msra.mxu0 0.0
    %3910 = vmatpush.msra.mxu0 0.0
    %3911 = vmatpush.msra.mxu0 0.0
    %3912 = vmatpush.msra.mxu0 0.0
    %3913 = vmatpush.msra.mxu0 0.0
    %3914 = vmatpush.msra.mxu0 0.0
    %3915 = vmatpush.msra.mxu0 0.0
    %3916 = vmatpush.msra.mxu0 0.0
    %3917 = vmatpush.msra.mxu0 0.0
    %3918 = vmatpush.msra.mxu0 0.0
    %3919 = vmatpush.msra.mxu0 0.0
    %3920 = vmatpush.msra.mxu0 0.0
    %3921 = vmatpush.msra.mxu0 0.0
    %3922 = vmatpush.msra.mxu0 %v3900
    %3923 = vmatmul.f32.gmra.mxu0 %v3902
    %v3924 = vpop.f32.mrf.mxu0
    %v3925 = vadd.f32 0.0, %v3924
    %3926 = vmatmul.f32.gmra.mxu0 %v3905
    %v3927 = vpop.f32.mrf.mxu0
    %v3928 = vadd.f32 0.0, %v3927
    %3929 = vdwg.mxu0
    %v3930 = vadd.f32 %v3721, %v3925
    %v3931 = vadd.f32 %v3722, %v3928
    %v3932 = vld [vmem:[#allocation2 + $0x2b8] sm:$0x1]
    %v3933 = vperm.slane %v3932, 0
    %v3934 = vadd.f32 %v3930, %v3933
    %v3935 = vadd.f32 %v3931, %v3933
    %v3936 = vadd.f32 %v3086, %v3934
    %v3937 = vadd.f32 %v3087, %v3935
    %v3938 = vld [vmem:[#allocation2 + $0x5b3] sm:$0x1]
    %v3939 = vld [vmem:[#allocation2 + $0x5b4] sm:$0x1]
    %v3940 = vsel %vm91, %v3936, 0.0
    %3941 = vadd.xlane.f32.xlu0 %v3940
    %v3942 = vpop.xlane.xlu0 %3941
    %v3943 = vsel %vm91, %v3937, 0.0
    %3944 = vadd.xlane.f32.xlu0 %v3943
    %v3945 = vpop.xlane.xlu0 %3944
    %v3946 = vmul.f32 %v3942, %v945
    %v3947 = vmul.f32 %v3945, %v945
    %v3948 = vsub.f32 %v3936, %v3946
    %v3949 = vsub.f32 %v3937, %v3947
    %v3950 = vmul.f32 %v3948, %v3948
    %v3951 = vmul.f32 %v3949, %v3949
    %v3952 = vsel %vm91, %v3950, 0.0
    %3953 = vadd.xlane.f32.xlu0 %v3952
    %v3954 = vpop.xlane.xlu0 %3953
    %v3955 = vsel %vm91, %v3951, 0.0
    %3956 = vadd.xlane.f32.xlu0 %v3955
    %v3957 = vpop.xlane.xlu0 %3956
    %v3958 = vmul.f32 %v3954, %v945
    %v3959 = vmul.f32 %v3957, %v945
    %v3960 = vadd.f32 %v3958, 1e-05
    %v3961 = vadd.f32 %v3959, 1e-05
    %v3962 = vrsqrt.pop %v3960
    %v3963 = vmul.f32 %v3962, %v3960
    %v3964 = vmul.f32 %v3963, %v3962
    %v3965 = vmul.f32 0.5, %v3964
    %v3966 = vsub.f32 1.5, %v3965
    %v3967 = vmul.f32 %v3962, %v3966
    %vm3968 = vweird.f32 %v3960
    %vm3969 = vweird.f32 %v3962
    %vm3970 = vmor %vm3968, %vm3969
    %v3971 = vsel %vm3970, %v3962, %v3967
    %v3972 = vrsqrt.pop %v3961
    %v3973 = vmul.f32 %v3972, %v3961
    %v3974 = vmul.f32 %v3973, %v3972
    %v3975 = vmul.f32 0.5, %v3974
    %v3976 = vsub.f32 1.5, %v3975
    %v3977 = vmul.f32 %v3972, %v3976
    %vm3978 = vweird.f32 %v3961
    %vm3979 = vweird.f32 %v3972
    %vm3980 = vmor %vm3978, %vm3979
    %v3981 = vsel %vm3980, %v3972, %v3977
    %v3982 = vmul.f32 %v3948, %v3971
    %v3983 = vmul.f32 %v3949, %v3981
    %v3984 = vperm.slane %v3938, 0
    %v3985 = vmul.f32 %v3982, %v3984
    %v3986 = vmul.f32 %v3983, %v3984
    %v3987 = vperm.slane %v3939, 0
    %v3988 = vadd.f32 %v3985, %v3987
    %v3989 = vadd.f32 %v3986, %v3987
    %v3990 = vld [vmem:[#allocation2 + $0x4d0] sm:$0xff]
    %v3991 = vld [vmem:[#allocation2 + $0x4d8] sm:$0xff]
    %v3992 = vld [vmem:[#allocation2 + $0x4e0] sm:$0xff]
    %v3993 = vld [vmem:[#allocation2 + $0x4e8] sm:$0xff]
    %v3994 = vld [vmem:[#allocation2 + $0x4f0] sm:$0x1]
    %v3995 = vld [vmem:[#allocation2 + $0x4f8] sm:$0xff]
    %v3996 = vld [vmem:[#allocation2 + $0x500] sm:$0xff]
    %v3997 = vld [vmem:[#allocation2 + $0x508] sm:$0xff]
    %v3998 = vld [vmem:[#allocation2 + $0x510] sm:$0xff]
    %v3999 = vld [vmem:[#allocation2 + $0x518] sm:$0xff]
    %v4000 = vld [vmem:[#allocation2 + $0x520] sm:$0xff]
    %v4001 = vld [vmem:[#allocation2 + $0x528] sm:$0xff]
    %v4002 = vld [vmem:[#allocation2 + $0x530] sm:$0xff]
    %v4003 = vld [vmem:[#allocation2 + $0x538] sm:$0x1]
    %v4004 = vperm.slane %v3994, 0
    %v4006 = vsel %vm91, %v3988, 0
    %v4009 = vsel %vm91, %v3989, 0
    %4011 = vmatpush.msra.mxu0 0.0
    %4012 = vmatpush.msra.mxu0 0.0
    %4013 = vmatpush.msra.mxu0 0.0
    %4014 = vmatpush.msra.mxu0 0.0
    %4015 = vmatpush.msra.mxu0 0.0
    %4016 = vmatpush.msra.mxu0 0.0
    %4017 = vmatpush.msra.mxu0 0.0
    %4018 = vmatpush.msra.mxu0 0.0
    %4019 = vmatpush.msra.mxu0 0.0
    %4020 = vmatpush.msra.mxu0 0.0
    %4021 = vmatpush.msra.mxu0 0.0
    %4022 = vmatpush.msra.mxu0 0.0
    %4023 = vmatpush.msra.mxu0 %v3993
    %4024 = vmatpush.msra.mxu0 %v3992
    %4025 = vmatpush.msra.mxu0 %v3991
    %4026 = vmatpush.msra.mxu0 %v3990
    %4027 = vmatmul.f32.gmra.mxu0 %v4006
    %v4028 = vpop.f32.mrf.mxu0
    %v4029 = vadd.f32 %v4004, %v4028
    %4030 = vmatmul.f32.gmra.mxu0 %v4009
    %v4031 = vpop.f32.mrf.mxu0
    %v4032 = vadd.f32 %v4004, %v4031
    %4033 = vdwg.mxu0
    %v4034 = vmax.f32 %v4029, 0.0
    %v4035 = vmax.f32 %v4032, 0.0
    %v4036 = vperm.slane %v4003, 0
    %v4038 = vsel %vm52, %v4034, 0
    %v4041 = vsel %vm52, %v4035, 0
    %4043 = vmatpush.msra.mxu0 0.0
    %4044 = vmatpush.msra.mxu0 0.0
    %4045 = vmatpush.msra.mxu0 0.0
    %4046 = vmatpush.msra.mxu0 0.0
    %4047 = vmatpush.msra.mxu0 0.0
    %4048 = vmatpush.msra.mxu0 0.0
    %4049 = vmatpush.msra.mxu0 0.0
    %4050 = vmatpush.msra.mxu0 0.0
    %4051 = vmatpush.msra.mxu0 %v4002
    %4052 = vmatpush.msra.mxu0 %v4001
    %4053 = vmatpush.msra.mxu0 %v4000
    %4054 = vmatpush.msra.mxu0 %v3999
    %4055 = vmatpush.msra.mxu0 %v3998
    %4056 = vmatpush.msra.mxu0 %v3997
    %4057 = vmatpush.msra.mxu0 %v3996
    %4058 = vmatpush.msra.mxu0 %v3995
    %4059 = vmatmul.f32.gmra.mxu0 %v4038
    %v4060 = vpop.f32.mrf.mxu0
    %v4061 = vadd.f32 %v4036, %v4060
    %4062 = vmatmul.f32.gmra.mxu0 %v4041
    %v4063 = vpop.f32.mrf.mxu0
    %v4064 = vadd.f32 %v4036, %v4063
    %4065 = vdwg.mxu0
    %v4066 = vadd.f32 %v3988, %v4061
    %v4067 = vadd.f32 %v3989, %v4064
    %v4068 = vld [vmem:[#allocation2 + $0x5b5] sm:$0x1]
    %v4069 = vld [vmem:[#allocation2 + $0x5b6] sm:$0x1]
    %v4070 = vsel %vm91, %v4066, 0.0
    %4071 = vadd.xlane.f32.xlu0 %v4070
    %v4072 = vpop.xlane.xlu0 %4071
    %v4073 = vsel %vm91, %v4067, 0.0
    %4074 = vadd.xlane.f32.xlu0 %v4073
    %v4075 = vpop.xlane.xlu0 %4074
    %v4076 = vmul.f32 %v4072, %v945
    %v4077 = vmul.f32 %v4075, %v945
    %v4078 = vsub.f32 %v4066, %v4076
    %v4079 = vsub.f32 %v4067, %v4077
    %v4080 = vmul.f32 %v4078, %v4078
    %v4081 = vmul.f32 %v4079, %v4079
    %v4082 = vsel %vm91, %v4080, 0.0
    %4083 = vadd.xlane.f32.xlu0 %v4082
    %v4084 = vpop.xlane.xlu0 %4083
    %v4085 = vsel %vm91, %v4081, 0.0
    %4086 = vadd.xlane.f32.xlu0 %v4085
    %v4087 = vpop.xlane.xlu0 %4086
    %v4088 = vmul.f32 %v4084, %v945
    %v4089 = vmul.f32 %v4087, %v945
    %v4090 = vadd.f32 %v4088, 1e-05
    %v4091 = vadd.f32 %v4089, 1e-05
    %v4092 = vrsqrt.pop %v4090
    %v4093 = vmul.f32 %v4092, %v4090
    %v4094 = vmul.f32 %v4093, %v4092
    %v4095 = vmul.f32 0.5, %v4094
    %v4096 = vsub.f32 1.5, %v4095
    %v4097 = vmul.f32 %v4092, %v4096
    %vm4098 = vweird.f32 %v4090
    %vm4099 = vweird.f32 %v4092
    %vm4100 = vmor %vm4098, %vm4099
    %v4101 = vsel %vm4100, %v4092, %v4097
    %v4102 = vrsqrt.pop %v4091
    %v4103 = vmul.f32 %v4102, %v4091
    %v4104 = vmul.f32 %v4103, %v4102
    %v4105 = vmul.f32 0.5, %v4104
    %v4106 = vsub.f32 1.5, %v4105
    %v4107 = vmul.f32 %v4102, %v4106
    %vm4108 = vweird.f32 %v4091
    %vm4109 = vweird.f32 %v4102
    %vm4110 = vmor %vm4108, %vm4109
    %v4111 = vsel %vm4110, %v4102, %v4107
    %v4112 = vmul.f32 %v4078, %v4101
    %v4113 = vmul.f32 %v4079, %v4111
    %v4114 = vperm.slane %v4068, 0
    %v4115 = vmul.f32 %v4112, %v4114
    %v4116 = vmul.f32 %v4113, %v4114
    %v4117 = vperm.slane %v4069, 0
    %v4118 = vadd.f32 %v4115, %v4117
    %v4119 = vadd.f32 %v4116, %v4117
    %v4120 = vld [vmem:[#allocation2 + $0x2c0] sm:$0xff]
    %v4121 = vld [vmem:[#allocation2 + $0x2e0] sm:$0xff]
    %v4122 = vld [vmem:[#allocation2 + $0x300] sm:$0xff]
    %v4123 = vld [vmem:[#allocation2 + $0x320] sm:$0x1]
    %v4124 = vld [vmem:[#allocation2 + $0x324] sm:$0x1]
    %v4125 = vld [vmem:[#allocation2 + $0x328] sm:$0x1]
    %v4126 = vperm.slane %v4123, 0
    %v4128 = vsel %vm91, %v4118, 0
    %v4131 = vsel %vm91, %v4119, 0
    %v4134 = vsel %vm91, %v4120, 0
    %4136 = vmatpush.xpose.msra.mxu0 0.0
    %4137 = vmatpush.xpose.msra.mxu0 0.0
    %4138 = vmatpush.xpose.msra.mxu0 0.0
    %4139 = vmatpush.xpose.msra.mxu0 0.0
    %4140 = vmatpush.xpose.msra.mxu0 0.0
    %4141 = vmatpush.xpose.msra.mxu0 0.0
    %4142 = vmatpush.xpose.msra.mxu0 0.0
    %4143 = vmatpush.xpose.msra.mxu0 0.0
    %4144 = vmatpush.xpose.msra.mxu0 0.0
    %4145 = vmatpush.xpose.msra.mxu0 0.0
    %4146 = vmatpush.xpose.msra.mxu0 0.0
    %4147 = vmatpush.xpose.msra.mxu0 0.0
    %4148 = vmatpush.xpose.msra.mxu0 0.0
    %4149 = vmatpush.xpose.msra.mxu0 0.0
    %4150 = vmatpush.xpose.msra.mxu0 0.0
    %4151 = vmatpush.xpose.msra.mxu0 %v4134
    %4152 = vmatmul.f32.gmra.mxu0 %v4128
    %v4153 = vpop.f32.mrf.mxu0
    %v4154 = vadd.f32 %v4126, %v4153
    %4155 = vmatmul.f32.gmra.mxu0 %v4131
    %v4156 = vpop.f32.mrf.mxu0
    %v4157 = vadd.f32 %v4126, %v4156
    %4158 = vdwg.mxu0
    %v4159 = vperm.slane %v4124, 0
    %v4161 = vsel %vm91, %v4121, 0
    %4163 = vmatpush.xpose.msra.mxu0 0.0
    %4164 = vmatpush.xpose.msra.mxu0 0.0
    %4165 = vmatpush.xpose.msra.mxu0 0.0
    %4166 = vmatpush.xpose.msra.mxu0 0.0
    %4167 = vmatpush.xpose.msra.mxu0 0.0
    %4168 = vmatpush.xpose.msra.mxu0 0.0
    %4169 = vmatpush.xpose.msra.mxu0 0.0
    %4170 = vmatpush.xpose.msra.mxu0 0.0
    %4171 = vmatpush.xpose.msra.mxu0 0.0
    %4172 = vmatpush.xpose.msra.mxu0 0.0
    %4173 = vmatpush.xpose.msra.mxu0 0.0
    %4174 = vmatpush.xpose.msra.mxu0 0.0
    %4175 = vmatpush.xpose.msra.mxu0 0.0
    %4176 = vmatpush.xpose.msra.mxu0 0.0
    %4177 = vmatpush.xpose.msra.mxu0 0.0
    %4178 = vmatpush.xpose.msra.mxu0 %v4161
    %4179 = vmatmul.f32.gmra.mxu0 %v4128
    %v4180 = vpop.f32.mrf.mxu0
    %v4181 = vadd.f32 %v4159, %v4180
    %4182 = vmatmul.f32.gmra.mxu0 %v4131
    %v4183 = vpop.f32.mrf.mxu0
    %v4184 = vadd.f32 %v4159, %v4183
    %4185 = vdwg.mxu0
    %v4186 = vperm.slane %v4125, 0
    %v4188 = vsel %vm91, %v4122, 0
    %4190 = vmatpush.xpose.msra.mxu0 0.0
    %4191 = vmatpush.xpose.msra.mxu0 0.0
    %4192 = vmatpush.xpose.msra.mxu0 0.0
    %4193 = vmatpush.xpose.msra.mxu0 0.0
    %4194 = vmatpush.xpose.msra.mxu0 0.0
    %4195 = vmatpush.xpose.msra.mxu0 0.0
    %4196 = vmatpush.xpose.msra.mxu0 0.0
    %4197 = vmatpush.xpose.msra.mxu0 0.0
    %4198 = vmatpush.xpose.msra.mxu0 0.0
    %4199 = vmatpush.xpose.msra.mxu0 0.0
    %4200 = vmatpush.xpose.msra.mxu0 0.0
    %4201 = vmatpush.xpose.msra.mxu0 0.0
    %4202 = vmatpush.xpose.msra.mxu0 0.0
    %4203 = vmatpush.xpose.msra.mxu0 0.0
    %4204 = vmatpush.xpose.msra.mxu0 0.0
    %4205 = vmatpush.xpose.msra.mxu0 %v4188
    %4206 = vmatmul.f32.gmra.mxu0 %v4128
    %v4207 = vpop.f32.mrf.mxu0
    %v4208 = vadd.f32 %v4186, %v4207
    %4209 = vmatmul.f32.gmra.mxu0 %v4131
    %v4210 = vpop.f32.mrf.mxu0
    %v4211 = vadd.f32 %v4186, %v4210
    %4212 = vdwg.mxu0
    %v4214 = vsel %vm178, %v4154, 0
    %v4217 = vsel %vm178, %v4157, 0
    %v4220 = vsel %vm178, %v4181, 0
    %v4223 = vsel %vm178, %v4184, 0
    %4225 = vmatpush.xpose.msra.mxu0 0.0
    %4226 = vmatpush.xpose.msra.mxu0 0.0
    %4227 = vmatpush.xpose.msra.mxu0 0.0
    %4228 = vmatpush.xpose.msra.mxu0 0.0
    %4229 = vmatpush.xpose.msra.mxu0 0.0
    %4230 = vmatpush.xpose.msra.mxu0 0.0
    %4231 = vmatpush.xpose.msra.mxu0 0.0
    %4232 = vmatpush.xpose.msra.mxu0 0.0
    %4233 = vmatpush.xpose.msra.mxu0 0.0
    %4234 = vmatpush.xpose.msra.mxu0 0.0
    %4235 = vmatpush.xpose.msra.mxu0 0.0
    %4236 = vmatpush.xpose.msra.mxu0 0.0
    %4237 = vmatpush.xpose.msra.mxu0 0.0
    %4238 = vmatpush.xpose.msra.mxu0 0.0
    %4239 = vmatpush.xpose.msra.mxu0 %v4223
    %4240 = vmatpush.xpose.msra.mxu0 %v4220
    %4241 = vmatmul.f32.gmra.mxu0 %v4214
    %v4242 = vpop.f32.mrf.mxu0
    %v4243 = vadd.f32 0.0, %v4242
    %4244 = vmatmul.f32.gmra.mxu0 %v4217
    %v4245 = vpop.f32.mrf.mxu0
    %v4246 = vadd.f32 0.0, %v4245
    %4247 = vdwg.mxu0
    %v4248 = vmul.f32 %v4243, 0.35355338
    %v4249 = vmul.f32 %v4246, 0.35355338
    %v4250 = vadd.f32 %v4248, %v82
    %v4251 = vadd.f32 %v4249, %v83
    %v4252 = vsel %vm218, %v4250, -inf
    %4253 = vmax.xlane.f32.xlu0 %v4252
    %v4254 = vpop.xlane.xlu0 %4253
    %v4255 = vsel %vm218, %v4251, -inf
    %4256 = vmax.xlane.f32.xlu0 %v4255
    %v4257 = vpop.xlane.xlu0 %4256
    %v4258 = vsub.f32 %v4250, %v4254
    %v4259 = vsub.f32 %v4251, %v4257
    %v4260 = vmul.f32 %v4258, 1.442695
    %v4261 = vpow.pop %v4260
    %v4262 = vmul.f32 %v4259, 1.442695
    %v4263 = vpow.pop %v4262
    %v4264 = vsel %vm218, %v4261, 0.0
    %4265 = vadd.xlane.f32.xlu0 %v4264
    %v4266 = vpop.xlane.xlu0 %4265
    %v4267 = vsel %vm218, %v4263, 0.0
    %4268 = vadd.xlane.f32.xlu0 %v4267
    %v4269 = vpop.xlane.xlu0 %4268
    %v4270 = vrcp.pop %v4266
    %v4271 = vrcp.pop %v4269
    %v4272 = vmul.f32 %v4261, %v4270
    %v4273 = vmul.f32 %v4263, %v4271
    %v4275 = vsel %vm218, %v4272, 0
    %v4278 = vsel %vm218, %v4273, 0
    %4280 = vmatpush.msra.mxu0 0.0
    %4281 = vmatpush.msra.mxu0 0.0
    %4282 = vmatpush.msra.mxu0 0.0
    %4283 = vmatpush.msra.mxu0 0.0
    %4284 = vmatpush.msra.mxu0 0.0
    %4285 = vmatpush.msra.mxu0 0.0
    %4286 = vmatpush.msra.mxu0 0.0
    %4287 = vmatpush.msra.mxu0 0.0
    %4288 = vmatpush.msra.mxu0 0.0
    %4289 = vmatpush.msra.mxu0 0.0
    %4290 = vmatpush.msra.mxu0 0.0
    %4291 = vmatpush.msra.mxu0 0.0
    %4292 = vmatpush.msra.mxu0 0.0
    %4293 = vmatpush.msra.mxu0 0.0
    %4294 = vmatpush.msra.mxu0 %v4211
    %4295 = vmatpush.msra.mxu0 %v4208
    %4296 = vmatmul.f32.gmra.mxu0 %v4275
    %v4297 = vpop.f32.mrf.mxu0
    %v4298 = vadd.f32 0.0, %v4297
    %4299 = vmatmul.f32.gmra.mxu0 %v4278
    %v4300 = vpop.f32.mrf.mxu0
    %v4301 = vadd.f32 0.0, %v4300
    %4302 = vdwg.mxu0
    %v4303 = vld [vmem:[#allocation2 + $0x330] sm:$0xff]
    %v4304 = vld [vmem:[#allocation2 + $0x2c8] sm:$0xff]
    %v4305 = vld [vmem:[#allocation2 + $0x2e8] sm:$0xff]
    %v4306 = vld [vmem:[#allocation2 + $0x308] sm:$0xff]
    %v4307 = vld [vmem:[#allocation2 + $0x321] sm:$0x1]
    %v4308 = vld [vmem:[#allocation2 + $0x325] sm:$0x1]
    %v4309 = vld [vmem:[#allocation2 + $0x329] sm:$0x1]
    %v4310 = vperm.slane %v4307, 0
    %v4312 = vsel %vm91, %v4304, 0
    %4314 = vmatpush.xpose.msra.mxu0 0.0
    %4315 = vmatpush.xpose.msra.mxu0 0.0
    %4316 = vmatpush.xpose.msra.mxu0 0.0
    %4317 = vmatpush.xpose.msra.mxu0 0.0
    %4318 = vmatpush.xpose.msra.mxu0 0.0
    %4319 = vmatpush.xpose.msra.mxu0 0.0
    %4320 = vmatpush.xpose.msra.mxu0 0.0
    %4321 = vmatpush.xpose.msra.mxu0 0.0
    %4322 = vmatpush.xpose.msra.mxu0 0.0
    %4323 = vmatpush.xpose.msra.mxu0 0.0
    %4324 = vmatpush.xpose.msra.mxu0 0.0
    %4325 = vmatpush.xpose.msra.mxu0 0.0
    %4326 = vmatpush.xpose.msra.mxu0 0.0
    %4327 = vmatpush.xpose.msra.mxu0 0.0
    %4328 = vmatpush.xpose.msra.mxu0 0.0
    %4329 = vmatpush.xpose.msra.mxu0 %v4312
    %4330 = vmatmul.f32.gmra.mxu0 %v4128
    %v4331 = vpop.f32.mrf.mxu0
    %v4332 = vadd.f32 %v4310, %v4331
    %4333 = vmatmul.f32.gmra.mxu0 %v4131
    %v4334 = vpop.f32.mrf.mxu0
    %v4335 = vadd.f32 %v4310, %v4334
    %4336 = vdwg.mxu0
    %v4337 = vperm.slane %v4308, 0
    %v4339 = vsel %vm91, %v4305, 0
    %4341 = vmatpush.xpose.msra.mxu0 0.0
    %4342 = vmatpush.xpose.msra.mxu0 0.0
    %4343 = vmatpush.xpose.msra.mxu0 0.0
    %4344 = vmatpush.xpose.msra.mxu0 0.0
    %4345 = vmatpush.xpose.msra.mxu0 0.0
    %4346 = vmatpush.xpose.msra.mxu0 0.0
    %4347 = vmatpush.xpose.msra.mxu0 0.0
    %4348 = vmatpush.xpose.msra.mxu0 0.0
    %4349 = vmatpush.xpose.msra.mxu0 0.0
    %4350 = vmatpush.xpose.msra.mxu0 0.0
    %4351 = vmatpush.xpose.msra.mxu0 0.0
    %4352 = vmatpush.xpose.msra.mxu0 0.0
    %4353 = vmatpush.xpose.msra.mxu0 0.0
    %4354 = vmatpush.xpose.msra.mxu0 0.0
    %4355 = vmatpush.xpose.msra.mxu0 0.0
    %4356 = vmatpush.xpose.msra.mxu0 %v4339
    %4357 = vmatmul.f32.gmra.mxu0 %v4128
    %v4358 = vpop.f32.mrf.mxu0
    %v4359 = vadd.f32 %v4337, %v4358
    %4360 = vmatmul.f32.gmra.mxu0 %v4131
    %v4361 = vpop.f32.mrf.mxu0
    %v4362 = vadd.f32 %v4337, %v4361
    %4363 = vdwg.mxu0
    %v4364 = vperm.slane %v4309, 0
    %v4366 = vsel %vm91, %v4306, 0
    %4368 = vmatpush.xpose.msra.mxu0 0.0
    %4369 = vmatpush.xpose.msra.mxu0 0.0
    %4370 = vmatpush.xpose.msra.mxu0 0.0
    %4371 = vmatpush.xpose.msra.mxu0 0.0
    %4372 = vmatpush.xpose.msra.mxu0 0.0
    %4373 = vmatpush.xpose.msra.mxu0 0.0
    %4374 = vmatpush.xpose.msra.mxu0 0.0
    %4375 = vmatpush.xpose.msra.mxu0 0.0
    %4376 = vmatpush.xpose.msra.mxu0 0.0
    %4377 = vmatpush.xpose.msra.mxu0 0.0
    %4378 = vmatpush.xpose.msra.mxu0 0.0
    %4379 = vmatpush.xpose.msra.mxu0 0.0
    %4380 = vmatpush.xpose.msra.mxu0 0.0
    %4381 = vmatpush.xpose.msra.mxu0 0.0
    %4382 = vmatpush.xpose.msra.mxu0 0.0
    %4383 = vmatpush.xpose.msra.mxu0 %v4366
    %4384 = vmatmul.f32.gmra.mxu0 %v4128
    %v4385 = vpop.f32.mrf.mxu0
    %v4386 = vadd.f32 %v4364, %v4385
    %4387 = vmatmul.f32.gmra.mxu0 %v4131
    %v4388 = vpop.f32.mrf.mxu0
    %v4389 = vadd.f32 %v4364, %v4388
    %4390 = vdwg.mxu0
    %v4392 = vsel %vm178, %v4332, 0
    %v4395 = vsel %vm178, %v4335, 0
    %v4398 = vsel %vm178, %v4359, 0
    %v4401 = vsel %vm178, %v4362, 0
    %4403 = vmatpush.xpose.msra.mxu0 0.0
    %4404 = vmatpush.xpose.msra.mxu0 0.0
    %4405 = vmatpush.xpose.msra.mxu0 0.0
    %4406 = vmatpush.xpose.msra.mxu0 0.0
    %4407 = vmatpush.xpose.msra.mxu0 0.0
    %4408 = vmatpush.xpose.msra.mxu0 0.0
    %4409 = vmatpush.xpose.msra.mxu0 0.0
    %4410 = vmatpush.xpose.msra.mxu0 0.0
    %4411 = vmatpush.xpose.msra.mxu0 0.0
    %4412 = vmatpush.xpose.msra.mxu0 0.0
    %4413 = vmatpush.xpose.msra.mxu0 0.0
    %4414 = vmatpush.xpose.msra.mxu0 0.0
    %4415 = vmatpush.xpose.msra.mxu0 0.0
    %4416 = vmatpush.xpose.msra.mxu0 0.0
    %4417 = vmatpush.xpose.msra.mxu0 %v4401
    %4418 = vmatpush.xpose.msra.mxu0 %v4398
    %4419 = vmatmul.f32.gmra.mxu0 %v4392
    %v4420 = vpop.f32.mrf.mxu0
    %v4421 = vadd.f32 0.0, %v4420
    %4422 = vmatmul.f32.gmra.mxu0 %v4395
    %v4423 = vpop.f32.mrf.mxu0
    %v4424 = vadd.f32 0.0, %v4423
    %4425 = vdwg.mxu0
    %v4426 = vmul.f32 %v4421, 0.35355338
    %v4427 = vmul.f32 %v4424, 0.35355338
    %v4428 = vadd.f32 %v4426, %v82
    %v4429 = vadd.f32 %v4427, %v83
    %v4430 = vsel %vm218, %v4428, -inf
    %4431 = vmax.xlane.f32.xlu0 %v4430
    %v4432 = vpop.xlane.xlu0 %4431
    %v4433 = vsel %vm218, %v4429, -inf
    %4434 = vmax.xlane.f32.xlu0 %v4433
    %v4435 = vpop.xlane.xlu0 %4434
    %v4436 = vsub.f32 %v4428, %v4432
    %v4437 = vsub.f32 %v4429, %v4435
    %v4438 = vmul.f32 %v4436, 1.442695
    %v4439 = vpow.pop %v4438
    %v4440 = vmul.f32 %v4437, 1.442695
    %v4441 = vpow.pop %v4440
    %v4442 = vsel %vm218, %v4439, 0.0
    %4443 = vadd.xlane.f32.xlu0 %v4442
    %v4444 = vpop.xlane.xlu0 %4443
    %v4445 = vsel %vm218, %v4441, 0.0
    %4446 = vadd.xlane.f32.xlu0 %v4445
    %v4447 = vpop.xlane.xlu0 %4446
    %v4448 = vrcp.pop %v4444
    %v4449 = vrcp.pop %v4447
    %v4450 = vmul.f32 %v4439, %v4448
    %v4451 = vmul.f32 %v4441, %v4449
    %v4453 = vsel %vm218, %v4450, 0
    %v4456 = vsel %vm218, %v4451, 0
    %4458 = vmatpush.msra.mxu0 0.0
    %4459 = vmatpush.msra.mxu0 0.0
    %4460 = vmatpush.msra.mxu0 0.0
    %4461 = vmatpush.msra.mxu0 0.0
    %4462 = vmatpush.msra.mxu0 0.0
    %4463 = vmatpush.msra.mxu0 0.0
    %4464 = vmatpush.msra.mxu0 0.0
    %4465 = vmatpush.msra.mxu0 0.0
    %4466 = vmatpush.msra.mxu0 0.0
    %4467 = vmatpush.msra.mxu0 0.0
    %4468 = vmatpush.msra.mxu0 0.0
    %4469 = vmatpush.msra.mxu0 0.0
    %4470 = vmatpush.msra.mxu0 0.0
    %4471 = vmatpush.msra.mxu0 0.0
    %4472 = vmatpush.msra.mxu0 %v4389
    %4473 = vmatpush.msra.mxu0 %v4386
    %4474 = vmatmul.f32.gmra.mxu0 %v4453
    %v4475 = vpop.f32.mrf.mxu0
    %v4476 = vadd.f32 0.0, %v4475
    %4477 = vmatmul.f32.gmra.mxu0 %v4456
    %v4478 = vpop.f32.mrf.mxu0
    %v4479 = vadd.f32 0.0, %v4478
    %4480 = vdwg.mxu0
    %v4481 = vld [vmem:[#allocation2 + $0x338] sm:$0xff]
    %v4483 = vsel %vm178, %v4476, 0
    %v4486 = vsel %vm178, %v4479, 0
    %4488 = vmatpush.msra.mxu0 0.0
    %4489 = vmatpush.msra.mxu0 0.0
    %4490 = vmatpush.msra.mxu0 0.0
    %4491 = vmatpush.msra.mxu0 0.0
    %4492 = vmatpush.msra.mxu0 0.0
    %4493 = vmatpush.msra.mxu0 0.0
    %4494 = vmatpush.msra.mxu0 0.0
    %4495 = vmatpush.msra.mxu0 0.0
    %4496 = vmatpush.msra.mxu0 0.0
    %4497 = vmatpush.msra.mxu0 0.0
    %4498 = vmatpush.msra.mxu0 0.0
    %4499 = vmatpush.msra.mxu0 0.0
    %4500 = vmatpush.msra.mxu0 0.0
    %4501 = vmatpush.msra.mxu0 0.0
    %4502 = vmatpush.msra.mxu0 0.0
    %4503 = vmatpush.msra.mxu0 %v4481
    %4504 = vmatmul.f32.gmra.mxu0 %v4483
    %v4505 = vpop.f32.mrf.mxu0
    %v4506 = vadd.f32 0.0, %v4505
    %4507 = vmatmul.f32.gmra.mxu0 %v4486
    %v4508 = vpop.f32.mrf.mxu0
    %v4509 = vadd.f32 0.0, %v4508
    %4510 = vdwg.mxu0
    %v4512 = vsel %vm178, %v4298, 0
    %v4515 = vsel %vm178, %v4301, 0
    %4517 = vmatpush.msra.mxu0 0.0
    %4518 = vmatpush.msra.mxu0 0.0
    %4519 = vmatpush.msra.mxu0 0.0
    %4520 = vmatpush.msra.mxu0 0.0
    %4521 = vmatpush.msra.mxu0 0.0
    %4522 = vmatpush.msra.mxu0 0.0
    %4523 = vmatpush.msra.mxu0 0.0
    %4524 = vmatpush.msra.mxu0 0.0
    %4525 = vmatpush.msra.mxu0 0.0
    %4526 = vmatpush.msra.mxu0 0.0
    %4527 = vmatpush.msra.mxu0 0.0
    %4528 = vmatpush.msra.mxu0 0.0
    %4529 = vmatpush.msra.mxu0 0.0
    %4530 = vmatpush.msra.mxu0 0.0
    %4531 = vmatpush.msra.mxu0 0.0
    %4532 = vmatpush.msra.mxu0 %v4303
    %4533 = vmatmul.f32.gmra.mxu0 %v4512
    %v4534 = vpop.f32.mrf.mxu0
    %v4535 = vadd.f32 %v4506, %v4534
    %4536 = vmatmul.f32.gmra.mxu0 %v4515
    %v4537 = vpop.f32.mrf.mxu0
    %v4538 = vadd.f32 %v4509, %v4537
    %4539 = vdwg.mxu0
    %v4540 = vld [vmem:[#allocation2 + $0x2d0] sm:$0xff]
    %v4541 = vld [vmem:[#allocation2 + $0x2f0] sm:$0xff]
    %v4542 = vld [vmem:[#allocation2 + $0x310] sm:$0xff]
    %v4543 = vld [vmem:[#allocation2 + $0x322] sm:$0x1]
    %v4544 = vld [vmem:[#allocation2 + $0x326] sm:$0x1]
    %v4545 = vld [vmem:[#allocation2 + $0x32a] sm:$0x1]
    %v4546 = vperm.slane %v4543, 0
    %v4548 = vsel %vm91, %v4540, 0
    %4550 = vmatpush.xpose.msra.mxu0 0.0
    %4551 = vmatpush.xpose.msra.mxu0 0.0
    %4552 = vmatpush.xpose.msra.mxu0 0.0
    %4553 = vmatpush.xpose.msra.mxu0 0.0
    %4554 = vmatpush.xpose.msra.mxu0 0.0
    %4555 = vmatpush.xpose.msra.mxu0 0.0
    %4556 = vmatpush.xpose.msra.mxu0 0.0
    %4557 = vmatpush.xpose.msra.mxu0 0.0
    %4558 = vmatpush.xpose.msra.mxu0 0.0
    %4559 = vmatpush.xpose.msra.mxu0 0.0
    %4560 = vmatpush.xpose.msra.mxu0 0.0
    %4561 = vmatpush.xpose.msra.mxu0 0.0
    %4562 = vmatpush.xpose.msra.mxu0 0.0
    %4563 = vmatpush.xpose.msra.mxu0 0.0
    %4564 = vmatpush.xpose.msra.mxu0 0.0
    %4565 = vmatpush.xpose.msra.mxu0 %v4548
    %4566 = vmatmul.f32.gmra.mxu0 %v4128
    %v4567 = vpop.f32.mrf.mxu0
    %v4568 = vadd.f32 %v4546, %v4567
    %4569 = vmatmul.f32.gmra.mxu0 %v4131
    %v4570 = vpop.f32.mrf.mxu0
    %v4571 = vadd.f32 %v4546, %v4570
    %4572 = vdwg.mxu0
    %v4573 = vperm.slane %v4544, 0
    %v4575 = vsel %vm91, %v4541, 0
    %4577 = vmatpush.xpose.msra.mxu0 0.0
    %4578 = vmatpush.xpose.msra.mxu0 0.0
    %4579 = vmatpush.xpose.msra.mxu0 0.0
    %4580 = vmatpush.xpose.msra.mxu0 0.0
    %4581 = vmatpush.xpose.msra.mxu0 0.0
    %4582 = vmatpush.xpose.msra.mxu0 0.0
    %4583 = vmatpush.xpose.msra.mxu0 0.0
    %4584 = vmatpush.xpose.msra.mxu0 0.0
    %4585 = vmatpush.xpose.msra.mxu0 0.0
    %4586 = vmatpush.xpose.msra.mxu0 0.0
    %4587 = vmatpush.xpose.msra.mxu0 0.0
    %4588 = vmatpush.xpose.msra.mxu0 0.0
    %4589 = vmatpush.xpose.msra.mxu0 0.0
    %4590 = vmatpush.xpose.msra.mxu0 0.0
    %4591 = vmatpush.xpose.msra.mxu0 0.0
    %4592 = vmatpush.xpose.msra.mxu0 %v4575
    %4593 = vmatmul.f32.gmra.mxu0 %v4128
    %v4594 = vpop.f32.mrf.mxu0
    %v4595 = vadd.f32 %v4573, %v4594
    %4596 = vmatmul.f32.gmra.mxu0 %v4131
    %v4597 = vpop.f32.mrf.mxu0
    %v4598 = vadd.f32 %v4573, %v4597
    %4599 = vdwg.mxu0
    %v4600 = vperm.slane %v4545, 0
    %v4602 = vsel %vm91, %v4542, 0
    %4604 = vmatpush.xpose.msra.mxu0 0.0
    %4605 = vmatpush.xpose.msra.mxu0 0.0
    %4606 = vmatpush.xpose.msra.mxu0 0.0
    %4607 = vmatpush.xpose.msra.mxu0 0.0
    %4608 = vmatpush.xpose.msra.mxu0 0.0
    %4609 = vmatpush.xpose.msra.mxu0 0.0
    %4610 = vmatpush.xpose.msra.mxu0 0.0
    %4611 = vmatpush.xpose.msra.mxu0 0.0
    %4612 = vmatpush.xpose.msra.mxu0 0.0
    %4613 = vmatpush.xpose.msra.mxu0 0.0
    %4614 = vmatpush.xpose.msra.mxu0 0.0
    %4615 = vmatpush.xpose.msra.mxu0 0.0
    %4616 = vmatpush.xpose.msra.mxu0 0.0
    %4617 = vmatpush.xpose.msra.mxu0 0.0
    %4618 = vmatpush.xpose.msra.mxu0 0.0
    %4619 = vmatpush.xpose.msra.mxu0 %v4602
    %4620 = vmatmul.f32.gmra.mxu0 %v4128
    %v4621 = vpop.f32.mrf.mxu0
    %v4622 = vadd.f32 %v4600, %v4621
    %4623 = vmatmul.f32.gmra.mxu0 %v4131
    %v4624 = vpop.f32.mrf.mxu0
    %v4625 = vadd.f32 %v4600, %v4624
    %4626 = vdwg.mxu0
    %v4628 = vsel %vm178, %v4568, 0
    %v4631 = vsel %vm178, %v4571, 0
    %v4634 = vsel %vm178, %v4595, 0
    %v4637 = vsel %vm178, %v4598, 0
    %4639 = vmatpush.xpose.msra.mxu0 0.0
    %4640 = vmatpush.xpose.msra.mxu0 0.0
    %4641 = vmatpush.xpose.msra.mxu0 0.0
    %4642 = vmatpush.xpose.msra.mxu0 0.0
    %4643 = vmatpush.xpose.msra.mxu0 0.0
    %4644 = vmatpush.xpose.msra.mxu0 0.0
    %4645 = vmatpush.xpose.msra.mxu0 0.0
    %4646 = vmatpush.xpose.msra.mxu0 0.0
    %4647 = vmatpush.xpose.msra.mxu0 0.0
    %4648 = vmatpush.xpose.msra.mxu0 0.0
    %4649 = vmatpush.xpose.msra.mxu0 0.0
    %4650 = vmatpush.xpose.msra.mxu0 0.0
    %4651 = vmatpush.xpose.msra.mxu0 0.0
    %4652 = vmatpush.xpose.msra.mxu0 0.0
    %4653 = vmatpush.xpose.msra.mxu0 %v4637
    %4654 = vmatpush.xpose.msra.mxu0 %v4634
    %4655 = vmatmul.f32.gmra.mxu0 %v4628
    %v4656 = vpop.f32.mrf.mxu0
    %v4657 = vadd.f32 0.0, %v4656
    %4658 = vmatmul.f32.gmra.mxu0 %v4631
    %v4659 = vpop.f32.mrf.mxu0
    %v4660 = vadd.f32 0.0, %v4659
    %4661 = vdwg.mxu0
    %v4662 = vmul.f32 %v4657, 0.35355338
    %v4663 = vmul.f32 %v4660, 0.35355338
    %v4664 = vadd.f32 %v4662, %v82
    %v4665 = vadd.f32 %v4663, %v83
    %v4666 = vsel %vm218, %v4664, -inf
    %4667 = vmax.xlane.f32.xlu0 %v4666
    %v4668 = vpop.xlane.xlu0 %4667
    %v4669 = vsel %vm218, %v4665, -inf
    %4670 = vmax.xlane.f32.xlu0 %v4669
    %v4671 = vpop.xlane.xlu0 %4670
    %v4672 = vsub.f32 %v4664, %v4668
    %v4673 = vsub.f32 %v4665, %v4671
    %v4674 = vmul.f32 %v4672, 1.442695
    %v4675 = vpow.pop %v4674
    %v4676 = vmul.f32 %v4673, 1.442695
    %v4677 = vpow.pop %v4676
    %v4678 = vsel %vm218, %v4675, 0.0
    %4679 = vadd.xlane.f32.xlu0 %v4678
    %v4680 = vpop.xlane.xlu0 %4679
    %v4681 = vsel %vm218, %v4677, 0.0
    %4682 = vadd.xlane.f32.xlu0 %v4681
    %v4683 = vpop.xlane.xlu0 %4682
    %v4684 = vrcp.pop %v4680
    %v4685 = vrcp.pop %v4683
    %v4686 = vmul.f32 %v4675, %v4684
    %v4687 = vmul.f32 %v4677, %v4685
    %v4689 = vsel %vm218, %v4686, 0
    %v4692 = vsel %vm218, %v4687, 0
    %4694 = vmatpush.msra.mxu0 0.0
    %4695 = vmatpush.msra.mxu0 0.0
    %4696 = vmatpush.msra.mxu0 0.0
    %4697 = vmatpush.msra.mxu0 0.0
    %4698 = vmatpush.msra.mxu0 0.0
    %4699 = vmatpush.msra.mxu0 0.0
    %4700 = vmatpush.msra.mxu0 0.0
    %4701 = vmatpush.msra.mxu0 0.0
    %4702 = vmatpush.msra.mxu0 0.0
    %4703 = vmatpush.msra.mxu0 0.0
    %4704 = vmatpush.msra.mxu0 0.0
    %4705 = vmatpush.msra.mxu0 0.0
    %4706 = vmatpush.msra.mxu0 0.0
    %4707 = vmatpush.msra.mxu0 0.0
    %4708 = vmatpush.msra.mxu0 %v4625
    %4709 = vmatpush.msra.mxu0 %v4622
    %4710 = vmatmul.f32.gmra.mxu0 %v4689
    %v4711 = vpop.f32.mrf.mxu0
    %v4712 = vadd.f32 0.0, %v4711
    %4713 = vmatmul.f32.gmra.mxu0 %v4692
    %v4714 = vpop.f32.mrf.mxu0
    %v4715 = vadd.f32 0.0, %v4714
    %4716 = vdwg.mxu0
    %v4717 = vld [vmem:[#allocation2 + $0x340] sm:$0xff]
    %v4719 = vsel %vm178, %v4712, 0
    %v4722 = vsel %vm178, %v4715, 0
    %4724 = vmatpush.msra.mxu0 0.0
    %4725 = vmatpush.msra.mxu0 0.0
    %4726 = vmatpush.msra.mxu0 0.0
    %4727 = vmatpush.msra.mxu0 0.0
    %4728 = vmatpush.msra.mxu0 0.0
    %4729 = vmatpush.msra.mxu0 0.0
    %4730 = vmatpush.msra.mxu0 0.0
    %4731 = vmatpush.msra.mxu0 0.0
    %4732 = vmatpush.msra.mxu0 0.0
    %4733 = vmatpush.msra.mxu0 0.0
    %4734 = vmatpush.msra.mxu0 0.0
    %4735 = vmatpush.msra.mxu0 0.0
    %4736 = vmatpush.msra.mxu0 0.0
    %4737 = vmatpush.msra.mxu0 0.0
    %4738 = vmatpush.msra.mxu0 0.0
    %4739 = vmatpush.msra.mxu0 %v4717
    %4740 = vmatmul.f32.gmra.mxu0 %v4719
    %v4741 = vpop.f32.mrf.mxu0
    %v4742 = vadd.f32 0.0, %v4741
    %4743 = vmatmul.f32.gmra.mxu0 %v4722
    %v4744 = vpop.f32.mrf.mxu0
    %v4745 = vadd.f32 0.0, %v4744
    %4746 = vdwg.mxu0
    %v4747 = vadd.f32 %v4535, %v4742
    %v4748 = vadd.f32 %v4538, %v4745
    %v4749 = vld [vmem:[#allocation2 + $0x2d8] sm:$0xff]
    %v4750 = vld [vmem:[#allocation2 + $0x2f8] sm:$0xff]
    %v4751 = vld [vmem:[#allocation2 + $0x318] sm:$0xff]
    %v4752 = vld [vmem:[#allocation2 + $0x323] sm:$0x1]
    %v4753 = vld [vmem:[#allocation2 + $0x327] sm:$0x1]
    %v4754 = vld [vmem:[#allocation2 + $0x32b] sm:$0x1]
    %v4755 = vperm.slane %v4752, 0
    %v4757 = vsel %vm91, %v4749, 0
    %4759 = vmatpush.xpose.msra.mxu0 0.0
    %4760 = vmatpush.xpose.msra.mxu0 0.0
    %4761 = vmatpush.xpose.msra.mxu0 0.0
    %4762 = vmatpush.xpose.msra.mxu0 0.0
    %4763 = vmatpush.xpose.msra.mxu0 0.0
    %4764 = vmatpush.xpose.msra.mxu0 0.0
    %4765 = vmatpush.xpose.msra.mxu0 0.0
    %4766 = vmatpush.xpose.msra.mxu0 0.0
    %4767 = vmatpush.xpose.msra.mxu0 0.0
    %4768 = vmatpush.xpose.msra.mxu0 0.0
    %4769 = vmatpush.xpose.msra.mxu0 0.0
    %4770 = vmatpush.xpose.msra.mxu0 0.0
    %4771 = vmatpush.xpose.msra.mxu0 0.0
    %4772 = vmatpush.xpose.msra.mxu0 0.0
    %4773 = vmatpush.xpose.msra.mxu0 0.0
    %4774 = vmatpush.xpose.msra.mxu0 %v4757
    %4775 = vmatmul.f32.gmra.mxu0 %v4128
    %v4776 = vpop.f32.mrf.mxu0
    %v4777 = vadd.f32 %v4755, %v4776
    %4778 = vmatmul.f32.gmra.mxu0 %v4131
    %v4779 = vpop.f32.mrf.mxu0
    %v4780 = vadd.f32 %v4755, %v4779
    %4781 = vdwg.mxu0
    %v4782 = vperm.slane %v4753, 0
    %v4784 = vsel %vm91, %v4750, 0
    %4786 = vmatpush.xpose.msra.mxu0 0.0
    %4787 = vmatpush.xpose.msra.mxu0 0.0
    %4788 = vmatpush.xpose.msra.mxu0 0.0
    %4789 = vmatpush.xpose.msra.mxu0 0.0
    %4790 = vmatpush.xpose.msra.mxu0 0.0
    %4791 = vmatpush.xpose.msra.mxu0 0.0
    %4792 = vmatpush.xpose.msra.mxu0 0.0
    %4793 = vmatpush.xpose.msra.mxu0 0.0
    %4794 = vmatpush.xpose.msra.mxu0 0.0
    %4795 = vmatpush.xpose.msra.mxu0 0.0
    %4796 = vmatpush.xpose.msra.mxu0 0.0
    %4797 = vmatpush.xpose.msra.mxu0 0.0
    %4798 = vmatpush.xpose.msra.mxu0 0.0
    %4799 = vmatpush.xpose.msra.mxu0 0.0
    %4800 = vmatpush.xpose.msra.mxu0 0.0
    %4801 = vmatpush.xpose.msra.mxu0 %v4784
    %4802 = vmatmul.f32.gmra.mxu0 %v4128
    %v4803 = vpop.f32.mrf.mxu0
    %v4804 = vadd.f32 %v4782, %v4803
    %4805 = vmatmul.f32.gmra.mxu0 %v4131
    %v4806 = vpop.f32.mrf.mxu0
    %v4807 = vadd.f32 %v4782, %v4806
    %4808 = vdwg.mxu0
    %v4809 = vperm.slane %v4754, 0
    %v4811 = vsel %vm91, %v4751, 0
    %4813 = vmatpush.xpose.msra.mxu0 0.0
    %4814 = vmatpush.xpose.msra.mxu0 0.0
    %4815 = vmatpush.xpose.msra.mxu0 0.0
    %4816 = vmatpush.xpose.msra.mxu0 0.0
    %4817 = vmatpush.xpose.msra.mxu0 0.0
    %4818 = vmatpush.xpose.msra.mxu0 0.0
    %4819 = vmatpush.xpose.msra.mxu0 0.0
    %4820 = vmatpush.xpose.msra.mxu0 0.0
    %4821 = vmatpush.xpose.msra.mxu0 0.0
    %4822 = vmatpush.xpose.msra.mxu0 0.0
    %4823 = vmatpush.xpose.msra.mxu0 0.0
    %4824 = vmatpush.xpose.msra.mxu0 0.0
    %4825 = vmatpush.xpose.msra.mxu0 0.0
    %4826 = vmatpush.xpose.msra.mxu0 0.0
    %4827 = vmatpush.xpose.msra.mxu0 0.0
    %4828 = vmatpush.xpose.msra.mxu0 %v4811
    %4829 = vmatmul.f32.gmra.mxu0 %v4128
    %v4830 = vpop.f32.mrf.mxu0
    %v4831 = vadd.f32 %v4809, %v4830
    %4832 = vmatmul.f32.gmra.mxu0 %v4131
    %v4833 = vpop.f32.mrf.mxu0
    %v4834 = vadd.f32 %v4809, %v4833
    %4835 = vdwg.mxu0
    %v4837 = vsel %vm178, %v4777, 0
    %v4840 = vsel %vm178, %v4780, 0
    %v4843 = vsel %vm178, %v4804, 0
    %v4846 = vsel %vm178, %v4807, 0
    %4848 = vmatpush.xpose.msra.mxu0 0.0
    %4849 = vmatpush.xpose.msra.mxu0 0.0
    %4850 = vmatpush.xpose.msra.mxu0 0.0
    %4851 = vmatpush.xpose.msra.mxu0 0.0
    %4852 = vmatpush.xpose.msra.mxu0 0.0
    %4853 = vmatpush.xpose.msra.mxu0 0.0
    %4854 = vmatpush.xpose.msra.mxu0 0.0
    %4855 = vmatpush.xpose.msra.mxu0 0.0
    %4856 = vmatpush.xpose.msra.mxu0 0.0
    %4857 = vmatpush.xpose.msra.mxu0 0.0
    %4858 = vmatpush.xpose.msra.mxu0 0.0
    %4859 = vmatpush.xpose.msra.mxu0 0.0
    %4860 = vmatpush.xpose.msra.mxu0 0.0
    %4861 = vmatpush.xpose.msra.mxu0 0.0
    %4862 = vmatpush.xpose.msra.mxu0 %v4846
    %4863 = vmatpush.xpose.msra.mxu0 %v4843
    %4864 = vmatmul.f32.gmra.mxu0 %v4837
    %v4865 = vpop.f32.mrf.mxu0
    %v4866 = vadd.f32 0.0, %v4865
    %4867 = vmatmul.f32.gmra.mxu0 %v4840
    %v4868 = vpop.f32.mrf.mxu0
    %v4869 = vadd.f32 0.0, %v4868
    %4870 = vdwg.mxu0
    %v4871 = vmul.f32 %v4866, 0.35355338
    %v4872 = vmul.f32 %v4869, 0.35355338
    %v4873 = vadd.f32 %v4871, %v82
    %v4874 = vadd.f32 %v4872, %v83
    %v4875 = vsel %vm218, %v4873, -inf
    %4876 = vmax.xlane.f32.xlu0 %v4875
    %v4877 = vpop.xlane.xlu0 %4876
    %v4878 = vsel %vm218, %v4874, -inf
    %4879 = vmax.xlane.f32.xlu0 %v4878
    %v4880 = vpop.xlane.xlu0 %4879
    %v4881 = vsub.f32 %v4873, %v4877
    %v4882 = vsub.f32 %v4874, %v4880
    %v4883 = vmul.f32 %v4881, 1.442695
    %v4884 = vpow.pop %v4883
    %v4885 = vmul.f32 %v4882, 1.442695
    %v4886 = vpow.pop %v4885
    %v4887 = vsel %vm218, %v4884, 0.0
    %4888 = vadd.xlane.f32.xlu0 %v4887
    %v4889 = vpop.xlane.xlu0 %4888
    %v4890 = vsel %vm218, %v4886, 0.0
    %4891 = vadd.xlane.f32.xlu0 %v4890
    %v4892 = vpop.xlane.xlu0 %4891
    %v4893 = vrcp.pop %v4889
    %v4894 = vrcp.pop %v4892
    %v4895 = vmul.f32 %v4884, %v4893
    %v4896 = vmul.f32 %v4886, %v4894
    %v4898 = vsel %vm218, %v4895, 0
    %v4901 = vsel %vm218, %v4896, 0
    %4903 = vmatpush.msra.mxu0 0.0
    %4904 = vmatpush.msra.mxu0 0.0
    %4905 = vmatpush.msra.mxu0 0.0
    %4906 = vmatpush.msra.mxu0 0.0
    %4907 = vmatpush.msra.mxu0 0.0
    %4908 = vmatpush.msra.mxu0 0.0
    %4909 = vmatpush.msra.mxu0 0.0
    %4910 = vmatpush.msra.mxu0 0.0
    %4911 = vmatpush.msra.mxu0 0.0
    %4912 = vmatpush.msra.mxu0 0.0
    %4913 = vmatpush.msra.mxu0 0.0
    %4914 = vmatpush.msra.mxu0 0.0
    %4915 = vmatpush.msra.mxu0 0.0
    %4916 = vmatpush.msra.mxu0 0.0
    %4917 = vmatpush.msra.mxu0 %v4834
    %4918 = vmatpush.msra.mxu0 %v4831
    %4919 = vmatmul.f32.gmra.mxu0 %v4898
    %v4920 = vpop.f32.mrf.mxu0
    %v4921 = vadd.f32 0.0, %v4920
    %4922 = vmatmul.f32.gmra.mxu0 %v4901
    %v4923 = vpop.f32.mrf.mxu0
    %v4924 = vadd.f32 0.0, %v4923
    %4925 = vdwg.mxu0
    %v4926 = vld [vmem:[#allocation2 + $0x348] sm:$0xff]
    %v4928 = vsel %vm178, %v4921, 0
    %v4931 = vsel %vm178, %v4924, 0
    %4933 = vmatpush.msra.mxu0 0.0
    %4934 = vmatpush.msra.mxu0 0.0
    %4935 = vmatpush.msra.mxu0 0.0
    %4936 = vmatpush.msra.mxu0 0.0
    %4937 = vmatpush.msra.mxu0 0.0
    %4938 = vmatpush.msra.mxu0 0.0
    %4939 = vmatpush.msra.mxu0 0.0
    %4940 = vmatpush.msra.mxu0 0.0
    %4941 = vmatpush.msra.mxu0 0.0
    %4942 = vmatpush.msra.mxu0 0.0
    %4943 = vmatpush.msra.mxu0 0.0
    %4944 = vmatpush.msra.mxu0 0.0
    %4945 = vmatpush.msra.mxu0 0.0
    %4946 = vmatpush.msra.mxu0 0.0
    %4947 = vmatpush.msra.mxu0 0.0
    %4948 = vmatpush.msra.mxu0 %v4926
    %4949 = vmatmul.f32.gmra.mxu0 %v4928
    %v4950 = vpop.f32.mrf.mxu0
    %v4951 = vadd.f32 0.0, %v4950
    %4952 = vmatmul.f32.gmra.mxu0 %v4931
    %v4953 = vpop.f32.mrf.mxu0
    %v4954 = vadd.f32 0.0, %v4953
    %4955 = vdwg.mxu0
    %v4956 = vadd.f32 %v4747, %v4951
    %v4957 = vadd.f32 %v4748, %v4954
    %v4958 = vld [vmem:[#allocation2 + $0x350] sm:$0x1]
    %v4959 = vperm.slane %v4958, 0
    %v4960 = vadd.f32 %v4956, %v4959
    %v4961 = vadd.f32 %v4957, %v4959
    %v4962 = vadd.f32 %v4118, %v4960
    %v4963 = vadd.f32 %v4119, %v4961
    %v4964 = vld [vmem:[#allocation2 + $0x5b7] sm:$0x1]
    %v4965 = vld [vmem:[#allocation2 + $0x5b8] sm:$0x1]
    %v4966 = vsel %vm91, %v4962, 0.0
    %4967 = vadd.xlane.f32.xlu0 %v4966
    %v4968 = vpop.xlane.xlu0 %4967
    %v4969 = vsel %vm91, %v4963, 0.0
    %4970 = vadd.xlane.f32.xlu0 %v4969
    %v4971 = vpop.xlane.xlu0 %4970
    %v4972 = vmul.f32 %v4968, %v945
    %v4973 = vmul.f32 %v4971, %v945
    %v4974 = vsub.f32 %v4962, %v4972
    %v4975 = vsub.f32 %v4963, %v4973
    %v4976 = vmul.f32 %v4974, %v4974
    %v4977 = vmul.f32 %v4975, %v4975
    %v4978 = vsel %vm91, %v4976, 0.0
    %4979 = vadd.xlane.f32.xlu0 %v4978
    %v4980 = vpop.xlane.xlu0 %4979
    %v4981 = vsel %vm91, %v4977, 0.0
    %4982 = vadd.xlane.f32.xlu0 %v4981
    %v4983 = vpop.xlane.xlu0 %4982
    %v4984 = vmul.f32 %v4980, %v945
    %v4985 = vmul.f32 %v4983, %v945
    %v4986 = vadd.f32 %v4984, 1e-05
    %v4987 = vadd.f32 %v4985, 1e-05
    %v4988 = vrsqrt.pop %v4986
    %v4989 = vmul.f32 %v4988, %v4986
    %v4990 = vmul.f32 %v4989, %v4988
    %v4991 = vmul.f32 0.5, %v4990
    %v4992 = vsub.f32 1.5, %v4991
    %v4993 = vmul.f32 %v4988, %v4992
    %vm4994 = vweird.f32 %v4986
    %vm4995 = vweird.f32 %v4988
    %vm4996 = vmor %vm4994, %vm4995
    %v4997 = vsel %vm4996, %v4988, %v4993
    %v4998 = vrsqrt.pop %v4987
    %v4999 = vmul.f32 %v4998, %v4987
    %v5000 = vmul.f32 %v4999, %v4998
    %v5001 = vmul.f32 0.5, %v5000
    %v5002 = vsub.f32 1.5, %v5001
    %v5003 = vmul.f32 %v4998, %v5002
    %vm5004 = vweird.f32 %v4987
    %vm5005 = vweird.f32 %v4998
    %vm5006 = vmor %vm5004, %vm5005
    %v5007 = vsel %vm5006, %v4998, %v5003
    %v5008 = vmul.f32 %v4974, %v4997
    %v5009 = vmul.f32 %v4975, %v5007
    %v5010 = vperm.slane %v4964, 0
    %v5011 = vmul.f32 %v5008, %v5010
    %v5012 = vmul.f32 %v5009, %v5010
    %v5013 = vperm.slane %v4965, 0
    %v5014 = vadd.f32 %v5011, %v5013
    %v5015 = vadd.f32 %v5012, %v5013
    %v5016 = vld [vmem:[#allocation2 + $0x358] sm:$0xff]
    %v5017 = vld [vmem:[#allocation2 + $0x378] sm:$0xff]
    %v5018 = vld [vmem:[#allocation2 + $0x398] sm:$0xff]
    %v5019 = vld [vmem:[#allocation2 + $0x3b8] sm:$0x1]
    %v5020 = vld [vmem:[#allocation2 + $0x3bc] sm:$0x1]
    %v5021 = vld [vmem:[#allocation2 + $0x3c0] sm:$0x1]
    %v5022 = vperm.slane %v5019, 0
    %v5024 = vsel %vm91, %v5014, 0
    %v5027 = vsel %vm91, %v5015, 0
    %v5030 = vsel %vm91, %v5016, 0
    %5032 = vmatpush.xpose.msra.mxu0 0.0
    %5033 = vmatpush.xpose.msra.mxu0 0.0
    %5034 = vmatpush.xpose.msra.mxu0 0.0
    %5035 = vmatpush.xpose.msra.mxu0 0.0
    %5036 = vmatpush.xpose.msra.mxu0 0.0
    %5037 = vmatpush.xpose.msra.mxu0 0.0
    %5038 = vmatpush.xpose.msra.mxu0 0.0
    %5039 = vmatpush.xpose.msra.mxu0 0.0
    %5040 = vmatpush.xpose.msra.mxu0 0.0
    %5041 = vmatpush.xpose.msra.mxu0 0.0
    %5042 = vmatpush.xpose.msra.mxu0 0.0
    %5043 = vmatpush.xpose.msra.mxu0 0.0
    %5044 = vmatpush.xpose.msra.mxu0 0.0
    %5045 = vmatpush.xpose.msra.mxu0 0.0
    %5046 = vmatpush.xpose.msra.mxu0 0.0
    %5047 = vmatpush.xpose.msra.mxu0 %v5030
    %5048 = vmatmul.f32.gmra.mxu0 %v5024
    %v5049 = vpop.f32.mrf.mxu0
    %v5050 = vadd.f32 %v5022, %v5049
    %5051 = vmatmul.f32.gmra.mxu0 %v5027
    %v5052 = vpop.f32.mrf.mxu0
    %v5053 = vadd.f32 %v5022, %v5052
    %5054 = vdwg.mxu0
    %v5055 = vperm.slane %v5020, 0
    %v5057 = vsel %vm91, %v5017, 0
    %5059 = vmatpush.xpose.msra.mxu0 0.0
    %5060 = vmatpush.xpose.msra.mxu0 0.0
    %5061 = vmatpush.xpose.msra.mxu0 0.0
    %5062 = vmatpush.xpose.msra.mxu0 0.0
    %5063 = vmatpush.xpose.msra.mxu0 0.0
    %5064 = vmatpush.xpose.msra.mxu0 0.0
    %5065 = vmatpush.xpose.msra.mxu0 0.0
    %5066 = vmatpush.xpose.msra.mxu0 0.0
    %5067 = vmatpush.xpose.msra.mxu0 0.0
    %5068 = vmatpush.xpose.msra.mxu0 0.0
    %5069 = vmatpush.xpose.msra.mxu0 0.0
    %5070 = vmatpush.xpose.msra.mxu0 0.0
    %5071 = vmatpush.xpose.msra.mxu0 0.0
    %5072 = vmatpush.xpose.msra.mxu0 0.0
    %5073 = vmatpush.xpose.msra.mxu0 0.0
    %5074 = vmatpush.xpose.msra.mxu0 %v5057
    %5075 = vmatmul.f32.gmra.mxu0 %v3129
    %v5076 = vpop.f32.mrf.mxu0
    %v5077 = vadd.f32 %v5055, %v5076
    %5078 = vmatmul.f32.gmra.mxu0 %v3132
    %v5079 = vpop.f32.mrf.mxu0
    %v5080 = vadd.f32 %v5055, %v5079
    %5081 = vdwg.mxu0
    %v5082 = vperm.slane %v5021, 0
    %v5084 = vsel %vm91, %v5018, 0
    %5086 = vmatpush.xpose.msra.mxu0 0.0
    %5087 = vmatpush.xpose.msra.mxu0 0.0
    %5088 = vmatpush.xpose.msra.mxu0 0.0
    %5089 = vmatpush.xpose.msra.mxu0 0.0
    %5090 = vmatpush.xpose.msra.mxu0 0.0
    %5091 = vmatpush.xpose.msra.mxu0 0.0
    %5092 = vmatpush.xpose.msra.mxu0 0.0
    %5093 = vmatpush.xpose.msra.mxu0 0.0
    %5094 = vmatpush.xpose.msra.mxu0 0.0
    %5095 = vmatpush.xpose.msra.mxu0 0.0
    %5096 = vmatpush.xpose.msra.mxu0 0.0
    %5097 = vmatpush.xpose.msra.mxu0 0.0
    %5098 = vmatpush.xpose.msra.mxu0 0.0
    %5099 = vmatpush.xpose.msra.mxu0 0.0
    %5100 = vmatpush.xpose.msra.mxu0 0.0
    %5101 = vmatpush.xpose.msra.mxu0 %v5084
    %5102 = vmatmul.f32.gmra.mxu0 %v3129
    %v5103 = vpop.f32.mrf.mxu0
    %v5104 = vadd.f32 %v5082, %v5103
    %5105 = vmatmul.f32.gmra.mxu0 %v3132
    %v5106 = vpop.f32.mrf.mxu0
    %v5107 = vadd.f32 %v5082, %v5106
    %5108 = vdwg.mxu0
    %v5110 = vsel %vm178, %v5050, 0
    %v5113 = vsel %vm178, %v5053, 0
    %v5116 = vsel %vm178, %v5077, 0
    %v5119 = vsel %vm178, %v5080, 0
    %5121 = vmatpush.xpose.msra.mxu0 0.0
    %5122 = vmatpush.xpose.msra.mxu0 0.0
    %5123 = vmatpush.xpose.msra.mxu0 0.0
    %5124 = vmatpush.xpose.msra.mxu0 0.0
    %5125 = vmatpush.xpose.msra.mxu0 0.0
    %5126 = vmatpush.xpose.msra.mxu0 0.0
    %5127 = vmatpush.xpose.msra.mxu0 0.0
    %5128 = vmatpush.xpose.msra.mxu0 0.0
    %5129 = vmatpush.xpose.msra.mxu0 0.0
    %5130 = vmatpush.xpose.msra.mxu0 0.0
    %5131 = vmatpush.xpose.msra.mxu0 0.0
    %5132 = vmatpush.xpose.msra.mxu0 0.0
    %5133 = vmatpush.xpose.msra.mxu0 0.0
    %5134 = vmatpush.xpose.msra.mxu0 0.0
    %5135 = vmatpush.xpose.msra.mxu0 %v5119
    %5136 = vmatpush.xpose.msra.mxu0 %v5116
    %5137 = vmatmul.f32.gmra.mxu0 %v5110
    %v5138 = vpop.f32.mrf.mxu0
    %v5139 = vadd.f32 0.0, %v5138
    %5140 = vmatmul.f32.gmra.mxu0 %v5113
    %v5141 = vpop.f32.mrf.mxu0
    %v5142 = vadd.f32 0.0, %v5141
    %5143 = vdwg.mxu0
    %v5144 = vmul.f32 %v5139, 0.35355338
    %v5145 = vmul.f32 %v5142, 0.35355338
    %v5146 = vadd.f32 %v5144, %v82
    %v5147 = vadd.f32 %v5145, %v83
    %v5148 = vsel %vm218, %v5146, -inf
    %5149 = vmax.xlane.f32.xlu0 %v5148
    %v5150 = vpop.xlane.xlu0 %5149
    %v5151 = vsel %vm218, %v5147, -inf
    %5152 = vmax.xlane.f32.xlu0 %v5151
    %v5153 = vpop.xlane.xlu0 %5152
    %v5154 = vsub.f32 %v5146, %v5150
    %v5155 = vsub.f32 %v5147, %v5153
    %v5156 = vmul.f32 %v5154, 1.442695
    %v5157 = vpow.pop %v5156
    %v5158 = vmul.f32 %v5155, 1.442695
    %v5159 = vpow.pop %v5158
    %v5160 = vsel %vm218, %v5157, 0.0
    %5161 = vadd.xlane.f32.xlu0 %v5160
    %v5162 = vpop.xlane.xlu0 %5161
    %v5163 = vsel %vm218, %v5159, 0.0
    %5164 = vadd.xlane.f32.xlu0 %v5163
    %v5165 = vpop.xlane.xlu0 %5164
    %v5166 = vrcp.pop %v5162
    %v5167 = vrcp.pop %v5165
    %v5168 = vmul.f32 %v5157, %v5166
    %v5169 = vmul.f32 %v5159, %v5167
    %v5171 = vsel %vm218, %v5168, 0
    %v5174 = vsel %vm218, %v5169, 0
    %5176 = vmatpush.msra.mxu0 0.0
    %5177 = vmatpush.msra.mxu0 0.0
    %5178 = vmatpush.msra.mxu0 0.0
    %5179 = vmatpush.msra.mxu0 0.0
    %5180 = vmatpush.msra.mxu0 0.0
    %5181 = vmatpush.msra.mxu0 0.0
    %5182 = vmatpush.msra.mxu0 0.0
    %5183 = vmatpush.msra.mxu0 0.0
    %5184 = vmatpush.msra.mxu0 0.0
    %5185 = vmatpush.msra.mxu0 0.0
    %5186 = vmatpush.msra.mxu0 0.0
    %5187 = vmatpush.msra.mxu0 0.0
    %5188 = vmatpush.msra.mxu0 0.0
    %5189 = vmatpush.msra.mxu0 0.0
    %5190 = vmatpush.msra.mxu0 %v5107
    %5191 = vmatpush.msra.mxu0 %v5104
    %5192 = vmatmul.f32.gmra.mxu0 %v5171
    %v5193 = vpop.f32.mrf.mxu0
    %v5194 = vadd.f32 0.0, %v5193
    %5195 = vmatmul.f32.gmra.mxu0 %v5174
    %v5196 = vpop.f32.mrf.mxu0
    %v5197 = vadd.f32 0.0, %v5196
    %5198 = vdwg.mxu0
    %v5199 = vld [vmem:[#allocation2 + $0x3c8] sm:$0xff]
    %v5200 = vld [vmem:[#allocation2 + $0x360] sm:$0xff]
    %v5201 = vld [vmem:[#allocation2 + $0x380] sm:$0xff]
    %v5202 = vld [vmem:[#allocation2 + $0x3a0] sm:$0xff]
    %v5203 = vld [vmem:[#allocation2 + $0x3b9] sm:$0x1]
    %v5204 = vld [vmem:[#allocation2 + $0x3bd] sm:$0x1]
    %v5205 = vld [vmem:[#allocation2 + $0x3c1] sm:$0x1]
    %v5206 = vperm.slane %v5203, 0
    %v5208 = vsel %vm91, %v5200, 0
    %5210 = vmatpush.xpose.msra.mxu0 0.0
    %5211 = vmatpush.xpose.msra.mxu0 0.0
    %5212 = vmatpush.xpose.msra.mxu0 0.0
    %5213 = vmatpush.xpose.msra.mxu0 0.0
    %5214 = vmatpush.xpose.msra.mxu0 0.0
    %5215 = vmatpush.xpose.msra.mxu0 0.0
    %5216 = vmatpush.xpose.msra.mxu0 0.0
    %5217 = vmatpush.xpose.msra.mxu0 0.0
    %5218 = vmatpush.xpose.msra.mxu0 0.0
    %5219 = vmatpush.xpose.msra.mxu0 0.0
    %5220 = vmatpush.xpose.msra.mxu0 0.0
    %5221 = vmatpush.xpose.msra.mxu0 0.0
    %5222 = vmatpush.xpose.msra.mxu0 0.0
    %5223 = vmatpush.xpose.msra.mxu0 0.0
    %5224 = vmatpush.xpose.msra.mxu0 0.0
    %5225 = vmatpush.xpose.msra.mxu0 %v5208
    %5226 = vmatmul.f32.gmra.mxu0 %v5024
    %v5227 = vpop.f32.mrf.mxu0
    %v5228 = vadd.f32 %v5206, %v5227
    %5229 = vmatmul.f32.gmra.mxu0 %v5027
    %v5230 = vpop.f32.mrf.mxu0
    %v5231 = vadd.f32 %v5206, %v5230
    %5232 = vdwg.mxu0
    %v5233 = vperm.slane %v5204, 0
    %v5235 = vsel %vm91, %v5201, 0
    %5237 = vmatpush.xpose.msra.mxu0 0.0
    %5238 = vmatpush.xpose.msra.mxu0 0.0
    %5239 = vmatpush.xpose.msra.mxu0 0.0
    %5240 = vmatpush.xpose.msra.mxu0 0.0
    %5241 = vmatpush.xpose.msra.mxu0 0.0
    %5242 = vmatpush.xpose.msra.mxu0 0.0
    %5243 = vmatpush.xpose.msra.mxu0 0.0
    %5244 = vmatpush.xpose.msra.mxu0 0.0
    %5245 = vmatpush.xpose.msra.mxu0 0.0
    %5246 = vmatpush.xpose.msra.mxu0 0.0
    %5247 = vmatpush.xpose.msra.mxu0 0.0
    %5248 = vmatpush.xpose.msra.mxu0 0.0
    %5249 = vmatpush.xpose.msra.mxu0 0.0
    %5250 = vmatpush.xpose.msra.mxu0 0.0
    %5251 = vmatpush.xpose.msra.mxu0 0.0
    %5252 = vmatpush.xpose.msra.mxu0 %v5235
    %5253 = vmatmul.f32.gmra.mxu0 %v3129
    %v5254 = vpop.f32.mrf.mxu0
    %v5255 = vadd.f32 %v5233, %v5254
    %5256 = vmatmul.f32.gmra.mxu0 %v3132
    %v5257 = vpop.f32.mrf.mxu0
    %v5258 = vadd.f32 %v5233, %v5257
    %5259 = vdwg.mxu0
    %v5260 = vperm.slane %v5205, 0
    %v5262 = vsel %vm91, %v5202, 0
    %5264 = vmatpush.xpose.msra.mxu0 0.0
    %5265 = vmatpush.xpose.msra.mxu0 0.0
    %5266 = vmatpush.xpose.msra.mxu0 0.0
    %5267 = vmatpush.xpose.msra.mxu0 0.0
    %5268 = vmatpush.xpose.msra.mxu0 0.0
    %5269 = vmatpush.xpose.msra.mxu0 0.0
    %5270 = vmatpush.xpose.msra.mxu0 0.0
    %5271 = vmatpush.xpose.msra.mxu0 0.0
    %5272 = vmatpush.xpose.msra.mxu0 0.0
    %5273 = vmatpush.xpose.msra.mxu0 0.0
    %5274 = vmatpush.xpose.msra.mxu0 0.0
    %5275 = vmatpush.xpose.msra.mxu0 0.0
    %5276 = vmatpush.xpose.msra.mxu0 0.0
    %5277 = vmatpush.xpose.msra.mxu0 0.0
    %5278 = vmatpush.xpose.msra.mxu0 0.0
    %5279 = vmatpush.xpose.msra.mxu0 %v5262
    %5280 = vmatmul.f32.gmra.mxu0 %v3129
    %v5281 = vpop.f32.mrf.mxu0
    %v5282 = vadd.f32 %v5260, %v5281
    %5283 = vmatmul.f32.gmra.mxu0 %v3132
    %v5284 = vpop.f32.mrf.mxu0
    %v5285 = vadd.f32 %v5260, %v5284
    %5286 = vdwg.mxu0
    %v5288 = vsel %vm178, %v5228, 0
    %v5291 = vsel %vm178, %v5231, 0
    %v5294 = vsel %vm178, %v5255, 0
    %v5297 = vsel %vm178, %v5258, 0
    %5299 = vmatpush.xpose.msra.mxu0 0.0
    %5300 = vmatpush.xpose.msra.mxu0 0.0
    %5301 = vmatpush.xpose.msra.mxu0 0.0
    %5302 = vmatpush.xpose.msra.mxu0 0.0
    %5303 = vmatpush.xpose.msra.mxu0 0.0
    %5304 = vmatpush.xpose.msra.mxu0 0.0
    %5305 = vmatpush.xpose.msra.mxu0 0.0
    %5306 = vmatpush.xpose.msra.mxu0 0.0
    %5307 = vmatpush.xpose.msra.mxu0 0.0
    %5308 = vmatpush.xpose.msra.mxu0 0.0
    %5309 = vmatpush.xpose.msra.mxu0 0.0
    %5310 = vmatpush.xpose.msra.mxu0 0.0
    %5311 = vmatpush.xpose.msra.mxu0 0.0
    %5312 = vmatpush.xpose.msra.mxu0 0.0
    %5313 = vmatpush.xpose.msra.mxu0 %v5297
    %5314 = vmatpush.xpose.msra.mxu0 %v5294
    %5315 = vmatmul.f32.gmra.mxu0 %v5288
    %v5316 = vpop.f32.mrf.mxu0
    %v5317 = vadd.f32 0.0, %v5316
    %5318 = vmatmul.f32.gmra.mxu0 %v5291
    %v5319 = vpop.f32.mrf.mxu0
    %v5320 = vadd.f32 0.0, %v5319
    %5321 = vdwg.mxu0
    %v5322 = vmul.f32 %v5317, 0.35355338
    %v5323 = vmul.f32 %v5320, 0.35355338
    %v5324 = vadd.f32 %v5322, %v82
    %v5325 = vadd.f32 %v5323, %v83
    %v5326 = vsel %vm218, %v5324, -inf
    %5327 = vmax.xlane.f32.xlu0 %v5326
    %v5328 = vpop.xlane.xlu0 %5327
    %v5329 = vsel %vm218, %v5325, -inf
    %5330 = vmax.xlane.f32.xlu0 %v5329
    %v5331 = vpop.xlane.xlu0 %5330
    %v5332 = vsub.f32 %v5324, %v5328
    %v5333 = vsub.f32 %v5325, %v5331
    %v5334 = vmul.f32 %v5332, 1.442695
    %v5335 = vpow.pop %v5334
    %v5336 = vmul.f32 %v5333, 1.442695
    %v5337 = vpow.pop %v5336
    %v5338 = vsel %vm218, %v5335, 0.0
    %5339 = vadd.xlane.f32.xlu0 %v5338
    %v5340 = vpop.xlane.xlu0 %5339
    %v5341 = vsel %vm218, %v5337, 0.0
    %5342 = vadd.xlane.f32.xlu0 %v5341
    %v5343 = vpop.xlane.xlu0 %5342
    %v5344 = vrcp.pop %v5340
    %v5345 = vrcp.pop %v5343
    %v5346 = vmul.f32 %v5335, %v5344
    %v5347 = vmul.f32 %v5337, %v5345
    %v5349 = vsel %vm218, %v5346, 0
    %v5352 = vsel %vm218, %v5347, 0
    %5354 = vmatpush.msra.mxu0 0.0
    %5355 = vmatpush.msra.mxu0 0.0
    %5356 = vmatpush.msra.mxu0 0.0
    %5357 = vmatpush.msra.mxu0 0.0
    %5358 = vmatpush.msra.mxu0 0.0
    %5359 = vmatpush.msra.mxu0 0.0
    %5360 = vmatpush.msra.mxu0 0.0
    %5361 = vmatpush.msra.mxu0 0.0
    %5362 = vmatpush.msra.mxu0 0.0
    %5363 = vmatpush.msra.mxu0 0.0
    %5364 = vmatpush.msra.mxu0 0.0
    %5365 = vmatpush.msra.mxu0 0.0
    %5366 = vmatpush.msra.mxu0 0.0
    %5367 = vmatpush.msra.mxu0 0.0
    %5368 = vmatpush.msra.mxu0 %v5285
    %5369 = vmatpush.msra.mxu0 %v5282
    %5370 = vmatmul.f32.gmra.mxu0 %v5349
    %v5371 = vpop.f32.mrf.mxu0
    %v5372 = vadd.f32 0.0, %v5371
    %5373 = vmatmul.f32.gmra.mxu0 %v5352
    %v5374 = vpop.f32.mrf.mxu0
    %v5375 = vadd.f32 0.0, %v5374
    %5376 = vdwg.mxu0
    %v5377 = vld [vmem:[#allocation2 + $0x3d0] sm:$0xff]
    %v5379 = vsel %vm178, %v5372, 0
    %v5382 = vsel %vm178, %v5375, 0
    %5384 = vmatpush.msra.mxu0 0.0
    %5385 = vmatpush.msra.mxu0 0.0
    %5386 = vmatpush.msra.mxu0 0.0
    %5387 = vmatpush.msra.mxu0 0.0
    %5388 = vmatpush.msra.mxu0 0.0
    %5389 = vmatpush.msra.mxu0 0.0
    %5390 = vmatpush.msra.mxu0 0.0
    %5391 = vmatpush.msra.mxu0 0.0
    %5392 = vmatpush.msra.mxu0 0.0
    %5393 = vmatpush.msra.mxu0 0.0
    %5394 = vmatpush.msra.mxu0 0.0
    %5395 = vmatpush.msra.mxu0 0.0
    %5396 = vmatpush.msra.mxu0 0.0
    %5397 = vmatpush.msra.mxu0 0.0
    %5398 = vmatpush.msra.mxu0 0.0
    %5399 = vmatpush.msra.mxu0 %v5377
    %5400 = vmatmul.f32.gmra.mxu0 %v5379
    %v5401 = vpop.f32.mrf.mxu0
    %v5402 = vadd.f32 0.0, %v5401
    %5403 = vmatmul.f32.gmra.mxu0 %v5382
    %v5404 = vpop.f32.mrf.mxu0
    %v5405 = vadd.f32 0.0, %v5404
    %5406 = vdwg.mxu0
    %v5408 = vsel %vm178, %v5194, 0
    %v5411 = vsel %vm178, %v5197, 0
    %5413 = vmatpush.msra.mxu0 0.0
    %5414 = vmatpush.msra.mxu0 0.0
    %5415 = vmatpush.msra.mxu0 0.0
    %5416 = vmatpush.msra.mxu0 0.0
    %5417 = vmatpush.msra.mxu0 0.0
    %5418 = vmatpush.msra.mxu0 0.0
    %5419 = vmatpush.msra.mxu0 0.0
    %5420 = vmatpush.msra.mxu0 0.0
    %5421 = vmatpush.msra.mxu0 0.0
    %5422 = vmatpush.msra.mxu0 0.0
    %5423 = vmatpush.msra.mxu0 0.0
    %5424 = vmatpush.msra.mxu0 0.0
    %5425 = vmatpush.msra.mxu0 0.0
    %5426 = vmatpush.msra.mxu0 0.0
    %5427 = vmatpush.msra.mxu0 0.0
    %5428 = vmatpush.msra.mxu0 %v5199
    %5429 = vmatmul.f32.gmra.mxu0 %v5408
    %v5430 = vpop.f32.mrf.mxu0
    %v5431 = vadd.f32 %v5402, %v5430
    %5432 = vmatmul.f32.gmra.mxu0 %v5411
    %v5433 = vpop.f32.mrf.mxu0
    %v5434 = vadd.f32 %v5405, %v5433
    %5435 = vdwg.mxu0
    %v5436 = vld [vmem:[#allocation2 + $0x368] sm:$0xff]
    %v5437 = vld [vmem:[#allocation2 + $0x388] sm:$0xff]
    %v5438 = vld [vmem:[#allocation2 + $0x3a8] sm:$0xff]
    %v5439 = vld [vmem:[#allocation2 + $0x3ba] sm:$0x1]
    %v5440 = vld [vmem:[#allocation2 + $0x3be] sm:$0x1]
    %v5441 = vld [vmem:[#allocation2 + $0x3c2] sm:$0x1]
    %v5442 = vperm.slane %v5439, 0
    %v5444 = vsel %vm91, %v5436, 0
    %5446 = vmatpush.xpose.msra.mxu0 0.0
    %5447 = vmatpush.xpose.msra.mxu0 0.0
    %5448 = vmatpush.xpose.msra.mxu0 0.0
    %5449 = vmatpush.xpose.msra.mxu0 0.0
    %5450 = vmatpush.xpose.msra.mxu0 0.0
    %5451 = vmatpush.xpose.msra.mxu0 0.0
    %5452 = vmatpush.xpose.msra.mxu0 0.0
    %5453 = vmatpush.xpose.msra.mxu0 0.0
    %5454 = vmatpush.xpose.msra.mxu0 0.0
    %5455 = vmatpush.xpose.msra.mxu0 0.0
    %5456 = vmatpush.xpose.msra.mxu0 0.0
    %5457 = vmatpush.xpose.msra.mxu0 0.0
    %5458 = vmatpush.xpose.msra.mxu0 0.0
    %5459 = vmatpush.xpose.msra.mxu0 0.0
    %5460 = vmatpush.xpose.msra.mxu0 0.0
    %5461 = vmatpush.xpose.msra.mxu0 %v5444
    %5462 = vmatmul.f32.gmra.mxu0 %v5024
    %v5463 = vpop.f32.mrf.mxu0
    %v5464 = vadd.f32 %v5442, %v5463
    %5465 = vmatmul.f32.gmra.mxu0 %v5027
    %v5466 = vpop.f32.mrf.mxu0
    %v5467 = vadd.f32 %v5442, %v5466
    %5468 = vdwg.mxu0
    %v5469 = vperm.slane %v5440, 0
    %v5471 = vsel %vm91, %v5437, 0
    %5473 = vmatpush.xpose.msra.mxu0 0.0
    %5474 = vmatpush.xpose.msra.mxu0 0.0
    %5475 = vmatpush.xpose.msra.mxu0 0.0
    %5476 = vmatpush.xpose.msra.mxu0 0.0
    %5477 = vmatpush.xpose.msra.mxu0 0.0
    %5478 = vmatpush.xpose.msra.mxu0 0.0
    %5479 = vmatpush.xpose.msra.mxu0 0.0
    %5480 = vmatpush.xpose.msra.mxu0 0.0
    %5481 = vmatpush.xpose.msra.mxu0 0.0
    %5482 = vmatpush.xpose.msra.mxu0 0.0
    %5483 = vmatpush.xpose.msra.mxu0 0.0
    %5484 = vmatpush.xpose.msra.mxu0 0.0
    %5485 = vmatpush.xpose.msra.mxu0 0.0
    %5486 = vmatpush.xpose.msra.mxu0 0.0
    %5487 = vmatpush.xpose.msra.mxu0 0.0
    %5488 = vmatpush.xpose.msra.mxu0 %v5471
    %5489 = vmatmul.f32.gmra.mxu0 %v3129
    %v5490 = vpop.f32.mrf.mxu0
    %v5491 = vadd.f32 %v5469, %v5490
    %5492 = vmatmul.f32.gmra.mxu0 %v3132
    %v5493 = vpop.f32.mrf.mxu0
    %v5494 = vadd.f32 %v5469, %v5493
    %5495 = vdwg.mxu0
    %v5496 = vperm.slane %v5441, 0
    %v5498 = vsel %vm91, %v5438, 0
    %5500 = vmatpush.xpose.msra.mxu0 0.0
    %5501 = vmatpush.xpose.msra.mxu0 0.0
    %5502 = vmatpush.xpose.msra.mxu0 0.0
    %5503 = vmatpush.xpose.msra.mxu0 0.0
    %5504 = vmatpush.xpose.msra.mxu0 0.0
    %5505 = vmatpush.xpose.msra.mxu0 0.0
    %5506 = vmatpush.xpose.msra.mxu0 0.0
    %5507 = vmatpush.xpose.msra.mxu0 0.0
    %5508 = vmatpush.xpose.msra.mxu0 0.0
    %5509 = vmatpush.xpose.msra.mxu0 0.0
    %5510 = vmatpush.xpose.msra.mxu0 0.0
    %5511 = vmatpush.xpose.msra.mxu0 0.0
    %5512 = vmatpush.xpose.msra.mxu0 0.0
    %5513 = vmatpush.xpose.msra.mxu0 0.0
    %5514 = vmatpush.xpose.msra.mxu0 0.0
    %5515 = vmatpush.xpose.msra.mxu0 %v5498
    %5516 = vmatmul.f32.gmra.mxu0 %v3129
    %v5517 = vpop.f32.mrf.mxu0
    %v5518 = vadd.f32 %v5496, %v5517
    %5519 = vmatmul.f32.gmra.mxu0 %v3132
    %v5520 = vpop.f32.mrf.mxu0
    %v5521 = vadd.f32 %v5496, %v5520
    %5522 = vdwg.mxu0
    %v5524 = vsel %vm178, %v5464, 0
    %v5527 = vsel %vm178, %v5467, 0
    %v5530 = vsel %vm178, %v5491, 0
    %v5533 = vsel %vm178, %v5494, 0
    %5535 = vmatpush.xpose.msra.mxu0 0.0
    %5536 = vmatpush.xpose.msra.mxu0 0.0
    %5537 = vmatpush.xpose.msra.mxu0 0.0
    %5538 = vmatpush.xpose.msra.mxu0 0.0
    %5539 = vmatpush.xpose.msra.mxu0 0.0
    %5540 = vmatpush.xpose.msra.mxu0 0.0
    %5541 = vmatpush.xpose.msra.mxu0 0.0
    %5542 = vmatpush.xpose.msra.mxu0 0.0
    %5543 = vmatpush.xpose.msra.mxu0 0.0
    %5544 = vmatpush.xpose.msra.mxu0 0.0
    %5545 = vmatpush.xpose.msra.mxu0 0.0
    %5546 = vmatpush.xpose.msra.mxu0 0.0
    %5547 = vmatpush.xpose.msra.mxu0 0.0
    %5548 = vmatpush.xpose.msra.mxu0 0.0
    %5549 = vmatpush.xpose.msra.mxu0 %v5533
    %5550 = vmatpush.xpose.msra.mxu0 %v5530
    %5551 = vmatmul.f32.gmra.mxu0 %v5524
    %v5552 = vpop.f32.mrf.mxu0
    %v5553 = vadd.f32 0.0, %v5552
    %5554 = vmatmul.f32.gmra.mxu0 %v5527
    %v5555 = vpop.f32.mrf.mxu0
    %v5556 = vadd.f32 0.0, %v5555
    %5557 = vdwg.mxu0
    %v5558 = vmul.f32 %v5553, 0.35355338
    %v5559 = vmul.f32 %v5556, 0.35355338
    %v5560 = vadd.f32 %v5558, %v82
    %v5561 = vadd.f32 %v5559, %v83
    %v5562 = vsel %vm218, %v5560, -inf
    %5563 = vmax.xlane.f32.xlu0 %v5562
    %v5564 = vpop.xlane.xlu0 %5563
    %v5565 = vsel %vm218, %v5561, -inf
    %5566 = vmax.xlane.f32.xlu0 %v5565
    %v5567 = vpop.xlane.xlu0 %5566
    %v5568 = vsub.f32 %v5560, %v5564
    %v5569 = vsub.f32 %v5561, %v5567
    %v5570 = vmul.f32 %v5568, 1.442695
    %v5571 = vpow.pop %v5570
    %v5572 = vmul.f32 %v5569, 1.442695
    %v5573 = vpow.pop %v5572
    %v5574 = vsel %vm218, %v5571, 0.0
    %5575 = vadd.xlane.f32.xlu0 %v5574
    %v5576 = vpop.xlane.xlu0 %5575
    %v5577 = vsel %vm218, %v5573, 0.0
    %5578 = vadd.xlane.f32.xlu0 %v5577
    %v5579 = vpop.xlane.xlu0 %5578
    %v5580 = vrcp.pop %v5576
    %v5581 = vrcp.pop %v5579
    %v5582 = vmul.f32 %v5571, %v5580
    %v5583 = vmul.f32 %v5573, %v5581
    %v5585 = vsel %vm218, %v5582, 0
    %v5588 = vsel %vm218, %v5583, 0
    %5590 = vmatpush.msra.mxu0 0.0
    %5591 = vmatpush.msra.mxu0 0.0
    %5592 = vmatpush.msra.mxu0 0.0
    %5593 = vmatpush.msra.mxu0 0.0
    %5594 = vmatpush.msra.mxu0 0.0
    %5595 = vmatpush.msra.mxu0 0.0
    %5596 = vmatpush.msra.mxu0 0.0
    %5597 = vmatpush.msra.mxu0 0.0
    %5598 = vmatpush.msra.mxu0 0.0
    %5599 = vmatpush.msra.mxu0 0.0
    %5600 = vmatpush.msra.mxu0 0.0
    %5601 = vmatpush.msra.mxu0 0.0
    %5602 = vmatpush.msra.mxu0 0.0
    %5603 = vmatpush.msra.mxu0 0.0
    %5604 = vmatpush.msra.mxu0 %v5521
    %5605 = vmatpush.msra.mxu0 %v5518
    %5606 = vmatmul.f32.gmra.mxu0 %v5585
    %v5607 = vpop.f32.mrf.mxu0
    %v5608 = vadd.f32 0.0, %v5607
    %5609 = vmatmul.f32.gmra.mxu0 %v5588
    %v5610 = vpop.f32.mrf.mxu0
    %v5611 = vadd.f32 0.0, %v5610
    %5612 = vdwg.mxu0
    %v5613 = vld [vmem:[#allocation2 + $0x3d8] sm:$0xff]
    %v5615 = vsel %vm178, %v5608, 0
    %v5618 = vsel %vm178, %v5611, 0
    %5620 = vmatpush.msra.mxu0 0.0
    %5621 = vmatpush.msra.mxu0 0.0
    %5622 = vmatpush.msra.mxu0 0.0
    %5623 = vmatpush.msra.mxu0 0.0
    %5624 = vmatpush.msra.mxu0 0.0
    %5625 = vmatpush.msra.mxu0 0.0
    %5626 = vmatpush.msra.mxu0 0.0
    %5627 = vmatpush.msra.mxu0 0.0
    %5628 = vmatpush.msra.mxu0 0.0
    %5629 = vmatpush.msra.mxu0 0.0
    %5630 = vmatpush.msra.mxu0 0.0
    %5631 = vmatpush.msra.mxu0 0.0
    %5632 = vmatpush.msra.mxu0 0.0
    %5633 = vmatpush.msra.mxu0 0.0
    %5634 = vmatpush.msra.mxu0 0.0
    %5635 = vmatpush.msra.mxu0 %v5613
    %5636 = vmatmul.f32.gmra.mxu0 %v5615
    %v5637 = vpop.f32.mrf.mxu0
    %v5638 = vadd.f32 0.0, %v5637
    %5639 = vmatmul.f32.gmra.mxu0 %v5618
    %v5640 = vpop.f32.mrf.mxu0
    %v5641 = vadd.f32 0.0, %v5640
    %5642 = vdwg.mxu0
    %v5643 = vadd.f32 %v5431, %v5638
    %v5644 = vadd.f32 %v5434, %v5641
    %v5645 = vld [vmem:[#allocation2 + $0x370] sm:$0xff]
    %v5646 = vld [vmem:[#allocation2 + $0x390] sm:$0xff]
    %v5647 = vld [vmem:[#allocation2 + $0x3b0] sm:$0xff]
    %v5648 = vld [vmem:[#allocation2 + $0x3bb] sm:$0x1]
    %v5649 = vld [vmem:[#allocation2 + $0x3bf] sm:$0x1]
    %v5650 = vld [vmem:[#allocation2 + $0x3c3] sm:$0x1]
    %v5651 = vperm.slane %v5648, 0
    %v5653 = vsel %vm91, %v5645, 0
    %5655 = vmatpush.xpose.msra.mxu0 0.0
    %5656 = vmatpush.xpose.msra.mxu0 0.0
    %5657 = vmatpush.xpose.msra.mxu0 0.0
    %5658 = vmatpush.xpose.msra.mxu0 0.0
    %5659 = vmatpush.xpose.msra.mxu0 0.0
    %5660 = vmatpush.xpose.msra.mxu0 0.0
    %5661 = vmatpush.xpose.msra.mxu0 0.0
    %5662 = vmatpush.xpose.msra.mxu0 0.0
    %5663 = vmatpush.xpose.msra.mxu0 0.0
    %5664 = vmatpush.xpose.msra.mxu0 0.0
    %5665 = vmatpush.xpose.msra.mxu0 0.0
    %5666 = vmatpush.xpose.msra.mxu0 0.0
    %5667 = vmatpush.xpose.msra.mxu0 0.0
    %5668 = vmatpush.xpose.msra.mxu0 0.0
    %5669 = vmatpush.xpose.msra.mxu0 0.0
    %5670 = vmatpush.xpose.msra.mxu0 %v5653
    %5671 = vmatmul.f32.gmra.mxu0 %v5024
    %v5672 = vpop.f32.mrf.mxu0
    %v5673 = vadd.f32 %v5651, %v5672
    %5674 = vmatmul.f32.gmra.mxu0 %v5027
    %v5675 = vpop.f32.mrf.mxu0
    %v5676 = vadd.f32 %v5651, %v5675
    %5677 = vdwg.mxu0
    %v5678 = vperm.slane %v5649, 0
    %v5680 = vsel %vm91, %v5646, 0
    %5682 = vmatpush.xpose.msra.mxu0 0.0
    %5683 = vmatpush.xpose.msra.mxu0 0.0
    %5684 = vmatpush.xpose.msra.mxu0 0.0
    %5685 = vmatpush.xpose.msra.mxu0 0.0
    %5686 = vmatpush.xpose.msra.mxu0 0.0
    %5687 = vmatpush.xpose.msra.mxu0 0.0
    %5688 = vmatpush.xpose.msra.mxu0 0.0
    %5689 = vmatpush.xpose.msra.mxu0 0.0
    %5690 = vmatpush.xpose.msra.mxu0 0.0
    %5691 = vmatpush.xpose.msra.mxu0 0.0
    %5692 = vmatpush.xpose.msra.mxu0 0.0
    %5693 = vmatpush.xpose.msra.mxu0 0.0
    %5694 = vmatpush.xpose.msra.mxu0 0.0
    %5695 = vmatpush.xpose.msra.mxu0 0.0
    %5696 = vmatpush.xpose.msra.mxu0 0.0
    %5697 = vmatpush.xpose.msra.mxu0 %v5680
    %5698 = vmatmul.f32.gmra.mxu0 %v3129
    %v5699 = vpop.f32.mrf.mxu0
    %v5700 = vadd.f32 %v5678, %v5699
    %5701 = vmatmul.f32.gmra.mxu0 %v3132
    %v5702 = vpop.f32.mrf.mxu0
    %v5703 = vadd.f32 %v5678, %v5702
    %5704 = vdwg.mxu0
    %v5705 = vperm.slane %v5650, 0
    %v5707 = vsel %vm91, %v5647, 0
    %5709 = vmatpush.xpose.msra.mxu0 0.0
    %5710 = vmatpush.xpose.msra.mxu0 0.0
    %5711 = vmatpush.xpose.msra.mxu0 0.0
    %5712 = vmatpush.xpose.msra.mxu0 0.0
    %5713 = vmatpush.xpose.msra.mxu0 0.0
    %5714 = vmatpush.xpose.msra.mxu0 0.0
    %5715 = vmatpush.xpose.msra.mxu0 0.0
    %5716 = vmatpush.xpose.msra.mxu0 0.0
    %5717 = vmatpush.xpose.msra.mxu0 0.0
    %5718 = vmatpush.xpose.msra.mxu0 0.0
    %5719 = vmatpush.xpose.msra.mxu0 0.0
    %5720 = vmatpush.xpose.msra.mxu0 0.0
    %5721 = vmatpush.xpose.msra.mxu0 0.0
    %5722 = vmatpush.xpose.msra.mxu0 0.0
    %5723 = vmatpush.xpose.msra.mxu0 0.0
    %5724 = vmatpush.xpose.msra.mxu0 %v5707
    %5725 = vmatmul.f32.gmra.mxu0 %v3129
    %v5726 = vpop.f32.mrf.mxu0
    %v5727 = vadd.f32 %v5705, %v5726
    %5728 = vmatmul.f32.gmra.mxu0 %v3132
    %v5729 = vpop.f32.mrf.mxu0
    %v5730 = vadd.f32 %v5705, %v5729
    %5731 = vdwg.mxu0
    %v5733 = vsel %vm178, %v5673, 0
    %v5736 = vsel %vm178, %v5676, 0
    %v5739 = vsel %vm178, %v5700, 0
    %v5742 = vsel %vm178, %v5703, 0
    %5744 = vmatpush.xpose.msra.mxu0 0.0
    %5745 = vmatpush.xpose.msra.mxu0 0.0
    %5746 = vmatpush.xpose.msra.mxu0 0.0
    %5747 = vmatpush.xpose.msra.mxu0 0.0
    %5748 = vmatpush.xpose.msra.mxu0 0.0
    %5749 = vmatpush.xpose.msra.mxu0 0.0
    %5750 = vmatpush.xpose.msra.mxu0 0.0
    %5751 = vmatpush.xpose.msra.mxu0 0.0
    %5752 = vmatpush.xpose.msra.mxu0 0.0
    %5753 = vmatpush.xpose.msra.mxu0 0.0
    %5754 = vmatpush.xpose.msra.mxu0 0.0
    %5755 = vmatpush.xpose.msra.mxu0 0.0
    %5756 = vmatpush.xpose.msra.mxu0 0.0
    %5757 = vmatpush.xpose.msra.mxu0 0.0
    %5758 = vmatpush.xpose.msra.mxu0 %v5742
    %5759 = vmatpush.xpose.msra.mxu0 %v5739
    %5760 = vmatmul.f32.gmra.mxu0 %v5733
    %v5761 = vpop.f32.mrf.mxu0
    %v5762 = vadd.f32 0.0, %v5761
    %5763 = vmatmul.f32.gmra.mxu0 %v5736
    %v5764 = vpop.f32.mrf.mxu0
    %v5765 = vadd.f32 0.0, %v5764
    %5766 = vdwg.mxu0
    %v5767 = vmul.f32 %v5762, 0.35355338
    %v5768 = vmul.f32 %v5765, 0.35355338
    %v5769 = vadd.f32 %v5767, %v82
    %v5770 = vadd.f32 %v5768, %v83
    %v5771 = vsel %vm218, %v5769, -inf
    %5772 = vmax.xlane.f32.xlu0 %v5771
    %v5773 = vpop.xlane.xlu0 %5772
    %v5774 = vsel %vm218, %v5770, -inf
    %5775 = vmax.xlane.f32.xlu0 %v5774
    %v5776 = vpop.xlane.xlu0 %5775
    %v5777 = vsub.f32 %v5769, %v5773
    %v5778 = vsub.f32 %v5770, %v5776
    %v5779 = vmul.f32 %v5777, 1.442695
    %v5780 = vpow.pop %v5779
    %v5781 = vmul.f32 %v5778, 1.442695
    %v5782 = vpow.pop %v5781
    %v5783 = vsel %vm218, %v5780, 0.0
    %5784 = vadd.xlane.f32.xlu0 %v5783
    %v5785 = vpop.xlane.xlu0 %5784
    %v5786 = vsel %vm218, %v5782, 0.0
    %5787 = vadd.xlane.f32.xlu0 %v5786
    %v5788 = vpop.xlane.xlu0 %5787
    %v5789 = vrcp.pop %v5785
    %v5790 = vrcp.pop %v5788
    %v5791 = vmul.f32 %v5780, %v5789
    %v5792 = vmul.f32 %v5782, %v5790
    %v5794 = vsel %vm218, %v5791, 0
    %v5797 = vsel %vm218, %v5792, 0
    %5799 = vmatpush.msra.mxu0 0.0
    %5800 = vmatpush.msra.mxu0 0.0
    %5801 = vmatpush.msra.mxu0 0.0
    %5802 = vmatpush.msra.mxu0 0.0
    %5803 = vmatpush.msra.mxu0 0.0
    %5804 = vmatpush.msra.mxu0 0.0
    %5805 = vmatpush.msra.mxu0 0.0
    %5806 = vmatpush.msra.mxu0 0.0
    %5807 = vmatpush.msra.mxu0 0.0
    %5808 = vmatpush.msra.mxu0 0.0
    %5809 = vmatpush.msra.mxu0 0.0
    %5810 = vmatpush.msra.mxu0 0.0
    %5811 = vmatpush.msra.mxu0 0.0
    %5812 = vmatpush.msra.mxu0 0.0
    %5813 = vmatpush.msra.mxu0 %v5730
    %5814 = vmatpush.msra.mxu0 %v5727
    %5815 = vmatmul.f32.gmra.mxu0 %v5794
    %v5816 = vpop.f32.mrf.mxu0
    %v5817 = vadd.f32 0.0, %v5816
    %5818 = vmatmul.f32.gmra.mxu0 %v5797
    %v5819 = vpop.f32.mrf.mxu0
    %v5820 = vadd.f32 0.0, %v5819
    %5821 = vdwg.mxu0
    %v5822 = vld [vmem:[#allocation2 + $0x3e0] sm:$0xff]
    %v5824 = vsel %vm178, %v5817, 0
    %v5827 = vsel %vm178, %v5820, 0
    %5829 = vmatpush.msra.mxu0 0.0
    %5830 = vmatpush.msra.mxu0 0.0
    %5831 = vmatpush.msra.mxu0 0.0
    %5832 = vmatpush.msra.mxu0 0.0
    %5833 = vmatpush.msra.mxu0 0.0
    %5834 = vmatpush.msra.mxu0 0.0
    %5835 = vmatpush.msra.mxu0 0.0
    %5836 = vmatpush.msra.mxu0 0.0
    %5837 = vmatpush.msra.mxu0 0.0
    %5838 = vmatpush.msra.mxu0 0.0
    %5839 = vmatpush.msra.mxu0 0.0
    %5840 = vmatpush.msra.mxu0 0.0
    %5841 = vmatpush.msra.mxu0 0.0
    %5842 = vmatpush.msra.mxu0 0.0
    %5843 = vmatpush.msra.mxu0 0.0
    %5844 = vmatpush.msra.mxu0 %v5822
    %5845 = vmatmul.f32.gmra.mxu0 %v5824
    %v5846 = vpop.f32.mrf.mxu0
    %v5847 = vadd.f32 0.0, %v5846
    %5848 = vmatmul.f32.gmra.mxu0 %v5827
    %v5849 = vpop.f32.mrf.mxu0
    %v5850 = vadd.f32 0.0, %v5849
    %5851 = vdwg.mxu0
    %v5852 = vadd.f32 %v5643, %v5847
    %v5853 = vadd.f32 %v5644, %v5850
    %v5854 = vld [vmem:[#allocation2 + $0x3e8] sm:$0x1]
    %v5855 = vperm.slane %v5854, 0
    %v5856 = vadd.f32 %v5852, %v5855
    %v5857 = vadd.f32 %v5853, %v5855
    %v5858 = vadd.f32 %v5014, %v5856
    %v5859 = vadd.f32 %v5015, %v5857
    %v5860 = vld [vmem:[#allocation2 + $0x5b9] sm:$0x1]
    %v5861 = vld [vmem:[#allocation2 + $0x5ba] sm:$0x1]
    %v5862 = vsel %vm91, %v5858, 0.0
    %5863 = vadd.xlane.f32.xlu0 %v5862
    %v5864 = vpop.xlane.xlu0 %5863
    %v5865 = vsel %vm91, %v5859, 0.0
    %5866 = vadd.xlane.f32.xlu0 %v5865
    %v5867 = vpop.xlane.xlu0 %5866
    %v5868 = vmul.f32 %v5864, %v945
    %v5869 = vmul.f32 %v5867, %v945
    %v5870 = vsub.f32 %v5858, %v5868
    %v5871 = vsub.f32 %v5859, %v5869
    %v5872 = vmul.f32 %v5870, %v5870
    %v5873 = vmul.f32 %v5871, %v5871
    %v5874 = vsel %vm91, %v5872, 0.0
    %5875 = vadd.xlane.f32.xlu0 %v5874
    %v5876 = vpop.xlane.xlu0 %5875
    %v5877 = vsel %vm91, %v5873, 0.0
    %5878 = vadd.xlane.f32.xlu0 %v5877
    %v5879 = vpop.xlane.xlu0 %5878
    %v5880 = vmul.f32 %v5876, %v945
    %v5881 = vmul.f32 %v5879, %v945
    %v5882 = vadd.f32 %v5880, 1e-05
    %v5883 = vadd.f32 %v5881, 1e-05
    %v5884 = vrsqrt.pop %v5882
    %v5885 = vmul.f32 %v5884, %v5882
    %v5886 = vmul.f32 %v5885, %v5884
    %v5887 = vmul.f32 0.5, %v5886
    %v5888 = vsub.f32 1.5, %v5887
    %v5889 = vmul.f32 %v5884, %v5888
    %vm5890 = vweird.f32 %v5882
    %vm5891 = vweird.f32 %v5884
    %vm5892 = vmor %vm5890, %vm5891
    %v5893 = vsel %vm5892, %v5884, %v5889
    %v5894 = vrsqrt.pop %v5883
    %v5895 = vmul.f32 %v5894, %v5883
    %v5896 = vmul.f32 %v5895, %v5894
    %v5897 = vmul.f32 0.5, %v5896
    %v5898 = vsub.f32 1.5, %v5897
    %v5899 = vmul.f32 %v5894, %v5898
    %vm5900 = vweird.f32 %v5883
    %vm5901 = vweird.f32 %v5894
    %vm5902 = vmor %vm5900, %vm5901
    %v5903 = vsel %vm5902, %v5894, %v5899
    %v5904 = vmul.f32 %v5870, %v5893
    %v5905 = vmul.f32 %v5871, %v5903
    %v5906 = vperm.slane %v5860, 0
    %v5907 = vmul.f32 %v5904, %v5906
    %v5908 = vmul.f32 %v5905, %v5906
    %v5909 = vperm.slane %v5861, 0
    %v5910 = vadd.f32 %v5907, %v5909
    %v5911 = vadd.f32 %v5908, %v5909
    %v5912 = vld [vmem:[#allocation2 + $0x540] sm:$0xff]
    %v5913 = vld [vmem:[#allocation2 + $0x548] sm:$0xff]
    %v5914 = vld [vmem:[#allocation2 + $0x550] sm:$0xff]
    %v5915 = vld [vmem:[#allocation2 + $0x558] sm:$0xff]
    %v5916 = vld [vmem:[#allocation2 + $0x560] sm:$0x1]
    %v5917 = vld [vmem:[#allocation2 + $0x568] sm:$0xff]
    %v5918 = vld [vmem:[#allocation2 + $0x570] sm:$0xff]
    %v5919 = vld [vmem:[#allocation2 + $0x578] sm:$0xff]
    %v5920 = vld [vmem:[#allocation2 + $0x580] sm:$0xff]
    %v5921 = vld [vmem:[#allocation2 + $0x588] sm:$0xff]
    %v5922 = vld [vmem:[#allocation2 + $0x590] sm:$0xff]
    %v5923 = vld [vmem:[#allocation2 + $0x598] sm:$0xff]
    %v5924 = vld [vmem:[#allocation2 + $0x5a0] sm:$0xff]
    %v5925 = vld [vmem:[#allocation2 + $0x5a8] sm:$0x1]
    %v5926 = vperm.slane %v5916, 0
    %v5928 = vsel %vm91, %v5910, 0
    %v5931 = vsel %vm91, %v5911, 0
    %5933 = vmatpush.msra.mxu0 0.0
    %5934 = vmatpush.msra.mxu0 0.0
    %5935 = vmatpush.msra.mxu0 0.0
    %5936 = vmatpush.msra.mxu0 0.0
    %5937 = vmatpush.msra.mxu0 0.0
    %5938 = vmatpush.msra.mxu0 0.0
    %5939 = vmatpush.msra.mxu0 0.0
    %5940 = vmatpush.msra.mxu0 0.0
    %5941 = vmatpush.msra.mxu0 0.0
    %5942 = vmatpush.msra.mxu0 0.0
    %5943 = vmatpush.msra.mxu0 0.0
    %5944 = vmatpush.msra.mxu0 0.0
    %5945 = vmatpush.msra.mxu0 %v5915
    %5946 = vmatpush.msra.mxu0 %v5914
    %5947 = vmatpush.msra.mxu0 %v5913
    %5948 = vmatpush.msra.mxu0 %v5912
    %5949 = vmatmul.f32.gmra.mxu0 %v5928
    %v5950 = vpop.f32.mrf.mxu0
    %v5951 = vadd.f32 %v5926, %v5950
    %5952 = vmatmul.f32.gmra.mxu0 %v5931
    %v5953 = vpop.f32.mrf.mxu0
    %v5954 = vadd.f32 %v5926, %v5953
    %5955 = vdwg.mxu0
    %v5956 = vmax.f32 %v5951, 0.0
    %v5957 = vmax.f32 %v5954, 0.0
    %v5958 = vperm.slane %v5925, 0
    %v5960 = vsel %vm52, %v5956, 0
    %v5963 = vsel %vm52, %v5957, 0
    %5965 = vmatpush.msra.mxu0 0.0
    %5966 = vmatpush.msra.mxu0 0.0
    %5967 = vmatpush.msra.mxu0 0.0
    %5968 = vmatpush.msra.mxu0 0.0
    %5969 = vmatpush.msra.mxu0 0.0
    %5970 = vmatpush.msra.mxu0 0.0
    %5971 = vmatpush.msra.mxu0 0.0
    %5972 = vmatpush.msra.mxu0 0.0
    %5973 = vmatpush.msra.mxu0 %v5924
    %5974 = vmatpush.msra.mxu0 %v5923
    %5975 = vmatpush.msra.mxu0 %v5922
    %5976 = vmatpush.msra.mxu0 %v5921
    %5977 = vmatpush.msra.mxu0 %v5920
    %5978 = vmatpush.msra.mxu0 %v5919
    %5979 = vmatpush.msra.mxu0 %v5918
    %5980 = vmatpush.msra.mxu0 %v5917
    %5981 = vmatmul.f32.gmra.mxu0 %v5960
    %v5982 = vpop.f32.mrf.mxu0
    %v5983 = vadd.f32 %v5958, %v5982
    %5984 = vmatmul.f32.gmra.mxu0 %v5963
    %v5985 = vpop.f32.mrf.mxu0
    %v5986 = vadd.f32 %v5958, %v5985
    %5987 = vdwg.mxu0
    %v5988 = vadd.f32 %v5910, %v5983
    %v5989 = vadd.f32 %v5911, %v5986
    %v5990 = vld [vmem:[#allocation2 + $0x5bb] sm:$0x1]
    %v5991 = vld [vmem:[#allocation2 + $0x5bc] sm:$0x1]
    %v5992 = vsel %vm91, %v5988, 0.0
    %5993 = vadd.xlane.f32.xlu0 %v5992
    %v5994 = vpop.xlane.xlu0 %5993
    %v5995 = vsel %vm91, %v5989, 0.0
    %5996 = vadd.xlane.f32.xlu0 %v5995
    %v5997 = vpop.xlane.xlu0 %5996
    %v5998 = vmul.f32 %v5994, %v945
    %v5999 = vmul.f32 %v5997, %v945
    %v6000 = vsub.f32 %v5988, %v5998
    %v6001 = vsub.f32 %v5989, %v5999
    %v6002 = vmul.f32 %v6000, %v6000
    %v6003 = vmul.f32 %v6001, %v6001
    %v6004 = vsel %vm91, %v6002, 0.0
    %6005 = vadd.xlane.f32.xlu0 %v6004
    %v6006 = vpop.xlane.xlu0 %6005
    %v6007 = vsel %vm91, %v6003, 0.0
    %6008 = vadd.xlane.f32.xlu0 %v6007
    %v6009 = vpop.xlane.xlu0 %6008
    %v6010 = vmul.f32 %v6006, %v945
    %v6011 = vmul.f32 %v6009, %v945
    %v6012 = vadd.f32 %v6010, 1e-05
    %v6013 = vadd.f32 %v6011, 1e-05
    %v6014 = vrsqrt.pop %v6012
    %v6015 = vmul.f32 %v6014, %v6012
    %v6016 = vmul.f32 %v6015, %v6014
    %v6017 = vmul.f32 0.5, %v6016
    %v6018 = vsub.f32 1.5, %v6017
    %v6019 = vmul.f32 %v6014, %v6018
    %vm6020 = vweird.f32 %v6012
    %vm6021 = vweird.f32 %v6014
    %vm6022 = vmor %vm6020, %vm6021
    %v6023 = vsel %vm6022, %v6014, %v6019
    %v6024 = vrsqrt.pop %v6013
    %v6025 = vmul.f32 %v6024, %v6013
    %v6026 = vmul.f32 %v6025, %v6024
    %v6027 = vmul.f32 0.5, %v6026
    %v6028 = vsub.f32 1.5, %v6027
    %v6029 = vmul.f32 %v6024, %v6028
    %vm6030 = vweird.f32 %v6013
    %vm6031 = vweird.f32 %v6024
    %vm6032 = vmor %vm6030, %vm6031
    %v6033 = vsel %vm6032, %v6024, %v6029
    %v6034 = vmul.f32 %v6000, %v6023
    %v6035 = vmul.f32 %v6001, %v6033
    %v6036 = vperm.slane %v5990, 0
    %v6037 = vmul.f32 %v6034, %v6036
    %v6038 = vmul.f32 %v6035, %v6036
    %v6039 = vperm.slane %v5991, 0
    %v6040 = vadd.f32 %v6037, %v6039
    %v6041 = vadd.f32 %v6038, %v6039
    %v6042 = vld [vmem:[#allocation2 + $0x5bf] sm:$0x1]
    %v6043 = vld [vmem:[#allocation2 + $0x5c0] sm:$0x1]
    %v6044 = vsel %vm91, %v6040, 0.0
    %6045 = vadd.xlane.f32.xlu0 %v6044
    %v6046 = vpop.xlane.xlu0 %6045
    %v6047 = vsel %vm91, %v6041, 0.0
    %6048 = vadd.xlane.f32.xlu0 %v6047
    %v6049 = vpop.xlane.xlu0 %6048
    %v6050 = vmul.f32 %v6046, %v945
    %v6051 = vmul.f32 %v6049, %v945
    %v6052 = vsub.f32 %v6040, %v6050
    %v6053 = vsub.f32 %v6041, %v6051
    %v6054 = vmul.f32 %v6052, %v6052
    %v6055 = vmul.f32 %v6053, %v6053
    %v6056 = vsel %vm91, %v6054, 0.0
    %6057 = vadd.xlane.f32.xlu0 %v6056
    %v6058 = vpop.xlane.xlu0 %6057
    %v6059 = vsel %vm91, %v6055, 0.0
    %6060 = vadd.xlane.f32.xlu0 %v6059
    %v6061 = vpop.xlane.xlu0 %6060
    %v6062 = vmul.f32 %v6058, %v945
    %v6063 = vmul.f32 %v6061, %v945
    %v6064 = vadd.f32 %v6062, 1e-05
    %v6065 = vadd.f32 %v6063, 1e-05
    %v6066 = vrsqrt.pop %v6064
    %v6067 = vmul.f32 %v6066, %v6064
    %v6068 = vmul.f32 %v6067, %v6066
    %v6069 = vmul.f32 0.5, %v6068
    %v6070 = vsub.f32 1.5, %v6069
    %v6071 = vmul.f32 %v6066, %v6070
    %vm6072 = vweird.f32 %v6064
    %vm6073 = vweird.f32 %v6066
    %vm6074 = vmor %vm6072, %vm6073
    %v6075 = vsel %vm6074, %v6066, %v6071
    %v6076 = vrsqrt.pop %v6065
    %v6077 = vmul.f32 %v6076, %v6065
    %v6078 = vmul.f32 %v6077, %v6076
    %v6079 = vmul.f32 0.5, %v6078
    %v6080 = vsub.f32 1.5, %v6079
    %v6081 = vmul.f32 %v6076, %v6080
    %vm6082 = vweird.f32 %v6065
    %vm6083 = vweird.f32 %v6076
    %vm6084 = vmor %vm6082, %vm6083
    %v6085 = vsel %vm6084, %v6076, %v6081
    %v6086 = vmul.f32 %v6052, %v6075
    %v6087 = vmul.f32 %v6053, %v6085
    %v6088 = vperm.slane %v6042, 0
    %v6089 = vmul.f32 %v6086, %v6088
    %v6090 = vmul.f32 %v6087, %v6088
    %v6091 = vperm.slane %v6043, 0
    %v6092 = vadd.f32 %v6089, %v6091
    %v6093 = vadd.f32 %v6090, %v6091
    %v6094 = vld [vmem:[#allocation2 + $0x5c8] sm:$0xff]
    %v6095 = vld [vmem:[#allocation2 + $0x5d0] sm:$0xff]
    %v6096 = vld [vmem:[#allocation2 + $0x5d8] sm:$0xff]
    %v6097 = vld [vmem:[#allocation2 + $0x5e0] sm:$0xff]
    %v6098 = vld [vmem:[#allocation2 + $0x5e8] sm:$0x1]
    %v6099 = vperm.slane %v6098, 0
    %v6101 = vsel %vm91, %v6092, 0
    %v6104 = vsel %vm91, %v6093, 0
    %6106 = vmatpush.msra.mxu0 0.0
    %6107 = vmatpush.msra.mxu0 0.0
    %6108 = vmatpush.msra.mxu0 0.0
    %6109 = vmatpush.msra.mxu0 0.0
    %6110 = vmatpush.msra.mxu0 0.0
    %6111 = vmatpush.msra.mxu0 0.0
    %6112 = vmatpush.msra.mxu0 0.0
    %6113 = vmatpush.msra.mxu0 0.0
    %6114 = vmatpush.msra.mxu0 0.0
    %6115 = vmatpush.msra.mxu0 0.0
    %6116 = vmatpush.msra.mxu0 0.0
    %6117 = vmatpush.msra.mxu0 0.0
    %6118 = vmatpush.msra.mxu0 %v6097
    %6119 = vmatpush.msra.mxu0 %v6096
    %6120 = vmatpush.msra.mxu0 %v6095
    %6121 = vmatpush.msra.mxu0 %v6094
    %6122 = vmatmul.f32.gmra.mxu0 %v6101
    %v6123 = vpop.f32.mrf.mxu0
    %v6124 = vadd.f32 %v6099, %v6123
    %6125 = vmatmul.f32.gmra.mxu0 %v6104
    %v6126 = vpop.f32.mrf.mxu0
    %v6127 = vadd.f32 %v6099, %v6126
    %6128 = vdwg.mxu0
    %6129 = vst [vmem:[#allocation5 - $0x7] sm:$0x80] %v6124
    %6130 = vst [vmem:[#allocation5 - $0x6] sm:$0x80] %v6127
    // Predicated region
    $region14: #{transformer_model_forward.1} parent=1 // pred_check
      _
    $region15: #{transformer_model_forward.1} parent=1 // pred_check_branch
      %6132 = sbr.rel (0) target = $region17
    $region16: #{transformer_model_forward.1} parent=1 // pred_region
      %6134 = vsyncadd [#allocation4], 0
      %s6136 = sshll.u32 [#allocation5], 4
      %s6137 = int_to_ptr.vmem [resolvable:$true] %s6136
      %s6138 = sshll.u32 %s2, 4
      %s6139 = int_to_ptr.hbm [resolvable:$true] %s6138
      %6141 = dma.vmem_to_hbm [thread:$0]  %s6137, 32, %s6139, [#allocation4]
    $region17: #{transformer_model_forward.1} parent=1 // pred_fallthru
      _
    // Predicated region
    $region18: #{transformer_model_forward.1} parent=1 // pred_check
      _
    $region19: #{transformer_model_forward.1} parent=1 // pred_check_branch
      %6143 = sbr.rel (0) target = $region21
    $region20: #{transformer_model_forward.1} parent=1 // pred_region
      %6145 = dma.done [#allocation4], 32
    $region21: #{transformer_model_forward.1} parent=1 // pred_fallthru
      _
    %6146 = vsyncpa [#allocation3], 1
    %6147 = vsyncpa [#allocation4], 1

</llo_original>
